<compile_context>
chip_gen: v6e
topology: v6e:2x2x1
jax: 0.10.0
libtpu: 0.0.40
codegen_flags: <defaults>
</compile_context>

<pallas_src>
import functools

import jax
import jax.numpy as jnp
from jax.experimental import pallas as pl
from jax.experimental.pallas import tpu as pltpu

_MXU_DEPTH = 256   # per-tap K (= C) already fills the MXU at/above this (v6e/v7x)


def _basic_block_kernel(x_ref, w1_ref, w2_ref, s1_ref, b1_ref, s2_ref, b2_ref,
                        o_ref, *, H, W, use_patch):
    R, C = x_ref.shape              # R = images_per_block * H * W; channels on lanes
    x = x_ref[...]                  # f32; kept in f32 so the residual add is exact

    # Per-row (y, x) image coordinates -> 8 halo masks, computed once and reused
    # by both convs.  The same masks also zero every row that wraps around under
    # the circular pltpu.roll used to build the shifted taps.
    i = jax.lax.broadcasted_iota(jnp.int32, (R, 1), 0)
    if (W & (W - 1)) == 0 and (H & (H - 1)) == 0:   # power of two: no vector int div
        col = i & (W - 1)
        row = (i >> (W.bit_length() - 1)) & (H - 1)
    else:
        col = i % W
        row = (i // W) % H

    offsets = [(dy, dx) for dy in (-1, 0, 1) for dx in (-1, 0, 1)]
    masks = {}
    for dy, dx in offsets:
        if dy == 0 and dx == 0:
            continue
        masks[(dy, dx)] = ((col + dx >= 0) & (col + dx < W) &
                           (row + dy >= 0) & (row + dy < H))

    def taps_bf16(act):
        # 9 shifted taps via XLU sublane rotation (no zero-extended copy, no
        # unaligned slices); halo masked and cast to bf16 (MXU operand) at once.
        for dy, dx in offsets:
            if dy == 0 and dx == 0:
                yield act.astype(jnp.bfloat16)
            else:
                off = dy * W + dx
                rolled = pltpu.roll(act, shift=(-off) % R, axis=0)
                yield jnp.where(masks[(dy, dx)], rolled, 0.0).astype(jnp.bfloat16)

    def conv3x3(act, w_ref):
        if use_patch:
            # Small C: one fused MXU matmul over a bf16 (R, 9C) im2col patch.
            patch = jnp.concatenate(list(taps_bf16(act)), axis=1)
            return jnp.dot(patch, w_ref[...], preferred_element_type=jnp.float32)
        # C >= MXU depth: 9 accumulating matmuls, no (R, 9C) patch materialized.
        acc = None
        for k, tap in enumerate(taps_bf16(act)):
            part = jnp.dot(tap, w_ref[k * C:(k + 1) * C, :],
                           preferred_element_type=jnp.float32)
            acc = part if acc is None else acc + part
        return acc

    out1 = conv3x3(x, w1_ref)                                     # conv1
    out1 = jnp.maximum(out1 * s1_ref[...] + b1_ref[...], 0.0)     # bn1 + relu (f32)
    out2 = conv3x3(out1, w2_ref)                                  # conv2
    out2 = out2 * s2_ref[...] + b2_ref[...]                       # bn2 (f32)
    o_ref[...] = jnp.maximum(out2 + x, 0.0).astype(o_ref.dtype)   # + residual, relu


def _choose_images_per_block(N, hw, Cp, use_patch, act_budget_bytes):
    # Realistic per-image live VMEM (double-buffered in/out blocks, bf16 taps,
    # bf16 patch or f32 accumulator, f32 conv result + out1, transients).
    bytes_per_pxch = 64 if use_patch else 40
    bytes_per_image = bytes_per_pxch * hw * Cp
    budget_imgs = max(1, act_budget_bytes // bytes_per_image)
    # Keep at least min(N, 4) grid steps so double-buffering overlaps DMA with
    # compute and both v7x TensorCores get >= 2 steps each.
    min_grid = min(N, 4)
    target = max(1, min(budget_imgs, N // min_grid))
    divisors = [d for d in range(1, N + 1) if N % d == 0]
    good = [d for d in divisors if (d * hw) % 8 == 0]      # (8, 128) sublane rule
    le = [d for d in good if d <= target]
    if le:
        return max(le)
    if good:
        return min(good)   # smallest block satisfying the sublane rule
    return N               # whole array as one block (block == full array dims)


def basic_block_pallas(x_nhwc, w1, w2, s1, b1, s2, b2, *, images_per_block=None):
    """BasicBlock forward (stride=1, no downsample).

    x_nhwc: (N, H, W, C) float32 (NHWC; the PyTorch module is NCHW).
    w1, w2: (3, 3, C, C) HWIO conv weights.
    s1, b1, s2, b2: (C,) folded inference-mode BatchNorm scale / bias.
    """
    N, H, W, C = x_nhwc.shape
    assert w1.shape == (3, 3, C, C) and w2.shape == (3, 3, C, C), (
        "residual path requires inplanes == planes (stride=1, downsample=None)")
    hw = H * W

    # Lane-dense channels: pad C up to a multiple of 128 so every VPU op and
    # every store is unmasked.  Padded channels are exactly zero end-to-end.
    Cp = C if C % 128 == 0 else ((C + 127) // 128) * 128
    use_patch = Cp < _MXU_DEPTH

    # --- VMEM budgeting per generation --------------------------------------
    try:
        vmem_physical = int(pltpu.get_tpu_info().vmem_capacity_bytes)
    except Exception:                      # be conservative (v7x-sized) if unknown
        vmem_physical = 64 << 20
    vmem_limit = (vmem_physical * 3) // 4
    # Grid-invariant weights still get double-buffered; count them in the budget
    # instead of relying on pipeline_mode support.
    weight_bytes = 2 * 2 * 9 * Cp * Cp * 2          # 2 weights, 2 buffers, bf16
    act_budget = max(1 << 20, vmem_limit - weight_bytes - (4 << 20))

    if images_per_block is None:
        images_per_block = _choose_images_per_block(N, hw, Cp, use_patch, act_budget)
    assert N % images_per_block == 0
    rows = images_per_block * hw

    # Flat (rows, Cp) layout; bf16 weights for the MXU; f32 activations.
    x2d = x_nhwc.reshape(N * hw, C).astype(jnp.float32)
    w1p = w1.astype(jnp.float32)
    w2p = w2.astype(jnp.float32)
    s1p, b1p, s2p, b2p = (v.astype(jnp.float32) for v in (s1, b1, s2, b2))
    if Cp != C:
        pc = Cp - C
        x2d = jnp.pad(x2d, ((0, 0), (0, pc)))
        w1p = jnp.pad(w1p, ((0, 0), (0, 0), (0, pc), (0, pc)))
        w2p = jnp.pad(w2p, ((0, 0), (0, 0), (0, pc), (0, pc)))
        s1p, b1p, s2p, b2p = (jnp.pad(v, (0, pc)) for v in (s1p, b1p, s2p, b2p))
    w1f = w1p.reshape(9 * Cp, Cp).astype(jnp.bfloat16)   # (kh, kw, Cin) -> rows
    w2f = w2p.reshape(9 * Cp, Cp).astype(jnp.bfloat16)
    s1p = s1p.reshape(1, Cp)
    b1p = b1p.reshape(1, Cp)
    s2p = s2p.reshape(1, Cp)
    b2p = b2p.reshape(1, Cp)

    grid = (N // images_per_block,)
    kernel = functools.partial(_basic_block_kernel, H=H, W=W, use_patch=use_patch)

    flops = 4 * 9 * N * hw * Cp * Cp                    # two convs, 2*M*K*N each
    bytes_accessed = (2 * N * hw * Cp * 4               # x in + out
                      + 2 * 9 * Cp * Cp * 2             # bf16 weights
                      + 4 * Cp * 4)                     # folded BN params

    out2d = pl.pallas_call(
        kernel,
        out_shape=jax.ShapeDtypeStruct((N * hw, Cp), jnp.float32),
        grid_spec=pltpu.PrefetchScalarGridSpec(
            num_scalar_prefetch=0,
            grid=grid,
            in_specs=[
                pl.BlockSpec((rows, Cp), lambda n: (n, 0)),       # activations
                pl.BlockSpec((9 * Cp, Cp), lambda n: (0, 0)),     # w1 (grid-invariant)
                pl.BlockSpec((9 * Cp, Cp), lambda n: (0, 0)),     # w2 (grid-invariant)
                pl.BlockSpec((1, Cp), lambda n: (0, 0)),          # bn1 scale
                pl.BlockSpec((1, Cp), lambda n: (0, 0)),          # bn1 bias
                pl.BlockSpec((1, Cp), lambda n: (0, 0)),          # bn2 scale
                pl.BlockSpec((1, Cp), lambda n: (0, 0)),          # bn2 bias
            ],
            out_specs=pl.BlockSpec((rows, Cp), lambda n: (n, 0)),
        ),
        compiler_params=pltpu.CompilerParams(
            # batch blocks are independent -> shard across TensorCores on v7x
            dimension_semantics=("parallel",),
            vmem_limit_bytes=int(vmem_limit)),
        cost_estimate=pl.CostEstimate(
            flops=flops, transcendentals=0, bytes_accessed=bytes_accessed),
    )(x2d, w1f, w2f, s1p, b1p, s2p, b2p)

    return out2d[:, :C].reshape(N, H, W, C)


def _reference_block(x_nhwc, w1, w2, s1, b1, s2, b2):
    # Matches the kernel's numerics: bf16 conv operands, f32 accumulation,
    # f32 BN / ReLU / residual.
    conv = functools.partial(
        jax.lax.conv_general_dilated,
        window_strides=(1, 1),
        padding=((1, 1), (1, 1)),
        dimension_numbers=("NHWC", "HWIO", "NHWC"),
        preferred_element_type=jnp.float32,
    )
    h = conv(x_nhwc.astype(jnp.bfloat16), w1.astype(jnp.bfloat16)) * s1 + b1
    h = jnp.maximum(h, 0.0)
    h = conv(h.astype(jnp.bfloat16), w2.astype(jnp.bfloat16)) * s2 + b2
    return jnp.maximum(h + x_nhwc, 0.0)


if __name__ == "__main__":
    # Small, BasicBlock-consistent shapes: N=2, C(inplanes=planes)=4, H=W=16.
    N, C, H, W = 2, 4, 16, 16
    key = jax.random.PRNGKey(0)
    (kx, kw1, kw2, kg1, kb1, km1, kv1, kg2, kb2, km2, kv2) = jax.random.split(key, 11)

    x_nchw = jax.random.normal(kx, (N, C, H, W), dtype=jnp.float32)
    x_nhwc = jnp.transpose(x_nchw, (0, 2, 3, 1))   # NCHW (torch) -> NHWC (kernel)

    # Conv weights (HWIO), deterministic init.
    w1 = jax.random.normal(kw1, (3, 3, C, C), dtype=jnp.float32) * 0.1
    w2 = jax.random.normal(kw2, (3, 3, C, C), dtype=jnp.float32) * 0.1

    # Inference-mode BatchNorm with non-trivial running stats, folded to scale/bias.
    eps = 1e-5
    gamma1 = 1.0 + 0.1 * jax.random.normal(kg1, (C,), dtype=jnp.float32)
    beta1 = 0.1 * jax.random.normal(kb1, (C,), dtype=jnp.float32)
    mean1 = 0.1 * jax.random.normal(km1, (C,), dtype=jnp.float32)
    var1 = 1.0 + 0.1 * jax.random.uniform(kv1, (C,), dtype=jnp.float32)
    gamma2 = 1.0 + 0.1 * jax.random.normal(kg2, (C,), dtype=jnp.float32)
    beta2 = 0.1 * jax.random.normal(kb2, (C,), dtype=jnp.float32)
    mean2 = 0.1 * jax.random.normal(km2, (C,), dtype=jnp.float32)
    var2 = 1.0 + 0.1 * jax.random.uniform(kv2, (C,), dtype=jnp.float32)

    s1 = gamma1 / jnp.sqrt(var1 + eps)
    b1 = beta1 - mean1 * s1
    s2 = gamma2 / jnp.sqrt(var2 + eps)
    b2 = beta2 - mean2 * s2

    out = basic_block_pallas(x_nhwc, w1, w2, s1, b1, s2, b2)
    out = jax.block_until_ready(out)

    ref = _reference_block(x_nhwc, w1, w2, s1, b1, s2, b2)
    assert out.shape == (N, H, W, C)
    max_err = float(jnp.max(jnp.abs(out - ref)))
    assert jnp.allclose(out, ref, atol=1e-3, rtol=1e-3), max_err

    print("KERNEL_OK")
</pallas_src>

<mosaic_0001>
module attributes {stable_mosaic.version = 11 : i64} {
  func.func @_basic_block_kernel(%arg0: i32, %arg1: memref<256x128xf32, #tpu.memory_space<vmem>>, %arg2: memref<1152x128xbf16, #tpu.memory_space<vmem>>, %arg3: memref<1152x128xbf16, #tpu.memory_space<vmem>>, %arg4: memref<1x128xf32, #tpu.memory_space<vmem>>, %arg5: memref<1x128xf32, #tpu.memory_space<vmem>>, %arg6: memref<1x128xf32, #tpu.memory_space<vmem>>, %arg7: memref<1x128xf32, #tpu.memory_space<vmem>>, %arg8: memref<256x128xf32, #tpu.memory_space<vmem>>) attributes {dimension_semantics = [#tpu.dimension_semantics<parallel>], iteration_bounds = array<i64: 2>, scalar_prefetch = 0 : i64, scratch_operands = 0 : i64, tpu.core_type = #tpu.core_type<tc>, window_params = [{transform_indices = @transform_0, window_bounds = array<i64: 256, 128>}, {pipeline_mode = #tpu.pipeline_mode<synchronous>, transform_indices = @transform_1, window_bounds = array<i64: 1152, 128>}, {pipeline_mode = #tpu.pipeline_mode<synchronous>, transform_indices = @transform_2, window_bounds = array<i64: 1152, 128>}, {pipeline_mode = #tpu.pipeline_mode<synchronous>, transform_indices = @transform_3, window_bounds = array<i64: 1, 128>}, {pipeline_mode = #tpu.pipeline_mode<synchronous>, transform_indices = @transform_4, window_bounds = array<i64: 1, 128>}, {pipeline_mode = #tpu.pipeline_mode<synchronous>, transform_indices = @transform_5, window_bounds = array<i64: 1, 128>}, {pipeline_mode = #tpu.pipeline_mode<synchronous>, transform_indices = @transform_6, window_bounds = array<i64: 1, 128>}, {transform_indices = @transform_7, window_bounds = array<i64: 256, 128>}]} {
    %c0 = arith.constant 0 : index
    %c0_0 = arith.constant 0 : index
    %0 = vector.load %arg1[%c0, %c0_0] : memref<256x128xf32, #tpu.memory_space<vmem>>, vector<256x128xf32>
    %1 = tpu.iota {dimensions = array<i32: 0>} : vector<256x1xi32>
    %c15_i32 = arith.constant 15 : i32
    %2 = vector.broadcast %c15_i32 : i32 to vector<256x1xi32>
    %3 = arith.andi %1, %2 : vector<256x1xi32>
    %c4_i32 = arith.constant 4 : i32
    %4 = vector.broadcast %c4_i32 : i32 to vector<256x1xi32>
    %5 = arith.shrsi %1, %4 : vector<256x1xi32>
    %c15_i32_1 = arith.constant 15 : i32
    %6 = vector.broadcast %c15_i32_1 : i32 to vector<256x1xi32>
    %7 = arith.andi %5, %6 : vector<256x1xi32>
    %c-1_i32 = arith.constant -1 : i32
    %8 = vector.broadcast %c-1_i32 : i32 to vector<256x1xi32>
    %9 = arith.addi %3, %8 : vector<256x1xi32>
    %c0_i32 = arith.constant 0 : i32
    %10 = vector.broadcast %c0_i32 : i32 to vector<256x1xi32>
    %11 = arith.cmpi sge, %9, %10 : vector<256x1xi32>
    %c-1_i32_2 = arith.constant -1 : i32
    %12 = vector.broadcast %c-1_i32_2 : i32 to vector<256x1xi32>
    %13 = arith.addi %3, %12 : vector<256x1xi32>
    %c16_i32 = arith.constant 16 : i32
    %14 = vector.broadcast %c16_i32 : i32 to vector<256x1xi32>
    %15 = arith.cmpi slt, %13, %14 : vector<256x1xi32>
    %16 = arith.andi %11, %15 : vector<256x1xi1>
    %c-1_i32_3 = arith.constant -1 : i32
    %17 = vector.broadcast %c-1_i32_3 : i32 to vector<256x1xi32>
    %18 = arith.addi %7, %17 : vector<256x1xi32>
    %c0_i32_4 = arith.constant 0 : i32
    %19 = vector.broadcast %c0_i32_4 : i32 to vector<256x1xi32>
    %20 = arith.cmpi sge, %18, %19 : vector<256x1xi32>
    %21 = arith.andi %16, %20 : vector<256x1xi1>
    %c-1_i32_5 = arith.constant -1 : i32
    %22 = vector.broadcast %c-1_i32_5 : i32 to vector<256x1xi32>
    %23 = arith.addi %7, %22 : vector<256x1xi32>
    %c16_i32_6 = arith.constant 16 : i32
    %24 = vector.broadcast %c16_i32_6 : i32 to vector<256x1xi32>
    %25 = arith.cmpi slt, %23, %24 : vector<256x1xi32>
    %26 = arith.andi %21, %25 : vector<256x1xi1>
    %c0_i32_7 = arith.constant 0 : i32
    %27 = vector.broadcast %c0_i32_7 : i32 to vector<256x1xi32>
    %28 = arith.addi %3, %27 : vector<256x1xi32>
    %c0_i32_8 = arith.constant 0 : i32
    %29 = vector.broadcast %c0_i32_8 : i32 to vector<256x1xi32>
    %30 = arith.cmpi sge, %28, %29 : vector<256x1xi32>
    %c0_i32_9 = arith.constant 0 : i32
    %31 = vector.broadcast %c0_i32_9 : i32 to vector<256x1xi32>
    %32 = arith.addi %3, %31 : vector<256x1xi32>
    %c16_i32_10 = arith.constant 16 : i32
    %33 = vector.broadcast %c16_i32_10 : i32 to vector<256x1xi32>
    %34 = arith.cmpi slt, %32, %33 : vector<256x1xi32>
    %35 = arith.andi %30, %34 : vector<256x1xi1>
    %c-1_i32_11 = arith.constant -1 : i32
    %36 = vector.broadcast %c-1_i32_11 : i32 to vector<256x1xi32>
    %37 = arith.addi %7, %36 : vector<256x1xi32>
    %c0_i32_12 = arith.constant 0 : i32
    %38 = vector.broadcast %c0_i32_12 : i32 to vector<256x1xi32>
    %39 = arith.cmpi sge, %37, %38 : vector<256x1xi32>
    %40 = arith.andi %35, %39 : vector<256x1xi1>
    %c-1_i32_13 = arith.constant -1 : i32
    %41 = vector.broadcast %c-1_i32_13 : i32 to vector<256x1xi32>
    %42 = arith.addi %7, %41 : vector<256x1xi32>
    %c16_i32_14 = arith.constant 16 : i32
    %43 = vector.broadcast %c16_i32_14 : i32 to vector<256x1xi32>
    %44 = arith.cmpi slt, %42, %43 : vector<256x1xi32>
    %45 = arith.andi %40, %44 : vector<256x1xi1>
    %c1_i32 = arith.constant 1 : i32
    %46 = vector.broadcast %c1_i32 : i32 to vector<256x1xi32>
    %47 = arith.addi %3, %46 : vector<256x1xi32>
    %c0_i32_15 = arith.constant 0 : i32
    %48 = vector.broadcast %c0_i32_15 : i32 to vector<256x1xi32>
    %49 = arith.cmpi sge, %47, %48 : vector<256x1xi32>
    %c1_i32_16 = arith.constant 1 : i32
    %50 = vector.broadcast %c1_i32_16 : i32 to vector<256x1xi32>
    %51 = arith.addi %3, %50 : vector<256x1xi32>
    %c16_i32_17 = arith.constant 16 : i32
    %52 = vector.broadcast %c16_i32_17 : i32 to vector<256x1xi32>
    %53 = arith.cmpi slt, %51, %52 : vector<256x1xi32>
    %54 = arith.andi %49, %53 : vector<256x1xi1>
    %c-1_i32_18 = arith.constant -1 : i32
    %55 = vector.broadcast %c-1_i32_18 : i32 to vector<256x1xi32>
    %56 = arith.addi %7, %55 : vector<256x1xi32>
    %c0_i32_19 = arith.constant 0 : i32
    %57 = vector.broadcast %c0_i32_19 : i32 to vector<256x1xi32>
    %58 = arith.cmpi sge, %56, %57 : vector<256x1xi32>
    %59 = arith.andi %54, %58 : vector<256x1xi1>
    %c-1_i32_20 = arith.constant -1 : i32
    %60 = vector.broadcast %c-1_i32_20 : i32 to vector<256x1xi32>
    %61 = arith.addi %7, %60 : vector<256x1xi32>
    %c16_i32_21 = arith.constant 16 : i32
    %62 = vector.broadcast %c16_i32_21 : i32 to vector<256x1xi32>
    %63 = arith.cmpi slt, %61, %62 : vector<256x1xi32>
    %64 = arith.andi %59, %63 : vector<256x1xi1>
    %c-1_i32_22 = arith.constant -1 : i32
    %65 = vector.broadcast %c-1_i32_22 : i32 to vector<256x1xi32>
    %66 = arith.addi %3, %65 : vector<256x1xi32>
    %c0_i32_23 = arith.constant 0 : i32
    %67 = vector.broadcast %c0_i32_23 : i32 to vector<256x1xi32>
    %68 = arith.cmpi sge, %66, %67 : vector<256x1xi32>
    %c-1_i32_24 = arith.constant -1 : i32
    %69 = vector.broadcast %c-1_i32_24 : i32 to vector<256x1xi32>
    %70 = arith.addi %3, %69 : vector<256x1xi32>
    %c16_i32_25 = arith.constant 16 : i32
    %71 = vector.broadcast %c16_i32_25 : i32 to vector<256x1xi32>
    %72 = arith.cmpi slt, %70, %71 : vector<256x1xi32>
    %73 = arith.andi %68, %72 : vector<256x1xi1>
    %c0_i32_26 = arith.constant 0 : i32
    %74 = vector.broadcast %c0_i32_26 : i32 to vector<256x1xi32>
    %75 = arith.addi %7, %74 : vector<256x1xi32>
    %c0_i32_27 = arith.constant 0 : i32
    %76 = vector.broadcast %c0_i32_27 : i32 to vector<256x1xi32>
    %77 = arith.cmpi sge, %75, %76 : vector<256x1xi32>
    %78 = arith.andi %73, %77 : vector<256x1xi1>
    %c0_i32_28 = arith.constant 0 : i32
    %79 = vector.broadcast %c0_i32_28 : i32 to vector<256x1xi32>
    %80 = arith.addi %7, %79 : vector<256x1xi32>
    %c16_i32_29 = arith.constant 16 : i32
    %81 = vector.broadcast %c16_i32_29 : i32 to vector<256x1xi32>
    %82 = arith.cmpi slt, %80, %81 : vector<256x1xi32>
    %83 = arith.andi %78, %82 : vector<256x1xi1>
    %c1_i32_30 = arith.constant 1 : i32
    %84 = vector.broadcast %c1_i32_30 : i32 to vector<256x1xi32>
    %85 = arith.addi %3, %84 : vector<256x1xi32>
    %c0_i32_31 = arith.constant 0 : i32
    %86 = vector.broadcast %c0_i32_31 : i32 to vector<256x1xi32>
    %87 = arith.cmpi sge, %85, %86 : vector<256x1xi32>
    %c1_i32_32 = arith.constant 1 : i32
    %88 = vector.broadcast %c1_i32_32 : i32 to vector<256x1xi32>
    %89 = arith.addi %3, %88 : vector<256x1xi32>
    %c16_i32_33 = arith.constant 16 : i32
    %90 = vector.broadcast %c16_i32_33 : i32 to vector<256x1xi32>
    %91 = arith.cmpi slt, %89, %90 : vector<256x1xi32>
    %92 = arith.andi %87, %91 : vector<256x1xi1>
    %c0_i32_34 = arith.constant 0 : i32
    %93 = vector.broadcast %c0_i32_34 : i32 to vector<256x1xi32>
    %94 = arith.addi %7, %93 : vector<256x1xi32>
    %c0_i32_35 = arith.constant 0 : i32
    %95 = vector.broadcast %c0_i32_35 : i32 to vector<256x1xi32>
    %96 = arith.cmpi sge, %94, %95 : vector<256x1xi32>
    %97 = arith.andi %92, %96 : vector<256x1xi1>
    %c0_i32_36 = arith.constant 0 : i32
    %98 = vector.broadcast %c0_i32_36 : i32 to vector<256x1xi32>
    %99 = arith.addi %7, %98 : vector<256x1xi32>
    %c16_i32_37 = arith.constant 16 : i32
    %100 = vector.broadcast %c16_i32_37 : i32 to vector<256x1xi32>
    %101 = arith.cmpi slt, %99, %100 : vector<256x1xi32>
    %102 = arith.andi %97, %101 : vector<256x1xi1>
    %c-1_i32_38 = arith.constant -1 : i32
    %103 = vector.broadcast %c-1_i32_38 : i32 to vector<256x1xi32>
    %104 = arith.addi %3, %103 : vector<256x1xi32>
    %c0_i32_39 = arith.constant 0 : i32
    %105 = vector.broadcast %c0_i32_39 : i32 to vector<256x1xi32>
    %106 = arith.cmpi sge, %104, %105 : vector<256x1xi32>
    %c-1_i32_40 = arith.constant -1 : i32
    %107 = vector.broadcast %c-1_i32_40 : i32 to vector<256x1xi32>
    %108 = arith.addi %3, %107 : vector<256x1xi32>
    %c16_i32_41 = arith.constant 16 : i32
    %109 = vector.broadcast %c16_i32_41 : i32 to vector<256x1xi32>
    %110 = arith.cmpi slt, %108, %109 : vector<256x1xi32>
    %111 = arith.andi %106, %110 : vector<256x1xi1>
    %c1_i32_42 = arith.constant 1 : i32
    %112 = vector.broadcast %c1_i32_42 : i32 to vector<256x1xi32>
    %113 = arith.addi %7, %112 : vector<256x1xi32>
    %c0_i32_43 = arith.constant 0 : i32
    %114 = vector.broadcast %c0_i32_43 : i32 to vector<256x1xi32>
    %115 = arith.cmpi sge, %113, %114 : vector<256x1xi32>
    %116 = arith.andi %111, %115 : vector<256x1xi1>
    %c1_i32_44 = arith.constant 1 : i32
    %117 = vector.broadcast %c1_i32_44 : i32 to vector<256x1xi32>
    %118 = arith.addi %7, %117 : vector<256x1xi32>
    %c16_i32_45 = arith.constant 16 : i32
    %119 = vector.broadcast %c16_i32_45 : i32 to vector<256x1xi32>
    %120 = arith.cmpi slt, %118, %119 : vector<256x1xi32>
    %121 = arith.andi %116, %120 : vector<256x1xi1>
    %c0_i32_46 = arith.constant 0 : i32
    %122 = vector.broadcast %c0_i32_46 : i32 to vector<256x1xi32>
    %123 = arith.addi %3, %122 : vector<256x1xi32>
    %c0_i32_47 = arith.constant 0 : i32
    %124 = vector.broadcast %c0_i32_47 : i32 to vector<256x1xi32>
    %125 = arith.cmpi sge, %123, %124 : vector<256x1xi32>
    %c0_i32_48 = arith.constant 0 : i32
    %126 = vector.broadcast %c0_i32_48 : i32 to vector<256x1xi32>
    %127 = arith.addi %3, %126 : vector<256x1xi32>
    %c16_i32_49 = arith.constant 16 : i32
    %128 = vector.broadcast %c16_i32_49 : i32 to vector<256x1xi32>
    %129 = arith.cmpi slt, %127, %128 : vector<256x1xi32>
    %130 = arith.andi %125, %129 : vector<256x1xi1>
    %c1_i32_50 = arith.constant 1 : i32
    %131 = vector.broadcast %c1_i32_50 : i32 to vector<256x1xi32>
    %132 = arith.addi %7, %131 : vector<256x1xi32>
    %c0_i32_51 = arith.constant 0 : i32
    %133 = vector.broadcast %c0_i32_51 : i32 to vector<256x1xi32>
    %134 = arith.cmpi sge, %132, %133 : vector<256x1xi32>
    %135 = arith.andi %130, %134 : vector<256x1xi1>
    %c1_i32_52 = arith.constant 1 : i32
    %136 = vector.broadcast %c1_i32_52 : i32 to vector<256x1xi32>
    %137 = arith.addi %7, %136 : vector<256x1xi32>
    %c16_i32_53 = arith.constant 16 : i32
    %138 = vector.broadcast %c16_i32_53 : i32 to vector<256x1xi32>
    %139 = arith.cmpi slt, %137, %138 : vector<256x1xi32>
    %140 = arith.andi %135, %139 : vector<256x1xi1>
    %c1_i32_54 = arith.constant 1 : i32
    %141 = vector.broadcast %c1_i32_54 : i32 to vector<256x1xi32>
    %142 = arith.addi %3, %141 : vector<256x1xi32>
    %c0_i32_55 = arith.constant 0 : i32
    %143 = vector.broadcast %c0_i32_55 : i32 to vector<256x1xi32>
    %144 = arith.cmpi sge, %142, %143 : vector<256x1xi32>
    %c1_i32_56 = arith.constant 1 : i32
    %145 = vector.broadcast %c1_i32_56 : i32 to vector<256x1xi32>
    %146 = arith.addi %3, %145 : vector<256x1xi32>
    %c16_i32_57 = arith.constant 16 : i32
    %147 = vector.broadcast %c16_i32_57 : i32 to vector<256x1xi32>
    %148 = arith.cmpi slt, %146, %147 : vector<256x1xi32>
    %149 = arith.andi %144, %148 : vector<256x1xi1>
    %c1_i32_58 = arith.constant 1 : i32
    %150 = vector.broadcast %c1_i32_58 : i32 to vector<256x1xi32>
    %151 = arith.addi %7, %150 : vector<256x1xi32>
    %c0_i32_59 = arith.constant 0 : i32
    %152 = vector.broadcast %c0_i32_59 : i32 to vector<256x1xi32>
    %153 = arith.cmpi sge, %151, %152 : vector<256x1xi32>
    %154 = arith.andi %149, %153 : vector<256x1xi1>
    %c1_i32_60 = arith.constant 1 : i32
    %155 = vector.broadcast %c1_i32_60 : i32 to vector<256x1xi32>
    %156 = arith.addi %7, %155 : vector<256x1xi32>
    %c16_i32_61 = arith.constant 16 : i32
    %157 = vector.broadcast %c16_i32_61 : i32 to vector<256x1xi32>
    %158 = arith.cmpi slt, %156, %157 : vector<256x1xi32>
    %159 = arith.andi %154, %158 : vector<256x1xi1>
    %c17_i32 = arith.constant 17 : i32
    %160 = tpu.dynamic_rotate %0 by %c17_i32 dim 0 : vector<256x128xf32>, i32 -> vector<256x128xf32>
    %cst = arith.constant 0.000000e+00 : f32
    %161 = vector.shape_cast %26 : vector<256x1xi1> to vector<256x1xi1>
    %162 = vector.broadcast %161 : vector<256x1xi1> to vector<256x128xi1>
    %163 = vector.broadcast %cst : f32 to vector<256x128xf32>
    %164 = arith.select %162, %160, %163 : vector<256x128xi1>, vector<256x128xf32>
    %165 = arith.truncf %164 : vector<256x128xf32> to vector<256x128xbf16>
    %c16_i32_62 = arith.constant 16 : i32
    %166 = tpu.dynamic_rotate %0 by %c16_i32_62 dim 0 : vector<256x128xf32>, i32 -> vector<256x128xf32>
    %cst_63 = arith.constant 0.000000e+00 : f32
    %167 = vector.shape_cast %45 : vector<256x1xi1> to vector<256x1xi1>
    %168 = vector.broadcast %167 : vector<256x1xi1> to vector<256x128xi1>
    %169 = vector.broadcast %cst_63 : f32 to vector<256x128xf32>
    %170 = arith.select %168, %166, %169 : vector<256x128xi1>, vector<256x128xf32>
    %171 = arith.truncf %170 : vector<256x128xf32> to vector<256x128xbf16>
    %c15_i32_64 = arith.constant 15 : i32
    %172 = tpu.dynamic_rotate %0 by %c15_i32_64 dim 0 : vector<256x128xf32>, i32 -> vector<256x128xf32>
    %cst_65 = arith.constant 0.000000e+00 : f32
    %173 = vector.shape_cast %64 : vector<256x1xi1> to vector<256x1xi1>
    %174 = vector.broadcast %173 : vector<256x1xi1> to vector<256x128xi1>
    %175 = vector.broadcast %cst_65 : f32 to vector<256x128xf32>
    %176 = arith.select %174, %172, %175 : vector<256x128xi1>, vector<256x128xf32>
    %177 = arith.truncf %176 : vector<256x128xf32> to vector<256x128xbf16>
    %c1_i32_66 = arith.constant 1 : i32
    %178 = tpu.dynamic_rotate %0 by %c1_i32_66 dim 0 : vector<256x128xf32>, i32 -> vector<256x128xf32>
    %cst_67 = arith.constant 0.000000e+00 : f32
    %179 = vector.shape_cast %83 : vector<256x1xi1> to vector<256x1xi1>
    %180 = vector.broadcast %179 : vector<256x1xi1> to vector<256x128xi1>
    %181 = vector.broadcast %cst_67 : f32 to vector<256x128xf32>
    %182 = arith.select %180, %178, %181 : vector<256x128xi1>, vector<256x128xf32>
    %183 = arith.truncf %182 : vector<256x128xf32> to vector<256x128xbf16>
    %184 = arith.truncf %0 : vector<256x128xf32> to vector<256x128xbf16>
    %c255_i32 = arith.constant 255 : i32
    %185 = tpu.dynamic_rotate %0 by %c255_i32 dim 0 : vector<256x128xf32>, i32 -> vector<256x128xf32>
    %cst_68 = arith.constant 0.000000e+00 : f32
    %186 = vector.shape_cast %102 : vector<256x1xi1> to vector<256x1xi1>
    %187 = vector.broadcast %186 : vector<256x1xi1> to vector<256x128xi1>
    %188 = vector.broadcast %cst_68 : f32 to vector<256x128xf32>
    %189 = arith.select %187, %185, %188 : vector<256x128xi1>, vector<256x128xf32>
    %190 = arith.truncf %189 : vector<256x128xf32> to vector<256x128xbf16>
    %c241_i32 = arith.constant 241 : i32
    %191 = tpu.dynamic_rotate %0 by %c241_i32 dim 0 : vector<256x128xf32>, i32 -> vector<256x128xf32>
    %cst_69 = arith.constant 0.000000e+00 : f32
    %192 = vector.shape_cast %121 : vector<256x1xi1> to vector<256x1xi1>
    %193 = vector.broadcast %192 : vector<256x1xi1> to vector<256x128xi1>
    %194 = vector.broadcast %cst_69 : f32 to vector<256x128xf32>
    %195 = arith.select %193, %191, %194 : vector<256x128xi1>, vector<256x128xf32>
    %196 = arith.truncf %195 : vector<256x128xf32> to vector<256x128xbf16>
    %c240_i32 = arith.constant 240 : i32
    %197 = tpu.dynamic_rotate %0 by %c240_i32 dim 0 : vector<256x128xf32>, i32 -> vector<256x128xf32>
    %cst_70 = arith.constant 0.000000e+00 : f32
    %198 = vector.shape_cast %140 : vector<256x1xi1> to vector<256x1xi1>
    %199 = vector.broadcast %198 : vector<256x1xi1> to vector<256x128xi1>
    %200 = vector.broadcast %cst_70 : f32 to vector<256x128xf32>
    %201 = arith.select %199, %197, %200 : vector<256x128xi1>, vector<256x128xf32>
    %202 = arith.truncf %201 : vector<256x128xf32> to vector<256x128xbf16>
    %c239_i32 = arith.constant 239 : i32
    %203 = tpu.dynamic_rotate %0 by %c239_i32 dim 0 : vector<256x128xf32>, i32 -> vector<256x128xf32>
    %cst_71 = arith.constant 0.000000e+00 : f32
    %204 = vector.shape_cast %159 : vector<256x1xi1> to vector<256x1xi1>
    %205 = vector.broadcast %204 : vector<256x1xi1> to vector<256x128xi1>
    %206 = vector.broadcast %cst_71 : f32 to vector<256x128xf32>
    %207 = arith.select %205, %203, %206 : vector<256x128xi1>, vector<256x128xf32>
    %208 = arith.truncf %207 : vector<256x128xf32> to vector<256x128xbf16>
    %209 = tpu.concatenate %165, %171, %177, %183, %184, %190, %196, %202, %208 in 1 : vector<256x128xbf16>, vector<256x128xbf16>, vector<256x128xbf16>, vector<256x128xbf16>, vector<256x128xbf16>, vector<256x128xbf16>, vector<256x128xbf16>, vector<256x128xbf16>, vector<256x128xbf16> -> vector<256x1152xbf16>
    %c0_72 = arith.constant 0 : index
    %c0_73 = arith.constant 0 : index
    %210 = vector.load %arg2[%c0_72, %c0_73] : memref<1152x128xbf16, #tpu.memory_space<vmem>>, vector<1152x128xbf16>
    %cst_74 = arith.constant dense<0.000000e+00> : vector<256x128xf32>
    %211 = tpu.matmul %209, %210, %cst_74 {dimension_numbers = #tpu.dot_dimension_numbers<[1], [0], [0], [1], [0, 0, 1, 1], [], []>} : vector<256x1152xbf16>, vector<1152x128xbf16>, vector<256x128xf32> -> vector<256x128xf32>
    %c0_75 = arith.constant 0 : index
    %c0_76 = arith.constant 0 : index
    %212 = vector.load %arg4[%c0_75, %c0_76] : memref<1x128xf32, #tpu.memory_space<vmem>>, vector<1x128xf32>
    %213 = vector.broadcast %212 : vector<1x128xf32> to vector<256x128xf32>
    %214 = arith.mulf %211, %213 : vector<256x128xf32>
    %c0_77 = arith.constant 0 : index
    %c0_78 = arith.constant 0 : index
    %215 = vector.load %arg5[%c0_77, %c0_78] : memref<1x128xf32, #tpu.memory_space<vmem>>, vector<1x128xf32>
    %216 = vector.broadcast %215 : vector<1x128xf32> to vector<256x128xf32>
    %217 = arith.addf %214, %216 : vector<256x128xf32>
    %cst_79 = arith.constant 0.000000e+00 : f32
    %218 = vector.broadcast %cst_79 : f32 to vector<256x128xf32>
    %219 = arith.maximumf %217, %218 : vector<256x128xf32>
    %c17_i32_80 = arith.constant 17 : i32
    %220 = tpu.dynamic_rotate %219 by %c17_i32_80 dim 0 : vector<256x128xf32>, i32 -> vector<256x128xf32>
    %cst_81 = arith.constant 0.000000e+00 : f32
    %221 = vector.shape_cast %26 : vector<256x1xi1> to vector<256x1xi1>
    %222 = vector.broadcast %221 : vector<256x1xi1> to vector<256x128xi1>
    %223 = vector.broadcast %cst_81 : f32 to vector<256x128xf32>
    %224 = arith.select %222, %220, %223 : vector<256x128xi1>, vector<256x128xf32>
    %225 = arith.truncf %224 : vector<256x128xf32> to vector<256x128xbf16>
    %c16_i32_82 = arith.constant 16 : i32
    %226 = tpu.dynamic_rotate %219 by %c16_i32_82 dim 0 : vector<256x128xf32>, i32 -> vector<256x128xf32>
    %cst_83 = arith.constant 0.000000e+00 : f32
    %227 = vector.shape_cast %45 : vector<256x1xi1> to vector<256x1xi1>
    %228 = vector.broadcast %227 : vector<256x1xi1> to vector<256x128xi1>
    %229 = vector.broadcast %cst_83 : f32 to vector<256x128xf32>
    %230 = arith.select %228, %226, %229 : vector<256x128xi1>, vector<256x128xf32>
    %231 = arith.truncf %230 : vector<256x128xf32> to vector<256x128xbf16>
    %c15_i32_84 = arith.constant 15 : i32
    %232 = tpu.dynamic_rotate %219 by %c15_i32_84 dim 0 : vector<256x128xf32>, i32 -> vector<256x128xf32>
    %cst_85 = arith.constant 0.000000e+00 : f32
    %233 = vector.shape_cast %64 : vector<256x1xi1> to vector<256x1xi1>
    %234 = vector.broadcast %233 : vector<256x1xi1> to vector<256x128xi1>
    %235 = vector.broadcast %cst_85 : f32 to vector<256x128xf32>
    %236 = arith.select %234, %232, %235 : vector<256x128xi1>, vector<256x128xf32>
    %237 = arith.truncf %236 : vector<256x128xf32> to vector<256x128xbf16>
    %c1_i32_86 = arith.constant 1 : i32
    %238 = tpu.dynamic_rotate %219 by %c1_i32_86 dim 0 : vector<256x128xf32>, i32 -> vector<256x128xf32>
    %cst_87 = arith.constant 0.000000e+00 : f32
    %239 = vector.shape_cast %83 : vector<256x1xi1> to vector<256x1xi1>
    %240 = vector.broadcast %239 : vector<256x1xi1> to vector<256x128xi1>
    %241 = vector.broadcast %cst_87 : f32 to vector<256x128xf32>
    %242 = arith.select %240, %238, %241 : vector<256x128xi1>, vector<256x128xf32>
    %243 = arith.truncf %242 : vector<256x128xf32> to vector<256x128xbf16>
    %244 = arith.truncf %219 : vector<256x128xf32> to vector<256x128xbf16>
    %c255_i32_88 = arith.constant 255 : i32
    %245 = tpu.dynamic_rotate %219 by %c255_i32_88 dim 0 : vector<256x128xf32>, i32 -> vector<256x128xf32>
    %cst_89 = arith.constant 0.000000e+00 : f32
    %246 = vector.shape_cast %102 : vector<256x1xi1> to vector<256x1xi1>
    %247 = vector.broadcast %246 : vector<256x1xi1> to vector<256x128xi1>
    %248 = vector.broadcast %cst_89 : f32 to vector<256x128xf32>
    %249 = arith.select %247, %245, %248 : vector<256x128xi1>, vector<256x128xf32>
    %250 = arith.truncf %249 : vector<256x128xf32> to vector<256x128xbf16>
    %c241_i32_90 = arith.constant 241 : i32
    %251 = tpu.dynamic_rotate %219 by %c241_i32_90 dim 0 : vector<256x128xf32>, i32 -> vector<256x128xf32>
    %cst_91 = arith.constant 0.000000e+00 : f32
    %252 = vector.shape_cast %121 : vector<256x1xi1> to vector<256x1xi1>
    %253 = vector.broadcast %252 : vector<256x1xi1> to vector<256x128xi1>
    %254 = vector.broadcast %cst_91 : f32 to vector<256x128xf32>
    %255 = arith.select %253, %251, %254 : vector<256x128xi1>, vector<256x128xf32>
    %256 = arith.truncf %255 : vector<256x128xf32> to vector<256x128xbf16>
    %c240_i32_92 = arith.constant 240 : i32
    %257 = tpu.dynamic_rotate %219 by %c240_i32_92 dim 0 : vector<256x128xf32>, i32 -> vector<256x128xf32>
    %cst_93 = arith.constant 0.000000e+00 : f32
    %258 = vector.shape_cast %140 : vector<256x1xi1> to vector<256x1xi1>
    %259 = vector.broadcast %258 : vector<256x1xi1> to vector<256x128xi1>
    %260 = vector.broadcast %cst_93 : f32 to vector<256x128xf32>
    %261 = arith.select %259, %257, %260 : vector<256x128xi1>, vector<256x128xf32>
    %262 = arith.truncf %261 : vector<256x128xf32> to vector<256x128xbf16>
    %c239_i32_94 = arith.constant 239 : i32
    %263 = tpu.dynamic_rotate %219 by %c239_i32_94 dim 0 : vector<256x128xf32>, i32 -> vector<256x128xf32>
    %cst_95 = arith.constant 0.000000e+00 : f32
    %264 = vector.shape_cast %159 : vector<256x1xi1> to vector<256x1xi1>
    %265 = vector.broadcast %264 : vector<256x1xi1> to vector<256x128xi1>
    %266 = vector.broadcast %cst_95 : f32 to vector<256x128xf32>
    %267 = arith.select %265, %263, %266 : vector<256x128xi1>, vector<256x128xf32>
    %268 = arith.truncf %267 : vector<256x128xf32> to vector<256x128xbf16>
    %269 = tpu.concatenate %225, %231, %237, %243, %244, %250, %256, %262, %268 in 1 : vector<256x128xbf16>, vector<256x128xbf16>, vector<256x128xbf16>, vector<256x128xbf16>, vector<256x128xbf16>, vector<256x128xbf16>, vector<256x128xbf16>, vector<256x128xbf16>, vector<256x128xbf16> -> vector<256x1152xbf16>
    %c0_96 = arith.constant 0 : index
    %c0_97 = arith.constant 0 : index
    %270 = vector.load %arg3[%c0_96, %c0_97] : memref<1152x128xbf16, #tpu.memory_space<vmem>>, vector<1152x128xbf16>
    %cst_98 = arith.constant dense<0.000000e+00> : vector<256x128xf32>
    %271 = tpu.matmul %269, %270, %cst_98 {dimension_numbers = #tpu.dot_dimension_numbers<[1], [0], [0], [1], [0, 0, 1, 1], [], []>} : vector<256x1152xbf16>, vector<1152x128xbf16>, vector<256x128xf32> -> vector<256x128xf32>
    %c0_99 = arith.constant 0 : index
    %c0_100 = arith.constant 0 : index
    %272 = vector.load %arg6[%c0_99, %c0_100] : memref<1x128xf32, #tpu.memory_space<vmem>>, vector<1x128xf32>
    %273 = vector.broadcast %272 : vector<1x128xf32> to vector<256x128xf32>
    %274 = arith.mulf %271, %273 : vector<256x128xf32>
    %c0_101 = arith.constant 0 : index
    %c0_102 = arith.constant 0 : index
    %275 = vector.load %arg7[%c0_101, %c0_102] : memref<1x128xf32, #tpu.memory_space<vmem>>, vector<1x128xf32>
    %276 = vector.broadcast %275 : vector<1x128xf32> to vector<256x128xf32>
    %277 = arith.addf %274, %276 : vector<256x128xf32>
    %278 = arith.addf %277, %0 : vector<256x128xf32>
    %cst_103 = arith.constant 0.000000e+00 : f32
    %279 = vector.broadcast %cst_103 : f32 to vector<256x128xf32>
    %280 = arith.maximumf %278, %279 : vector<256x128xf32>
    %c0_104 = arith.constant 0 : index
    %c0_105 = arith.constant 0 : index
    %281 = vector.load %arg8[%c0_104, %c0_105] : memref<256x128xf32, #tpu.memory_space<vmem>>, vector<256x128xf32>
    tpu.vector_store %arg8[%c0_104, %c0_105], %280 {strides = array<i32>} : memref<256x128xf32, #tpu.memory_space<vmem>>, vector<256x128xf32>,
    return
  }
  func.func @transform_0(%arg0: i32) -> (i32, i32) {
    %c0_i32 = arith.constant 0 : i32
    %c0_i32_0 = arith.constant 0 : i32
    return %arg0, %c0_i32 : i32, i32
  }
  func.func @transform_1(%arg0: i32) -> (i32, i32) {
    %c0_i32 = arith.constant 0 : i32
    %c0_i32_0 = arith.constant 0 : i32
    %c0_i32_1 = arith.constant 0 : i32
    return %c0_i32, %c0_i32_0 : i32, i32
  }
  func.func @transform_2(%arg0: i32) -> (i32, i32) {
    %c0_i32 = arith.constant 0 : i32
    %c0_i32_0 = arith.constant 0 : i32
    %c0_i32_1 = arith.constant 0 : i32
    return %c0_i32, %c0_i32_0 : i32, i32
  }
  func.func @transform_3(%arg0: i32) -> (i32, i32) {
    %c0_i32 = arith.constant 0 : i32
    %c0_i32_0 = arith.constant 0 : i32
    %c0_i32_1 = arith.constant 0 : i32
    return %c0_i32, %c0_i32_0 : i32, i32
  }
  func.func @transform_4(%arg0: i32) -> (i32, i32) {
    %c0_i32 = arith.constant 0 : i32
    %c0_i32_0 = arith.constant 0 : i32
    %c0_i32_1 = arith.constant 0 : i32
    return %c0_i32, %c0_i32_0 : i32, i32
  }
  func.func @transform_5(%arg0: i32) -> (i32, i32) {
    %c0_i32 = arith.constant 0 : i32
    %c0_i32_0 = arith.constant 0 : i32
    %c0_i32_1 = arith.constant 0 : i32
    return %c0_i32, %c0_i32_0 : i32, i32
  }
  func.func @transform_6(%arg0: i32) -> (i32, i32) {
    %c0_i32 = arith.constant 0 : i32
    %c0_i32_0 = arith.constant 0 : i32
    %c0_i32_1 = arith.constant 0 : i32
    return %c0_i32, %c0_i32_0 : i32, i32
  }
  func.func @transform_7(%arg0: i32) -> (i32, i32) {
    %c0_i32 = arith.constant 0 : i32
    %c0_i32_0 = arith.constant 0 : i32
    return %arg0, %c0_i32 : i32, i32
  }
}

</mosaic_0001>

<llo_original>
// kernel: tpu_custom_call.1
$region0: #{tpu_custom_call.1}
  #allocation0 [shape = 'u32[]', space=smem, size = 0x4, offset = 0x4, fixed_abs, tag = 'smem constant byte address 0x4 - core index']
  #allocation1 [shape = 'u32[144,128]{1,0:T(1,128)}', space=vmem, size = 0x12000, scoped, tag = 'internal scratch']
  %s0 = inlined_call_operand.hbm [shape: f32[512,128], index: 0, kind: input, shape index: {}]
  %s1 = inlined_call_operand.hbm [shape: bf16[1152,128], index: 1, kind: input, shape index: {}]
  %s2 = inlined_call_operand.hbm [shape: bf16[1152,128], index: 2, kind: input, shape index: {}]
  %s3 = inlined_call_operand.vmem [shape: f32[1,128], index: 3, kind: input, shape index: {}]
  %s4 = inlined_call_operand.vmem [shape: f32[1,128], index: 4, kind: input, shape index: {}]
  %s5 = inlined_call_operand.vmem [shape: f32[1,128], index: 5, kind: input, shape index: {}]
  %s6 = inlined_call_operand.vmem [shape: f32[1,128], index: 6, kind: input, shape index: {}]
  %s7 = inlined_call_operand.hbm [shape: f32[512,128], index: 7, kind: output, shape index: {}]
  %s8 = sld [smem:[#allocation0]]
  $region73: #{tpu_custom_call.1} parent=0
    _
  %s10 = ssub.s32 1, %s8
  %s11 = scalar_select 0, %s10, %s8
  $region1: #{tpu_custom_call.1} parent=0
    #allocation2 [shape = 'u8[262144]{0}', space=vmem, size = 0x40000, scoped, tag = 'input window, operand 0']
    #allocation3 [shape = 's32[2]{0}', space=sflag, size = 0x8, scoped, tag = 'scoped memory for tpu_custom_call.1']
    #allocation4 [shape = 's32[2]{0}', space=sflag, size = 0x8, scoped, tag = 'scoped memory for tpu_custom_call.1']
    #allocation5 [shape = 'u8[294912]{0}', space=vmem, size = 0x48000, scoped, tag = 'input window, operand 1, single buffered']
    #allocation6 [shape = 's32[1]{0}', space=sflag, size = 0x4, scoped, tag = 'scoped memory for tpu_custom_call.1']
    #allocation7 [shape = 'u8[294912]{0}', space=vmem, size = 0x48000, scoped, tag = 'input window, operand 2, single buffered']
    #allocation8 [shape = 'u8[262144]{0}', space=vmem, size = 0x40000, scoped, tag = 'output window, operand 0']
    %12 = vsyncpa [#allocation3], 0
    %s13 = scalar_lea.sflag [#allocation3], 1
    %14 = vsyncpa %s13, 0
    %15 = vsyncpa [#allocation6], 0
    %16 = vsyncpa [#allocation4], 0
    %s17 = scalar_lea.sflag [#allocation4], 1
    %18 = vsyncpa %s17, 0
    loop: start=0, step=1, limit=4
    $region2: #{tpu_custom_call.1} parent=1 // loop_pre_header
      _
    $region3: #{tpu_custom_call.1} parent=1 // loop_header
      %s20 = sphi 0, %s24
      %p21 = scmp.ge.s32.totalorder %s20, 4
      %s30 = sphi 0, %s32
      %s33 = sphi 0, %s30
      %s34 = sphi 0, %s33
      %s50 = sphi 0, %s34
      %s54 = sphi 0, %s54
      %s56 = sphi 0, %s54
      %s57 = sphi 0, %s56
      %s71 = sphi 0, %s57
      %s75 = sphi 0, %s75
      %s77 = sphi 0, %s75
      %s78 = sphi 0, %s77
      %s92 = sphi 0, %s78
      %s96 = sphi 0, %s96
      %s98 = sphi 0, %s96
      %s99 = sphi 0, %s98
      %s113 = sphi 0, %s99
      %s117 = sphi 0, %s117
      %s119 = sphi 0, %s117
      %s120 = sphi 0, %s119
      %s134 = sphi 0, %s120
      %s138 = sphi 0, %s138
      %s140 = sphi 0, %s138
      %s141 = sphi 0, %s140
      %s155 = sphi 0, %s141
      %s159 = sphi 0, %s159
      %s161 = sphi 0, %s159
      %s162 = sphi 0, %s161
      %s176 = sphi 0, %s162
      %s182 = sphi 0, %s184
      %s185 = sphi 0, %s182
      %s186 = sphi 0, %s185
      %s202 = sphi 0, %s186
    $region4: #{tpu_custom_call.1} parent=1 // loop_header_branch
      %23 = sbr.rel (%p21) target = $region8
    $region5: #{tpu_custom_call.1} parent=1 // loop_body
      %s25 = ssub.s32 %s20, 1
      %s26 = ssub.s32 %s20, 2
      %s27 = sadd.s32 %s20, 1
      %s28 = ssub.s32 %s20, %s27
      %p29 = scmp.eq.s32.totalorder %s28, 0
      %s31 = sadd.s32 %s30, 1
      %s32 = scalar_select %p29, %s30, %s31
      %p35 = pneg %p29
      %p36 = scmp.eq.s32.totalorder %s20, 1
      %p37 = por %p35, %p36
      %p38 = scmp.ne.s32.totalorder %s30, %s33
      %p39 = scmp.eq.s32.totalorder %s20, 0
      %p40 = por %p38, %p39
      %p41 = scmp.ne.s32.totalorder %s30, %s33
      %p42 = scmp.eq.s32.totalorder %s25, 1
      %p43 = por %p41, %p42
      %p44 = scmp.ne.s32.totalorder %s33, %s34
      %p45 = scmp.eq.s32.totalorder %s25, 0
      %p46 = por %p44, %p45
      %p47 = scmp.ne.s32.totalorder %s33, %s34
      %p48 = scmp.eq.s32.totalorder %s26, 1
      %p49 = por %p47, %p48
      %p51 = scmp.ne.s32.totalorder %s34, %s50
      %p52 = scmp.eq.s32.totalorder %s26, 0
      %p53 = por %p51, %p52
      %s55 = sadd.s32 %s54, 1
      %p58 = scmp.eq.s32.totalorder %s20, 1
      %p59 = scmp.ne.s32.totalorder %s54, %s56
      %p60 = scmp.eq.s32.totalorder %s20, 0
      %p61 = por %p59, %p60
      %p62 = scmp.ne.s32.totalorder %s54, %s56
      %p63 = scmp.eq.s32.totalorder %s25, 1
      %p64 = por %p62, %p63
      %p65 = scmp.ne.s32.totalorder %s56, %s57
      %p66 = scmp.eq.s32.totalorder %s25, 0
      %p67 = por %p65, %p66
      %p68 = scmp.ne.s32.totalorder %s56, %s57
      %p69 = scmp.eq.s32.totalorder %s26, 1
      %p70 = por %p68, %p69
      %p72 = scmp.ne.s32.totalorder %s57, %s71
      %p73 = scmp.eq.s32.totalorder %s26, 0
      %p74 = por %p72, %p73
      %s76 = sadd.s32 %s75, 1
      %p79 = scmp.eq.s32.totalorder %s20, 1
      %p80 = scmp.ne.s32.totalorder %s75, %s77
      %p81 = scmp.eq.s32.totalorder %s20, 0
      %p82 = por %p80, %p81
      %p83 = scmp.ne.s32.totalorder %s75, %s77
      %p84 = scmp.eq.s32.totalorder %s25, 1
      %p85 = por %p83, %p84
      %p86 = scmp.ne.s32.totalorder %s77, %s78
      %p87 = scmp.eq.s32.totalorder %s25, 0
      %p88 = por %p86, %p87
      %p89 = scmp.ne.s32.totalorder %s77, %s78
      %p90 = scmp.eq.s32.totalorder %s26, 1
      %p91 = por %p89, %p90
      %p93 = scmp.ne.s32.totalorder %s78, %s92
      %p94 = scmp.eq.s32.totalorder %s26, 0
      %p95 = por %p93, %p94
      %s97 = sadd.s32 %s96, 1
      %p100 = scmp.eq.s32.totalorder %s20, 1
      %p101 = scmp.ne.s32.totalorder %s96, %s98
      %p102 = scmp.eq.s32.totalorder %s20, 0
      %p103 = por %p101, %p102
      %p104 = scmp.ne.s32.totalorder %s96, %s98
      %p105 = scmp.eq.s32.totalorder %s25, 1
      %p106 = por %p104, %p105
      %p107 = scmp.ne.s32.totalorder %s98, %s99
      %p108 = scmp.eq.s32.totalorder %s25, 0
      %p109 = por %p107, %p108
      %p110 = scmp.ne.s32.totalorder %s98, %s99
      %p111 = scmp.eq.s32.totalorder %s26, 1
      %p112 = por %p110, %p111
      %p114 = scmp.ne.s32.totalorder %s99, %s113
      %p115 = scmp.eq.s32.totalorder %s26, 0
      %p116 = por %p114, %p115
      %s118 = sadd.s32 %s117, 1
      %p121 = scmp.eq.s32.totalorder %s20, 1
      %p122 = scmp.ne.s32.totalorder %s117, %s119
      %p123 = scmp.eq.s32.totalorder %s20, 0
      %p124 = por %p122, %p123
      %p125 = scmp.ne.s32.totalorder %s117, %s119
      %p126 = scmp.eq.s32.totalorder %s25, 1
      %p127 = por %p125, %p126
      %p128 = scmp.ne.s32.totalorder %s119, %s120
      %p129 = scmp.eq.s32.totalorder %s25, 0
      %p130 = por %p128, %p129
      %p131 = scmp.ne.s32.totalorder %s119, %s120
      %p132 = scmp.eq.s32.totalorder %s26, 1
      %p133 = por %p131, %p132
      %p135 = scmp.ne.s32.totalorder %s120, %s134
      %p136 = scmp.eq.s32.totalorder %s26, 0
      %p137 = por %p135, %p136
      %s139 = sadd.s32 %s138, 1
      %p142 = scmp.eq.s32.totalorder %s20, 1
      %p143 = scmp.ne.s32.totalorder %s138, %s140
      %p144 = scmp.eq.s32.totalorder %s20, 0
      %p145 = por %p143, %p144
      %p146 = scmp.ne.s32.totalorder %s138, %s140
      %p147 = scmp.eq.s32.totalorder %s25, 1
      %p148 = por %p146, %p147
      %p149 = scmp.ne.s32.totalorder %s140, %s141
      %p150 = scmp.eq.s32.totalorder %s25, 0
      %p151 = por %p149, %p150
      %p152 = scmp.ne.s32.totalorder %s140, %s141
      %p153 = scmp.eq.s32.totalorder %s26, 1
      %p154 = por %p152, %p153
      %p156 = scmp.ne.s32.totalorder %s141, %s155
      %p157 = scmp.eq.s32.totalorder %s26, 0
      %p158 = por %p156, %p157
      %s160 = sadd.s32 %s159, 1
      %p163 = scmp.eq.s32.totalorder %s20, 1
      %p164 = scmp.ne.s32.totalorder %s159, %s161
      %p165 = scmp.eq.s32.totalorder %s20, 0
      %p166 = por %p164, %p165
      %p167 = scmp.ne.s32.totalorder %s159, %s161
      %p168 = scmp.eq.s32.totalorder %s25, 1
      %p169 = por %p167, %p168
      %p170 = scmp.ne.s32.totalorder %s161, %s162
      %p171 = scmp.eq.s32.totalorder %s25, 0
      %p172 = por %p170, %p171
      %p173 = scmp.ne.s32.totalorder %s161, %s162
      %p174 = scmp.eq.s32.totalorder %s26, 1
      %p175 = por %p173, %p174
      %p177 = scmp.ne.s32.totalorder %s162, %s176
      %p178 = scmp.eq.s32.totalorder %s26, 0
      %p179 = por %p177, %p178
      %s180 = ssub.s32 %s20, %s27
      %p181 = scmp.eq.s32.totalorder %s180, 0
      %s183 = sadd.s32 %s182, 1
      %s184 = scalar_select %p181, %s182, %s183
      %p187 = pneg %p181
      %p188 = scmp.eq.s32.totalorder %s20, 1
      %p189 = por %p187, %p188
      %p190 = scmp.ne.s32.totalorder %s182, %s185
      %p191 = scmp.eq.s32.totalorder %s20, 0
      %p192 = por %p190, %p191
      %p193 = scmp.ne.s32.totalorder %s182, %s185
      %p194 = scmp.eq.s32.totalorder %s25, 1
      %p195 = por %p193, %p194
      %p196 = scmp.ne.s32.totalorder %s185, %s186
      %p197 = scmp.eq.s32.totalorder %s25, 0
      %p198 = por %p196, %p197
      %p199 = scmp.ne.s32.totalorder %s185, %s186
      %p200 = scmp.eq.s32.totalorder %s26, 1
      %p201 = por %p199, %p200
      %p203 = scmp.ne.s32.totalorder %s186, %s202
      %p204 = scmp.eq.s32.totalorder %s26, 0
      %p205 = por %p203, %p204
      %p206 = scmp.le.s32.totalorder 1, %s20
      %p207 = scmp.lt.s32.totalorder %s20, 3
      %p208 = pnand %p206, %p207
      %p209 = pneg %p208
      // Predicated region
      $region9: #{tpu_custom_call.1} parent=5 // pred_check
        _
      $region10: #{tpu_custom_call.1} parent=5 // pred_check_branch
        %211 = sbr.rel (%p208) target = $region12
      $region11: #{tpu_custom_call.1} parent=5 // pred_region
        %s212 = ssub.s32 %s20, 1
        // Predicated region
        $region13: #{tpu_custom_call.1} parent=11 // pred_check
          %p213 = pneg %p67
        $region14: #{tpu_custom_call.1} parent=11 // pred_check_branch
          %215 = sbr.rel (%p213) target = $region16
        $region15: #{tpu_custom_call.1} parent=11 // pred_region
          %s217 = ssub.s32 9216, 9216
          %218 = vsyncadd [#allocation6], %s217
          %s219 = sshll.u32 [#allocation5], 4
          %s220 = int_to_ptr.vmem [resolvable:$true] %s219
          %225 = dma.hbm_to_vmem [thread:$0]  %s1, 9216, %s220, [#allocation6], 64, 64, 4
        $region16: #{tpu_custom_call.1} parent=11 // pred_fallthru
          _
        // Predicated region
        $region17: #{tpu_custom_call.1} parent=11 // pred_check
          %p226 = pneg %p88
        $region18: #{tpu_custom_call.1} parent=11 // pred_check_branch
          %228 = sbr.rel (%p226) target = $region20
        $region19: #{tpu_custom_call.1} parent=11 // pred_region
          %s230 = ssub.s32 9216, 9216
          %231 = vsyncadd [#allocation6], %s230
          %s232 = sshll.u32 [#allocation7], 4
          %s233 = int_to_ptr.vmem [resolvable:$true] %s232
          %238 = dma.hbm_to_vmem [thread:$0]  %s2, 9216, %s233, [#allocation6], 64, 64, 4
        $region20: #{tpu_custom_call.1} parent=11 // pred_fallthru
          _
        // Predicated region
        $region21: #{tpu_custom_call.1} parent=11 // pred_check
          %p239 = pneg %p109
        $region22: #{tpu_custom_call.1} parent=11 // pred_check_branch
          %241 = sbr.rel (%p239) target = $region24
        $region23: #{tpu_custom_call.1} parent=11 // pred_region
          _
        $region24: #{tpu_custom_call.1} parent=11 // pred_fallthru
          _
        // Predicated region
        $region25: #{tpu_custom_call.1} parent=11 // pred_check
          %p242 = pneg %p130
        $region26: #{tpu_custom_call.1} parent=11 // pred_check_branch
          %244 = sbr.rel (%p242) target = $region28
        $region27: #{tpu_custom_call.1} parent=11 // pred_region
          _
        $region28: #{tpu_custom_call.1} parent=11 // pred_fallthru
          _
        // Predicated region
        $region29: #{tpu_custom_call.1} parent=11 // pred_check
          %p245 = pneg %p151
        $region30: #{tpu_custom_call.1} parent=11 // pred_check_branch
          %247 = sbr.rel (%p245) target = $region32
        $region31: #{tpu_custom_call.1} parent=11 // pred_region
          _
        $region32: #{tpu_custom_call.1} parent=11 // pred_fallthru
          _
        // Predicated region
        $region33: #{tpu_custom_call.1} parent=11 // pred_check
          %p248 = pneg %p172
        $region34: #{tpu_custom_call.1} parent=11 // pred_check_branch
          %250 = sbr.rel (%p248) target = $region36
        $region35: #{tpu_custom_call.1} parent=11 // pred_region
          _
        $region36: #{tpu_custom_call.1} parent=11 // pred_fallthru
          _
      $region12: #{tpu_custom_call.1} parent=5 // pred_fallthru
        _
      %p251 = scmp.lt.s32.totalorder %s20, 2
      // Predicated region
      $region37: #{tpu_custom_call.1} parent=5 // pred_check
        %p252 = pneg %p251
      $region38: #{tpu_custom_call.1} parent=5 // pred_check_branch
        %254 = sbr.rel (%p252) target = $region40
      $region39: #{tpu_custom_call.1} parent=5 // pred_region
        // Predicated region
        $region41: #{tpu_custom_call.1} parent=39 // pred_check
          %p255 = pneg %p40
        $region42: #{tpu_custom_call.1} parent=39 // pred_check_branch
          %257 = sbr.rel (%p255) target = $region44
        $region43: #{tpu_custom_call.1} parent=39 // pred_region
          %s258 = sand.u32 %s30, 1
          %s259 = scalar_lea.sflag [#allocation3], %s258
          %s260 = sand.u32 %s30, 1
          %s261 = smul.addr %s260, 256
          %s262 = scalar_lea.vmem [#allocation2], %s261
          %s263 = smul.u32 32, %s20
          %s265 = ssub.s32 4096, 4096
          %266 = vsyncadd %s259, %s265
          %s267 = smul.addr %s263, 128
          %s268 = scalar_lea.hbm %s0, %s267
          %s269 = sshll.u32 %s262, 4
          %s270 = int_to_ptr.vmem [resolvable:$true] %s269
          %275 = dma.hbm_to_vmem [thread:$0]  %s268, 4096, %s270, %s259, 128, 128, 8
        $region44: #{tpu_custom_call.1} parent=39 // pred_fallthru
          _
      $region40: #{tpu_custom_call.1} parent=5 // pred_fallthru
        _
      %p276 = scmp.le.s32.totalorder 1, %s20
      %p277 = scmp.lt.s32.totalorder %s20, 3
      %p278 = pnand %p276, %p277
      %p279 = pneg %p278
      // Predicated region
      $region45: #{tpu_custom_call.1} parent=5 // pred_check
        _
      $region46: #{tpu_custom_call.1} parent=5 // pred_check_branch
        %281 = sbr.rel (%p278) target = $region48
      $region47: #{tpu_custom_call.1} parent=5 // pred_region
        %s282 = ssub.s32 %s20, 1
        %s283 = sand.u32 %s33, 1
        %s284 = scalar_lea.sflag [#allocation3], %s283
        %s285 = sand.u32 %s33, 1
        %s286 = smul.addr %s285, 256
        %s287 = scalar_lea.vmem [#allocation2], %s286
        // Predicated region
        $region49: #{tpu_custom_call.1} parent=47 // pred_check
          %p288 = pneg %p46
        $region50: #{tpu_custom_call.1} parent=47 // pred_check_branch
          %290 = sbr.rel (%p288) target = $region52
        $region51: #{tpu_custom_call.1} parent=47 // pred_region
          %291 = dma.done %s284, 4096
        $region52: #{tpu_custom_call.1} parent=47 // pred_fallthru
          _
        // Predicated region
        $region53: #{tpu_custom_call.1} parent=47 // pred_check
          %p292 = pneg %p67
        $region54: #{tpu_custom_call.1} parent=47 // pred_check_branch
          %294 = sbr.rel (%p292) target = $region56
        $region55: #{tpu_custom_call.1} parent=47 // pred_region
          %295 = dma.done [#allocation6], 9216
        $region56: #{tpu_custom_call.1} parent=47 // pred_fallthru
          _
        // Predicated region
        $region57: #{tpu_custom_call.1} parent=47 // pred_check
          %p296 = pneg %p88
        $region58: #{tpu_custom_call.1} parent=47 // pred_check_branch
          %298 = sbr.rel (%p296) target = $region60
        $region59: #{tpu_custom_call.1} parent=47 // pred_region
          %299 = dma.done [#allocation6], 9216
        $region60: #{tpu_custom_call.1} parent=47 // pred_fallthru
          _
        %s300 = sand.u32 %s33, 1
        %s301 = scalar_lea.sflag [#allocation3], %s300
        %s302 = sand.u32 %s33, 1
        %s303 = smul.addr %s302, 256
        %s304 = scalar_lea.vmem [#allocation2], %s303
        %p305 = pneg %p46
        %p306 = pneg %p43
        %p307 = pneg %p67
        %p308 = pneg %p64
        %p309 = pneg %p88
        %p310 = pneg %p85
        %p311 = pneg %p109
        %p312 = pneg %p106
        %p313 = pneg %p130
        %p314 = pneg %p127
        %p315 = pneg %p151
        %p316 = pneg %p148
        %p317 = pneg %p172
        %p318 = pneg %p169
        %p319 = pneg %p198
        %p320 = pneg %p195
        %s321 = sand.u32 %s185, 1
        %s322 = scalar_lea.sflag [#allocation4], %s321
        %s323 = sand.u32 %s185, 1
        %s324 = smul.addr %s323, 256
        %s325 = scalar_lea.vmem [#allocation8], %s324
        %s326 = smul.u32 32, %s25
        %s327 = smul.u32 32, %s25
        %v329 = vld [vmem:[%s287] sm:$0xff]
        %v330 = vld [vmem:[%s287 + $0x8] sm:$0xff]
        %v331 = vld [vmem:[%s287 + $0x10] sm:$0xff]
        %v332 = vld [vmem:[%s287 + $0x18] sm:$0xff]
        %v333 = vld [vmem:[%s287 + $0x20] sm:$0xff]
        %v334 = vld [vmem:[%s287 + $0x28] sm:$0xff]
        %v335 = vld [vmem:[%s287 + $0x30] sm:$0xff]
        %v336 = vld [vmem:[%s287 + $0x38] sm:$0xff]
        %v337 = vld [vmem:[%s287 + $0x40] sm:$0xff]
        %v338 = vld [vmem:[%s287 + $0x48] sm:$0xff]
        %v339 = vld [vmem:[%s287 + $0x50] sm:$0xff]
        %v340 = vld [vmem:[%s287 + $0x58] sm:$0xff]
        %v341 = vld [vmem:[%s287 + $0x60] sm:$0xff]
        %v342 = vld [vmem:[%s287 + $0x68] sm:$0xff]
        %v343 = vld [vmem:[%s287 + $0x70] sm:$0xff]
        %v344 = vld [vmem:[%s287 + $0x78] sm:$0xff]
        %v345 = vld [vmem:[%s287 + $0x80] sm:$0xff]
        %v346 = vld [vmem:[%s287 + $0x88] sm:$0xff]
        %v347 = vld [vmem:[%s287 + $0x90] sm:$0xff]
        %v348 = vld [vmem:[%s287 + $0x98] sm:$0xff]
        %v349 = vld [vmem:[%s287 + $0xa0] sm:$0xff]
        %v350 = vld [vmem:[%s287 + $0xa8] sm:$0xff]
        %v351 = vld [vmem:[%s287 + $0xb0] sm:$0xff]
        %v352 = vld [vmem:[%s287 + $0xb8] sm:$0xff]
        %v353 = vld [vmem:[%s287 + $0xc0] sm:$0xff]
        %v354 = vld [vmem:[%s287 + $0xc8] sm:$0xff]
        %v355 = vld [vmem:[%s287 + $0xd0] sm:$0xff]
        %v356 = vld [vmem:[%s287 + $0xd8] sm:$0xff]
        %v357 = vld [vmem:[%s287 + $0xe0] sm:$0xff]
        %v358 = vld [vmem:[%s287 + $0xe8] sm:$0xff]
        %v359 = vld [vmem:[%s287 + $0xf0] sm:$0xff]
        %v360 = vld [vmem:[%s287 + $0xf8] sm:$0xff]
        %v361 = vlaneseq
        %v362 = vshrl.u32 %v361, 7
        %v363 = vadd.s32 %v362, 8
        %v364 = vadd.s32 %v362, 16
        %v365 = vadd.s32 %v362, 24
        %v366 = vadd.s32 %v362, 32
        %v367 = vadd.s32 %v362, 40
        %v368 = vadd.s32 %v362, 48
        %v369 = vadd.s32 %v362, 56
        %v370 = vadd.s32 %v362, 64
        %v371 = vadd.s32 %v362, 72
        %v372 = vadd.s32 %v362, 80
        %v373 = vadd.s32 %v362, 88
        %v374 = vadd.s32 %v362, 96
        %v375 = vadd.s32 %v362, 104
        %v376 = vadd.s32 %v362, 112
        %v377 = vadd.s32 %v362, 120
        %v378 = vadd.s32 %v362, 128
        %v379 = vadd.s32 %v362, 136
        %v380 = vadd.s32 %v362, 144
        %v381 = vadd.s32 %v362, 152
        %v382 = vadd.s32 %v362, 160
        %v383 = vadd.s32 %v362, 168
        %v384 = vadd.s32 %v362, 176
        %v385 = vadd.s32 %v362, 184
        %v386 = vadd.s32 %v362, 192
        %v387 = vadd.s32 %v362, 200
        %v388 = vadd.s32 %v362, 208
        %v389 = vadd.s32 %v362, 216
        %v390 = vadd.s32 %v362, 224
        %v391 = vadd.s32 %v362, 232
        %v392 = vadd.s32 %v362, 240
        %v393 = vadd.s32 %v362, 248
        %v394 = vand.u32 %v362, 15
        %v395 = vand.u32 %v363, 15
        %v396 = vand.u32 %v364, 15
        %v397 = vand.u32 %v365, 15
        %v398 = vand.u32 %v366, 15
        %v399 = vand.u32 %v367, 15
        %v400 = vand.u32 %v368, 15
        %v401 = vand.u32 %v369, 15
        %v402 = vand.u32 %v370, 15
        %v403 = vand.u32 %v371, 15
        %v404 = vand.u32 %v372, 15
        %v405 = vand.u32 %v373, 15
        %v406 = vand.u32 %v374, 15
        %v407 = vand.u32 %v375, 15
        %v408 = vand.u32 %v376, 15
        %v409 = vand.u32 %v377, 15
        %v410 = vand.u32 %v378, 15
        %v411 = vand.u32 %v379, 15
        %v412 = vand.u32 %v380, 15
        %v413 = vand.u32 %v381, 15
        %v414 = vand.u32 %v382, 15
        %v415 = vand.u32 %v383, 15
        %v416 = vand.u32 %v384, 15
        %v417 = vand.u32 %v385, 15
        %v418 = vand.u32 %v386, 15
        %v419 = vand.u32 %v387, 15
        %v420 = vand.u32 %v388, 15
        %v421 = vand.u32 %v389, 15
        %v422 = vand.u32 %v390, 15
        %v423 = vand.u32 %v391, 15
        %v424 = vand.u32 %v392, 15
        %v425 = vand.u32 %v393, 15
        %v426 = vshra.s32 %v362, 4
        %v427 = vshra.s32 %v363, 4
        %v428 = vshra.s32 %v364, 4
        %v429 = vshra.s32 %v365, 4
        %v430 = vshra.s32 %v366, 4
        %v431 = vshra.s32 %v367, 4
        %v432 = vshra.s32 %v368, 4
        %v433 = vshra.s32 %v369, 4
        %v434 = vshra.s32 %v370, 4
        %v435 = vshra.s32 %v371, 4
        %v436 = vshra.s32 %v372, 4
        %v437 = vshra.s32 %v373, 4
        %v438 = vshra.s32 %v374, 4
        %v439 = vshra.s32 %v375, 4
        %v440 = vshra.s32 %v376, 4
        %v441 = vshra.s32 %v377, 4
        %v442 = vshra.s32 %v378, 4
        %v443 = vshra.s32 %v379, 4
        %v444 = vshra.s32 %v380, 4
        %v445 = vshra.s32 %v381, 4
        %v446 = vshra.s32 %v382, 4
        %v447 = vshra.s32 %v383, 4
        %v448 = vshra.s32 %v384, 4
        %v449 = vshra.s32 %v385, 4
        %v450 = vshra.s32 %v386, 4
        %v451 = vshra.s32 %v387, 4
        %v452 = vshra.s32 %v388, 4
        %v453 = vshra.s32 %v389, 4
        %v454 = vshra.s32 %v390, 4
        %v455 = vshra.s32 %v391, 4
        %v456 = vshra.s32 %v392, 4
        %v457 = vshra.s32 %v393, 4
        %v458 = vand.u32 %v426, 15
        %v459 = vand.u32 %v427, 15
        %v460 = vand.u32 %v428, 15
        %v461 = vand.u32 %v429, 15
        %v462 = vand.u32 %v430, 15
        %v463 = vand.u32 %v431, 15
        %v464 = vand.u32 %v432, 15
        %v465 = vand.u32 %v433, 15
        %v466 = vand.u32 %v434, 15
        %v467 = vand.u32 %v435, 15
        %v468 = vand.u32 %v436, 15
        %v469 = vand.u32 %v437, 15
        %v470 = vand.u32 %v438, 15
        %v471 = vand.u32 %v439, 15
        %v472 = vand.u32 %v440, 15
        %v473 = vand.u32 %v441, 15
        %v474 = vand.u32 %v442, 15
        %v475 = vand.u32 %v443, 15
        %v476 = vand.u32 %v444, 15
        %v477 = vand.u32 %v445, 15
        %v478 = vand.u32 %v446, 15
        %v479 = vand.u32 %v447, 15
        %v480 = vand.u32 %v448, 15
        %v481 = vand.u32 %v449, 15
        %v482 = vand.u32 %v450, 15
        %v483 = vand.u32 %v451, 15
        %v484 = vand.u32 %v452, 15
        %v485 = vand.u32 %v453, 15
        %v486 = vand.u32 %v454, 15
        %v487 = vand.u32 %v455, 15
        %v488 = vand.u32 %v456, 15
        %v489 = vand.u32 %v457, 15
        %v490 = vadd.s32 %v394, 4294967295
        %v491 = vadd.s32 %v395, 4294967295
        %v492 = vadd.s32 %v396, 4294967295
        %v493 = vadd.s32 %v397, 4294967295
        %v494 = vadd.s32 %v398, 4294967295
        %v495 = vadd.s32 %v399, 4294967295
        %v496 = vadd.s32 %v400, 4294967295
        %v497 = vadd.s32 %v401, 4294967295
        %v498 = vadd.s32 %v402, 4294967295
        %v499 = vadd.s32 %v403, 4294967295
        %v500 = vadd.s32 %v404, 4294967295
        %v501 = vadd.s32 %v405, 4294967295
        %v502 = vadd.s32 %v406, 4294967295
        %v503 = vadd.s32 %v407, 4294967295
        %v504 = vadd.s32 %v408, 4294967295
        %v505 = vadd.s32 %v409, 4294967295
        %v506 = vadd.s32 %v410, 4294967295
        %v507 = vadd.s32 %v411, 4294967295
        %v508 = vadd.s32 %v412, 4294967295
        %v509 = vadd.s32 %v413, 4294967295
        %v510 = vadd.s32 %v414, 4294967295
        %v511 = vadd.s32 %v415, 4294967295
        %v512 = vadd.s32 %v416, 4294967295
        %v513 = vadd.s32 %v417, 4294967295
        %v514 = vadd.s32 %v418, 4294967295
        %v515 = vadd.s32 %v419, 4294967295
        %v516 = vadd.s32 %v420, 4294967295
        %v517 = vadd.s32 %v421, 4294967295
        %v518 = vadd.s32 %v422, 4294967295
        %v519 = vadd.s32 %v423, 4294967295
        %v520 = vadd.s32 %v424, 4294967295
        %v521 = vadd.s32 %v425, 4294967295
        %vm522 = vcmp.ge.s32.totalorder %v490, 0
        %vm523 = vcmp.ge.s32.totalorder %v491, 0
        %vm524 = vcmp.ge.s32.totalorder %v492, 0
        %vm525 = vcmp.ge.s32.totalorder %v493, 0
        %vm526 = vcmp.ge.s32.totalorder %v494, 0
        %vm527 = vcmp.ge.s32.totalorder %v495, 0
        %vm528 = vcmp.ge.s32.totalorder %v496, 0
        %vm529 = vcmp.ge.s32.totalorder %v497, 0
        %vm530 = vcmp.ge.s32.totalorder %v498, 0
        %vm531 = vcmp.ge.s32.totalorder %v499, 0
        %vm532 = vcmp.ge.s32.totalorder %v500, 0
        %vm533 = vcmp.ge.s32.totalorder %v501, 0
        %vm534 = vcmp.ge.s32.totalorder %v502, 0
        %vm535 = vcmp.ge.s32.totalorder %v503, 0
        %vm536 = vcmp.ge.s32.totalorder %v504, 0
        %vm537 = vcmp.ge.s32.totalorder %v505, 0
        %vm538 = vcmp.ge.s32.totalorder %v506, 0
        %vm539 = vcmp.ge.s32.totalorder %v507, 0
        %vm540 = vcmp.ge.s32.totalorder %v508, 0
        %vm541 = vcmp.ge.s32.totalorder %v509, 0
        %vm542 = vcmp.ge.s32.totalorder %v510, 0
        %vm543 = vcmp.ge.s32.totalorder %v511, 0
        %vm544 = vcmp.ge.s32.totalorder %v512, 0
        %vm545 = vcmp.ge.s32.totalorder %v513, 0
        %vm546 = vcmp.ge.s32.totalorder %v514, 0
        %vm547 = vcmp.ge.s32.totalorder %v515, 0
        %vm548 = vcmp.ge.s32.totalorder %v516, 0
        %vm549 = vcmp.ge.s32.totalorder %v517, 0
        %vm550 = vcmp.ge.s32.totalorder %v518, 0
        %vm551 = vcmp.ge.s32.totalorder %v519, 0
        %vm552 = vcmp.ge.s32.totalorder %v520, 0
        %vm553 = vcmp.ge.s32.totalorder %v521, 0
        %vm554 = vcmp.lt.s32.totalorder %v490, 16
        %vm555 = vcmp.lt.s32.totalorder %v491, 16
        %vm556 = vcmp.lt.s32.totalorder %v492, 16
        %vm557 = vcmp.lt.s32.totalorder %v493, 16
        %vm558 = vcmp.lt.s32.totalorder %v494, 16
        %vm559 = vcmp.lt.s32.totalorder %v495, 16
        %vm560 = vcmp.lt.s32.totalorder %v496, 16
        %vm561 = vcmp.lt.s32.totalorder %v497, 16
        %vm562 = vcmp.lt.s32.totalorder %v498, 16
        %vm563 = vcmp.lt.s32.totalorder %v499, 16
        %vm564 = vcmp.lt.s32.totalorder %v500, 16
        %vm565 = vcmp.lt.s32.totalorder %v501, 16
        %vm566 = vcmp.lt.s32.totalorder %v502, 16
        %vm567 = vcmp.lt.s32.totalorder %v503, 16
        %vm568 = vcmp.lt.s32.totalorder %v504, 16
        %vm569 = vcmp.lt.s32.totalorder %v505, 16
        %vm570 = vcmp.lt.s32.totalorder %v506, 16
        %vm571 = vcmp.lt.s32.totalorder %v507, 16
        %vm572 = vcmp.lt.s32.totalorder %v508, 16
        %vm573 = vcmp.lt.s32.totalorder %v509, 16
        %vm574 = vcmp.lt.s32.totalorder %v510, 16
        %vm575 = vcmp.lt.s32.totalorder %v511, 16
        %vm576 = vcmp.lt.s32.totalorder %v512, 16
        %vm577 = vcmp.lt.s32.totalorder %v513, 16
        %vm578 = vcmp.lt.s32.totalorder %v514, 16
        %vm579 = vcmp.lt.s32.totalorder %v515, 16
        %vm580 = vcmp.lt.s32.totalorder %v516, 16
        %vm581 = vcmp.lt.s32.totalorder %v517, 16
        %vm582 = vcmp.lt.s32.totalorder %v518, 16
        %vm583 = vcmp.lt.s32.totalorder %v519, 16
        %vm584 = vcmp.lt.s32.totalorder %v520, 16
        %vm585 = vcmp.lt.s32.totalorder %v521, 16
        %vm586 = vmand %vm522, %vm554
        %vm587 = vmand %vm523, %vm555
        %vm588 = vmand %vm524, %vm556
        %vm589 = vmand %vm525, %vm557
        %vm590 = vmand %vm526, %vm558
        %vm591 = vmand %vm527, %vm559
        %vm592 = vmand %vm528, %vm560
        %vm593 = vmand %vm529, %vm561
        %vm594 = vmand %vm530, %vm562
        %vm595 = vmand %vm531, %vm563
        %vm596 = vmand %vm532, %vm564
        %vm597 = vmand %vm533, %vm565
        %vm598 = vmand %vm534, %vm566
        %vm599 = vmand %vm535, %vm567
        %vm600 = vmand %vm536, %vm568
        %vm601 = vmand %vm537, %vm569
        %vm602 = vmand %vm538, %vm570
        %vm603 = vmand %vm539, %vm571
        %vm604 = vmand %vm540, %vm572
        %vm605 = vmand %vm541, %vm573
        %vm606 = vmand %vm542, %vm574
        %vm607 = vmand %vm543, %vm575
        %vm608 = vmand %vm544, %vm576
        %vm609 = vmand %vm545, %vm577
        %vm610 = vmand %vm546, %vm578
        %vm611 = vmand %vm547, %vm579
        %vm612 = vmand %vm548, %vm580
        %vm613 = vmand %vm549, %vm581
        %vm614 = vmand %vm550, %vm582
        %vm615 = vmand %vm551, %vm583
        %vm616 = vmand %vm552, %vm584
        %vm617 = vmand %vm553, %vm585
        %v618 = vadd.s32 %v458, 4294967295
        %v619 = vadd.s32 %v459, 4294967295
        %v620 = vadd.s32 %v460, 4294967295
        %v621 = vadd.s32 %v461, 4294967295
        %v622 = vadd.s32 %v462, 4294967295
        %v623 = vadd.s32 %v463, 4294967295
        %v624 = vadd.s32 %v464, 4294967295
        %v625 = vadd.s32 %v465, 4294967295
        %v626 = vadd.s32 %v466, 4294967295
        %v627 = vadd.s32 %v467, 4294967295
        %v628 = vadd.s32 %v468, 4294967295
        %v629 = vadd.s32 %v469, 4294967295
        %v630 = vadd.s32 %v470, 4294967295
        %v631 = vadd.s32 %v471, 4294967295
        %v632 = vadd.s32 %v472, 4294967295
        %v633 = vadd.s32 %v473, 4294967295
        %v634 = vadd.s32 %v474, 4294967295
        %v635 = vadd.s32 %v475, 4294967295
        %v636 = vadd.s32 %v476, 4294967295
        %v637 = vadd.s32 %v477, 4294967295
        %v638 = vadd.s32 %v478, 4294967295
        %v639 = vadd.s32 %v479, 4294967295
        %v640 = vadd.s32 %v480, 4294967295
        %v641 = vadd.s32 %v481, 4294967295
        %v642 = vadd.s32 %v482, 4294967295
        %v643 = vadd.s32 %v483, 4294967295
        %v644 = vadd.s32 %v484, 4294967295
        %v645 = vadd.s32 %v485, 4294967295
        %v646 = vadd.s32 %v486, 4294967295
        %v647 = vadd.s32 %v487, 4294967295
        %v648 = vadd.s32 %v488, 4294967295
        %v649 = vadd.s32 %v489, 4294967295
        %vm650 = vcmp.ge.s32.totalorder %v618, 0
        %vm651 = vcmp.ge.s32.totalorder %v619, 0
        %vm652 = vcmp.ge.s32.totalorder %v620, 0
        %vm653 = vcmp.ge.s32.totalorder %v621, 0
        %vm654 = vcmp.ge.s32.totalorder %v622, 0
        %vm655 = vcmp.ge.s32.totalorder %v623, 0
        %vm656 = vcmp.ge.s32.totalorder %v624, 0
        %vm657 = vcmp.ge.s32.totalorder %v625, 0
        %vm658 = vcmp.ge.s32.totalorder %v626, 0
        %vm659 = vcmp.ge.s32.totalorder %v627, 0
        %vm660 = vcmp.ge.s32.totalorder %v628, 0
        %vm661 = vcmp.ge.s32.totalorder %v629, 0
        %vm662 = vcmp.ge.s32.totalorder %v630, 0
        %vm663 = vcmp.ge.s32.totalorder %v631, 0
        %vm664 = vcmp.ge.s32.totalorder %v632, 0
        %vm665 = vcmp.ge.s32.totalorder %v633, 0
        %vm666 = vcmp.ge.s32.totalorder %v634, 0
        %vm667 = vcmp.ge.s32.totalorder %v635, 0
        %vm668 = vcmp.ge.s32.totalorder %v636, 0
        %vm669 = vcmp.ge.s32.totalorder %v637, 0
        %vm670 = vcmp.ge.s32.totalorder %v638, 0
        %vm671 = vcmp.ge.s32.totalorder %v639, 0
        %vm672 = vcmp.ge.s32.totalorder %v640, 0
        %vm673 = vcmp.ge.s32.totalorder %v641, 0
        %vm674 = vcmp.ge.s32.totalorder %v642, 0
        %vm675 = vcmp.ge.s32.totalorder %v643, 0
        %vm676 = vcmp.ge.s32.totalorder %v644, 0
        %vm677 = vcmp.ge.s32.totalorder %v645, 0
        %vm678 = vcmp.ge.s32.totalorder %v646, 0
        %vm679 = vcmp.ge.s32.totalorder %v647, 0
        %vm680 = vcmp.ge.s32.totalorder %v648, 0
        %vm681 = vcmp.ge.s32.totalorder %v649, 0
        %vm682 = vmand %vm586, %vm650
        %vm683 = vmand %vm587, %vm651
        %vm684 = vmand %vm588, %vm652
        %vm685 = vmand %vm589, %vm653
        %vm686 = vmand %vm590, %vm654
        %vm687 = vmand %vm591, %vm655
        %vm688 = vmand %vm592, %vm656
        %vm689 = vmand %vm593, %vm657
        %vm690 = vmand %vm594, %vm658
        %vm691 = vmand %vm595, %vm659
        %vm692 = vmand %vm596, %vm660
        %vm693 = vmand %vm597, %vm661
        %vm694 = vmand %vm598, %vm662
        %vm695 = vmand %vm599, %vm663
        %vm696 = vmand %vm600, %vm664
        %vm697 = vmand %vm601, %vm665
        %vm698 = vmand %vm602, %vm666
        %vm699 = vmand %vm603, %vm667
        %vm700 = vmand %vm604, %vm668
        %vm701 = vmand %vm605, %vm669
        %vm702 = vmand %vm606, %vm670
        %vm703 = vmand %vm607, %vm671
        %vm704 = vmand %vm608, %vm672
        %vm705 = vmand %vm609, %vm673
        %vm706 = vmand %vm610, %vm674
        %vm707 = vmand %vm611, %vm675
        %vm708 = vmand %vm612, %vm676
        %vm709 = vmand %vm613, %vm677
        %vm710 = vmand %vm614, %vm678
        %vm711 = vmand %vm615, %vm679
        %vm712 = vmand %vm616, %vm680
        %vm713 = vmand %vm617, %vm681
        %vm714 = vcmp.lt.s32.totalorder %v618, 16
        %vm715 = vcmp.lt.s32.totalorder %v619, 16
        %vm716 = vcmp.lt.s32.totalorder %v620, 16
        %vm717 = vcmp.lt.s32.totalorder %v621, 16
        %vm718 = vcmp.lt.s32.totalorder %v622, 16
        %vm719 = vcmp.lt.s32.totalorder %v623, 16
        %vm720 = vcmp.lt.s32.totalorder %v624, 16
        %vm721 = vcmp.lt.s32.totalorder %v625, 16
        %vm722 = vcmp.lt.s32.totalorder %v626, 16
        %vm723 = vcmp.lt.s32.totalorder %v627, 16
        %vm724 = vcmp.lt.s32.totalorder %v628, 16
        %vm725 = vcmp.lt.s32.totalorder %v629, 16
        %vm726 = vcmp.lt.s32.totalorder %v630, 16
        %vm727 = vcmp.lt.s32.totalorder %v631, 16
        %vm728 = vcmp.lt.s32.totalorder %v632, 16
        %vm729 = vcmp.lt.s32.totalorder %v633, 16
        %vm730 = vcmp.lt.s32.totalorder %v634, 16
        %vm731 = vcmp.lt.s32.totalorder %v635, 16
        %vm732 = vcmp.lt.s32.totalorder %v636, 16
        %vm733 = vcmp.lt.s32.totalorder %v637, 16
        %vm734 = vcmp.lt.s32.totalorder %v638, 16
        %vm735 = vcmp.lt.s32.totalorder %v639, 16
        %vm736 = vcmp.lt.s32.totalorder %v640, 16
        %vm737 = vcmp.lt.s32.totalorder %v641, 16
        %vm738 = vcmp.lt.s32.totalorder %v642, 16
        %vm739 = vcmp.lt.s32.totalorder %v643, 16
        %vm740 = vcmp.lt.s32.totalorder %v644, 16
        %vm741 = vcmp.lt.s32.totalorder %v645, 16
        %vm742 = vcmp.lt.s32.totalorder %v646, 16
        %vm743 = vcmp.lt.s32.totalorder %v647, 16
        %vm744 = vcmp.lt.s32.totalorder %v648, 16
        %vm745 = vcmp.lt.s32.totalorder %v649, 16
        %vm746 = vmand %vm682, %vm714
        %vm747 = vmand %vm683, %vm715
        %vm748 = vmand %vm684, %vm716
        %vm749 = vmand %vm685, %vm717
        %vm750 = vmand %vm686, %vm718
        %vm751 = vmand %vm687, %vm719
        %vm752 = vmand %vm688, %vm720
        %vm753 = vmand %vm689, %vm721
        %vm754 = vmand %vm690, %vm722
        %vm755 = vmand %vm691, %vm723
        %vm756 = vmand %vm692, %vm724
        %vm757 = vmand %vm693, %vm725
        %vm758 = vmand %vm694, %vm726
        %vm759 = vmand %vm695, %vm727
        %vm760 = vmand %vm696, %vm728
        %vm761 = vmand %vm697, %vm729
        %vm762 = vmand %vm698, %vm730
        %vm763 = vmand %vm699, %vm731
        %vm764 = vmand %vm700, %vm732
        %vm765 = vmand %vm701, %vm733
        %vm766 = vmand %vm702, %vm734
        %vm767 = vmand %vm703, %vm735
        %vm768 = vmand %vm704, %vm736
        %vm769 = vmand %vm705, %vm737
        %vm770 = vmand %vm706, %vm738
        %vm771 = vmand %vm707, %vm739
        %vm772 = vmand %vm708, %vm740
        %vm773 = vmand %vm709, %vm741
        %vm774 = vmand %vm710, %vm742
        %vm775 = vmand %vm711, %vm743
        %vm776 = vmand %vm712, %vm744
        %vm777 = vmand %vm713, %vm745
        %vm778 = vcmp.ge.s32.totalorder %v394, 0
        %vm779 = vcmp.ge.s32.totalorder %v395, 0
        %vm780 = vcmp.ge.s32.totalorder %v396, 0
        %vm781 = vcmp.ge.s32.totalorder %v397, 0
        %vm782 = vcmp.ge.s32.totalorder %v398, 0
        %vm783 = vcmp.ge.s32.totalorder %v399, 0
        %vm784 = vcmp.ge.s32.totalorder %v400, 0
        %vm785 = vcmp.ge.s32.totalorder %v401, 0
        %vm786 = vcmp.ge.s32.totalorder %v402, 0
        %vm787 = vcmp.ge.s32.totalorder %v403, 0
        %vm788 = vcmp.ge.s32.totalorder %v404, 0
        %vm789 = vcmp.ge.s32.totalorder %v405, 0
        %vm790 = vcmp.ge.s32.totalorder %v406, 0
        %vm791 = vcmp.ge.s32.totalorder %v407, 0
        %vm792 = vcmp.ge.s32.totalorder %v408, 0
        %vm793 = vcmp.ge.s32.totalorder %v409, 0
        %vm794 = vcmp.ge.s32.totalorder %v410, 0
        %vm795 = vcmp.ge.s32.totalorder %v411, 0
        %vm796 = vcmp.ge.s32.totalorder %v412, 0
        %vm797 = vcmp.ge.s32.totalorder %v413, 0
        %vm798 = vcmp.ge.s32.totalorder %v414, 0
        %vm799 = vcmp.ge.s32.totalorder %v415, 0
        %vm800 = vcmp.ge.s32.totalorder %v416, 0
        %vm801 = vcmp.ge.s32.totalorder %v417, 0
        %vm802 = vcmp.ge.s32.totalorder %v418, 0
        %vm803 = vcmp.ge.s32.totalorder %v419, 0
        %vm804 = vcmp.ge.s32.totalorder %v420, 0
        %vm805 = vcmp.ge.s32.totalorder %v421, 0
        %vm806 = vcmp.ge.s32.totalorder %v422, 0
        %vm807 = vcmp.ge.s32.totalorder %v423, 0
        %vm808 = vcmp.ge.s32.totalorder %v424, 0
        %vm809 = vcmp.ge.s32.totalorder %v425, 0
        %vm810 = vcmp.lt.s32.totalorder %v394, 16
        %vm811 = vcmp.lt.s32.totalorder %v395, 16
        %vm812 = vcmp.lt.s32.totalorder %v396, 16
        %vm813 = vcmp.lt.s32.totalorder %v397, 16
        %vm814 = vcmp.lt.s32.totalorder %v398, 16
        %vm815 = vcmp.lt.s32.totalorder %v399, 16
        %vm816 = vcmp.lt.s32.totalorder %v400, 16
        %vm817 = vcmp.lt.s32.totalorder %v401, 16
        %vm818 = vcmp.lt.s32.totalorder %v402, 16
        %vm819 = vcmp.lt.s32.totalorder %v403, 16
        %vm820 = vcmp.lt.s32.totalorder %v404, 16
        %vm821 = vcmp.lt.s32.totalorder %v405, 16
        %vm822 = vcmp.lt.s32.totalorder %v406, 16
        %vm823 = vcmp.lt.s32.totalorder %v407, 16
        %vm824 = vcmp.lt.s32.totalorder %v408, 16
        %vm825 = vcmp.lt.s32.totalorder %v409, 16
        %vm826 = vcmp.lt.s32.totalorder %v410, 16
        %vm827 = vcmp.lt.s32.totalorder %v411, 16
        %vm828 = vcmp.lt.s32.totalorder %v412, 16
        %vm829 = vcmp.lt.s32.totalorder %v413, 16
        %vm830 = vcmp.lt.s32.totalorder %v414, 16
        %vm831 = vcmp.lt.s32.totalorder %v415, 16
        %vm832 = vcmp.lt.s32.totalorder %v416, 16
        %vm833 = vcmp.lt.s32.totalorder %v417, 16
        %vm834 = vcmp.lt.s32.totalorder %v418, 16
        %vm835 = vcmp.lt.s32.totalorder %v419, 16
        %vm836 = vcmp.lt.s32.totalorder %v420, 16
        %vm837 = vcmp.lt.s32.totalorder %v421, 16
        %vm838 = vcmp.lt.s32.totalorder %v422, 16
        %vm839 = vcmp.lt.s32.totalorder %v423, 16
        %vm840 = vcmp.lt.s32.totalorder %v424, 16
        %vm841 = vcmp.lt.s32.totalorder %v425, 16
        %vm842 = vmand %vm778, %vm810
        %vm843 = vmand %vm779, %vm811
        %vm844 = vmand %vm780, %vm812
        %vm845 = vmand %vm781, %vm813
        %vm846 = vmand %vm782, %vm814
        %vm847 = vmand %vm783, %vm815
        %vm848 = vmand %vm784, %vm816
        %vm849 = vmand %vm785, %vm817
        %vm850 = vmand %vm786, %vm818
        %vm851 = vmand %vm787, %vm819
        %vm852 = vmand %vm788, %vm820
        %vm853 = vmand %vm789, %vm821
        %vm854 = vmand %vm790, %vm822
        %vm855 = vmand %vm791, %vm823
        %vm856 = vmand %vm792, %vm824
        %vm857 = vmand %vm793, %vm825
        %vm858 = vmand %vm794, %vm826
        %vm859 = vmand %vm795, %vm827
        %vm860 = vmand %vm796, %vm828
        %vm861 = vmand %vm797, %vm829
        %vm862 = vmand %vm798, %vm830
        %vm863 = vmand %vm799, %vm831
        %vm864 = vmand %vm800, %vm832
        %vm865 = vmand %vm801, %vm833
        %vm866 = vmand %vm802, %vm834
        %vm867 = vmand %vm803, %vm835
        %vm868 = vmand %vm804, %vm836
        %vm869 = vmand %vm805, %vm837
        %vm870 = vmand %vm806, %vm838
        %vm871 = vmand %vm807, %vm839
        %vm872 = vmand %vm808, %vm840
        %vm873 = vmand %vm809, %vm841
        %vm874 = vmand %vm842, %vm650
        %vm875 = vmand %vm843, %vm651
        %vm876 = vmand %vm844, %vm652
        %vm877 = vmand %vm845, %vm653
        %vm878 = vmand %vm846, %vm654
        %vm879 = vmand %vm847, %vm655
        %vm880 = vmand %vm848, %vm656
        %vm881 = vmand %vm849, %vm657
        %vm882 = vmand %vm850, %vm658
        %vm883 = vmand %vm851, %vm659
        %vm884 = vmand %vm852, %vm660
        %vm885 = vmand %vm853, %vm661
        %vm886 = vmand %vm854, %vm662
        %vm887 = vmand %vm855, %vm663
        %vm888 = vmand %vm856, %vm664
        %vm889 = vmand %vm857, %vm665
        %vm890 = vmand %vm858, %vm666
        %vm891 = vmand %vm859, %vm667
        %vm892 = vmand %vm860, %vm668
        %vm893 = vmand %vm861, %vm669
        %vm894 = vmand %vm862, %vm670
        %vm895 = vmand %vm863, %vm671
        %vm896 = vmand %vm864, %vm672
        %vm897 = vmand %vm865, %vm673
        %vm898 = vmand %vm866, %vm674
        %vm899 = vmand %vm867, %vm675
        %vm900 = vmand %vm868, %vm676
        %vm901 = vmand %vm869, %vm677
        %vm902 = vmand %vm870, %vm678
        %vm903 = vmand %vm871, %vm679
        %vm904 = vmand %vm872, %vm680
        %vm905 = vmand %vm873, %vm681
        %vm906 = vmand %vm874, %vm714
        %vm907 = vmand %vm875, %vm715
        %vm908 = vmand %vm876, %vm716
        %vm909 = vmand %vm877, %vm717
        %vm910 = vmand %vm878, %vm718
        %vm911 = vmand %vm879, %vm719
        %vm912 = vmand %vm880, %vm720
        %vm913 = vmand %vm881, %vm721
        %vm914 = vmand %vm882, %vm722
        %vm915 = vmand %vm883, %vm723
        %vm916 = vmand %vm884, %vm724
        %vm917 = vmand %vm885, %vm725
        %vm918 = vmand %vm886, %vm726
        %vm919 = vmand %vm887, %vm727
        %vm920 = vmand %vm888, %vm728
        %vm921 = vmand %vm889, %vm729
        %vm922 = vmand %vm890, %vm730
        %vm923 = vmand %vm891, %vm731
        %vm924 = vmand %vm892, %vm732
        %vm925 = vmand %vm893, %vm733
        %vm926 = vmand %vm894, %vm734
        %vm927 = vmand %vm895, %vm735
        %vm928 = vmand %vm896, %vm736
        %vm929 = vmand %vm897, %vm737
        %vm930 = vmand %vm898, %vm738
        %vm931 = vmand %vm899, %vm739
        %vm932 = vmand %vm900, %vm740
        %vm933 = vmand %vm901, %vm741
        %vm934 = vmand %vm902, %vm742
        %vm935 = vmand %vm903, %vm743
        %vm936 = vmand %vm904, %vm744
        %vm937 = vmand %vm905, %vm745
        %v938 = vadd.s32 %v394, 1
        %v939 = vadd.s32 %v395, 1
        %v940 = vadd.s32 %v396, 1
        %v941 = vadd.s32 %v397, 1
        %v942 = vadd.s32 %v398, 1
        %v943 = vadd.s32 %v399, 1
        %v944 = vadd.s32 %v400, 1
        %v945 = vadd.s32 %v401, 1
        %v946 = vadd.s32 %v402, 1
        %v947 = vadd.s32 %v403, 1
        %v948 = vadd.s32 %v404, 1
        %v949 = vadd.s32 %v405, 1
        %v950 = vadd.s32 %v406, 1
        %v951 = vadd.s32 %v407, 1
        %v952 = vadd.s32 %v408, 1
        %v953 = vadd.s32 %v409, 1
        %v954 = vadd.s32 %v410, 1
        %v955 = vadd.s32 %v411, 1
        %v956 = vadd.s32 %v412, 1
        %v957 = vadd.s32 %v413, 1
        %v958 = vadd.s32 %v414, 1
        %v959 = vadd.s32 %v415, 1
        %v960 = vadd.s32 %v416, 1
        %v961 = vadd.s32 %v417, 1
        %v962 = vadd.s32 %v418, 1
        %v963 = vadd.s32 %v419, 1
        %v964 = vadd.s32 %v420, 1
        %v965 = vadd.s32 %v421, 1
        %v966 = vadd.s32 %v422, 1
        %v967 = vadd.s32 %v423, 1
        %v968 = vadd.s32 %v424, 1
        %v969 = vadd.s32 %v425, 1
        %vm970 = vcmp.ge.s32.totalorder %v938, 0
        %vm971 = vcmp.ge.s32.totalorder %v939, 0
        %vm972 = vcmp.ge.s32.totalorder %v940, 0
        %vm973 = vcmp.ge.s32.totalorder %v941, 0
        %vm974 = vcmp.ge.s32.totalorder %v942, 0
        %vm975 = vcmp.ge.s32.totalorder %v943, 0
        %vm976 = vcmp.ge.s32.totalorder %v944, 0
        %vm977 = vcmp.ge.s32.totalorder %v945, 0
        %vm978 = vcmp.ge.s32.totalorder %v946, 0
        %vm979 = vcmp.ge.s32.totalorder %v947, 0
        %vm980 = vcmp.ge.s32.totalorder %v948, 0
        %vm981 = vcmp.ge.s32.totalorder %v949, 0
        %vm982 = vcmp.ge.s32.totalorder %v950, 0
        %vm983 = vcmp.ge.s32.totalorder %v951, 0
        %vm984 = vcmp.ge.s32.totalorder %v952, 0
        %vm985 = vcmp.ge.s32.totalorder %v953, 0
        %vm986 = vcmp.ge.s32.totalorder %v954, 0
        %vm987 = vcmp.ge.s32.totalorder %v955, 0
        %vm988 = vcmp.ge.s32.totalorder %v956, 0
        %vm989 = vcmp.ge.s32.totalorder %v957, 0
        %vm990 = vcmp.ge.s32.totalorder %v958, 0
        %vm991 = vcmp.ge.s32.totalorder %v959, 0
        %vm992 = vcmp.ge.s32.totalorder %v960, 0
        %vm993 = vcmp.ge.s32.totalorder %v961, 0
        %vm994 = vcmp.ge.s32.totalorder %v962, 0
        %vm995 = vcmp.ge.s32.totalorder %v963, 0
        %vm996 = vcmp.ge.s32.totalorder %v964, 0
        %vm997 = vcmp.ge.s32.totalorder %v965, 0
        %vm998 = vcmp.ge.s32.totalorder %v966, 0
        %vm999 = vcmp.ge.s32.totalorder %v967, 0
        %vm1000 = vcmp.ge.s32.totalorder %v968, 0
        %vm1001 = vcmp.ge.s32.totalorder %v969, 0
        %vm1002 = vcmp.lt.s32.totalorder %v938, 16
        %vm1003 = vcmp.lt.s32.totalorder %v939, 16
        %vm1004 = vcmp.lt.s32.totalorder %v940, 16
        %vm1005 = vcmp.lt.s32.totalorder %v941, 16
        %vm1006 = vcmp.lt.s32.totalorder %v942, 16
        %vm1007 = vcmp.lt.s32.totalorder %v943, 16
        %vm1008 = vcmp.lt.s32.totalorder %v944, 16
        %vm1009 = vcmp.lt.s32.totalorder %v945, 16
        %vm1010 = vcmp.lt.s32.totalorder %v946, 16
        %vm1011 = vcmp.lt.s32.totalorder %v947, 16
        %vm1012 = vcmp.lt.s32.totalorder %v948, 16
        %vm1013 = vcmp.lt.s32.totalorder %v949, 16
        %vm1014 = vcmp.lt.s32.totalorder %v950, 16
        %vm1015 = vcmp.lt.s32.totalorder %v951, 16
        %vm1016 = vcmp.lt.s32.totalorder %v952, 16
        %vm1017 = vcmp.lt.s32.totalorder %v953, 16
        %vm1018 = vcmp.lt.s32.totalorder %v954, 16
        %vm1019 = vcmp.lt.s32.totalorder %v955, 16
        %vm1020 = vcmp.lt.s32.totalorder %v956, 16
        %vm1021 = vcmp.lt.s32.totalorder %v957, 16
        %vm1022 = vcmp.lt.s32.totalorder %v958, 16
        %vm1023 = vcmp.lt.s32.totalorder %v959, 16
        %vm1024 = vcmp.lt.s32.totalorder %v960, 16
        %vm1025 = vcmp.lt.s32.totalorder %v961, 16
        %vm1026 = vcmp.lt.s32.totalorder %v962, 16
        %vm1027 = vcmp.lt.s32.totalorder %v963, 16
        %vm1028 = vcmp.lt.s32.totalorder %v964, 16
        %vm1029 = vcmp.lt.s32.totalorder %v965, 16
        %vm1030 = vcmp.lt.s32.totalorder %v966, 16
        %vm1031 = vcmp.lt.s32.totalorder %v967, 16
        %vm1032 = vcmp.lt.s32.totalorder %v968, 16
        %vm1033 = vcmp.lt.s32.totalorder %v969, 16
        %vm1034 = vmand %vm970, %vm1002
        %vm1035 = vmand %vm971, %vm1003
        %vm1036 = vmand %vm972, %vm1004
        %vm1037 = vmand %vm973, %vm1005
        %vm1038 = vmand %vm974, %vm1006
        %vm1039 = vmand %vm975, %vm1007
        %vm1040 = vmand %vm976, %vm1008
        %vm1041 = vmand %vm977, %vm1009
        %vm1042 = vmand %vm978, %vm1010
        %vm1043 = vmand %vm979, %vm1011
        %vm1044 = vmand %vm980, %vm1012
        %vm1045 = vmand %vm981, %vm1013
        %vm1046 = vmand %vm982, %vm1014
        %vm1047 = vmand %vm983, %vm1015
        %vm1048 = vmand %vm984, %vm1016
        %vm1049 = vmand %vm985, %vm1017
        %vm1050 = vmand %vm986, %vm1018
        %vm1051 = vmand %vm987, %vm1019
        %vm1052 = vmand %vm988, %vm1020
        %vm1053 = vmand %vm989, %vm1021
        %vm1054 = vmand %vm990, %vm1022
        %vm1055 = vmand %vm991, %vm1023
        %vm1056 = vmand %vm992, %vm1024
        %vm1057 = vmand %vm993, %vm1025
        %vm1058 = vmand %vm994, %vm1026
        %vm1059 = vmand %vm995, %vm1027
        %vm1060 = vmand %vm996, %vm1028
        %vm1061 = vmand %vm997, %vm1029
        %vm1062 = vmand %vm998, %vm1030
        %vm1063 = vmand %vm999, %vm1031
        %vm1064 = vmand %vm1000, %vm1032
        %vm1065 = vmand %vm1001, %vm1033
        %vm1066 = vmand %vm1034, %vm650
        %vm1067 = vmand %vm1035, %vm651
        %vm1068 = vmand %vm1036, %vm652
        %vm1069 = vmand %vm1037, %vm653
        %vm1070 = vmand %vm1038, %vm654
        %vm1071 = vmand %vm1039, %vm655
        %vm1072 = vmand %vm1040, %vm656
        %vm1073 = vmand %vm1041, %vm657
        %vm1074 = vmand %vm1042, %vm658
        %vm1075 = vmand %vm1043, %vm659
        %vm1076 = vmand %vm1044, %vm660
        %vm1077 = vmand %vm1045, %vm661
        %vm1078 = vmand %vm1046, %vm662
        %vm1079 = vmand %vm1047, %vm663
        %vm1080 = vmand %vm1048, %vm664
        %vm1081 = vmand %vm1049, %vm665
        %vm1082 = vmand %vm1050, %vm666
        %vm1083 = vmand %vm1051, %vm667
        %vm1084 = vmand %vm1052, %vm668
        %vm1085 = vmand %vm1053, %vm669
        %vm1086 = vmand %vm1054, %vm670
        %vm1087 = vmand %vm1055, %vm671
        %vm1088 = vmand %vm1056, %vm672
        %vm1089 = vmand %vm1057, %vm673
        %vm1090 = vmand %vm1058, %vm674
        %vm1091 = vmand %vm1059, %vm675
        %vm1092 = vmand %vm1060, %vm676
        %vm1093 = vmand %vm1061, %vm677
        %vm1094 = vmand %vm1062, %vm678
        %vm1095 = vmand %vm1063, %vm679
        %vm1096 = vmand %vm1064, %vm680
        %vm1097 = vmand %vm1065, %vm681
        %vm1098 = vmand %vm1066, %vm714
        %vm1099 = vmand %vm1067, %vm715
        %vm1100 = vmand %vm1068, %vm716
        %vm1101 = vmand %vm1069, %vm717
        %vm1102 = vmand %vm1070, %vm718
        %vm1103 = vmand %vm1071, %vm719
        %vm1104 = vmand %vm1072, %vm720
        %vm1105 = vmand %vm1073, %vm721
        %vm1106 = vmand %vm1074, %vm722
        %vm1107 = vmand %vm1075, %vm723
        %vm1108 = vmand %vm1076, %vm724
        %vm1109 = vmand %vm1077, %vm725
        %vm1110 = vmand %vm1078, %vm726
        %vm1111 = vmand %vm1079, %vm727
        %vm1112 = vmand %vm1080, %vm728
        %vm1113 = vmand %vm1081, %vm729
        %vm1114 = vmand %vm1082, %vm730
        %vm1115 = vmand %vm1083, %vm731
        %vm1116 = vmand %vm1084, %vm732
        %vm1117 = vmand %vm1085, %vm733
        %vm1118 = vmand %vm1086, %vm734
        %vm1119 = vmand %vm1087, %vm735
        %vm1120 = vmand %vm1088, %vm736
        %vm1121 = vmand %vm1089, %vm737
        %vm1122 = vmand %vm1090, %vm738
        %vm1123 = vmand %vm1091, %vm739
        %vm1124 = vmand %vm1092, %vm740
        %vm1125 = vmand %vm1093, %vm741
        %vm1126 = vmand %vm1094, %vm742
        %vm1127 = vmand %vm1095, %vm743
        %vm1128 = vmand %vm1096, %vm744
        %vm1129 = vmand %vm1097, %vm745
        %vm1130 = vcmp.ge.s32.totalorder %v458, 0
        %vm1131 = vcmp.ge.s32.totalorder %v459, 0
        %vm1132 = vcmp.ge.s32.totalorder %v460, 0
        %vm1133 = vcmp.ge.s32.totalorder %v461, 0
        %vm1134 = vcmp.ge.s32.totalorder %v462, 0
        %vm1135 = vcmp.ge.s32.totalorder %v463, 0
        %vm1136 = vcmp.ge.s32.totalorder %v464, 0
        %vm1137 = vcmp.ge.s32.totalorder %v465, 0
        %vm1138 = vcmp.ge.s32.totalorder %v466, 0
        %vm1139 = vcmp.ge.s32.totalorder %v467, 0
        %vm1140 = vcmp.ge.s32.totalorder %v468, 0
        %vm1141 = vcmp.ge.s32.totalorder %v469, 0
        %vm1142 = vcmp.ge.s32.totalorder %v470, 0
        %vm1143 = vcmp.ge.s32.totalorder %v471, 0
        %vm1144 = vcmp.ge.s32.totalorder %v472, 0
        %vm1145 = vcmp.ge.s32.totalorder %v473, 0
        %vm1146 = vcmp.ge.s32.totalorder %v474, 0
        %vm1147 = vcmp.ge.s32.totalorder %v475, 0
        %vm1148 = vcmp.ge.s32.totalorder %v476, 0
        %vm1149 = vcmp.ge.s32.totalorder %v477, 0
        %vm1150 = vcmp.ge.s32.totalorder %v478, 0
        %vm1151 = vcmp.ge.s32.totalorder %v479, 0
        %vm1152 = vcmp.ge.s32.totalorder %v480, 0
        %vm1153 = vcmp.ge.s32.totalorder %v481, 0
        %vm1154 = vcmp.ge.s32.totalorder %v482, 0
        %vm1155 = vcmp.ge.s32.totalorder %v483, 0
        %vm1156 = vcmp.ge.s32.totalorder %v484, 0
        %vm1157 = vcmp.ge.s32.totalorder %v485, 0
        %vm1158 = vcmp.ge.s32.totalorder %v486, 0
        %vm1159 = vcmp.ge.s32.totalorder %v487, 0
        %vm1160 = vcmp.ge.s32.totalorder %v488, 0
        %vm1161 = vcmp.ge.s32.totalorder %v489, 0
        %vm1162 = vmand %vm586, %vm1130
        %vm1163 = vmand %vm587, %vm1131
        %vm1164 = vmand %vm588, %vm1132
        %vm1165 = vmand %vm589, %vm1133
        %vm1166 = vmand %vm590, %vm1134
        %vm1167 = vmand %vm591, %vm1135
        %vm1168 = vmand %vm592, %vm1136
        %vm1169 = vmand %vm593, %vm1137
        %vm1170 = vmand %vm594, %vm1138
        %vm1171 = vmand %vm595, %vm1139
        %vm1172 = vmand %vm596, %vm1140
        %vm1173 = vmand %vm597, %vm1141
        %vm1174 = vmand %vm598, %vm1142
        %vm1175 = vmand %vm599, %vm1143
        %vm1176 = vmand %vm600, %vm1144
        %vm1177 = vmand %vm601, %vm1145
        %vm1178 = vmand %vm602, %vm1146
        %vm1179 = vmand %vm603, %vm1147
        %vm1180 = vmand %vm604, %vm1148
        %vm1181 = vmand %vm605, %vm1149
        %vm1182 = vmand %vm606, %vm1150
        %vm1183 = vmand %vm607, %vm1151
        %vm1184 = vmand %vm608, %vm1152
        %vm1185 = vmand %vm609, %vm1153
        %vm1186 = vmand %vm610, %vm1154
        %vm1187 = vmand %vm611, %vm1155
        %vm1188 = vmand %vm612, %vm1156
        %vm1189 = vmand %vm613, %vm1157
        %vm1190 = vmand %vm614, %vm1158
        %vm1191 = vmand %vm615, %vm1159
        %vm1192 = vmand %vm616, %vm1160
        %vm1193 = vmand %vm617, %vm1161
        %vm1194 = vcmp.lt.s32.totalorder %v458, 16
        %vm1195 = vcmp.lt.s32.totalorder %v459, 16
        %vm1196 = vcmp.lt.s32.totalorder %v460, 16
        %vm1197 = vcmp.lt.s32.totalorder %v461, 16
        %vm1198 = vcmp.lt.s32.totalorder %v462, 16
        %vm1199 = vcmp.lt.s32.totalorder %v463, 16
        %vm1200 = vcmp.lt.s32.totalorder %v464, 16
        %vm1201 = vcmp.lt.s32.totalorder %v465, 16
        %vm1202 = vcmp.lt.s32.totalorder %v466, 16
        %vm1203 = vcmp.lt.s32.totalorder %v467, 16
        %vm1204 = vcmp.lt.s32.totalorder %v468, 16
        %vm1205 = vcmp.lt.s32.totalorder %v469, 16
        %vm1206 = vcmp.lt.s32.totalorder %v470, 16
        %vm1207 = vcmp.lt.s32.totalorder %v471, 16
        %vm1208 = vcmp.lt.s32.totalorder %v472, 16
        %vm1209 = vcmp.lt.s32.totalorder %v473, 16
        %vm1210 = vcmp.lt.s32.totalorder %v474, 16
        %vm1211 = vcmp.lt.s32.totalorder %v475, 16
        %vm1212 = vcmp.lt.s32.totalorder %v476, 16
        %vm1213 = vcmp.lt.s32.totalorder %v477, 16
        %vm1214 = vcmp.lt.s32.totalorder %v478, 16
        %vm1215 = vcmp.lt.s32.totalorder %v479, 16
        %vm1216 = vcmp.lt.s32.totalorder %v480, 16
        %vm1217 = vcmp.lt.s32.totalorder %v481, 16
        %vm1218 = vcmp.lt.s32.totalorder %v482, 16
        %vm1219 = vcmp.lt.s32.totalorder %v483, 16
        %vm1220 = vcmp.lt.s32.totalorder %v484, 16
        %vm1221 = vcmp.lt.s32.totalorder %v485, 16
        %vm1222 = vcmp.lt.s32.totalorder %v486, 16
        %vm1223 = vcmp.lt.s32.totalorder %v487, 16
        %vm1224 = vcmp.lt.s32.totalorder %v488, 16
        %vm1225 = vcmp.lt.s32.totalorder %v489, 16
        %vm1226 = vmand %vm1162, %vm1194
        %vm1227 = vmand %vm1163, %vm1195
        %vm1228 = vmand %vm1164, %vm1196
        %vm1229 = vmand %vm1165, %vm1197
        %vm1230 = vmand %vm1166, %vm1198
        %vm1231 = vmand %vm1167, %vm1199
        %vm1232 = vmand %vm1168, %vm1200
        %vm1233 = vmand %vm1169, %vm1201
        %vm1234 = vmand %vm1170, %vm1202
        %vm1235 = vmand %vm1171, %vm1203
        %vm1236 = vmand %vm1172, %vm1204
        %vm1237 = vmand %vm1173, %vm1205
        %vm1238 = vmand %vm1174, %vm1206
        %vm1239 = vmand %vm1175, %vm1207
        %vm1240 = vmand %vm1176, %vm1208
        %vm1241 = vmand %vm1177, %vm1209
        %vm1242 = vmand %vm1178, %vm1210
        %vm1243 = vmand %vm1179, %vm1211
        %vm1244 = vmand %vm1180, %vm1212
        %vm1245 = vmand %vm1181, %vm1213
        %vm1246 = vmand %vm1182, %vm1214
        %vm1247 = vmand %vm1183, %vm1215
        %vm1248 = vmand %vm1184, %vm1216
        %vm1249 = vmand %vm1185, %vm1217
        %vm1250 = vmand %vm1186, %vm1218
        %vm1251 = vmand %vm1187, %vm1219
        %vm1252 = vmand %vm1188, %vm1220
        %vm1253 = vmand %vm1189, %vm1221
        %vm1254 = vmand %vm1190, %vm1222
        %vm1255 = vmand %vm1191, %vm1223
        %vm1256 = vmand %vm1192, %vm1224
        %vm1257 = vmand %vm1193, %vm1225
        %vm1258 = vmand %vm1034, %vm1130
        %vm1259 = vmand %vm1035, %vm1131
        %vm1260 = vmand %vm1036, %vm1132
        %vm1261 = vmand %vm1037, %vm1133
        %vm1262 = vmand %vm1038, %vm1134
        %vm1263 = vmand %vm1039, %vm1135
        %vm1264 = vmand %vm1040, %vm1136
        %vm1265 = vmand %vm1041, %vm1137
        %vm1266 = vmand %vm1042, %vm1138
        %vm1267 = vmand %vm1043, %vm1139
        %vm1268 = vmand %vm1044, %vm1140
        %vm1269 = vmand %vm1045, %vm1141
        %vm1270 = vmand %vm1046, %vm1142
        %vm1271 = vmand %vm1047, %vm1143
        %vm1272 = vmand %vm1048, %vm1144
        %vm1273 = vmand %vm1049, %vm1145
        %vm1274 = vmand %vm1050, %vm1146
        %vm1275 = vmand %vm1051, %vm1147
        %vm1276 = vmand %vm1052, %vm1148
        %vm1277 = vmand %vm1053, %vm1149
        %vm1278 = vmand %vm1054, %vm1150
        %vm1279 = vmand %vm1055, %vm1151
        %vm1280 = vmand %vm1056, %vm1152
        %vm1281 = vmand %vm1057, %vm1153
        %vm1282 = vmand %vm1058, %vm1154
        %vm1283 = vmand %vm1059, %vm1155
        %vm1284 = vmand %vm1060, %vm1156
        %vm1285 = vmand %vm1061, %vm1157
        %vm1286 = vmand %vm1062, %vm1158
        %vm1287 = vmand %vm1063, %vm1159
        %vm1288 = vmand %vm1064, %vm1160
        %vm1289 = vmand %vm1065, %vm1161
        %vm1290 = vmand %vm1258, %vm1194
        %vm1291 = vmand %vm1259, %vm1195
        %vm1292 = vmand %vm1260, %vm1196
        %vm1293 = vmand %vm1261, %vm1197
        %vm1294 = vmand %vm1262, %vm1198
        %vm1295 = vmand %vm1263, %vm1199
        %vm1296 = vmand %vm1264, %vm1200
        %vm1297 = vmand %vm1265, %vm1201
        %vm1298 = vmand %vm1266, %vm1202
        %vm1299 = vmand %vm1267, %vm1203
        %vm1300 = vmand %vm1268, %vm1204
        %vm1301 = vmand %vm1269, %vm1205
        %vm1302 = vmand %vm1270, %vm1206
        %vm1303 = vmand %vm1271, %vm1207
        %vm1304 = vmand %vm1272, %vm1208
        %vm1305 = vmand %vm1273, %vm1209
        %vm1306 = vmand %vm1274, %vm1210
        %vm1307 = vmand %vm1275, %vm1211
        %vm1308 = vmand %vm1276, %vm1212
        %vm1309 = vmand %vm1277, %vm1213
        %vm1310 = vmand %vm1278, %vm1214
        %vm1311 = vmand %vm1279, %vm1215
        %vm1312 = vmand %vm1280, %vm1216
        %vm1313 = vmand %vm1281, %vm1217
        %vm1314 = vmand %vm1282, %vm1218
        %vm1315 = vmand %vm1283, %vm1219
        %vm1316 = vmand %vm1284, %vm1220
        %vm1317 = vmand %vm1285, %vm1221
        %vm1318 = vmand %vm1286, %vm1222
        %vm1319 = vmand %vm1287, %vm1223
        %vm1320 = vmand %vm1288, %vm1224
        %vm1321 = vmand %vm1289, %vm1225
        %v1322 = vadd.s32 %v458, 1
        %v1323 = vadd.s32 %v459, 1
        %v1324 = vadd.s32 %v460, 1
        %v1325 = vadd.s32 %v461, 1
        %v1326 = vadd.s32 %v462, 1
        %v1327 = vadd.s32 %v463, 1
        %v1328 = vadd.s32 %v464, 1
        %v1329 = vadd.s32 %v465, 1
        %v1330 = vadd.s32 %v466, 1
        %v1331 = vadd.s32 %v467, 1
        %v1332 = vadd.s32 %v468, 1
        %v1333 = vadd.s32 %v469, 1
        %v1334 = vadd.s32 %v470, 1
        %v1335 = vadd.s32 %v471, 1
        %v1336 = vadd.s32 %v472, 1
        %v1337 = vadd.s32 %v473, 1
        %v1338 = vadd.s32 %v474, 1
        %v1339 = vadd.s32 %v475, 1
        %v1340 = vadd.s32 %v476, 1
        %v1341 = vadd.s32 %v477, 1
        %v1342 = vadd.s32 %v478, 1
        %v1343 = vadd.s32 %v479, 1
        %v1344 = vadd.s32 %v480, 1
        %v1345 = vadd.s32 %v481, 1
        %v1346 = vadd.s32 %v482, 1
        %v1347 = vadd.s32 %v483, 1
        %v1348 = vadd.s32 %v484, 1
        %v1349 = vadd.s32 %v485, 1
        %v1350 = vadd.s32 %v486, 1
        %v1351 = vadd.s32 %v487, 1
        %v1352 = vadd.s32 %v488, 1
        %v1353 = vadd.s32 %v489, 1
        %vm1354 = vcmp.ge.s32.totalorder %v1322, 0
        %vm1355 = vcmp.ge.s32.totalorder %v1323, 0
        %vm1356 = vcmp.ge.s32.totalorder %v1324, 0
        %vm1357 = vcmp.ge.s32.totalorder %v1325, 0
        %vm1358 = vcmp.ge.s32.totalorder %v1326, 0
        %vm1359 = vcmp.ge.s32.totalorder %v1327, 0
        %vm1360 = vcmp.ge.s32.totalorder %v1328, 0
        %vm1361 = vcmp.ge.s32.totalorder %v1329, 0
        %vm1362 = vcmp.ge.s32.totalorder %v1330, 0
        %vm1363 = vcmp.ge.s32.totalorder %v1331, 0
        %vm1364 = vcmp.ge.s32.totalorder %v1332, 0
        %vm1365 = vcmp.ge.s32.totalorder %v1333, 0
        %vm1366 = vcmp.ge.s32.totalorder %v1334, 0
        %vm1367 = vcmp.ge.s32.totalorder %v1335, 0
        %vm1368 = vcmp.ge.s32.totalorder %v1336, 0
        %vm1369 = vcmp.ge.s32.totalorder %v1337, 0
        %vm1370 = vcmp.ge.s32.totalorder %v1338, 0
        %vm1371 = vcmp.ge.s32.totalorder %v1339, 0
        %vm1372 = vcmp.ge.s32.totalorder %v1340, 0
        %vm1373 = vcmp.ge.s32.totalorder %v1341, 0
        %vm1374 = vcmp.ge.s32.totalorder %v1342, 0
        %vm1375 = vcmp.ge.s32.totalorder %v1343, 0
        %vm1376 = vcmp.ge.s32.totalorder %v1344, 0
        %vm1377 = vcmp.ge.s32.totalorder %v1345, 0
        %vm1378 = vcmp.ge.s32.totalorder %v1346, 0
        %vm1379 = vcmp.ge.s32.totalorder %v1347, 0
        %vm1380 = vcmp.ge.s32.totalorder %v1348, 0
        %vm1381 = vcmp.ge.s32.totalorder %v1349, 0
        %vm1382 = vcmp.ge.s32.totalorder %v1350, 0
        %vm1383 = vcmp.ge.s32.totalorder %v1351, 0
        %vm1384 = vcmp.ge.s32.totalorder %v1352, 0
        %vm1385 = vcmp.ge.s32.totalorder %v1353, 0
        %vm1386 = vmand %vm586, %vm1354
        %vm1387 = vmand %vm587, %vm1355
        %vm1388 = vmand %vm588, %vm1356
        %vm1389 = vmand %vm589, %vm1357
        %vm1390 = vmand %vm590, %vm1358
        %vm1391 = vmand %vm591, %vm1359
        %vm1392 = vmand %vm592, %vm1360
        %vm1393 = vmand %vm593, %vm1361
        %vm1394 = vmand %vm594, %vm1362
        %vm1395 = vmand %vm595, %vm1363
        %vm1396 = vmand %vm596, %vm1364
        %vm1397 = vmand %vm597, %vm1365
        %vm1398 = vmand %vm598, %vm1366
        %vm1399 = vmand %vm599, %vm1367
        %vm1400 = vmand %vm600, %vm1368
        %vm1401 = vmand %vm601, %vm1369
        %vm1402 = vmand %vm602, %vm1370
        %vm1403 = vmand %vm603, %vm1371
        %vm1404 = vmand %vm604, %vm1372
        %vm1405 = vmand %vm605, %vm1373
        %vm1406 = vmand %vm606, %vm1374
        %vm1407 = vmand %vm607, %vm1375
        %vm1408 = vmand %vm608, %vm1376
        %vm1409 = vmand %vm609, %vm1377
        %vm1410 = vmand %vm610, %vm1378
        %vm1411 = vmand %vm611, %vm1379
        %vm1412 = vmand %vm612, %vm1380
        %vm1413 = vmand %vm613, %vm1381
        %vm1414 = vmand %vm614, %vm1382
        %vm1415 = vmand %vm615, %vm1383
        %vm1416 = vmand %vm616, %vm1384
        %vm1417 = vmand %vm617, %vm1385
        %vm1418 = vcmp.lt.s32.totalorder %v1322, 16
        %vm1419 = vcmp.lt.s32.totalorder %v1323, 16
        %vm1420 = vcmp.lt.s32.totalorder %v1324, 16
        %vm1421 = vcmp.lt.s32.totalorder %v1325, 16
        %vm1422 = vcmp.lt.s32.totalorder %v1326, 16
        %vm1423 = vcmp.lt.s32.totalorder %v1327, 16
        %vm1424 = vcmp.lt.s32.totalorder %v1328, 16
        %vm1425 = vcmp.lt.s32.totalorder %v1329, 16
        %vm1426 = vcmp.lt.s32.totalorder %v1330, 16
        %vm1427 = vcmp.lt.s32.totalorder %v1331, 16
        %vm1428 = vcmp.lt.s32.totalorder %v1332, 16
        %vm1429 = vcmp.lt.s32.totalorder %v1333, 16
        %vm1430 = vcmp.lt.s32.totalorder %v1334, 16
        %vm1431 = vcmp.lt.s32.totalorder %v1335, 16
        %vm1432 = vcmp.lt.s32.totalorder %v1336, 16
        %vm1433 = vcmp.lt.s32.totalorder %v1337, 16
        %vm1434 = vcmp.lt.s32.totalorder %v1338, 16
        %vm1435 = vcmp.lt.s32.totalorder %v1339, 16
        %vm1436 = vcmp.lt.s32.totalorder %v1340, 16
        %vm1437 = vcmp.lt.s32.totalorder %v1341, 16
        %vm1438 = vcmp.lt.s32.totalorder %v1342, 16
        %vm1439 = vcmp.lt.s32.totalorder %v1343, 16
        %vm1440 = vcmp.lt.s32.totalorder %v1344, 16
        %vm1441 = vcmp.lt.s32.totalorder %v1345, 16
        %vm1442 = vcmp.lt.s32.totalorder %v1346, 16
        %vm1443 = vcmp.lt.s32.totalorder %v1347, 16
        %vm1444 = vcmp.lt.s32.totalorder %v1348, 16
        %vm1445 = vcmp.lt.s32.totalorder %v1349, 16
        %vm1446 = vcmp.lt.s32.totalorder %v1350, 16
        %vm1447 = vcmp.lt.s32.totalorder %v1351, 16
        %vm1448 = vcmp.lt.s32.totalorder %v1352, 16
        %vm1449 = vcmp.lt.s32.totalorder %v1353, 16
        %vm1450 = vmand %vm1386, %vm1418
        %vm1451 = vmand %vm1387, %vm1419
        %vm1452 = vmand %vm1388, %vm1420
        %vm1453 = vmand %vm1389, %vm1421
        %vm1454 = vmand %vm1390, %vm1422
        %vm1455 = vmand %vm1391, %vm1423
        %vm1456 = vmand %vm1392, %vm1424
        %vm1457 = vmand %vm1393, %vm1425
        %vm1458 = vmand %vm1394, %vm1426
        %vm1459 = vmand %vm1395, %vm1427
        %vm1460 = vmand %vm1396, %vm1428
        %vm1461 = vmand %vm1397, %vm1429
        %vm1462 = vmand %vm1398, %vm1430
        %vm1463 = vmand %vm1399, %vm1431
        %vm1464 = vmand %vm1400, %vm1432
        %vm1465 = vmand %vm1401, %vm1433
        %vm1466 = vmand %vm1402, %vm1434
        %vm1467 = vmand %vm1403, %vm1435
        %vm1468 = vmand %vm1404, %vm1436
        %vm1469 = vmand %vm1405, %vm1437
        %vm1470 = vmand %vm1406, %vm1438
        %vm1471 = vmand %vm1407, %vm1439
        %vm1472 = vmand %vm1408, %vm1440
        %vm1473 = vmand %vm1409, %vm1441
        %vm1474 = vmand %vm1410, %vm1442
        %vm1475 = vmand %vm1411, %vm1443
        %vm1476 = vmand %vm1412, %vm1444
        %vm1477 = vmand %vm1413, %vm1445
        %vm1478 = vmand %vm1414, %vm1446
        %vm1479 = vmand %vm1415, %vm1447
        %vm1480 = vmand %vm1416, %vm1448
        %vm1481 = vmand %vm1417, %vm1449
        %vm1482 = vmand %vm842, %vm1354
        %vm1483 = vmand %vm843, %vm1355
        %vm1484 = vmand %vm844, %vm1356
        %vm1485 = vmand %vm845, %vm1357
        %vm1486 = vmand %vm846, %vm1358
        %vm1487 = vmand %vm847, %vm1359
        %vm1488 = vmand %vm848, %vm1360
        %vm1489 = vmand %vm849, %vm1361
        %vm1490 = vmand %vm850, %vm1362
        %vm1491 = vmand %vm851, %vm1363
        %vm1492 = vmand %vm852, %vm1364
        %vm1493 = vmand %vm853, %vm1365
        %vm1494 = vmand %vm854, %vm1366
        %vm1495 = vmand %vm855, %vm1367
        %vm1496 = vmand %vm856, %vm1368
        %vm1497 = vmand %vm857, %vm1369
        %vm1498 = vmand %vm858, %vm1370
        %vm1499 = vmand %vm859, %vm1371
        %vm1500 = vmand %vm860, %vm1372
        %vm1501 = vmand %vm861, %vm1373
        %vm1502 = vmand %vm862, %vm1374
        %vm1503 = vmand %vm863, %vm1375
        %vm1504 = vmand %vm864, %vm1376
        %vm1505 = vmand %vm865, %vm1377
        %vm1506 = vmand %vm866, %vm1378
        %vm1507 = vmand %vm867, %vm1379
        %vm1508 = vmand %vm868, %vm1380
        %vm1509 = vmand %vm869, %vm1381
        %vm1510 = vmand %vm870, %vm1382
        %vm1511 = vmand %vm871, %vm1383
        %vm1512 = vmand %vm872, %vm1384
        %vm1513 = vmand %vm873, %vm1385
        %vm1514 = vmand %vm1482, %vm1418
        %vm1515 = vmand %vm1483, %vm1419
        %vm1516 = vmand %vm1484, %vm1420
        %vm1517 = vmand %vm1485, %vm1421
        %vm1518 = vmand %vm1486, %vm1422
        %vm1519 = vmand %vm1487, %vm1423
        %vm1520 = vmand %vm1488, %vm1424
        %vm1521 = vmand %vm1489, %vm1425
        %vm1522 = vmand %vm1490, %vm1426
        %vm1523 = vmand %vm1491, %vm1427
        %vm1524 = vmand %vm1492, %vm1428
        %vm1525 = vmand %vm1493, %vm1429
        %vm1526 = vmand %vm1494, %vm1430
        %vm1527 = vmand %vm1495, %vm1431
        %vm1528 = vmand %vm1496, %vm1432
        %vm1529 = vmand %vm1497, %vm1433
        %vm1530 = vmand %vm1498, %vm1434
        %vm1531 = vmand %vm1499, %vm1435
        %vm1532 = vmand %vm1500, %vm1436
        %vm1533 = vmand %vm1501, %vm1437
        %vm1534 = vmand %vm1502, %vm1438
        %vm1535 = vmand %vm1503, %vm1439
        %vm1536 = vmand %vm1504, %vm1440
        %vm1537 = vmand %vm1505, %vm1441
        %vm1538 = vmand %vm1506, %vm1442
        %vm1539 = vmand %vm1507, %vm1443
        %vm1540 = vmand %vm1508, %vm1444
        %vm1541 = vmand %vm1509, %vm1445
        %vm1542 = vmand %vm1510, %vm1446
        %vm1543 = vmand %vm1511, %vm1447
        %vm1544 = vmand %vm1512, %vm1448
        %vm1545 = vmand %vm1513, %vm1449
        %vm1546 = vmand %vm1034, %vm1354
        %vm1547 = vmand %vm1035, %vm1355
        %vm1548 = vmand %vm1036, %vm1356
        %vm1549 = vmand %vm1037, %vm1357
        %vm1550 = vmand %vm1038, %vm1358
        %vm1551 = vmand %vm1039, %vm1359
        %vm1552 = vmand %vm1040, %vm1360
        %vm1553 = vmand %vm1041, %vm1361
        %vm1554 = vmand %vm1042, %vm1362
        %vm1555 = vmand %vm1043, %vm1363
        %vm1556 = vmand %vm1044, %vm1364
        %vm1557 = vmand %vm1045, %vm1365
        %vm1558 = vmand %vm1046, %vm1366
        %vm1559 = vmand %vm1047, %vm1367
        %vm1560 = vmand %vm1048, %vm1368
        %vm1561 = vmand %vm1049, %vm1369
        %vm1562 = vmand %vm1050, %vm1370
        %vm1563 = vmand %vm1051, %vm1371
        %vm1564 = vmand %vm1052, %vm1372
        %vm1565 = vmand %vm1053, %vm1373
        %vm1566 = vmand %vm1054, %vm1374
        %vm1567 = vmand %vm1055, %vm1375
        %vm1568 = vmand %vm1056, %vm1376
        %vm1569 = vmand %vm1057, %vm1377
        %vm1570 = vmand %vm1058, %vm1378
        %vm1571 = vmand %vm1059, %vm1379
        %vm1572 = vmand %vm1060, %vm1380
        %vm1573 = vmand %vm1061, %vm1381
        %vm1574 = vmand %vm1062, %vm1382
        %vm1575 = vmand %vm1063, %vm1383
        %vm1576 = vmand %vm1064, %vm1384
        %vm1577 = vmand %vm1065, %vm1385
        %vm1578 = vmand %vm1546, %vm1418
        %vm1579 = vmand %vm1547, %vm1419
        %vm1580 = vmand %vm1548, %vm1420
        %vm1581 = vmand %vm1549, %vm1421
        %vm1582 = vmand %vm1550, %vm1422
        %vm1583 = vmand %vm1551, %vm1423
        %vm1584 = vmand %vm1552, %vm1424
        %vm1585 = vmand %vm1553, %vm1425
        %vm1586 = vmand %vm1554, %vm1426
        %vm1587 = vmand %vm1555, %vm1427
        %vm1588 = vmand %vm1556, %vm1428
        %vm1589 = vmand %vm1557, %vm1429
        %vm1590 = vmand %vm1558, %vm1430
        %vm1591 = vmand %vm1559, %vm1431
        %vm1592 = vmand %vm1560, %vm1432
        %vm1593 = vmand %vm1561, %vm1433
        %vm1594 = vmand %vm1562, %vm1434
        %vm1595 = vmand %vm1563, %vm1435
        %vm1596 = vmand %vm1564, %vm1436
        %vm1597 = vmand %vm1565, %vm1437
        %vm1598 = vmand %vm1566, %vm1438
        %vm1599 = vmand %vm1567, %vm1439
        %vm1600 = vmand %vm1568, %vm1440
        %vm1601 = vmand %vm1569, %vm1441
        %vm1602 = vmand %vm1570, %vm1442
        %vm1603 = vmand %vm1571, %vm1443
        %vm1604 = vmand %vm1572, %vm1444
        %vm1605 = vmand %vm1573, %vm1445
        %vm1606 = vmand %vm1574, %vm1446
        %vm1607 = vmand %vm1575, %vm1447
        %vm1608 = vmand %vm1576, %vm1448
        %vm1609 = vmand %vm1577, %vm1449
        %v1610 = vrot.slane %v329, 7
        %v1611 = vrot.slane %v330, 7
        %v1612 = vrot.slane %v331, 7
        %v1613 = vrot.slane %v332, 7
        %v1614 = vrot.slane %v333, 7
        %v1615 = vrot.slane %v334, 7
        %v1616 = vrot.slane %v335, 7
        %v1617 = vrot.slane %v336, 7
        %v1618 = vrot.slane %v337, 7
        %v1619 = vrot.slane %v338, 7
        %v1620 = vrot.slane %v339, 7
        %v1621 = vrot.slane %v340, 7
        %v1622 = vrot.slane %v341, 7
        %v1623 = vrot.slane %v342, 7
        %v1624 = vrot.slane %v343, 7
        %v1625 = vrot.slane %v344, 7
        %v1626 = vrot.slane %v345, 7
        %v1627 = vrot.slane %v346, 7
        %v1628 = vrot.slane %v347, 7
        %v1629 = vrot.slane %v348, 7
        %v1630 = vrot.slane %v349, 7
        %v1631 = vrot.slane %v350, 7
        %v1632 = vrot.slane %v351, 7
        %v1633 = vrot.slane %v352, 7
        %v1634 = vrot.slane %v353, 7
        %v1635 = vrot.slane %v354, 7
        %v1636 = vrot.slane %v355, 7
        %v1637 = vrot.slane %v356, 7
        %v1638 = vrot.slane %v357, 7
        %v1639 = vrot.slane %v358, 7
        %v1640 = vrot.slane %v359, 7
        %v1641 = vrot.slane %v360, 7
        %vm1642 = vcmp.lt.s32.totalorder %v362, 1
        %v1643 = vsel %vm1642, %v1640, %v1641
        %v1644 = vsel %vm1642, %v1639, %v1640
        %v1645 = vsel %vm1642, %v1638, %v1639
        %v1646 = vsel %vm1642, %v1637, %v1638
        %v1647 = vsel %vm1642, %v1636, %v1637
        %v1648 = vsel %vm1642, %v1635, %v1636
        %v1649 = vsel %vm1642, %v1634, %v1635
        %v1650 = vsel %vm1642, %v1633, %v1634
        %v1651 = vsel %vm1642, %v1632, %v1633
        %v1652 = vsel %vm1642, %v1631, %v1632
        %v1653 = vsel %vm1642, %v1630, %v1631
        %v1654 = vsel %vm1642, %v1629, %v1630
        %v1655 = vsel %vm1642, %v1628, %v1629
        %v1656 = vsel %vm1642, %v1627, %v1628
        %v1657 = vsel %vm1642, %v1626, %v1627
        %v1658 = vsel %vm1642, %v1625, %v1626
        %v1659 = vsel %vm1642, %v1624, %v1625
        %v1660 = vsel %vm1642, %v1623, %v1624
        %v1661 = vsel %vm1642, %v1622, %v1623
        %v1662 = vsel %vm1642, %v1621, %v1622
        %v1663 = vsel %vm1642, %v1620, %v1621
        %v1664 = vsel %vm1642, %v1619, %v1620
        %v1665 = vsel %vm1642, %v1618, %v1619
        %v1666 = vsel %vm1642, %v1617, %v1618
        %v1667 = vsel %vm1642, %v1616, %v1617
        %v1668 = vsel %vm1642, %v1615, %v1616
        %v1669 = vsel %vm1642, %v1614, %v1615
        %v1670 = vsel %vm1642, %v1613, %v1614
        %v1671 = vsel %vm1642, %v1612, %v1613
        %v1672 = vsel %vm1642, %v1611, %v1612
        %v1673 = vsel %vm1642, %v1610, %v1611
        %v1674 = vsel %vm1642, %v1641, %v1610
        %v1675 = vsel %vm746, 1, 0
        %v1676 = vsel %vm747, 1, 0
        %v1677 = vsel %vm748, 1, 0
        %v1678 = vsel %vm749, 1, 0
        %v1679 = vsel %vm750, 1, 0
        %v1680 = vsel %vm751, 1, 0
        %v1681 = vsel %vm752, 1, 0
        %v1682 = vsel %vm753, 1, 0
        %v1683 = vsel %vm754, 1, 0
        %v1684 = vsel %vm755, 1, 0
        %v1685 = vsel %vm756, 1, 0
        %v1686 = vsel %vm757, 1, 0
        %v1687 = vsel %vm758, 1, 0
        %v1688 = vsel %vm759, 1, 0
        %v1689 = vsel %vm760, 1, 0
        %v1690 = vsel %vm761, 1, 0
        %v1691 = vsel %vm762, 1, 0
        %v1692 = vsel %vm763, 1, 0
        %v1693 = vsel %vm764, 1, 0
        %v1694 = vsel %vm765, 1, 0
        %v1695 = vsel %vm766, 1, 0
        %v1696 = vsel %vm767, 1, 0
        %v1697 = vsel %vm768, 1, 0
        %v1698 = vsel %vm769, 1, 0
        %v1699 = vsel %vm770, 1, 0
        %v1700 = vsel %vm771, 1, 0
        %v1701 = vsel %vm772, 1, 0
        %v1702 = vsel %vm773, 1, 0
        %v1703 = vsel %vm774, 1, 0
        %v1704 = vsel %vm775, 1, 0
        %v1705 = vsel %vm776, 1, 0
        %v1706 = vsel %vm777, 1, 0
        %vm1707 = vcmp.eq.s32.totalorder %v1675, 1
        %vm1708 = vcmp.eq.s32.totalorder %v1676, 1
        %vm1709 = vcmp.eq.s32.totalorder %v1677, 1
        %vm1710 = vcmp.eq.s32.totalorder %v1678, 1
        %vm1711 = vcmp.eq.s32.totalorder %v1679, 1
        %vm1712 = vcmp.eq.s32.totalorder %v1680, 1
        %vm1713 = vcmp.eq.s32.totalorder %v1681, 1
        %vm1714 = vcmp.eq.s32.totalorder %v1682, 1
        %vm1715 = vcmp.eq.s32.totalorder %v1683, 1
        %vm1716 = vcmp.eq.s32.totalorder %v1684, 1
        %vm1717 = vcmp.eq.s32.totalorder %v1685, 1
        %vm1718 = vcmp.eq.s32.totalorder %v1686, 1
        %vm1719 = vcmp.eq.s32.totalorder %v1687, 1
        %vm1720 = vcmp.eq.s32.totalorder %v1688, 1
        %vm1721 = vcmp.eq.s32.totalorder %v1689, 1
        %vm1722 = vcmp.eq.s32.totalorder %v1690, 1
        %vm1723 = vcmp.eq.s32.totalorder %v1691, 1
        %vm1724 = vcmp.eq.s32.totalorder %v1692, 1
        %vm1725 = vcmp.eq.s32.totalorder %v1693, 1
        %vm1726 = vcmp.eq.s32.totalorder %v1694, 1
        %vm1727 = vcmp.eq.s32.totalorder %v1695, 1
        %vm1728 = vcmp.eq.s32.totalorder %v1696, 1
        %vm1729 = vcmp.eq.s32.totalorder %v1697, 1
        %vm1730 = vcmp.eq.s32.totalorder %v1698, 1
        %vm1731 = vcmp.eq.s32.totalorder %v1699, 1
        %vm1732 = vcmp.eq.s32.totalorder %v1700, 1
        %vm1733 = vcmp.eq.s32.totalorder %v1701, 1
        %vm1734 = vcmp.eq.s32.totalorder %v1702, 1
        %vm1735 = vcmp.eq.s32.totalorder %v1703, 1
        %vm1736 = vcmp.eq.s32.totalorder %v1704, 1
        %vm1737 = vcmp.eq.s32.totalorder %v1705, 1
        %vm1738 = vcmp.eq.s32.totalorder %v1706, 1
        %v1739 = vsel %vm1707, %v1644, 0.0
        %v1740 = vsel %vm1708, %v1643, 0.0
        %v1741 = vsel %vm1709, %v1674, 0.0
        %v1742 = vsel %vm1710, %v1673, 0.0
        %v1743 = vsel %vm1711, %v1672, 0.0
        %v1744 = vsel %vm1712, %v1671, 0.0
        %v1745 = vsel %vm1713, %v1670, 0.0
        %v1746 = vsel %vm1714, %v1669, 0.0
        %v1747 = vsel %vm1715, %v1668, 0.0
        %v1748 = vsel %vm1716, %v1667, 0.0
        %v1749 = vsel %vm1717, %v1666, 0.0
        %v1750 = vsel %vm1718, %v1665, 0.0
        %v1751 = vsel %vm1719, %v1664, 0.0
        %v1752 = vsel %vm1720, %v1663, 0.0
        %v1753 = vsel %vm1721, %v1662, 0.0
        %v1754 = vsel %vm1722, %v1661, 0.0
        %v1755 = vsel %vm1723, %v1660, 0.0
        %v1756 = vsel %vm1724, %v1659, 0.0
        %v1757 = vsel %vm1725, %v1658, 0.0
        %v1758 = vsel %vm1726, %v1657, 0.0
        %v1759 = vsel %vm1727, %v1656, 0.0
        %v1760 = vsel %vm1728, %v1655, 0.0
        %v1761 = vsel %vm1729, %v1654, 0.0
        %v1762 = vsel %vm1730, %v1653, 0.0
        %v1763 = vsel %vm1731, %v1652, 0.0
        %v1764 = vsel %vm1732, %v1651, 0.0
        %v1765 = vsel %vm1733, %v1650, 0.0
        %v1766 = vsel %vm1734, %v1649, 0.0
        %v1767 = vsel %vm1735, %v1648, 0.0
        %v1768 = vsel %vm1736, %v1647, 0.0
        %v1769 = vsel %vm1737, %v1646, 0.0
        %v1770 = vsel %vm1738, %v1645, 0.0
        %v1771 = vpack.c.bf16 %v1740, %v1739
        %v1772 = vpack.c.bf16 %v1742, %v1741
        %v1773 = vpack.c.bf16 %v1744, %v1743
        %v1774 = vpack.c.bf16 %v1746, %v1745
        %v1775 = vpack.c.bf16 %v1748, %v1747
        %v1776 = vpack.c.bf16 %v1750, %v1749
        %v1777 = vpack.c.bf16 %v1752, %v1751
        %v1778 = vpack.c.bf16 %v1754, %v1753
        %v1779 = vpack.c.bf16 %v1756, %v1755
        %v1780 = vpack.c.bf16 %v1758, %v1757
        %v1781 = vpack.c.bf16 %v1760, %v1759
        %v1782 = vpack.c.bf16 %v1762, %v1761
        %v1783 = vpack.c.bf16 %v1764, %v1763
        %v1784 = vpack.c.bf16 %v1766, %v1765
        %v1785 = vpack.c.bf16 %v1768, %v1767
        %v1786 = vpack.c.bf16 %v1770, %v1769
        %v1787 = vsel %vm906, 1, 0
        %v1788 = vsel %vm907, 1, 0
        %v1789 = vsel %vm908, 1, 0
        %v1790 = vsel %vm909, 1, 0
        %v1791 = vsel %vm910, 1, 0
        %v1792 = vsel %vm911, 1, 0
        %v1793 = vsel %vm912, 1, 0
        %v1794 = vsel %vm913, 1, 0
        %v1795 = vsel %vm914, 1, 0
        %v1796 = vsel %vm915, 1, 0
        %v1797 = vsel %vm916, 1, 0
        %v1798 = vsel %vm917, 1, 0
        %v1799 = vsel %vm918, 1, 0
        %v1800 = vsel %vm919, 1, 0
        %v1801 = vsel %vm920, 1, 0
        %v1802 = vsel %vm921, 1, 0
        %v1803 = vsel %vm922, 1, 0
        %v1804 = vsel %vm923, 1, 0
        %v1805 = vsel %vm924, 1, 0
        %v1806 = vsel %vm925, 1, 0
        %v1807 = vsel %vm926, 1, 0
        %v1808 = vsel %vm927, 1, 0
        %v1809 = vsel %vm928, 1, 0
        %v1810 = vsel %vm929, 1, 0
        %v1811 = vsel %vm930, 1, 0
        %v1812 = vsel %vm931, 1, 0
        %v1813 = vsel %vm932, 1, 0
        %v1814 = vsel %vm933, 1, 0
        %v1815 = vsel %vm934, 1, 0
        %v1816 = vsel %vm935, 1, 0
        %v1817 = vsel %vm936, 1, 0
        %v1818 = vsel %vm937, 1, 0
        %vm1819 = vcmp.eq.s32.totalorder %v1787, 1
        %vm1820 = vcmp.eq.s32.totalorder %v1788, 1
        %vm1821 = vcmp.eq.s32.totalorder %v1789, 1
        %vm1822 = vcmp.eq.s32.totalorder %v1790, 1
        %vm1823 = vcmp.eq.s32.totalorder %v1791, 1
        %vm1824 = vcmp.eq.s32.totalorder %v1792, 1
        %vm1825 = vcmp.eq.s32.totalorder %v1793, 1
        %vm1826 = vcmp.eq.s32.totalorder %v1794, 1
        %vm1827 = vcmp.eq.s32.totalorder %v1795, 1
        %vm1828 = vcmp.eq.s32.totalorder %v1796, 1
        %vm1829 = vcmp.eq.s32.totalorder %v1797, 1
        %vm1830 = vcmp.eq.s32.totalorder %v1798, 1
        %vm1831 = vcmp.eq.s32.totalorder %v1799, 1
        %vm1832 = vcmp.eq.s32.totalorder %v1800, 1
        %vm1833 = vcmp.eq.s32.totalorder %v1801, 1
        %vm1834 = vcmp.eq.s32.totalorder %v1802, 1
        %vm1835 = vcmp.eq.s32.totalorder %v1803, 1
        %vm1836 = vcmp.eq.s32.totalorder %v1804, 1
        %vm1837 = vcmp.eq.s32.totalorder %v1805, 1
        %vm1838 = vcmp.eq.s32.totalorder %v1806, 1
        %vm1839 = vcmp.eq.s32.totalorder %v1807, 1
        %vm1840 = vcmp.eq.s32.totalorder %v1808, 1
        %vm1841 = vcmp.eq.s32.totalorder %v1809, 1
        %vm1842 = vcmp.eq.s32.totalorder %v1810, 1
        %vm1843 = vcmp.eq.s32.totalorder %v1811, 1
        %vm1844 = vcmp.eq.s32.totalorder %v1812, 1
        %vm1845 = vcmp.eq.s32.totalorder %v1813, 1
        %vm1846 = vcmp.eq.s32.totalorder %v1814, 1
        %vm1847 = vcmp.eq.s32.totalorder %v1815, 1
        %vm1848 = vcmp.eq.s32.totalorder %v1816, 1
        %vm1849 = vcmp.eq.s32.totalorder %v1817, 1
        %vm1850 = vcmp.eq.s32.totalorder %v1818, 1
        %v1851 = vsel %vm1819, %v359, 0.0
        %v1852 = vsel %vm1820, %v360, 0.0
        %v1853 = vsel %vm1821, %v329, 0.0
        %v1854 = vsel %vm1822, %v330, 0.0
        %v1855 = vsel %vm1823, %v331, 0.0
        %v1856 = vsel %vm1824, %v332, 0.0
        %v1857 = vsel %vm1825, %v333, 0.0
        %v1858 = vsel %vm1826, %v334, 0.0
        %v1859 = vsel %vm1827, %v335, 0.0
        %v1860 = vsel %vm1828, %v336, 0.0
        %v1861 = vsel %vm1829, %v337, 0.0
        %v1862 = vsel %vm1830, %v338, 0.0
        %v1863 = vsel %vm1831, %v339, 0.0
        %v1864 = vsel %vm1832, %v340, 0.0
        %v1865 = vsel %vm1833, %v341, 0.0
        %v1866 = vsel %vm1834, %v342, 0.0
        %v1867 = vsel %vm1835, %v343, 0.0
        %v1868 = vsel %vm1836, %v344, 0.0
        %v1869 = vsel %vm1837, %v345, 0.0
        %v1870 = vsel %vm1838, %v346, 0.0
        %v1871 = vsel %vm1839, %v347, 0.0
        %v1872 = vsel %vm1840, %v348, 0.0
        %v1873 = vsel %vm1841, %v349, 0.0
        %v1874 = vsel %vm1842, %v350, 0.0
        %v1875 = vsel %vm1843, %v351, 0.0
        %v1876 = vsel %vm1844, %v352, 0.0
        %v1877 = vsel %vm1845, %v353, 0.0
        %v1878 = vsel %vm1846, %v354, 0.0
        %v1879 = vsel %vm1847, %v355, 0.0
        %v1880 = vsel %vm1848, %v356, 0.0
        %v1881 = vsel %vm1849, %v357, 0.0
        %v1882 = vsel %vm1850, %v358, 0.0
        %v1883 = vpack.c.bf16 %v1852, %v1851
        %v1884 = vpack.c.bf16 %v1854, %v1853
        %v1885 = vpack.c.bf16 %v1856, %v1855
        %v1886 = vpack.c.bf16 %v1858, %v1857
        %v1887 = vpack.c.bf16 %v1860, %v1859
        %v1888 = vpack.c.bf16 %v1862, %v1861
        %v1889 = vpack.c.bf16 %v1864, %v1863
        %v1890 = vpack.c.bf16 %v1866, %v1865
        %v1891 = vpack.c.bf16 %v1868, %v1867
        %v1892 = vpack.c.bf16 %v1870, %v1869
        %v1893 = vpack.c.bf16 %v1872, %v1871
        %v1894 = vpack.c.bf16 %v1874, %v1873
        %v1895 = vpack.c.bf16 %v1876, %v1875
        %v1896 = vpack.c.bf16 %v1878, %v1877
        %v1897 = vpack.c.bf16 %v1880, %v1879
        %v1898 = vpack.c.bf16 %v1882, %v1881
        %v1899 = vrot.slane %v329, 1
        %v1900 = vrot.slane %v330, 1
        %v1901 = vrot.slane %v331, 1
        %v1902 = vrot.slane %v332, 1
        %v1903 = vrot.slane %v333, 1
        %v1904 = vrot.slane %v334, 1
        %v1905 = vrot.slane %v335, 1
        %v1906 = vrot.slane %v336, 1
        %v1907 = vrot.slane %v337, 1
        %v1908 = vrot.slane %v338, 1
        %v1909 = vrot.slane %v339, 1
        %v1910 = vrot.slane %v340, 1
        %v1911 = vrot.slane %v341, 1
        %v1912 = vrot.slane %v342, 1
        %v1913 = vrot.slane %v343, 1
        %v1914 = vrot.slane %v344, 1
        %v1915 = vrot.slane %v345, 1
        %v1916 = vrot.slane %v346, 1
        %v1917 = vrot.slane %v347, 1
        %v1918 = vrot.slane %v348, 1
        %v1919 = vrot.slane %v349, 1
        %v1920 = vrot.slane %v350, 1
        %v1921 = vrot.slane %v351, 1
        %v1922 = vrot.slane %v352, 1
        %v1923 = vrot.slane %v353, 1
        %v1924 = vrot.slane %v354, 1
        %v1925 = vrot.slane %v355, 1
        %v1926 = vrot.slane %v356, 1
        %v1927 = vrot.slane %v357, 1
        %v1928 = vrot.slane %v358, 1
        %v1929 = vrot.slane %v359, 1
        %v1930 = vrot.slane %v360, 1
        %vm1931 = vcmp.lt.s32.totalorder %v362, 7
        %v1932 = vsel %vm1931, %v1929, %v1930
        %v1933 = vsel %vm1931, %v1928, %v1929
        %v1934 = vsel %vm1931, %v1927, %v1928
        %v1935 = vsel %vm1931, %v1926, %v1927
        %v1936 = vsel %vm1931, %v1925, %v1926
        %v1937 = vsel %vm1931, %v1924, %v1925
        %v1938 = vsel %vm1931, %v1923, %v1924
        %v1939 = vsel %vm1931, %v1922, %v1923
        %v1940 = vsel %vm1931, %v1921, %v1922
        %v1941 = vsel %vm1931, %v1920, %v1921
        %v1942 = vsel %vm1931, %v1919, %v1920
        %v1943 = vsel %vm1931, %v1918, %v1919
        %v1944 = vsel %vm1931, %v1917, %v1918
        %v1945 = vsel %vm1931, %v1916, %v1917
        %v1946 = vsel %vm1931, %v1915, %v1916
        %v1947 = vsel %vm1931, %v1914, %v1915
        %v1948 = vsel %vm1931, %v1913, %v1914
        %v1949 = vsel %vm1931, %v1912, %v1913
        %v1950 = vsel %vm1931, %v1911, %v1912
        %v1951 = vsel %vm1931, %v1910, %v1911
        %v1952 = vsel %vm1931, %v1909, %v1910
        %v1953 = vsel %vm1931, %v1908, %v1909
        %v1954 = vsel %vm1931, %v1907, %v1908
        %v1955 = vsel %vm1931, %v1906, %v1907
        %v1956 = vsel %vm1931, %v1905, %v1906
        %v1957 = vsel %vm1931, %v1904, %v1905
        %v1958 = vsel %vm1931, %v1903, %v1904
        %v1959 = vsel %vm1931, %v1902, %v1903
        %v1960 = vsel %vm1931, %v1901, %v1902
        %v1961 = vsel %vm1931, %v1900, %v1901
        %v1962 = vsel %vm1931, %v1899, %v1900
        %v1963 = vsel %vm1931, %v1930, %v1899
        %v1964 = vsel %vm1098, 1, 0
        %v1965 = vsel %vm1099, 1, 0
        %v1966 = vsel %vm1100, 1, 0
        %v1967 = vsel %vm1101, 1, 0
        %v1968 = vsel %vm1102, 1, 0
        %v1969 = vsel %vm1103, 1, 0
        %v1970 = vsel %vm1104, 1, 0
        %v1971 = vsel %vm1105, 1, 0
        %v1972 = vsel %vm1106, 1, 0
        %v1973 = vsel %vm1107, 1, 0
        %v1974 = vsel %vm1108, 1, 0
        %v1975 = vsel %vm1109, 1, 0
        %v1976 = vsel %vm1110, 1, 0
        %v1977 = vsel %vm1111, 1, 0
        %v1978 = vsel %vm1112, 1, 0
        %v1979 = vsel %vm1113, 1, 0
        %v1980 = vsel %vm1114, 1, 0
        %v1981 = vsel %vm1115, 1, 0
        %v1982 = vsel %vm1116, 1, 0
        %v1983 = vsel %vm1117, 1, 0
        %v1984 = vsel %vm1118, 1, 0
        %v1985 = vsel %vm1119, 1, 0
        %v1986 = vsel %vm1120, 1, 0
        %v1987 = vsel %vm1121, 1, 0
        %v1988 = vsel %vm1122, 1, 0
        %v1989 = vsel %vm1123, 1, 0
        %v1990 = vsel %vm1124, 1, 0
        %v1991 = vsel %vm1125, 1, 0
        %v1992 = vsel %vm1126, 1, 0
        %v1993 = vsel %vm1127, 1, 0
        %v1994 = vsel %vm1128, 1, 0
        %v1995 = vsel %vm1129, 1, 0
        %vm1996 = vcmp.eq.s32.totalorder %v1964, 1
        %vm1997 = vcmp.eq.s32.totalorder %v1965, 1
        %vm1998 = vcmp.eq.s32.totalorder %v1966, 1
        %vm1999 = vcmp.eq.s32.totalorder %v1967, 1
        %vm2000 = vcmp.eq.s32.totalorder %v1968, 1
        %vm2001 = vcmp.eq.s32.totalorder %v1969, 1
        %vm2002 = vcmp.eq.s32.totalorder %v1970, 1
        %vm2003 = vcmp.eq.s32.totalorder %v1971, 1
        %vm2004 = vcmp.eq.s32.totalorder %v1972, 1
        %vm2005 = vcmp.eq.s32.totalorder %v1973, 1
        %vm2006 = vcmp.eq.s32.totalorder %v1974, 1
        %vm2007 = vcmp.eq.s32.totalorder %v1975, 1
        %vm2008 = vcmp.eq.s32.totalorder %v1976, 1
        %vm2009 = vcmp.eq.s32.totalorder %v1977, 1
        %vm2010 = vcmp.eq.s32.totalorder %v1978, 1
        %vm2011 = vcmp.eq.s32.totalorder %v1979, 1
        %vm2012 = vcmp.eq.s32.totalorder %v1980, 1
        %vm2013 = vcmp.eq.s32.totalorder %v1981, 1
        %vm2014 = vcmp.eq.s32.totalorder %v1982, 1
        %vm2015 = vcmp.eq.s32.totalorder %v1983, 1
        %vm2016 = vcmp.eq.s32.totalorder %v1984, 1
        %vm2017 = vcmp.eq.s32.totalorder %v1985, 1
        %vm2018 = vcmp.eq.s32.totalorder %v1986, 1
        %vm2019 = vcmp.eq.s32.totalorder %v1987, 1
        %vm2020 = vcmp.eq.s32.totalorder %v1988, 1
        %vm2021 = vcmp.eq.s32.totalorder %v1989, 1
        %vm2022 = vcmp.eq.s32.totalorder %v1990, 1
        %vm2023 = vcmp.eq.s32.totalorder %v1991, 1
        %vm2024 = vcmp.eq.s32.totalorder %v1992, 1
        %vm2025 = vcmp.eq.s32.totalorder %v1993, 1
        %vm2026 = vcmp.eq.s32.totalorder %v1994, 1
        %vm2027 = vcmp.eq.s32.totalorder %v1995, 1
        %v2028 = vsel %vm1996, %v1932, 0.0
        %v2029 = vsel %vm1997, %v1963, 0.0
        %v2030 = vsel %vm1998, %v1962, 0.0
        %v2031 = vsel %vm1999, %v1961, 0.0
        %v2032 = vsel %vm2000, %v1960, 0.0
        %v2033 = vsel %vm2001, %v1959, 0.0
        %v2034 = vsel %vm2002, %v1958, 0.0
        %v2035 = vsel %vm2003, %v1957, 0.0
        %v2036 = vsel %vm2004, %v1956, 0.0
        %v2037 = vsel %vm2005, %v1955, 0.0
        %v2038 = vsel %vm2006, %v1954, 0.0
        %v2039 = vsel %vm2007, %v1953, 0.0
        %v2040 = vsel %vm2008, %v1952, 0.0
        %v2041 = vsel %vm2009, %v1951, 0.0
        %v2042 = vsel %vm2010, %v1950, 0.0
        %v2043 = vsel %vm2011, %v1949, 0.0
        %v2044 = vsel %vm2012, %v1948, 0.0
        %v2045 = vsel %vm2013, %v1947, 0.0
        %v2046 = vsel %vm2014, %v1946, 0.0
        %v2047 = vsel %vm2015, %v1945, 0.0
        %v2048 = vsel %vm2016, %v1944, 0.0
        %v2049 = vsel %vm2017, %v1943, 0.0
        %v2050 = vsel %vm2018, %v1942, 0.0
        %v2051 = vsel %vm2019, %v1941, 0.0
        %v2052 = vsel %vm2020, %v1940, 0.0
        %v2053 = vsel %vm2021, %v1939, 0.0
        %v2054 = vsel %vm2022, %v1938, 0.0
        %v2055 = vsel %vm2023, %v1937, 0.0
        %v2056 = vsel %vm2024, %v1936, 0.0
        %v2057 = vsel %vm2025, %v1935, 0.0
        %v2058 = vsel %vm2026, %v1934, 0.0
        %v2059 = vsel %vm2027, %v1933, 0.0
        %v2060 = vpack.c.bf16 %v2029, %v2028
        %v2061 = vpack.c.bf16 %v2031, %v2030
        %v2062 = vpack.c.bf16 %v2033, %v2032
        %v2063 = vpack.c.bf16 %v2035, %v2034
        %v2064 = vpack.c.bf16 %v2037, %v2036
        %v2065 = vpack.c.bf16 %v2039, %v2038
        %v2066 = vpack.c.bf16 %v2041, %v2040
        %v2067 = vpack.c.bf16 %v2043, %v2042
        %v2068 = vpack.c.bf16 %v2045, %v2044
        %v2069 = vpack.c.bf16 %v2047, %v2046
        %v2070 = vpack.c.bf16 %v2049, %v2048
        %v2071 = vpack.c.bf16 %v2051, %v2050
        %v2072 = vpack.c.bf16 %v2053, %v2052
        %v2073 = vpack.c.bf16 %v2055, %v2054
        %v2074 = vpack.c.bf16 %v2057, %v2056
        %v2075 = vpack.c.bf16 %v2059, %v2058
        %v2076 = vsel %vm1226, 1, 0
        %v2077 = vsel %vm1227, 1, 0
        %v2078 = vsel %vm1228, 1, 0
        %v2079 = vsel %vm1229, 1, 0
        %v2080 = vsel %vm1230, 1, 0
        %v2081 = vsel %vm1231, 1, 0
        %v2082 = vsel %vm1232, 1, 0
        %v2083 = vsel %vm1233, 1, 0
        %v2084 = vsel %vm1234, 1, 0
        %v2085 = vsel %vm1235, 1, 0
        %v2086 = vsel %vm1236, 1, 0
        %v2087 = vsel %vm1237, 1, 0
        %v2088 = vsel %vm1238, 1, 0
        %v2089 = vsel %vm1239, 1, 0
        %v2090 = vsel %vm1240, 1, 0
        %v2091 = vsel %vm1241, 1, 0
        %v2092 = vsel %vm1242, 1, 0
        %v2093 = vsel %vm1243, 1, 0
        %v2094 = vsel %vm1244, 1, 0
        %v2095 = vsel %vm1245, 1, 0
        %v2096 = vsel %vm1246, 1, 0
        %v2097 = vsel %vm1247, 1, 0
        %v2098 = vsel %vm1248, 1, 0
        %v2099 = vsel %vm1249, 1, 0
        %v2100 = vsel %vm1250, 1, 0
        %v2101 = vsel %vm1251, 1, 0
        %v2102 = vsel %vm1252, 1, 0
        %v2103 = vsel %vm1253, 1, 0
        %v2104 = vsel %vm1254, 1, 0
        %v2105 = vsel %vm1255, 1, 0
        %v2106 = vsel %vm1256, 1, 0
        %v2107 = vsel %vm1257, 1, 0
        %vm2108 = vcmp.eq.s32.totalorder %v2076, 1
        %vm2109 = vcmp.eq.s32.totalorder %v2077, 1
        %vm2110 = vcmp.eq.s32.totalorder %v2078, 1
        %vm2111 = vcmp.eq.s32.totalorder %v2079, 1
        %vm2112 = vcmp.eq.s32.totalorder %v2080, 1
        %vm2113 = vcmp.eq.s32.totalorder %v2081, 1
        %vm2114 = vcmp.eq.s32.totalorder %v2082, 1
        %vm2115 = vcmp.eq.s32.totalorder %v2083, 1
        %vm2116 = vcmp.eq.s32.totalorder %v2084, 1
        %vm2117 = vcmp.eq.s32.totalorder %v2085, 1
        %vm2118 = vcmp.eq.s32.totalorder %v2086, 1
        %vm2119 = vcmp.eq.s32.totalorder %v2087, 1
        %vm2120 = vcmp.eq.s32.totalorder %v2088, 1
        %vm2121 = vcmp.eq.s32.totalorder %v2089, 1
        %vm2122 = vcmp.eq.s32.totalorder %v2090, 1
        %vm2123 = vcmp.eq.s32.totalorder %v2091, 1
        %vm2124 = vcmp.eq.s32.totalorder %v2092, 1
        %vm2125 = vcmp.eq.s32.totalorder %v2093, 1
        %vm2126 = vcmp.eq.s32.totalorder %v2094, 1
        %vm2127 = vcmp.eq.s32.totalorder %v2095, 1
        %vm2128 = vcmp.eq.s32.totalorder %v2096, 1
        %vm2129 = vcmp.eq.s32.totalorder %v2097, 1
        %vm2130 = vcmp.eq.s32.totalorder %v2098, 1
        %vm2131 = vcmp.eq.s32.totalorder %v2099, 1
        %vm2132 = vcmp.eq.s32.totalorder %v2100, 1
        %vm2133 = vcmp.eq.s32.totalorder %v2101, 1
        %vm2134 = vcmp.eq.s32.totalorder %v2102, 1
        %vm2135 = vcmp.eq.s32.totalorder %v2103, 1
        %vm2136 = vcmp.eq.s32.totalorder %v2104, 1
        %vm2137 = vcmp.eq.s32.totalorder %v2105, 1
        %vm2138 = vcmp.eq.s32.totalorder %v2106, 1
        %vm2139 = vcmp.eq.s32.totalorder %v2107, 1
        %v2140 = vsel %vm2108, %v1674, 0.0
        %v2141 = vsel %vm2109, %v1673, 0.0
        %v2142 = vsel %vm2110, %v1672, 0.0
        %v2143 = vsel %vm2111, %v1671, 0.0
        %v2144 = vsel %vm2112, %v1670, 0.0
        %v2145 = vsel %vm2113, %v1669, 0.0
        %v2146 = vsel %vm2114, %v1668, 0.0
        %v2147 = vsel %vm2115, %v1667, 0.0
        %v2148 = vsel %vm2116, %v1666, 0.0
        %v2149 = vsel %vm2117, %v1665, 0.0
        %v2150 = vsel %vm2118, %v1664, 0.0
        %v2151 = vsel %vm2119, %v1663, 0.0
        %v2152 = vsel %vm2120, %v1662, 0.0
        %v2153 = vsel %vm2121, %v1661, 0.0
        %v2154 = vsel %vm2122, %v1660, 0.0
        %v2155 = vsel %vm2123, %v1659, 0.0
        %v2156 = vsel %vm2124, %v1658, 0.0
        %v2157 = vsel %vm2125, %v1657, 0.0
        %v2158 = vsel %vm2126, %v1656, 0.0
        %v2159 = vsel %vm2127, %v1655, 0.0
        %v2160 = vsel %vm2128, %v1654, 0.0
        %v2161 = vsel %vm2129, %v1653, 0.0
        %v2162 = vsel %vm2130, %v1652, 0.0
        %v2163 = vsel %vm2131, %v1651, 0.0
        %v2164 = vsel %vm2132, %v1650, 0.0
        %v2165 = vsel %vm2133, %v1649, 0.0
        %v2166 = vsel %vm2134, %v1648, 0.0
        %v2167 = vsel %vm2135, %v1647, 0.0
        %v2168 = vsel %vm2136, %v1646, 0.0
        %v2169 = vsel %vm2137, %v1645, 0.0
        %v2170 = vsel %vm2138, %v1644, 0.0
        %v2171 = vsel %vm2139, %v1643, 0.0
        %v2172 = vpack.c.bf16 %v2141, %v2140
        %v2173 = vpack.c.bf16 %v2143, %v2142
        %v2174 = vpack.c.bf16 %v2145, %v2144
        %v2175 = vpack.c.bf16 %v2147, %v2146
        %v2176 = vpack.c.bf16 %v2149, %v2148
        %v2177 = vpack.c.bf16 %v2151, %v2150
        %v2178 = vpack.c.bf16 %v2153, %v2152
        %v2179 = vpack.c.bf16 %v2155, %v2154
        %v2180 = vpack.c.bf16 %v2157, %v2156
        %v2181 = vpack.c.bf16 %v2159, %v2158
        %v2182 = vpack.c.bf16 %v2161, %v2160
        %v2183 = vpack.c.bf16 %v2163, %v2162
        %v2184 = vpack.c.bf16 %v2165, %v2164
        %v2185 = vpack.c.bf16 %v2167, %v2166
        %v2186 = vpack.c.bf16 %v2169, %v2168
        %v2187 = vpack.c.bf16 %v2171, %v2170
        %v2188 = vpack.c.bf16 %v330, %v329
        %v2189 = vpack.c.bf16 %v332, %v331
        %v2190 = vpack.c.bf16 %v334, %v333
        %v2191 = vpack.c.bf16 %v336, %v335
        %v2192 = vpack.c.bf16 %v338, %v337
        %v2193 = vpack.c.bf16 %v340, %v339
        %v2194 = vpack.c.bf16 %v342, %v341
        %v2195 = vpack.c.bf16 %v344, %v343
        %v2196 = vpack.c.bf16 %v346, %v345
        %v2197 = vpack.c.bf16 %v348, %v347
        %v2198 = vpack.c.bf16 %v350, %v349
        %v2199 = vpack.c.bf16 %v352, %v351
        %v2200 = vpack.c.bf16 %v354, %v353
        %v2201 = vpack.c.bf16 %v356, %v355
        %v2202 = vpack.c.bf16 %v358, %v357
        %v2203 = vpack.c.bf16 %v360, %v359
        %v2204 = vsel %vm1290, 1, 0
        %v2205 = vsel %vm1291, 1, 0
        %v2206 = vsel %vm1292, 1, 0
        %v2207 = vsel %vm1293, 1, 0
        %v2208 = vsel %vm1294, 1, 0
        %v2209 = vsel %vm1295, 1, 0
        %v2210 = vsel %vm1296, 1, 0
        %v2211 = vsel %vm1297, 1, 0
        %v2212 = vsel %vm1298, 1, 0
        %v2213 = vsel %vm1299, 1, 0
        %v2214 = vsel %vm1300, 1, 0
        %v2215 = vsel %vm1301, 1, 0
        %v2216 = vsel %vm1302, 1, 0
        %v2217 = vsel %vm1303, 1, 0
        %v2218 = vsel %vm1304, 1, 0
        %v2219 = vsel %vm1305, 1, 0
        %v2220 = vsel %vm1306, 1, 0
        %v2221 = vsel %vm1307, 1, 0
        %v2222 = vsel %vm1308, 1, 0
        %v2223 = vsel %vm1309, 1, 0
        %v2224 = vsel %vm1310, 1, 0
        %v2225 = vsel %vm1311, 1, 0
        %v2226 = vsel %vm1312, 1, 0
        %v2227 = vsel %vm1313, 1, 0
        %v2228 = vsel %vm1314, 1, 0
        %v2229 = vsel %vm1315, 1, 0
        %v2230 = vsel %vm1316, 1, 0
        %v2231 = vsel %vm1317, 1, 0
        %v2232 = vsel %vm1318, 1, 0
        %v2233 = vsel %vm1319, 1, 0
        %v2234 = vsel %vm1320, 1, 0
        %v2235 = vsel %vm1321, 1, 0
        %vm2236 = vcmp.eq.s32.totalorder %v2204, 1
        %vm2237 = vcmp.eq.s32.totalorder %v2205, 1
        %vm2238 = vcmp.eq.s32.totalorder %v2206, 1
        %vm2239 = vcmp.eq.s32.totalorder %v2207, 1
        %vm2240 = vcmp.eq.s32.totalorder %v2208, 1
        %vm2241 = vcmp.eq.s32.totalorder %v2209, 1
        %vm2242 = vcmp.eq.s32.totalorder %v2210, 1
        %vm2243 = vcmp.eq.s32.totalorder %v2211, 1
        %vm2244 = vcmp.eq.s32.totalorder %v2212, 1
        %vm2245 = vcmp.eq.s32.totalorder %v2213, 1
        %vm2246 = vcmp.eq.s32.totalorder %v2214, 1
        %vm2247 = vcmp.eq.s32.totalorder %v2215, 1
        %vm2248 = vcmp.eq.s32.totalorder %v2216, 1
        %vm2249 = vcmp.eq.s32.totalorder %v2217, 1
        %vm2250 = vcmp.eq.s32.totalorder %v2218, 1
        %vm2251 = vcmp.eq.s32.totalorder %v2219, 1
        %vm2252 = vcmp.eq.s32.totalorder %v2220, 1
        %vm2253 = vcmp.eq.s32.totalorder %v2221, 1
        %vm2254 = vcmp.eq.s32.totalorder %v2222, 1
        %vm2255 = vcmp.eq.s32.totalorder %v2223, 1
        %vm2256 = vcmp.eq.s32.totalorder %v2224, 1
        %vm2257 = vcmp.eq.s32.totalorder %v2225, 1
        %vm2258 = vcmp.eq.s32.totalorder %v2226, 1
        %vm2259 = vcmp.eq.s32.totalorder %v2227, 1
        %vm2260 = vcmp.eq.s32.totalorder %v2228, 1
        %vm2261 = vcmp.eq.s32.totalorder %v2229, 1
        %vm2262 = vcmp.eq.s32.totalorder %v2230, 1
        %vm2263 = vcmp.eq.s32.totalorder %v2231, 1
        %vm2264 = vcmp.eq.s32.totalorder %v2232, 1
        %vm2265 = vcmp.eq.s32.totalorder %v2233, 1
        %vm2266 = vcmp.eq.s32.totalorder %v2234, 1
        %vm2267 = vcmp.eq.s32.totalorder %v2235, 1
        %v2268 = vsel %vm2236, %v1962, 0.0
        %v2269 = vsel %vm2237, %v1961, 0.0
        %v2270 = vsel %vm2238, %v1960, 0.0
        %v2271 = vsel %vm2239, %v1959, 0.0
        %v2272 = vsel %vm2240, %v1958, 0.0
        %v2273 = vsel %vm2241, %v1957, 0.0
        %v2274 = vsel %vm2242, %v1956, 0.0
        %v2275 = vsel %vm2243, %v1955, 0.0
        %v2276 = vsel %vm2244, %v1954, 0.0
        %v2277 = vsel %vm2245, %v1953, 0.0
        %v2278 = vsel %vm2246, %v1952, 0.0
        %v2279 = vsel %vm2247, %v1951, 0.0
        %v2280 = vsel %vm2248, %v1950, 0.0
        %v2281 = vsel %vm2249, %v1949, 0.0
        %v2282 = vsel %vm2250, %v1948, 0.0
        %v2283 = vsel %vm2251, %v1947, 0.0
        %v2284 = vsel %vm2252, %v1946, 0.0
        %v2285 = vsel %vm2253, %v1945, 0.0
        %v2286 = vsel %vm2254, %v1944, 0.0
        %v2287 = vsel %vm2255, %v1943, 0.0
        %v2288 = vsel %vm2256, %v1942, 0.0
        %v2289 = vsel %vm2257, %v1941, 0.0
        %v2290 = vsel %vm2258, %v1940, 0.0
        %v2291 = vsel %vm2259, %v1939, 0.0
        %v2292 = vsel %vm2260, %v1938, 0.0
        %v2293 = vsel %vm2261, %v1937, 0.0
        %v2294 = vsel %vm2262, %v1936, 0.0
        %v2295 = vsel %vm2263, %v1935, 0.0
        %v2296 = vsel %vm2264, %v1934, 0.0
        %v2297 = vsel %vm2265, %v1933, 0.0
        %v2298 = vsel %vm2266, %v1932, 0.0
        %v2299 = vsel %vm2267, %v1963, 0.0
        %v2300 = vpack.c.bf16 %v2269, %v2268
        %v2301 = vpack.c.bf16 %v2271, %v2270
        %v2302 = vpack.c.bf16 %v2273, %v2272
        %v2303 = vpack.c.bf16 %v2275, %v2274
        %v2304 = vpack.c.bf16 %v2277, %v2276
        %v2305 = vpack.c.bf16 %v2279, %v2278
        %v2306 = vpack.c.bf16 %v2281, %v2280
        %v2307 = vpack.c.bf16 %v2283, %v2282
        %v2308 = vpack.c.bf16 %v2285, %v2284
        %v2309 = vpack.c.bf16 %v2287, %v2286
        %v2310 = vpack.c.bf16 %v2289, %v2288
        %v2311 = vpack.c.bf16 %v2291, %v2290
        %v2312 = vpack.c.bf16 %v2293, %v2292
        %v2313 = vpack.c.bf16 %v2295, %v2294
        %v2314 = vpack.c.bf16 %v2297, %v2296
        %v2315 = vpack.c.bf16 %v2299, %v2298
        %v2316 = vsel %vm1450, 1, 0
        %v2317 = vsel %vm1451, 1, 0
        %v2318 = vsel %vm1452, 1, 0
        %v2319 = vsel %vm1453, 1, 0
        %v2320 = vsel %vm1454, 1, 0
        %v2321 = vsel %vm1455, 1, 0
        %v2322 = vsel %vm1456, 1, 0
        %v2323 = vsel %vm1457, 1, 0
        %v2324 = vsel %vm1458, 1, 0
        %v2325 = vsel %vm1459, 1, 0
        %v2326 = vsel %vm1460, 1, 0
        %v2327 = vsel %vm1461, 1, 0
        %v2328 = vsel %vm1462, 1, 0
        %v2329 = vsel %vm1463, 1, 0
        %v2330 = vsel %vm1464, 1, 0
        %v2331 = vsel %vm1465, 1, 0
        %v2332 = vsel %vm1466, 1, 0
        %v2333 = vsel %vm1467, 1, 0
        %v2334 = vsel %vm1468, 1, 0
        %v2335 = vsel %vm1469, 1, 0
        %v2336 = vsel %vm1470, 1, 0
        %v2337 = vsel %vm1471, 1, 0
        %v2338 = vsel %vm1472, 1, 0
        %v2339 = vsel %vm1473, 1, 0
        %v2340 = vsel %vm1474, 1, 0
        %v2341 = vsel %vm1475, 1, 0
        %v2342 = vsel %vm1476, 1, 0
        %v2343 = vsel %vm1477, 1, 0
        %v2344 = vsel %vm1478, 1, 0
        %v2345 = vsel %vm1479, 1, 0
        %v2346 = vsel %vm1480, 1, 0
        %v2347 = vsel %vm1481, 1, 0
        %vm2348 = vcmp.eq.s32.totalorder %v2316, 1
        %vm2349 = vcmp.eq.s32.totalorder %v2317, 1
        %vm2350 = vcmp.eq.s32.totalorder %v2318, 1
        %vm2351 = vcmp.eq.s32.totalorder %v2319, 1
        %vm2352 = vcmp.eq.s32.totalorder %v2320, 1
        %vm2353 = vcmp.eq.s32.totalorder %v2321, 1
        %vm2354 = vcmp.eq.s32.totalorder %v2322, 1
        %vm2355 = vcmp.eq.s32.totalorder %v2323, 1
        %vm2356 = vcmp.eq.s32.totalorder %v2324, 1
        %vm2357 = vcmp.eq.s32.totalorder %v2325, 1
        %vm2358 = vcmp.eq.s32.totalorder %v2326, 1
        %vm2359 = vcmp.eq.s32.totalorder %v2327, 1
        %vm2360 = vcmp.eq.s32.totalorder %v2328, 1
        %vm2361 = vcmp.eq.s32.totalorder %v2329, 1
        %vm2362 = vcmp.eq.s32.totalorder %v2330, 1
        %vm2363 = vcmp.eq.s32.totalorder %v2331, 1
        %vm2364 = vcmp.eq.s32.totalorder %v2332, 1
        %vm2365 = vcmp.eq.s32.totalorder %v2333, 1
        %vm2366 = vcmp.eq.s32.totalorder %v2334, 1
        %vm2367 = vcmp.eq.s32.totalorder %v2335, 1
        %vm2368 = vcmp.eq.s32.totalorder %v2336, 1
        %vm2369 = vcmp.eq.s32.totalorder %v2337, 1
        %vm2370 = vcmp.eq.s32.totalorder %v2338, 1
        %vm2371 = vcmp.eq.s32.totalorder %v2339, 1
        %vm2372 = vcmp.eq.s32.totalorder %v2340, 1
        %vm2373 = vcmp.eq.s32.totalorder %v2341, 1
        %vm2374 = vcmp.eq.s32.totalorder %v2342, 1
        %vm2375 = vcmp.eq.s32.totalorder %v2343, 1
        %vm2376 = vcmp.eq.s32.totalorder %v2344, 1
        %vm2377 = vcmp.eq.s32.totalorder %v2345, 1
        %vm2378 = vcmp.eq.s32.totalorder %v2346, 1
        %vm2379 = vcmp.eq.s32.totalorder %v2347, 1
        %v2380 = vsel %vm2348, %v1672, 0.0
        %v2381 = vsel %vm2349, %v1671, 0.0
        %v2382 = vsel %vm2350, %v1670, 0.0
        %v2383 = vsel %vm2351, %v1669, 0.0
        %v2384 = vsel %vm2352, %v1668, 0.0
        %v2385 = vsel %vm2353, %v1667, 0.0
        %v2386 = vsel %vm2354, %v1666, 0.0
        %v2387 = vsel %vm2355, %v1665, 0.0
        %v2388 = vsel %vm2356, %v1664, 0.0
        %v2389 = vsel %vm2357, %v1663, 0.0
        %v2390 = vsel %vm2358, %v1662, 0.0
        %v2391 = vsel %vm2359, %v1661, 0.0
        %v2392 = vsel %vm2360, %v1660, 0.0
        %v2393 = vsel %vm2361, %v1659, 0.0
        %v2394 = vsel %vm2362, %v1658, 0.0
        %v2395 = vsel %vm2363, %v1657, 0.0
        %v2396 = vsel %vm2364, %v1656, 0.0
        %v2397 = vsel %vm2365, %v1655, 0.0
        %v2398 = vsel %vm2366, %v1654, 0.0
        %v2399 = vsel %vm2367, %v1653, 0.0
        %v2400 = vsel %vm2368, %v1652, 0.0
        %v2401 = vsel %vm2369, %v1651, 0.0
        %v2402 = vsel %vm2370, %v1650, 0.0
        %v2403 = vsel %vm2371, %v1649, 0.0
        %v2404 = vsel %vm2372, %v1648, 0.0
        %v2405 = vsel %vm2373, %v1647, 0.0
        %v2406 = vsel %vm2374, %v1646, 0.0
        %v2407 = vsel %vm2375, %v1645, 0.0
        %v2408 = vsel %vm2376, %v1644, 0.0
        %v2409 = vsel %vm2377, %v1643, 0.0
        %v2410 = vsel %vm2378, %v1674, 0.0
        %v2411 = vsel %vm2379, %v1673, 0.0
        %v2412 = vpack.c.bf16 %v2381, %v2380
        %v2413 = vpack.c.bf16 %v2383, %v2382
        %v2414 = vpack.c.bf16 %v2385, %v2384
        %v2415 = vpack.c.bf16 %v2387, %v2386
        %v2416 = vpack.c.bf16 %v2389, %v2388
        %v2417 = vpack.c.bf16 %v2391, %v2390
        %v2418 = vpack.c.bf16 %v2393, %v2392
        %v2419 = vpack.c.bf16 %v2395, %v2394
        %v2420 = vpack.c.bf16 %v2397, %v2396
        %v2421 = vpack.c.bf16 %v2399, %v2398
        %v2422 = vpack.c.bf16 %v2401, %v2400
        %v2423 = vpack.c.bf16 %v2403, %v2402
        %v2424 = vpack.c.bf16 %v2405, %v2404
        %v2425 = vpack.c.bf16 %v2407, %v2406
        %v2426 = vpack.c.bf16 %v2409, %v2408
        %v2427 = vpack.c.bf16 %v2411, %v2410
        %v2428 = vsel %vm1514, 1, 0
        %v2429 = vsel %vm1515, 1, 0
        %v2430 = vsel %vm1516, 1, 0
        %v2431 = vsel %vm1517, 1, 0
        %v2432 = vsel %vm1518, 1, 0
        %v2433 = vsel %vm1519, 1, 0
        %v2434 = vsel %vm1520, 1, 0
        %v2435 = vsel %vm1521, 1, 0
        %v2436 = vsel %vm1522, 1, 0
        %v2437 = vsel %vm1523, 1, 0
        %v2438 = vsel %vm1524, 1, 0
        %v2439 = vsel %vm1525, 1, 0
        %v2440 = vsel %vm1526, 1, 0
        %v2441 = vsel %vm1527, 1, 0
        %v2442 = vsel %vm1528, 1, 0
        %v2443 = vsel %vm1529, 1, 0
        %v2444 = vsel %vm1530, 1, 0
        %v2445 = vsel %vm1531, 1, 0
        %v2446 = vsel %vm1532, 1, 0
        %v2447 = vsel %vm1533, 1, 0
        %v2448 = vsel %vm1534, 1, 0
        %v2449 = vsel %vm1535, 1, 0
        %v2450 = vsel %vm1536, 1, 0
        %v2451 = vsel %vm1537, 1, 0
        %v2452 = vsel %vm1538, 1, 0
        %v2453 = vsel %vm1539, 1, 0
        %v2454 = vsel %vm1540, 1, 0
        %v2455 = vsel %vm1541, 1, 0
        %v2456 = vsel %vm1542, 1, 0
        %v2457 = vsel %vm1543, 1, 0
        %v2458 = vsel %vm1544, 1, 0
        %v2459 = vsel %vm1545, 1, 0
        %vm2460 = vcmp.eq.s32.totalorder %v2428, 1
        %vm2461 = vcmp.eq.s32.totalorder %v2429, 1
        %vm2462 = vcmp.eq.s32.totalorder %v2430, 1
        %vm2463 = vcmp.eq.s32.totalorder %v2431, 1
        %vm2464 = vcmp.eq.s32.totalorder %v2432, 1
        %vm2465 = vcmp.eq.s32.totalorder %v2433, 1
        %vm2466 = vcmp.eq.s32.totalorder %v2434, 1
        %vm2467 = vcmp.eq.s32.totalorder %v2435, 1
        %vm2468 = vcmp.eq.s32.totalorder %v2436, 1
        %vm2469 = vcmp.eq.s32.totalorder %v2437, 1
        %vm2470 = vcmp.eq.s32.totalorder %v2438, 1
        %vm2471 = vcmp.eq.s32.totalorder %v2439, 1
        %vm2472 = vcmp.eq.s32.totalorder %v2440, 1
        %vm2473 = vcmp.eq.s32.totalorder %v2441, 1
        %vm2474 = vcmp.eq.s32.totalorder %v2442, 1
        %vm2475 = vcmp.eq.s32.totalorder %v2443, 1
        %vm2476 = vcmp.eq.s32.totalorder %v2444, 1
        %vm2477 = vcmp.eq.s32.totalorder %v2445, 1
        %vm2478 = vcmp.eq.s32.totalorder %v2446, 1
        %vm2479 = vcmp.eq.s32.totalorder %v2447, 1
        %vm2480 = vcmp.eq.s32.totalorder %v2448, 1
        %vm2481 = vcmp.eq.s32.totalorder %v2449, 1
        %vm2482 = vcmp.eq.s32.totalorder %v2450, 1
        %vm2483 = vcmp.eq.s32.totalorder %v2451, 1
        %vm2484 = vcmp.eq.s32.totalorder %v2452, 1
        %vm2485 = vcmp.eq.s32.totalorder %v2453, 1
        %vm2486 = vcmp.eq.s32.totalorder %v2454, 1
        %vm2487 = vcmp.eq.s32.totalorder %v2455, 1
        %vm2488 = vcmp.eq.s32.totalorder %v2456, 1
        %vm2489 = vcmp.eq.s32.totalorder %v2457, 1
        %vm2490 = vcmp.eq.s32.totalorder %v2458, 1
        %vm2491 = vcmp.eq.s32.totalorder %v2459, 1
        %v2492 = vsel %vm2460, %v331, 0.0
        %v2493 = vsel %vm2461, %v332, 0.0
        %v2494 = vsel %vm2462, %v333, 0.0
        %v2495 = vsel %vm2463, %v334, 0.0
        %v2496 = vsel %vm2464, %v335, 0.0
        %v2497 = vsel %vm2465, %v336, 0.0
        %v2498 = vsel %vm2466, %v337, 0.0
        %v2499 = vsel %vm2467, %v338, 0.0
        %v2500 = vsel %vm2468, %v339, 0.0
        %v2501 = vsel %vm2469, %v340, 0.0
        %v2502 = vsel %vm2470, %v341, 0.0
        %v2503 = vsel %vm2471, %v342, 0.0
        %v2504 = vsel %vm2472, %v343, 0.0
        %v2505 = vsel %vm2473, %v344, 0.0
        %v2506 = vsel %vm2474, %v345, 0.0
        %v2507 = vsel %vm2475, %v346, 0.0
        %v2508 = vsel %vm2476, %v347, 0.0
        %v2509 = vsel %vm2477, %v348, 0.0
        %v2510 = vsel %vm2478, %v349, 0.0
        %v2511 = vsel %vm2479, %v350, 0.0
        %v2512 = vsel %vm2480, %v351, 0.0
        %v2513 = vsel %vm2481, %v352, 0.0
        %v2514 = vsel %vm2482, %v353, 0.0
        %v2515 = vsel %vm2483, %v354, 0.0
        %v2516 = vsel %vm2484, %v355, 0.0
        %v2517 = vsel %vm2485, %v356, 0.0
        %v2518 = vsel %vm2486, %v357, 0.0
        %v2519 = vsel %vm2487, %v358, 0.0
        %v2520 = vsel %vm2488, %v359, 0.0
        %v2521 = vsel %vm2489, %v360, 0.0
        %v2522 = vsel %vm2490, %v329, 0.0
        %v2523 = vsel %vm2491, %v330, 0.0
        %v2524 = vpack.c.bf16 %v2493, %v2492
        %v2525 = vpack.c.bf16 %v2495, %v2494
        %v2526 = vpack.c.bf16 %v2497, %v2496
        %v2527 = vpack.c.bf16 %v2499, %v2498
        %v2528 = vpack.c.bf16 %v2501, %v2500
        %v2529 = vpack.c.bf16 %v2503, %v2502
        %v2530 = vpack.c.bf16 %v2505, %v2504
        %v2531 = vpack.c.bf16 %v2507, %v2506
        %v2532 = vpack.c.bf16 %v2509, %v2508
        %v2533 = vpack.c.bf16 %v2511, %v2510
        %v2534 = vpack.c.bf16 %v2513, %v2512
        %v2535 = vpack.c.bf16 %v2515, %v2514
        %v2536 = vpack.c.bf16 %v2517, %v2516
        %v2537 = vpack.c.bf16 %v2519, %v2518
        %v2538 = vpack.c.bf16 %v2521, %v2520
        %v2539 = vpack.c.bf16 %v2523, %v2522
        %v2540 = vsel %vm1578, 1, 0
        %v2541 = vsel %vm1579, 1, 0
        %v2542 = vsel %vm1580, 1, 0
        %v2543 = vsel %vm1581, 1, 0
        %v2544 = vsel %vm1582, 1, 0
        %v2545 = vsel %vm1583, 1, 0
        %v2546 = vsel %vm1584, 1, 0
        %v2547 = vsel %vm1585, 1, 0
        %v2548 = vsel %vm1586, 1, 0
        %v2549 = vsel %vm1587, 1, 0
        %v2550 = vsel %vm1588, 1, 0
        %v2551 = vsel %vm1589, 1, 0
        %v2552 = vsel %vm1590, 1, 0
        %v2553 = vsel %vm1591, 1, 0
        %v2554 = vsel %vm1592, 1, 0
        %v2555 = vsel %vm1593, 1, 0
        %v2556 = vsel %vm1594, 1, 0
        %v2557 = vsel %vm1595, 1, 0
        %v2558 = vsel %vm1596, 1, 0
        %v2559 = vsel %vm1597, 1, 0
        %v2560 = vsel %vm1598, 1, 0
        %v2561 = vsel %vm1599, 1, 0
        %v2562 = vsel %vm1600, 1, 0
        %v2563 = vsel %vm1601, 1, 0
        %v2564 = vsel %vm1602, 1, 0
        %v2565 = vsel %vm1603, 1, 0
        %v2566 = vsel %vm1604, 1, 0
        %v2567 = vsel %vm1605, 1, 0
        %v2568 = vsel %vm1606, 1, 0
        %v2569 = vsel %vm1607, 1, 0
        %v2570 = vsel %vm1608, 1, 0
        %v2571 = vsel %vm1609, 1, 0
        %vm2572 = vcmp.eq.s32.totalorder %v2540, 1
        %vm2573 = vcmp.eq.s32.totalorder %v2541, 1
        %vm2574 = vcmp.eq.s32.totalorder %v2542, 1
        %vm2575 = vcmp.eq.s32.totalorder %v2543, 1
        %vm2576 = vcmp.eq.s32.totalorder %v2544, 1
        %vm2577 = vcmp.eq.s32.totalorder %v2545, 1
        %vm2578 = vcmp.eq.s32.totalorder %v2546, 1
        %vm2579 = vcmp.eq.s32.totalorder %v2547, 1
        %vm2580 = vcmp.eq.s32.totalorder %v2548, 1
        %vm2581 = vcmp.eq.s32.totalorder %v2549, 1
        %vm2582 = vcmp.eq.s32.totalorder %v2550, 1
        %vm2583 = vcmp.eq.s32.totalorder %v2551, 1
        %vm2584 = vcmp.eq.s32.totalorder %v2552, 1
        %vm2585 = vcmp.eq.s32.totalorder %v2553, 1
        %vm2586 = vcmp.eq.s32.totalorder %v2554, 1
        %vm2587 = vcmp.eq.s32.totalorder %v2555, 1
        %vm2588 = vcmp.eq.s32.totalorder %v2556, 1
        %vm2589 = vcmp.eq.s32.totalorder %v2557, 1
        %vm2590 = vcmp.eq.s32.totalorder %v2558, 1
        %vm2591 = vcmp.eq.s32.totalorder %v2559, 1
        %vm2592 = vcmp.eq.s32.totalorder %v2560, 1
        %vm2593 = vcmp.eq.s32.totalorder %v2561, 1
        %vm2594 = vcmp.eq.s32.totalorder %v2562, 1
        %vm2595 = vcmp.eq.s32.totalorder %v2563, 1
        %vm2596 = vcmp.eq.s32.totalorder %v2564, 1
        %vm2597 = vcmp.eq.s32.totalorder %v2565, 1
        %vm2598 = vcmp.eq.s32.totalorder %v2566, 1
        %vm2599 = vcmp.eq.s32.totalorder %v2567, 1
        %vm2600 = vcmp.eq.s32.totalorder %v2568, 1
        %vm2601 = vcmp.eq.s32.totalorder %v2569, 1
        %vm2602 = vcmp.eq.s32.totalorder %v2570, 1
        %vm2603 = vcmp.eq.s32.totalorder %v2571, 1
        %v2604 = vsel %vm2572, %v1960, 0.0
        %v2605 = vsel %vm2573, %v1959, 0.0
        %v2606 = vsel %vm2574, %v1958, 0.0
        %v2607 = vsel %vm2575, %v1957, 0.0
        %v2608 = vsel %vm2576, %v1956, 0.0
        %v2609 = vsel %vm2577, %v1955, 0.0
        %v2610 = vsel %vm2578, %v1954, 0.0
        %v2611 = vsel %vm2579, %v1953, 0.0
        %v2612 = vsel %vm2580, %v1952, 0.0
        %v2613 = vsel %vm2581, %v1951, 0.0
        %v2614 = vsel %vm2582, %v1950, 0.0
        %v2615 = vsel %vm2583, %v1949, 0.0
        %v2616 = vsel %vm2584, %v1948, 0.0
        %v2617 = vsel %vm2585, %v1947, 0.0
        %v2618 = vsel %vm2586, %v1946, 0.0
        %v2619 = vsel %vm2587, %v1945, 0.0
        %v2620 = vsel %vm2588, %v1944, 0.0
        %v2621 = vsel %vm2589, %v1943, 0.0
        %v2622 = vsel %vm2590, %v1942, 0.0
        %v2623 = vsel %vm2591, %v1941, 0.0
        %v2624 = vsel %vm2592, %v1940, 0.0
        %v2625 = vsel %vm2593, %v1939, 0.0
        %v2626 = vsel %vm2594, %v1938, 0.0
        %v2627 = vsel %vm2595, %v1937, 0.0
        %v2628 = vsel %vm2596, %v1936, 0.0
        %v2629 = vsel %vm2597, %v1935, 0.0
        %v2630 = vsel %vm2598, %v1934, 0.0
        %v2631 = vsel %vm2599, %v1933, 0.0
        %v2632 = vsel %vm2600, %v1932, 0.0
        %v2633 = vsel %vm2601, %v1963, 0.0
        %v2634 = vsel %vm2602, %v1962, 0.0
        %v2635 = vsel %vm2603, %v1961, 0.0
        %v2636 = vpack.c.bf16 %v2605, %v2604
        %v2637 = vpack.c.bf16 %v2607, %v2606
        %v2638 = vpack.c.bf16 %v2609, %v2608
        %v2639 = vpack.c.bf16 %v2611, %v2610
        %v2640 = vpack.c.bf16 %v2613, %v2612
        %v2641 = vpack.c.bf16 %v2615, %v2614
        %v2642 = vpack.c.bf16 %v2617, %v2616
        %v2643 = vpack.c.bf16 %v2619, %v2618
        %v2644 = vpack.c.bf16 %v2621, %v2620
        %v2645 = vpack.c.bf16 %v2623, %v2622
        %v2646 = vpack.c.bf16 %v2625, %v2624
        %v2647 = vpack.c.bf16 %v2627, %v2626
        %v2648 = vpack.c.bf16 %v2629, %v2628
        %v2649 = vpack.c.bf16 %v2631, %v2630
        %v2650 = vpack.c.bf16 %v2633, %v2632
        %v2651 = vpack.c.bf16 %v2635, %v2634
        %v2652 = vld [vmem:[#allocation5] sm:$0xf]
        %v2653 = vld [vmem:[#allocation5 + $0x4] sm:$0xf]
        %v2654 = vld [vmem:[#allocation5 + $0x8] sm:$0xf]
        %v2655 = vld [vmem:[#allocation5 + $0xc] sm:$0xf]
        %v2656 = vld [vmem:[#allocation5 + $0x10] sm:$0xf]
        %v2657 = vld [vmem:[#allocation5 + $0x14] sm:$0xf]
        %v2658 = vld [vmem:[#allocation5 + $0x18] sm:$0xf]
        %v2659 = vld [vmem:[#allocation5 + $0x1c] sm:$0xf]
        %v2660 = vld [vmem:[#allocation5 + $0x20] sm:$0xf]
        %v2661 = vld [vmem:[#allocation5 + $0x24] sm:$0xf]
        %v2662 = vld [vmem:[#allocation5 + $0x28] sm:$0xf]
        %v2663 = vld [vmem:[#allocation5 + $0x2c] sm:$0xf]
        %v2664 = vld [vmem:[#allocation5 + $0x30] sm:$0xf]
        %v2665 = vld [vmem:[#allocation5 + $0x34] sm:$0xf]
        %v2666 = vld [vmem:[#allocation5 + $0x38] sm:$0xf]
        %v2667 = vld [vmem:[#allocation5 + $0x3c] sm:$0xf]
        %v2668 = vld [vmem:[#allocation5 + $0x40] sm:$0xf]
        %v2669 = vld [vmem:[#allocation5 + $0x44] sm:$0xf]
        %v2670 = vld [vmem:[#allocation5 + $0x48] sm:$0xf]
        %v2671 = vld [vmem:[#allocation5 + $0x4c] sm:$0xf]
        %v2672 = vld [vmem:[#allocation5 + $0x50] sm:$0xf]
        %v2673 = vld [vmem:[#allocation5 + $0x54] sm:$0xf]
        %v2674 = vld [vmem:[#allocation5 + $0x58] sm:$0xf]
        %v2675 = vld [vmem:[#allocation5 + $0x5c] sm:$0xf]
        %v2676 = vld [vmem:[#allocation5 + $0x60] sm:$0xf]
        %v2677 = vld [vmem:[#allocation5 + $0x64] sm:$0xf]
        %v2678 = vld [vmem:[#allocation5 + $0x68] sm:$0xf]
        %v2679 = vld [vmem:[#allocation5 + $0x6c] sm:$0xf]
        %v2680 = vld [vmem:[#allocation5 + $0x70] sm:$0xf]
        %v2681 = vld [vmem:[#allocation5 + $0x74] sm:$0xf]
        %v2682 = vld [vmem:[#allocation5 + $0x78] sm:$0xf]
        %v2683 = vld [vmem:[#allocation5 + $0x7c] sm:$0xf]
        %v2684 = vld [vmem:[#allocation5 + $0x80] sm:$0xf]
        %v2685 = vld [vmem:[#allocation5 + $0x84] sm:$0xf]
        %v2686 = vld [vmem:[#allocation5 + $0x88] sm:$0xf]
        %v2687 = vld [vmem:[#allocation5 + $0x8c] sm:$0xf]
        %v2688 = vld [vmem:[#allocation5 + $0x90] sm:$0xf]
        %v2689 = vld [vmem:[#allocation5 + $0x94] sm:$0xf]
        %v2690 = vld [vmem:[#allocation5 + $0x98] sm:$0xf]
        %v2691 = vld [vmem:[#allocation5 + $0x9c] sm:$0xf]
        %v2692 = vld [vmem:[#allocation5 + $0xa0] sm:$0xf]
        %v2693 = vld [vmem:[#allocation5 + $0xa4] sm:$0xf]
        %v2694 = vld [vmem:[#allocation5 + $0xa8] sm:$0xf]
        %v2695 = vld [vmem:[#allocation5 + $0xac] sm:$0xf]
        %v2696 = vld [vmem:[#allocation5 + $0xb0] sm:$0xf]
        %v2697 = vld [vmem:[#allocation5 + $0xb4] sm:$0xf]
        %v2698 = vld [vmem:[#allocation5 + $0xb8] sm:$0xf]
        %v2699 = vld [vmem:[#allocation5 + $0xbc] sm:$0xf]
        %v2700 = vld [vmem:[#allocation5 + $0xc0] sm:$0xf]
        %v2701 = vld [vmem:[#allocation5 + $0xc4] sm:$0xf]
        %v2702 = vld [vmem:[#allocation5 + $0xc8] sm:$0xf]
        %v2703 = vld [vmem:[#allocation5 + $0xcc] sm:$0xf]
        %v2704 = vld [vmem:[#allocation5 + $0xd0] sm:$0xf]
        %v2705 = vld [vmem:[#allocation5 + $0xd4] sm:$0xf]
        %v2706 = vld [vmem:[#allocation5 + $0xd8] sm:$0xf]
        %v2707 = vld [vmem:[#allocation5 + $0xdc] sm:$0xf]
        %v2708 = vld [vmem:[#allocation5 + $0xe0] sm:$0xf]
        %v2709 = vld [vmem:[#allocation5 + $0xe4] sm:$0xf]
        %v2710 = vld [vmem:[#allocation5 + $0xe8] sm:$0xf]
        %v2711 = vld [vmem:[#allocation5 + $0xec] sm:$0xf]
        %v2712 = vld [vmem:[#allocation5 + $0xf0] sm:$0xf]
        %v2713 = vld [vmem:[#allocation5 + $0xf4] sm:$0xf]
        %v2714 = vld [vmem:[#allocation5 + $0xf8] sm:$0xf]
        %v2715 = vld [vmem:[#allocation5 + $0xfc] sm:$0xf]
        %v2716 = vld [vmem:[#allocation5 + $0x100] sm:$0xf]
        %v2717 = vld [vmem:[#allocation5 + $0x104] sm:$0xf]
        %v2718 = vld [vmem:[#allocation5 + $0x108] sm:$0xf]
        %v2719 = vld [vmem:[#allocation5 + $0x10c] sm:$0xf]
        %v2720 = vld [vmem:[#allocation5 + $0x110] sm:$0xf]
        %v2721 = vld [vmem:[#allocation5 + $0x114] sm:$0xf]
        %v2722 = vld [vmem:[#allocation5 + $0x118] sm:$0xf]
        %v2723 = vld [vmem:[#allocation5 + $0x11c] sm:$0xf]
        %v2724 = vld [vmem:[#allocation5 + $0x120] sm:$0xf]
        %v2725 = vld [vmem:[#allocation5 + $0x124] sm:$0xf]
        %v2726 = vld [vmem:[#allocation5 + $0x128] sm:$0xf]
        %v2727 = vld [vmem:[#allocation5 + $0x12c] sm:$0xf]
        %v2728 = vld [vmem:[#allocation5 + $0x130] sm:$0xf]
        %v2729 = vld [vmem:[#allocation5 + $0x134] sm:$0xf]
        %v2730 = vld [vmem:[#allocation5 + $0x138] sm:$0xf]
        %v2731 = vld [vmem:[#allocation5 + $0x13c] sm:$0xf]
        %v2732 = vld [vmem:[#allocation5 + $0x140] sm:$0xf]
        %v2733 = vld [vmem:[#allocation5 + $0x144] sm:$0xf]
        %v2734 = vld [vmem:[#allocation5 + $0x148] sm:$0xf]
        %v2735 = vld [vmem:[#allocation5 + $0x14c] sm:$0xf]
        %v2736 = vld [vmem:[#allocation5 + $0x150] sm:$0xf]
        %v2737 = vld [vmem:[#allocation5 + $0x154] sm:$0xf]
        %v2738 = vld [vmem:[#allocation5 + $0x158] sm:$0xf]
        %v2739 = vld [vmem:[#allocation5 + $0x15c] sm:$0xf]
        %v2740 = vld [vmem:[#allocation5 + $0x160] sm:$0xf]
        %v2741 = vld [vmem:[#allocation5 + $0x164] sm:$0xf]
        %v2742 = vld [vmem:[#allocation5 + $0x168] sm:$0xf]
        %v2743 = vld [vmem:[#allocation5 + $0x16c] sm:$0xf]
        %v2744 = vld [vmem:[#allocation5 + $0x170] sm:$0xf]
        %v2745 = vld [vmem:[#allocation5 + $0x174] sm:$0xf]
        %v2746 = vld [vmem:[#allocation5 + $0x178] sm:$0xf]
        %v2747 = vld [vmem:[#allocation5 + $0x17c] sm:$0xf]
        %v2748 = vld [vmem:[#allocation5 + $0x180] sm:$0xf]
        %v2749 = vld [vmem:[#allocation5 + $0x184] sm:$0xf]
        %v2750 = vld [vmem:[#allocation5 + $0x188] sm:$0xf]
        %v2751 = vld [vmem:[#allocation5 + $0x18c] sm:$0xf]
        %v2752 = vld [vmem:[#allocation5 + $0x190] sm:$0xf]
        %v2753 = vld [vmem:[#allocation5 + $0x194] sm:$0xf]
        %v2754 = vld [vmem:[#allocation5 + $0x198] sm:$0xf]
        %v2755 = vld [vmem:[#allocation5 + $0x19c] sm:$0xf]
        %v2756 = vld [vmem:[#allocation5 + $0x1a0] sm:$0xf]
        %v2757 = vld [vmem:[#allocation5 + $0x1a4] sm:$0xf]
        %v2758 = vld [vmem:[#allocation5 + $0x1a8] sm:$0xf]
        %v2759 = vld [vmem:[#allocation5 + $0x1ac] sm:$0xf]
        %v2760 = vld [vmem:[#allocation5 + $0x1b0] sm:$0xf]
        %v2761 = vld [vmem:[#allocation5 + $0x1b4] sm:$0xf]
        %v2762 = vld [vmem:[#allocation5 + $0x1b8] sm:$0xf]
        %v2763 = vld [vmem:[#allocation5 + $0x1bc] sm:$0xf]
        %v2764 = vld [vmem:[#allocation5 + $0x1c0] sm:$0xf]
        %v2765 = vld [vmem:[#allocation5 + $0x1c4] sm:$0xf]
        %v2766 = vld [vmem:[#allocation5 + $0x1c8] sm:$0xf]
        %v2767 = vld [vmem:[#allocation5 + $0x1cc] sm:$0xf]
        %v2768 = vld [vmem:[#allocation5 + $0x1d0] sm:$0xf]
        %v2769 = vld [vmem:[#allocation5 + $0x1d4] sm:$0xf]
        %v2770 = vld [vmem:[#allocation5 + $0x1d8] sm:$0xf]
        %v2771 = vld [vmem:[#allocation5 + $0x1dc] sm:$0xf]
        %v2772 = vld [vmem:[#allocation5 + $0x1e0] sm:$0xf]
        %v2773 = vld [vmem:[#allocation5 + $0x1e4] sm:$0xf]
        %v2774 = vld [vmem:[#allocation5 + $0x1e8] sm:$0xf]
        %v2775 = vld [vmem:[#allocation5 + $0x1ec] sm:$0xf]
        %v2776 = vld [vmem:[#allocation5 + $0x1f0] sm:$0xf]
        %v2777 = vld [vmem:[#allocation5 + $0x1f4] sm:$0xf]
        %v2778 = vld [vmem:[#allocation5 + $0x1f8] sm:$0xf]
        %v2779 = vld [vmem:[#allocation5 + $0x1fc] sm:$0xf]
        %v2780 = vld [vmem:[#allocation5 + $0x200] sm:$0xf]
        %v2781 = vld [vmem:[#allocation5 + $0x204] sm:$0xf]
        %v2782 = vld [vmem:[#allocation5 + $0x208] sm:$0xf]
        %v2783 = vld [vmem:[#allocation5 + $0x20c] sm:$0xf]
        %v2784 = vld [vmem:[#allocation5 + $0x210] sm:$0xf]
        %v2785 = vld [vmem:[#allocation5 + $0x214] sm:$0xf]
        %v2786 = vld [vmem:[#allocation5 + $0x218] sm:$0xf]
        %v2787 = vld [vmem:[#allocation5 + $0x21c] sm:$0xf]
        %v2788 = vld [vmem:[#allocation5 + $0x220] sm:$0xf]
        %v2789 = vld [vmem:[#allocation5 + $0x224] sm:$0xf]
        %v2790 = vld [vmem:[#allocation5 + $0x228] sm:$0xf]
        %v2791 = vld [vmem:[#allocation5 + $0x22c] sm:$0xf]
        %v2792 = vld [vmem:[#allocation5 + $0x230] sm:$0xf]
        %v2793 = vld [vmem:[#allocation5 + $0x234] sm:$0xf]
        %v2794 = vld [vmem:[#allocation5 + $0x238] sm:$0xf]
        %v2795 = vld [vmem:[#allocation5 + $0x23c] sm:$0xf]
        %v2940 = vunpack.c.l.b16 %v2652
        %v2941 = vunpack.c.l.b16 %v2653
        %v2942 = vunpack.c.l.b16 %v2654
        %v2943 = vunpack.c.l.b16 %v2655
        %v2944 = vunpack.c.l.b16 %v2656
        %v2945 = vunpack.c.l.b16 %v2657
        %v2946 = vunpack.c.l.b16 %v2658
        %v2947 = vunpack.c.l.b16 %v2659
        %v2948 = vunpack.c.l.b16 %v2660
        %v2949 = vunpack.c.l.b16 %v2661
        %v2950 = vunpack.c.l.b16 %v2662
        %v2951 = vunpack.c.l.b16 %v2663
        %v2952 = vunpack.c.l.b16 %v2664
        %v2953 = vunpack.c.l.b16 %v2665
        %v2954 = vunpack.c.l.b16 %v2666
        %v2955 = vunpack.c.l.b16 %v2667
        %v2956 = vunpack.c.l.b16 %v2668
        %v2957 = vunpack.c.l.b16 %v2669
        %v2958 = vunpack.c.l.b16 %v2670
        %v2959 = vunpack.c.l.b16 %v2671
        %v2960 = vunpack.c.l.b16 %v2672
        %v2961 = vunpack.c.l.b16 %v2673
        %v2962 = vunpack.c.l.b16 %v2674
        %v2963 = vunpack.c.l.b16 %v2675
        %v2964 = vunpack.c.l.b16 %v2676
        %v2965 = vunpack.c.l.b16 %v2677
        %v2966 = vunpack.c.l.b16 %v2678
        %v2967 = vunpack.c.l.b16 %v2679
        %v2968 = vunpack.c.l.b16 %v2680
        %v2969 = vunpack.c.l.b16 %v2681
        %v2970 = vunpack.c.l.b16 %v2682
        %v2971 = vunpack.c.l.b16 %v2683
        %v2972 = vunpack.c.l.b16 %v2684
        %v2973 = vunpack.c.l.b16 %v2685
        %v2974 = vunpack.c.l.b16 %v2686
        %v2975 = vunpack.c.l.b16 %v2687
        %v2976 = vunpack.c.l.b16 %v2688
        %v2977 = vunpack.c.l.b16 %v2689
        %v2978 = vunpack.c.l.b16 %v2690
        %v2979 = vunpack.c.l.b16 %v2691
        %v2980 = vunpack.c.l.b16 %v2692
        %v2981 = vunpack.c.l.b16 %v2693
        %v2982 = vunpack.c.l.b16 %v2694
        %v2983 = vunpack.c.l.b16 %v2695
        %v2984 = vunpack.c.l.b16 %v2696
        %v2985 = vunpack.c.l.b16 %v2697
        %v2986 = vunpack.c.l.b16 %v2698
        %v2987 = vunpack.c.l.b16 %v2699
        %v2988 = vunpack.c.l.b16 %v2700
        %v2989 = vunpack.c.l.b16 %v2701
        %v2990 = vunpack.c.l.b16 %v2702
        %v2991 = vunpack.c.l.b16 %v2703
        %v2992 = vunpack.c.l.b16 %v2704
        %v2993 = vunpack.c.l.b16 %v2705
        %v2994 = vunpack.c.l.b16 %v2706
        %v2995 = vunpack.c.l.b16 %v2707
        %v2996 = vunpack.c.l.b16 %v2708
        %v2997 = vunpack.c.l.b16 %v2709
        %v2998 = vunpack.c.l.b16 %v2710
        %v2999 = vunpack.c.l.b16 %v2711
        %v3000 = vunpack.c.l.b16 %v2712
        %v3001 = vunpack.c.l.b16 %v2713
        %v3002 = vunpack.c.l.b16 %v2714
        %v3003 = vunpack.c.l.b16 %v2715
        %v3004 = vunpack.c.l.b16 %v2716
        %v3005 = vunpack.c.l.b16 %v2717
        %v3006 = vunpack.c.l.b16 %v2718
        %v3007 = vunpack.c.l.b16 %v2719
        %v3008 = vunpack.c.l.b16 %v2720
        %v3009 = vunpack.c.l.b16 %v2721
        %v3010 = vunpack.c.l.b16 %v2722
        %v3011 = vunpack.c.l.b16 %v2723
        %v3012 = vunpack.c.l.b16 %v2724
        %v3013 = vunpack.c.l.b16 %v2725
        %v3014 = vunpack.c.l.b16 %v2726
        %v3015 = vunpack.c.l.b16 %v2727
        %v3016 = vunpack.c.l.b16 %v2728
        %v3017 = vunpack.c.l.b16 %v2729
        %v3018 = vunpack.c.l.b16 %v2730
        %v3019 = vunpack.c.l.b16 %v2731
        %v3020 = vunpack.c.l.b16 %v2732
        %v3021 = vunpack.c.l.b16 %v2733
        %v3022 = vunpack.c.l.b16 %v2734
        %v3023 = vunpack.c.l.b16 %v2735
        %v3024 = vunpack.c.l.b16 %v2736
        %v3025 = vunpack.c.l.b16 %v2737
        %v3026 = vunpack.c.l.b16 %v2738
        %v3027 = vunpack.c.l.b16 %v2739
        %v3028 = vunpack.c.l.b16 %v2740
        %v3029 = vunpack.c.l.b16 %v2741
        %v3030 = vunpack.c.l.b16 %v2742
        %v3031 = vunpack.c.l.b16 %v2743
        %v3032 = vunpack.c.l.b16 %v2744
        %v3033 = vunpack.c.l.b16 %v2745
        %v3034 = vunpack.c.l.b16 %v2746
        %v3035 = vunpack.c.l.b16 %v2747
        %v3036 = vunpack.c.l.b16 %v2748
        %v3037 = vunpack.c.l.b16 %v2749
        %v3038 = vunpack.c.l.b16 %v2750
        %v3039 = vunpack.c.l.b16 %v2751
        %v3040 = vunpack.c.l.b16 %v2752
        %v3041 = vunpack.c.l.b16 %v2753
        %v3042 = vunpack.c.l.b16 %v2754
        %v3043 = vunpack.c.l.b16 %v2755
        %v3044 = vunpack.c.l.b16 %v2756
        %v3045 = vunpack.c.l.b16 %v2757
        %v3046 = vunpack.c.l.b16 %v2758
        %v3047 = vunpack.c.l.b16 %v2759
        %v3048 = vunpack.c.l.b16 %v2760
        %v3049 = vunpack.c.l.b16 %v2761
        %v3050 = vunpack.c.l.b16 %v2762
        %v3051 = vunpack.c.l.b16 %v2763
        %v3052 = vunpack.c.l.b16 %v2764
        %v3053 = vunpack.c.l.b16 %v2765
        %v3054 = vunpack.c.l.b16 %v2766
        %v3055 = vunpack.c.l.b16 %v2767
        %v3056 = vunpack.c.l.b16 %v2768
        %v3057 = vunpack.c.l.b16 %v2769
        %v3058 = vunpack.c.l.b16 %v2770
        %v3059 = vunpack.c.l.b16 %v2771
        %v3060 = vunpack.c.l.b16 %v2772
        %v3061 = vunpack.c.l.b16 %v2773
        %v3062 = vunpack.c.l.b16 %v2774
        %v3063 = vunpack.c.l.b16 %v2775
        %v3064 = vunpack.c.l.b16 %v2776
        %v3065 = vunpack.c.l.b16 %v2777
        %v3066 = vunpack.c.l.b16 %v2778
        %v3067 = vunpack.c.l.b16 %v2779
        %v3068 = vunpack.c.l.b16 %v2780
        %v3069 = vunpack.c.l.b16 %v2781
        %v3070 = vunpack.c.l.b16 %v2782
        %v3071 = vunpack.c.l.b16 %v2783
        %v3072 = vunpack.c.l.b16 %v2784
        %v3073 = vunpack.c.l.b16 %v2785
        %v3074 = vunpack.c.l.b16 %v2786
        %v3075 = vunpack.c.l.b16 %v2787
        %v3076 = vunpack.c.l.b16 %v2788
        %v3077 = vunpack.c.l.b16 %v2789
        %v3078 = vunpack.c.l.b16 %v2790
        %v3079 = vunpack.c.l.b16 %v2791
        %v3080 = vunpack.c.l.b16 %v2792
        %v3081 = vunpack.c.l.b16 %v2793
        %v3082 = vunpack.c.l.b16 %v2794
        %v3083 = vunpack.c.l.b16 %v2795
        %v3084 = vpack.c.b16 %v2941, %v2940
        %v3085 = vpack.c.b16 %v2943, %v2942
        %v3086 = vpack.c.b16 %v2945, %v2944
        %v3087 = vpack.c.b16 %v2947, %v2946
        %v3088 = vpack.c.b16 %v2949, %v2948
        %v3089 = vpack.c.b16 %v2951, %v2950
        %v3090 = vpack.c.b16 %v2953, %v2952
        %v3091 = vpack.c.b16 %v2955, %v2954
        %v3092 = vpack.c.b16 %v2957, %v2956
        %v3093 = vpack.c.b16 %v2959, %v2958
        %v3094 = vpack.c.b16 %v2961, %v2960
        %v3095 = vpack.c.b16 %v2963, %v2962
        %v3096 = vpack.c.b16 %v2965, %v2964
        %v3097 = vpack.c.b16 %v2967, %v2966
        %v3098 = vpack.c.b16 %v2969, %v2968
        %v3099 = vpack.c.b16 %v2971, %v2970
        %v3100 = vpack.c.b16 %v2973, %v2972
        %v3101 = vpack.c.b16 %v2975, %v2974
        %v3102 = vpack.c.b16 %v2977, %v2976
        %v3103 = vpack.c.b16 %v2979, %v2978
        %v3104 = vpack.c.b16 %v2981, %v2980
        %v3105 = vpack.c.b16 %v2983, %v2982
        %v3106 = vpack.c.b16 %v2985, %v2984
        %v3107 = vpack.c.b16 %v2987, %v2986
        %v3108 = vpack.c.b16 %v2989, %v2988
        %v3109 = vpack.c.b16 %v2991, %v2990
        %v3110 = vpack.c.b16 %v2993, %v2992
        %v3111 = vpack.c.b16 %v2995, %v2994
        %v3112 = vpack.c.b16 %v2997, %v2996
        %v3113 = vpack.c.b16 %v2999, %v2998
        %v3114 = vpack.c.b16 %v3001, %v3000
        %v3115 = vpack.c.b16 %v3003, %v3002
        %v3116 = vpack.c.b16 %v3005, %v3004
        %v3117 = vpack.c.b16 %v3007, %v3006
        %v3118 = vpack.c.b16 %v3009, %v3008
        %v3119 = vpack.c.b16 %v3011, %v3010
        %v3120 = vpack.c.b16 %v3013, %v3012
        %v3121 = vpack.c.b16 %v3015, %v3014
        %v3122 = vpack.c.b16 %v3017, %v3016
        %v3123 = vpack.c.b16 %v3019, %v3018
        %v3124 = vpack.c.b16 %v3021, %v3020
        %v3125 = vpack.c.b16 %v3023, %v3022
        %v3126 = vpack.c.b16 %v3025, %v3024
        %v3127 = vpack.c.b16 %v3027, %v3026
        %v3128 = vpack.c.b16 %v3029, %v3028
        %v3129 = vpack.c.b16 %v3031, %v3030
        %v3130 = vpack.c.b16 %v3033, %v3032
        %v3131 = vpack.c.b16 %v3035, %v3034
        %v3132 = vpack.c.b16 %v3037, %v3036
        %v3133 = vpack.c.b16 %v3039, %v3038
        %v3134 = vpack.c.b16 %v3041, %v3040
        %v3135 = vpack.c.b16 %v3043, %v3042
        %v3136 = vpack.c.b16 %v3045, %v3044
        %v3137 = vpack.c.b16 %v3047, %v3046
        %v3138 = vpack.c.b16 %v3049, %v3048
        %v3139 = vpack.c.b16 %v3051, %v3050
        %v3140 = vpack.c.b16 %v3053, %v3052
        %v3141 = vpack.c.b16 %v3055, %v3054
        %v3142 = vpack.c.b16 %v3057, %v3056
        %v3143 = vpack.c.b16 %v3059, %v3058
        %v3144 = vpack.c.b16 %v3061, %v3060
        %v3145 = vpack.c.b16 %v3063, %v3062
        %v3146 = vpack.c.b16 %v3065, %v3064
        %v3147 = vpack.c.b16 %v3067, %v3066
        %v3148 = vpack.c.b16 %v3069, %v3068
        %v3149 = vpack.c.b16 %v3071, %v3070
        %v3150 = vpack.c.b16 %v3073, %v3072
        %v3151 = vpack.c.b16 %v3075, %v3074
        %v3152 = vpack.c.b16 %v3077, %v3076
        %v3153 = vpack.c.b16 %v3079, %v3078
        %v3154 = vpack.c.b16 %v3081, %v3080
        %v3155 = vpack.c.b16 %v3083, %v3082
        %3228 = vmatprep.subr.bf16.mxu0 0
        %3229 = vmatpush1.bf16.msra.mxu0 %v3091
        %3230 = vmatprep.subr.bf16.mxu0 0
        %3231 = vmatpush1.bf16.msra.mxu0 %v3090
        %3232 = vmatprep.subr.bf16.mxu0 0
        %3233 = vmatpush1.bf16.msra.mxu0 %v3089
        %3234 = vmatprep.subr.bf16.mxu0 0
        %3235 = vmatpush1.bf16.msra.mxu0 %v3088
        %3236 = vmatprep.subr.bf16.mxu0 0
        %3237 = vmatpush1.bf16.msra.mxu0 %v3087
        %3238 = vmatprep.subr.bf16.mxu0 0
        %3239 = vmatpush1.bf16.msra.mxu0 %v3086
        %3240 = vmatprep.subr.bf16.mxu0 0
        %3241 = vmatpush1.bf16.msra.mxu0 %v3085
        %3242 = vmatprep.subr.bf16.mxu0 0
        %3243 = vmatpush1.bf16.msra.mxu0 %v3084
        %3244 = vmatprep.subr.bf16.mxu0 0
        %3245 = vmatpush2.bf16.msra.mxu0 %v3099
        %3246 = vmatprep.subr.bf16.mxu0 0
        %3247 = vmatpush2.bf16.msra.mxu0 %v3098
        %3248 = vmatprep.subr.bf16.mxu0 0
        %3249 = vmatpush2.bf16.msra.mxu0 %v3097
        %3250 = vmatprep.subr.bf16.mxu0 0
        %3251 = vmatpush2.bf16.msra.mxu0 %v3096
        %3252 = vmatprep.subr.bf16.mxu0 0
        %3253 = vmatpush2.bf16.msra.mxu0 %v3095
        %3254 = vmatprep.subr.bf16.mxu0 0
        %3255 = vmatpush2.bf16.msra.mxu0 %v3094
        %3256 = vmatprep.subr.bf16.mxu0 0
        %3257 = vmatpush2.bf16.msra.mxu0 %v3093
        %3258 = vmatprep.subr.bf16.mxu0 0
        %3259 = vmatpush2.bf16.msra.mxu0 %v3092
        %3260 = vmatprep.mubr.bf16.mxu0 %v1883
        %3261 = vmatmul.mubr.bf16.gmra.mxu0 %v1771
        %v3262 = vpop.f32.mrf.mxu0
        %v3263 = vadd.f32 0.0, %v3262
        %v3264 = vpop.f32.mrf.mxu0
        %v3265 = vpop.f32.mrf.mxu0
        %v3266 = vadd.f32 0.0, %v3265
        %v3267 = vpop.f32.mrf.mxu0
        %3268 = vmatprep.mubr.bf16.mxu0 %v1884
        %3269 = vmatmul.mubr.bf16.gmra.mxu0 %v1772
        %v3270 = vpop.f32.mrf.mxu0
        %v3271 = vadd.f32 0.0, %v3270
        %v3272 = vpop.f32.mrf.mxu0
        %v3273 = vpop.f32.mrf.mxu0
        %v3274 = vadd.f32 0.0, %v3273
        %v3275 = vpop.f32.mrf.mxu0
        %3276 = vmatprep.mubr.bf16.mxu0 %v1885
        %3277 = vmatmul.mubr.bf16.gmra.mxu0 %v1773
        %v3278 = vpop.f32.mrf.mxu0
        %v3279 = vadd.f32 0.0, %v3278
        %v3280 = vpop.f32.mrf.mxu0
        %v3281 = vpop.f32.mrf.mxu0
        %v3282 = vadd.f32 0.0, %v3281
        %v3283 = vpop.f32.mrf.mxu0
        %3284 = vmatprep.mubr.bf16.mxu0 %v1886
        %3285 = vmatmul.mubr.bf16.gmra.mxu0 %v1774
        %v3286 = vpop.f32.mrf.mxu0
        %v3287 = vadd.f32 0.0, %v3286
        %v3288 = vpop.f32.mrf.mxu0
        %v3289 = vpop.f32.mrf.mxu0
        %v3290 = vadd.f32 0.0, %v3289
        %v3291 = vpop.f32.mrf.mxu0
        %3292 = vmatprep.mubr.bf16.mxu0 %v1887
        %3293 = vmatmul.mubr.bf16.gmra.mxu0 %v1775
        %v3294 = vpop.f32.mrf.mxu0
        %v3295 = vadd.f32 0.0, %v3294
        %v3296 = vpop.f32.mrf.mxu0
        %v3297 = vpop.f32.mrf.mxu0
        %v3298 = vadd.f32 0.0, %v3297
        %v3299 = vpop.f32.mrf.mxu0
        %3300 = vmatprep.mubr.bf16.mxu0 %v1888
        %3301 = vmatmul.mubr.bf16.gmra.mxu0 %v1776
        %v3302 = vpop.f32.mrf.mxu0
        %v3303 = vadd.f32 0.0, %v3302
        %v3304 = vpop.f32.mrf.mxu0
        %v3305 = vpop.f32.mrf.mxu0
        %v3306 = vadd.f32 0.0, %v3305
        %v3307 = vpop.f32.mrf.mxu0
        %3308 = vmatprep.mubr.bf16.mxu0 %v1889
        %3309 = vmatmul.mubr.bf16.gmra.mxu0 %v1777
        %v3310 = vpop.f32.mrf.mxu0
        %v3311 = vadd.f32 0.0, %v3310
        %v3312 = vpop.f32.mrf.mxu0
        %v3313 = vpop.f32.mrf.mxu0
        %v3314 = vadd.f32 0.0, %v3313
        %v3315 = vpop.f32.mrf.mxu0
        %3316 = vmatprep.mubr.bf16.mxu0 %v1890
        %3317 = vmatmul.mubr.bf16.gmra.mxu0 %v1778
        %v3318 = vpop.f32.mrf.mxu0
        %v3319 = vadd.f32 0.0, %v3318
        %v3320 = vpop.f32.mrf.mxu0
        %v3321 = vpop.f32.mrf.mxu0
        %v3322 = vadd.f32 0.0, %v3321
        %v3323 = vpop.f32.mrf.mxu0
        %3324 = vmatprep.mubr.bf16.mxu0 %v1891
        %3325 = vmatmul.mubr.bf16.gmra.mxu0 %v1779
        %v3326 = vpop.f32.mrf.mxu0
        %v3327 = vadd.f32 0.0, %v3326
        %v3328 = vpop.f32.mrf.mxu0
        %v3329 = vpop.f32.mrf.mxu0
        %v3330 = vadd.f32 0.0, %v3329
        %v3331 = vpop.f32.mrf.mxu0
        %3332 = vmatprep.mubr.bf16.mxu0 %v1892
        %3333 = vmatmul.mubr.bf16.gmra.mxu0 %v1780
        %v3334 = vpop.f32.mrf.mxu0
        %v3335 = vadd.f32 0.0, %v3334
        %v3336 = vpop.f32.mrf.mxu0
        %v3337 = vpop.f32.mrf.mxu0
        %v3338 = vadd.f32 0.0, %v3337
        %v3339 = vpop.f32.mrf.mxu0
        %3340 = vmatprep.mubr.bf16.mxu0 %v1893
        %3341 = vmatmul.mubr.bf16.gmra.mxu0 %v1781
        %v3342 = vpop.f32.mrf.mxu0
        %v3343 = vadd.f32 0.0, %v3342
        %v3344 = vpop.f32.mrf.mxu0
        %v3345 = vpop.f32.mrf.mxu0
        %v3346 = vadd.f32 0.0, %v3345
        %v3347 = vpop.f32.mrf.mxu0
        %3348 = vmatprep.mubr.bf16.mxu0 %v1894
        %3349 = vmatmul.mubr.bf16.gmra.mxu0 %v1782
        %v3350 = vpop.f32.mrf.mxu0
        %v3351 = vadd.f32 0.0, %v3350
        %v3352 = vpop.f32.mrf.mxu0
        %v3353 = vpop.f32.mrf.mxu0
        %v3354 = vadd.f32 0.0, %v3353
        %v3355 = vpop.f32.mrf.mxu0
        %3356 = vmatprep.mubr.bf16.mxu0 %v1895
        %3357 = vmatmul.mubr.bf16.gmra.mxu0 %v1783
        %v3358 = vpop.f32.mrf.mxu0
        %v3359 = vadd.f32 0.0, %v3358
        %v3360 = vpop.f32.mrf.mxu0
        %v3361 = vpop.f32.mrf.mxu0
        %v3362 = vadd.f32 0.0, %v3361
        %v3363 = vpop.f32.mrf.mxu0
        %3364 = vmatprep.mubr.bf16.mxu0 %v1896
        %3365 = vmatmul.mubr.bf16.gmra.mxu0 %v1784
        %v3366 = vpop.f32.mrf.mxu0
        %v3367 = vadd.f32 0.0, %v3366
        %v3368 = vpop.f32.mrf.mxu0
        %v3369 = vpop.f32.mrf.mxu0
        %v3370 = vadd.f32 0.0, %v3369
        %v3371 = vpop.f32.mrf.mxu0
        %3372 = vmatprep.mubr.bf16.mxu0 %v1897
        %3373 = vmatmul.mubr.bf16.gmra.mxu0 %v1785
        %v3374 = vpop.f32.mrf.mxu0
        %v3375 = vadd.f32 0.0, %v3374
        %v3376 = vpop.f32.mrf.mxu0
        %v3377 = vpop.f32.mrf.mxu0
        %v3378 = vadd.f32 0.0, %v3377
        %v3379 = vpop.f32.mrf.mxu0
        %3380 = vmatprep.mubr.bf16.mxu0 %v1898
        %3381 = vmatmul.mubr.bf16.gmra.mxu0 %v1786
        %v3382 = vpop.f32.mrf.mxu0
        %v3383 = vadd.f32 0.0, %v3382
        %v3384 = vpop.f32.mrf.mxu0
        %v3385 = vpop.f32.mrf.mxu0
        %v3386 = vadd.f32 0.0, %v3385
        %v3387 = vpop.f32.mrf.mxu0
        %3388 = vdwg.mxu0
        %3389 = vmatprep.subr.bf16.mxu0 0
        %3390 = vmatpush1.bf16.msra.mxu0 %v3107
        %3391 = vmatprep.subr.bf16.mxu0 0
        %3392 = vmatpush1.bf16.msra.mxu0 %v3106
        %3393 = vmatprep.subr.bf16.mxu0 0
        %3394 = vmatpush1.bf16.msra.mxu0 %v3105
        %3395 = vmatprep.subr.bf16.mxu0 0
        %3396 = vmatpush1.bf16.msra.mxu0 %v3104
        %3397 = vmatprep.subr.bf16.mxu0 0
        %3398 = vmatpush1.bf16.msra.mxu0 %v3103
        %3399 = vmatprep.subr.bf16.mxu0 0
        %3400 = vmatpush1.bf16.msra.mxu0 %v3102
        %3401 = vmatprep.subr.bf16.mxu0 0
        %3402 = vmatpush1.bf16.msra.mxu0 %v3101
        %3403 = vmatprep.subr.bf16.mxu0 0
        %3404 = vmatpush1.bf16.msra.mxu0 %v3100
        %3405 = vmatprep.subr.bf16.mxu0 0
        %3406 = vmatpush2.bf16.msra.mxu0 %v3115
        %3407 = vmatprep.subr.bf16.mxu0 0
        %3408 = vmatpush2.bf16.msra.mxu0 %v3114
        %3409 = vmatprep.subr.bf16.mxu0 0
        %3410 = vmatpush2.bf16.msra.mxu0 %v3113
        %3411 = vmatprep.subr.bf16.mxu0 0
        %3412 = vmatpush2.bf16.msra.mxu0 %v3112
        %3413 = vmatprep.subr.bf16.mxu0 0
        %3414 = vmatpush2.bf16.msra.mxu0 %v3111
        %3415 = vmatprep.subr.bf16.mxu0 0
        %3416 = vmatpush2.bf16.msra.mxu0 %v3110
        %3417 = vmatprep.subr.bf16.mxu0 0
        %3418 = vmatpush2.bf16.msra.mxu0 %v3109
        %3419 = vmatprep.subr.bf16.mxu0 0
        %3420 = vmatpush2.bf16.msra.mxu0 %v3108
        %3421 = vmatprep.mubr.bf16.mxu0 %v2172
        %3422 = vmatmul.mubr.bf16.gmra.mxu0 %v2060
        %v3423 = vpop.f32.mrf.mxu0
        %v3424 = vadd.f32 %v3263, %v3423
        %v3425 = vpop.f32.mrf.mxu0
        %v3426 = vpop.f32.mrf.mxu0
        %v3427 = vadd.f32 %v3266, %v3426
        %v3428 = vpop.f32.mrf.mxu0
        %3429 = vmatprep.mubr.bf16.mxu0 %v2173
        %3430 = vmatmul.mubr.bf16.gmra.mxu0 %v2061
        %v3431 = vpop.f32.mrf.mxu0
        %v3432 = vadd.f32 %v3271, %v3431
        %v3433 = vpop.f32.mrf.mxu0
        %v3434 = vpop.f32.mrf.mxu0
        %v3435 = vadd.f32 %v3274, %v3434
        %v3436 = vpop.f32.mrf.mxu0
        %3437 = vmatprep.mubr.bf16.mxu0 %v2174
        %3438 = vmatmul.mubr.bf16.gmra.mxu0 %v2062
        %v3439 = vpop.f32.mrf.mxu0
        %v3440 = vadd.f32 %v3279, %v3439
        %v3441 = vpop.f32.mrf.mxu0
        %v3442 = vpop.f32.mrf.mxu0
        %v3443 = vadd.f32 %v3282, %v3442
        %v3444 = vpop.f32.mrf.mxu0
        %3445 = vmatprep.mubr.bf16.mxu0 %v2175
        %3446 = vmatmul.mubr.bf16.gmra.mxu0 %v2063
        %v3447 = vpop.f32.mrf.mxu0
        %v3448 = vadd.f32 %v3287, %v3447
        %v3449 = vpop.f32.mrf.mxu0
        %v3450 = vpop.f32.mrf.mxu0
        %v3451 = vadd.f32 %v3290, %v3450
        %v3452 = vpop.f32.mrf.mxu0
        %3453 = vmatprep.mubr.bf16.mxu0 %v2176
        %3454 = vmatmul.mubr.bf16.gmra.mxu0 %v2064
        %v3455 = vpop.f32.mrf.mxu0
        %v3456 = vadd.f32 %v3295, %v3455
        %v3457 = vpop.f32.mrf.mxu0
        %v3458 = vpop.f32.mrf.mxu0
        %v3459 = vadd.f32 %v3298, %v3458
        %v3460 = vpop.f32.mrf.mxu0
        %3461 = vmatprep.mubr.bf16.mxu0 %v2177
        %3462 = vmatmul.mubr.bf16.gmra.mxu0 %v2065
        %v3463 = vpop.f32.mrf.mxu0
        %v3464 = vadd.f32 %v3303, %v3463
        %v3465 = vpop.f32.mrf.mxu0
        %v3466 = vpop.f32.mrf.mxu0
        %v3467 = vadd.f32 %v3306, %v3466
        %v3468 = vpop.f32.mrf.mxu0
        %3469 = vmatprep.mubr.bf16.mxu0 %v2178
        %3470 = vmatmul.mubr.bf16.gmra.mxu0 %v2066
        %v3471 = vpop.f32.mrf.mxu0
        %v3472 = vadd.f32 %v3311, %v3471
        %v3473 = vpop.f32.mrf.mxu0
        %v3474 = vpop.f32.mrf.mxu0
        %v3475 = vadd.f32 %v3314, %v3474
        %v3476 = vpop.f32.mrf.mxu0
        %3477 = vmatprep.mubr.bf16.mxu0 %v2179
        %3478 = vmatmul.mubr.bf16.gmra.mxu0 %v2067
        %v3479 = vpop.f32.mrf.mxu0
        %v3480 = vadd.f32 %v3319, %v3479
        %v3481 = vpop.f32.mrf.mxu0
        %v3482 = vpop.f32.mrf.mxu0
        %v3483 = vadd.f32 %v3322, %v3482
        %v3484 = vpop.f32.mrf.mxu0
        %3485 = vmatprep.mubr.bf16.mxu0 %v2180
        %3486 = vmatmul.mubr.bf16.gmra.mxu0 %v2068
        %v3487 = vpop.f32.mrf.mxu0
        %v3488 = vadd.f32 %v3327, %v3487
        %v3489 = vpop.f32.mrf.mxu0
        %v3490 = vpop.f32.mrf.mxu0
        %v3491 = vadd.f32 %v3330, %v3490
        %v3492 = vpop.f32.mrf.mxu0
        %3493 = vmatprep.mubr.bf16.mxu0 %v2181
        %3494 = vmatmul.mubr.bf16.gmra.mxu0 %v2069
        %v3495 = vpop.f32.mrf.mxu0
        %v3496 = vadd.f32 %v3335, %v3495
        %v3497 = vpop.f32.mrf.mxu0
        %v3498 = vpop.f32.mrf.mxu0
        %v3499 = vadd.f32 %v3338, %v3498
        %v3500 = vpop.f32.mrf.mxu0
        %3501 = vmatprep.mubr.bf16.mxu0 %v2182
        %3502 = vmatmul.mubr.bf16.gmra.mxu0 %v2070
        %v3503 = vpop.f32.mrf.mxu0
        %v3504 = vadd.f32 %v3343, %v3503
        %v3505 = vpop.f32.mrf.mxu0
        %v3506 = vpop.f32.mrf.mxu0
        %v3507 = vadd.f32 %v3346, %v3506
        %v3508 = vpop.f32.mrf.mxu0
        %3509 = vmatprep.mubr.bf16.mxu0 %v2183
        %3510 = vmatmul.mubr.bf16.gmra.mxu0 %v2071
        %v3511 = vpop.f32.mrf.mxu0
        %v3512 = vadd.f32 %v3351, %v3511
        %v3513 = vpop.f32.mrf.mxu0
        %v3514 = vpop.f32.mrf.mxu0
        %v3515 = vadd.f32 %v3354, %v3514
        %v3516 = vpop.f32.mrf.mxu0
        %3517 = vmatprep.mubr.bf16.mxu0 %v2184
        %3518 = vmatmul.mubr.bf16.gmra.mxu0 %v2072
        %v3519 = vpop.f32.mrf.mxu0
        %v3520 = vadd.f32 %v3359, %v3519
        %v3521 = vpop.f32.mrf.mxu0
        %v3522 = vpop.f32.mrf.mxu0
        %v3523 = vadd.f32 %v3362, %v3522
        %v3524 = vpop.f32.mrf.mxu0
        %3525 = vmatprep.mubr.bf16.mxu0 %v2185
        %3526 = vmatmul.mubr.bf16.gmra.mxu0 %v2073
        %v3527 = vpop.f32.mrf.mxu0
        %v3528 = vadd.f32 %v3367, %v3527
        %v3529 = vpop.f32.mrf.mxu0
        %v3530 = vpop.f32.mrf.mxu0
        %v3531 = vadd.f32 %v3370, %v3530
        %v3532 = vpop.f32.mrf.mxu0
        %3533 = vmatprep.mubr.bf16.mxu0 %v2186
        %3534 = vmatmul.mubr.bf16.gmra.mxu0 %v2074
        %v3535 = vpop.f32.mrf.mxu0
        %v3536 = vadd.f32 %v3375, %v3535
        %v3537 = vpop.f32.mrf.mxu0
        %v3538 = vpop.f32.mrf.mxu0
        %v3539 = vadd.f32 %v3378, %v3538
        %v3540 = vpop.f32.mrf.mxu0
        %3541 = vmatprep.mubr.bf16.mxu0 %v2187
        %3542 = vmatmul.mubr.bf16.gmra.mxu0 %v2075
        %v3543 = vpop.f32.mrf.mxu0
        %v3544 = vadd.f32 %v3383, %v3543
        %v3545 = vpop.f32.mrf.mxu0
        %v3546 = vpop.f32.mrf.mxu0
        %v3547 = vadd.f32 %v3386, %v3546
        %v3548 = vpop.f32.mrf.mxu0
        %3549 = vdwg.mxu0
        %3550 = vmatprep.subr.bf16.mxu0 0
        %3551 = vmatpush1.bf16.msra.mxu0 %v3123
        %3552 = vmatprep.subr.bf16.mxu0 0
        %3553 = vmatpush1.bf16.msra.mxu0 %v3122
        %3554 = vmatprep.subr.bf16.mxu0 0
        %3555 = vmatpush1.bf16.msra.mxu0 %v3121
        %3556 = vmatprep.subr.bf16.mxu0 0
        %3557 = vmatpush1.bf16.msra.mxu0 %v3120
        %3558 = vmatprep.subr.bf16.mxu0 0
        %3559 = vmatpush1.bf16.msra.mxu0 %v3119
        %3560 = vmatprep.subr.bf16.mxu0 0
        %3561 = vmatpush1.bf16.msra.mxu0 %v3118
        %3562 = vmatprep.subr.bf16.mxu0 0
        %3563 = vmatpush1.bf16.msra.mxu0 %v3117
        %3564 = vmatprep.subr.bf16.mxu0 0
        %3565 = vmatpush1.bf16.msra.mxu0 %v3116
        %3566 = vmatprep.subr.bf16.mxu0 0
        %3567 = vmatpush2.bf16.msra.mxu0 %v3131
        %3568 = vmatprep.subr.bf16.mxu0 0
        %3569 = vmatpush2.bf16.msra.mxu0 %v3130
        %3570 = vmatprep.subr.bf16.mxu0 0
        %3571 = vmatpush2.bf16.msra.mxu0 %v3129
        %3572 = vmatprep.subr.bf16.mxu0 0
        %3573 = vmatpush2.bf16.msra.mxu0 %v3128
        %3574 = vmatprep.subr.bf16.mxu0 0
        %3575 = vmatpush2.bf16.msra.mxu0 %v3127
        %3576 = vmatprep.subr.bf16.mxu0 0
        %3577 = vmatpush2.bf16.msra.mxu0 %v3126
        %3578 = vmatprep.subr.bf16.mxu0 0
        %3579 = vmatpush2.bf16.msra.mxu0 %v3125
        %3580 = vmatprep.subr.bf16.mxu0 0
        %3581 = vmatpush2.bf16.msra.mxu0 %v3124
        %3582 = vmatprep.mubr.bf16.mxu0 %v2300
        %3583 = vmatmul.mubr.bf16.gmra.mxu0 %v2188
        %v3584 = vpop.f32.mrf.mxu0
        %v3585 = vadd.f32 %v3424, %v3584
        %v3586 = vpop.f32.mrf.mxu0
        %v3587 = vpop.f32.mrf.mxu0
        %v3588 = vadd.f32 %v3427, %v3587
        %v3589 = vpop.f32.mrf.mxu0
        %3590 = vmatprep.mubr.bf16.mxu0 %v2301
        %3591 = vmatmul.mubr.bf16.gmra.mxu0 %v2189
        %v3592 = vpop.f32.mrf.mxu0
        %v3593 = vadd.f32 %v3432, %v3592
        %v3594 = vpop.f32.mrf.mxu0
        %v3595 = vpop.f32.mrf.mxu0
        %v3596 = vadd.f32 %v3435, %v3595
        %v3597 = vpop.f32.mrf.mxu0
        %3598 = vmatprep.mubr.bf16.mxu0 %v2302
        %3599 = vmatmul.mubr.bf16.gmra.mxu0 %v2190
        %v3600 = vpop.f32.mrf.mxu0
        %v3601 = vadd.f32 %v3440, %v3600
        %v3602 = vpop.f32.mrf.mxu0
        %v3603 = vpop.f32.mrf.mxu0
        %v3604 = vadd.f32 %v3443, %v3603
        %v3605 = vpop.f32.mrf.mxu0
        %3606 = vmatprep.mubr.bf16.mxu0 %v2303
        %3607 = vmatmul.mubr.bf16.gmra.mxu0 %v2191
        %v3608 = vpop.f32.mrf.mxu0
        %v3609 = vadd.f32 %v3448, %v3608
        %v3610 = vpop.f32.mrf.mxu0
        %v3611 = vpop.f32.mrf.mxu0
        %v3612 = vadd.f32 %v3451, %v3611
        %v3613 = vpop.f32.mrf.mxu0
        %3614 = vmatprep.mubr.bf16.mxu0 %v2304
        %3615 = vmatmul.mubr.bf16.gmra.mxu0 %v2192
        %v3616 = vpop.f32.mrf.mxu0
        %v3617 = vadd.f32 %v3456, %v3616
        %v3618 = vpop.f32.mrf.mxu0
        %v3619 = vpop.f32.mrf.mxu0
        %v3620 = vadd.f32 %v3459, %v3619
        %v3621 = vpop.f32.mrf.mxu0
        %3622 = vmatprep.mubr.bf16.mxu0 %v2305
        %3623 = vmatmul.mubr.bf16.gmra.mxu0 %v2193
        %v3624 = vpop.f32.mrf.mxu0
        %v3625 = vadd.f32 %v3464, %v3624
        %v3626 = vpop.f32.mrf.mxu0
        %v3627 = vpop.f32.mrf.mxu0
        %v3628 = vadd.f32 %v3467, %v3627
        %v3629 = vpop.f32.mrf.mxu0
        %3630 = vmatprep.mubr.bf16.mxu0 %v2306
        %3631 = vmatmul.mubr.bf16.gmra.mxu0 %v2194
        %v3632 = vpop.f32.mrf.mxu0
        %v3633 = vadd.f32 %v3472, %v3632
        %v3634 = vpop.f32.mrf.mxu0
        %v3635 = vpop.f32.mrf.mxu0
        %v3636 = vadd.f32 %v3475, %v3635
        %v3637 = vpop.f32.mrf.mxu0
        %3638 = vmatprep.mubr.bf16.mxu0 %v2307
        %3639 = vmatmul.mubr.bf16.gmra.mxu0 %v2195
        %v3640 = vpop.f32.mrf.mxu0
        %v3641 = vadd.f32 %v3480, %v3640
        %v3642 = vpop.f32.mrf.mxu0
        %v3643 = vpop.f32.mrf.mxu0
        %v3644 = vadd.f32 %v3483, %v3643
        %v3645 = vpop.f32.mrf.mxu0
        %3646 = vmatprep.mubr.bf16.mxu0 %v2308
        %3647 = vmatmul.mubr.bf16.gmra.mxu0 %v2196
        %v3648 = vpop.f32.mrf.mxu0
        %v3649 = vadd.f32 %v3488, %v3648
        %v3650 = vpop.f32.mrf.mxu0
        %v3651 = vpop.f32.mrf.mxu0
        %v3652 = vadd.f32 %v3491, %v3651
        %v3653 = vpop.f32.mrf.mxu0
        %3654 = vmatprep.mubr.bf16.mxu0 %v2309
        %3655 = vmatmul.mubr.bf16.gmra.mxu0 %v2197
        %v3656 = vpop.f32.mrf.mxu0
        %v3657 = vadd.f32 %v3496, %v3656
        %v3658 = vpop.f32.mrf.mxu0
        %v3659 = vpop.f32.mrf.mxu0
        %v3660 = vadd.f32 %v3499, %v3659
        %v3661 = vpop.f32.mrf.mxu0
        %3662 = vmatprep.mubr.bf16.mxu0 %v2310
        %3663 = vmatmul.mubr.bf16.gmra.mxu0 %v2198
        %v3664 = vpop.f32.mrf.mxu0
        %v3665 = vadd.f32 %v3504, %v3664
        %v3666 = vpop.f32.mrf.mxu0
        %v3667 = vpop.f32.mrf.mxu0
        %v3668 = vadd.f32 %v3507, %v3667
        %v3669 = vpop.f32.mrf.mxu0
        %3670 = vmatprep.mubr.bf16.mxu0 %v2311
        %3671 = vmatmul.mubr.bf16.gmra.mxu0 %v2199
        %v3672 = vpop.f32.mrf.mxu0
        %v3673 = vadd.f32 %v3512, %v3672
        %v3674 = vpop.f32.mrf.mxu0
        %v3675 = vpop.f32.mrf.mxu0
        %v3676 = vadd.f32 %v3515, %v3675
        %v3677 = vpop.f32.mrf.mxu0
        %3678 = vmatprep.mubr.bf16.mxu0 %v2312
        %3679 = vmatmul.mubr.bf16.gmra.mxu0 %v2200
        %v3680 = vpop.f32.mrf.mxu0
        %v3681 = vadd.f32 %v3520, %v3680
        %v3682 = vpop.f32.mrf.mxu0
        %v3683 = vpop.f32.mrf.mxu0
        %v3684 = vadd.f32 %v3523, %v3683
        %v3685 = vpop.f32.mrf.mxu0
        %3686 = vmatprep.mubr.bf16.mxu0 %v2313
        %3687 = vmatmul.mubr.bf16.gmra.mxu0 %v2201
        %v3688 = vpop.f32.mrf.mxu0
        %v3689 = vadd.f32 %v3528, %v3688
        %v3690 = vpop.f32.mrf.mxu0
        %v3691 = vpop.f32.mrf.mxu0
        %v3692 = vadd.f32 %v3531, %v3691
        %v3693 = vpop.f32.mrf.mxu0
        %3694 = vmatprep.mubr.bf16.mxu0 %v2314
        %3695 = vmatmul.mubr.bf16.gmra.mxu0 %v2202
        %v3696 = vpop.f32.mrf.mxu0
        %v3697 = vadd.f32 %v3536, %v3696
        %v3698 = vpop.f32.mrf.mxu0
        %v3699 = vpop.f32.mrf.mxu0
        %v3700 = vadd.f32 %v3539, %v3699
        %v3701 = vpop.f32.mrf.mxu0
        %3702 = vmatprep.mubr.bf16.mxu0 %v2315
        %3703 = vmatmul.mubr.bf16.gmra.mxu0 %v2203
        %v3704 = vpop.f32.mrf.mxu0
        %v3705 = vadd.f32 %v3544, %v3704
        %v3706 = vpop.f32.mrf.mxu0
        %v3707 = vpop.f32.mrf.mxu0
        %v3708 = vadd.f32 %v3547, %v3707
        %v3709 = vpop.f32.mrf.mxu0
        %3710 = vdwg.mxu0
        %3711 = vmatprep.subr.bf16.mxu0 0
        %3712 = vmatpush1.bf16.msra.mxu0 %v3139
        %3713 = vmatprep.subr.bf16.mxu0 0
        %3714 = vmatpush1.bf16.msra.mxu0 %v3138
        %3715 = vmatprep.subr.bf16.mxu0 0
        %3716 = vmatpush1.bf16.msra.mxu0 %v3137
        %3717 = vmatprep.subr.bf16.mxu0 0
        %3718 = vmatpush1.bf16.msra.mxu0 %v3136
        %3719 = vmatprep.subr.bf16.mxu0 0
        %3720 = vmatpush1.bf16.msra.mxu0 %v3135
        %3721 = vmatprep.subr.bf16.mxu0 0
        %3722 = vmatpush1.bf16.msra.mxu0 %v3134
        %3723 = vmatprep.subr.bf16.mxu0 0
        %3724 = vmatpush1.bf16.msra.mxu0 %v3133
        %3725 = vmatprep.subr.bf16.mxu0 0
        %3726 = vmatpush1.bf16.msra.mxu0 %v3132
        %3727 = vmatprep.subr.bf16.mxu0 0
        %3728 = vmatpush2.bf16.msra.mxu0 %v3147
        %3729 = vmatprep.subr.bf16.mxu0 0
        %3730 = vmatpush2.bf16.msra.mxu0 %v3146
        %3731 = vmatprep.subr.bf16.mxu0 0
        %3732 = vmatpush2.bf16.msra.mxu0 %v3145
        %3733 = vmatprep.subr.bf16.mxu0 0
        %3734 = vmatpush2.bf16.msra.mxu0 %v3144
        %3735 = vmatprep.subr.bf16.mxu0 0
        %3736 = vmatpush2.bf16.msra.mxu0 %v3143
        %3737 = vmatprep.subr.bf16.mxu0 0
        %3738 = vmatpush2.bf16.msra.mxu0 %v3142
        %3739 = vmatprep.subr.bf16.mxu0 0
        %3740 = vmatpush2.bf16.msra.mxu0 %v3141
        %3741 = vmatprep.subr.bf16.mxu0 0
        %3742 = vmatpush2.bf16.msra.mxu0 %v3140
        %3743 = vmatprep.mubr.bf16.mxu0 %v2524
        %3744 = vmatmul.mubr.bf16.gmra.mxu0 %v2412
        %v3745 = vpop.f32.mrf.mxu0
        %v3746 = vadd.f32 %v3585, %v3745
        %v3747 = vpop.f32.mrf.mxu0
        %v3748 = vpop.f32.mrf.mxu0
        %v3749 = vadd.f32 %v3588, %v3748
        %v3750 = vpop.f32.mrf.mxu0
        %3751 = vmatprep.mubr.bf16.mxu0 %v2525
        %3752 = vmatmul.mubr.bf16.gmra.mxu0 %v2413
        %v3753 = vpop.f32.mrf.mxu0
        %v3754 = vadd.f32 %v3593, %v3753
        %v3755 = vpop.f32.mrf.mxu0
        %v3756 = vpop.f32.mrf.mxu0
        %v3757 = vadd.f32 %v3596, %v3756
        %v3758 = vpop.f32.mrf.mxu0
        %3759 = vmatprep.mubr.bf16.mxu0 %v2526
        %3760 = vmatmul.mubr.bf16.gmra.mxu0 %v2414
        %v3761 = vpop.f32.mrf.mxu0
        %v3762 = vadd.f32 %v3601, %v3761
        %v3763 = vpop.f32.mrf.mxu0
        %v3764 = vpop.f32.mrf.mxu0
        %v3765 = vadd.f32 %v3604, %v3764
        %v3766 = vpop.f32.mrf.mxu0
        %3767 = vmatprep.mubr.bf16.mxu0 %v2527
        %3768 = vmatmul.mubr.bf16.gmra.mxu0 %v2415
        %v3769 = vpop.f32.mrf.mxu0
        %v3770 = vadd.f32 %v3609, %v3769
        %v3771 = vpop.f32.mrf.mxu0
        %v3772 = vpop.f32.mrf.mxu0
        %v3773 = vadd.f32 %v3612, %v3772
        %v3774 = vpop.f32.mrf.mxu0
        %3775 = vmatprep.mubr.bf16.mxu0 %v2528
        %3776 = vmatmul.mubr.bf16.gmra.mxu0 %v2416
        %v3777 = vpop.f32.mrf.mxu0
        %v3778 = vadd.f32 %v3617, %v3777
        %v3779 = vpop.f32.mrf.mxu0
        %v3780 = vpop.f32.mrf.mxu0
        %v3781 = vadd.f32 %v3620, %v3780
        %v3782 = vpop.f32.mrf.mxu0
        %3783 = vmatprep.mubr.bf16.mxu0 %v2529
        %3784 = vmatmul.mubr.bf16.gmra.mxu0 %v2417
        %v3785 = vpop.f32.mrf.mxu0
        %v3786 = vadd.f32 %v3625, %v3785
        %v3787 = vpop.f32.mrf.mxu0
        %v3788 = vpop.f32.mrf.mxu0
        %v3789 = vadd.f32 %v3628, %v3788
        %v3790 = vpop.f32.mrf.mxu0
        %3791 = vmatprep.mubr.bf16.mxu0 %v2530
        %3792 = vmatmul.mubr.bf16.gmra.mxu0 %v2418
        %v3793 = vpop.f32.mrf.mxu0
        %v3794 = vadd.f32 %v3633, %v3793
        %v3795 = vpop.f32.mrf.mxu0
        %v3796 = vpop.f32.mrf.mxu0
        %v3797 = vadd.f32 %v3636, %v3796
        %v3798 = vpop.f32.mrf.mxu0
        %3799 = vmatprep.mubr.bf16.mxu0 %v2531
        %3800 = vmatmul.mubr.bf16.gmra.mxu0 %v2419
        %v3801 = vpop.f32.mrf.mxu0
        %v3802 = vadd.f32 %v3641, %v3801
        %v3803 = vpop.f32.mrf.mxu0
        %v3804 = vpop.f32.mrf.mxu0
        %v3805 = vadd.f32 %v3644, %v3804
        %v3806 = vpop.f32.mrf.mxu0
        %3807 = vmatprep.mubr.bf16.mxu0 %v2532
        %3808 = vmatmul.mubr.bf16.gmra.mxu0 %v2420
        %v3809 = vpop.f32.mrf.mxu0
        %v3810 = vadd.f32 %v3649, %v3809
        %v3811 = vpop.f32.mrf.mxu0
        %v3812 = vpop.f32.mrf.mxu0
        %v3813 = vadd.f32 %v3652, %v3812
        %v3814 = vpop.f32.mrf.mxu0
        %3815 = vmatprep.mubr.bf16.mxu0 %v2533
        %3816 = vmatmul.mubr.bf16.gmra.mxu0 %v2421
        %v3817 = vpop.f32.mrf.mxu0
        %v3818 = vadd.f32 %v3657, %v3817
        %v3819 = vpop.f32.mrf.mxu0
        %v3820 = vpop.f32.mrf.mxu0
        %v3821 = vadd.f32 %v3660, %v3820
        %v3822 = vpop.f32.mrf.mxu0
        %3823 = vmatprep.mubr.bf16.mxu0 %v2534
        %3824 = vmatmul.mubr.bf16.gmra.mxu0 %v2422
        %v3825 = vpop.f32.mrf.mxu0
        %v3826 = vadd.f32 %v3665, %v3825
        %v3827 = vpop.f32.mrf.mxu0
        %v3828 = vpop.f32.mrf.mxu0
        %v3829 = vadd.f32 %v3668, %v3828
        %v3830 = vpop.f32.mrf.mxu0
        %3831 = vmatprep.mubr.bf16.mxu0 %v2535
        %3832 = vmatmul.mubr.bf16.gmra.mxu0 %v2423
        %v3833 = vpop.f32.mrf.mxu0
        %v3834 = vadd.f32 %v3673, %v3833
        %v3835 = vpop.f32.mrf.mxu0
        %v3836 = vpop.f32.mrf.mxu0
        %v3837 = vadd.f32 %v3676, %v3836
        %v3838 = vpop.f32.mrf.mxu0
        %3839 = vmatprep.mubr.bf16.mxu0 %v2536
        %3840 = vmatmul.mubr.bf16.gmra.mxu0 %v2424
        %v3841 = vpop.f32.mrf.mxu0
        %v3842 = vadd.f32 %v3681, %v3841
        %v3843 = vpop.f32.mrf.mxu0
        %v3844 = vpop.f32.mrf.mxu0
        %v3845 = vadd.f32 %v3684, %v3844
        %v3846 = vpop.f32.mrf.mxu0
        %3847 = vmatprep.mubr.bf16.mxu0 %v2537
        %3848 = vmatmul.mubr.bf16.gmra.mxu0 %v2425
        %v3849 = vpop.f32.mrf.mxu0
        %v3850 = vadd.f32 %v3689, %v3849
        %v3851 = vpop.f32.mrf.mxu0
        %v3852 = vpop.f32.mrf.mxu0
        %v3853 = vadd.f32 %v3692, %v3852
        %v3854 = vpop.f32.mrf.mxu0
        %3855 = vmatprep.mubr.bf16.mxu0 %v2538
        %3856 = vmatmul.mubr.bf16.gmra.mxu0 %v2426
        %v3857 = vpop.f32.mrf.mxu0
        %v3858 = vadd.f32 %v3697, %v3857
        %v3859 = vpop.f32.mrf.mxu0
        %v3860 = vpop.f32.mrf.mxu0
        %v3861 = vadd.f32 %v3700, %v3860
        %v3862 = vpop.f32.mrf.mxu0
        %3863 = vmatprep.mubr.bf16.mxu0 %v2539
        %3864 = vmatmul.mubr.bf16.gmra.mxu0 %v2427
        %v3865 = vpop.f32.mrf.mxu0
        %v3866 = vadd.f32 %v3705, %v3865
        %v3867 = vpop.f32.mrf.mxu0
        %v3868 = vpop.f32.mrf.mxu0
        %v3869 = vadd.f32 %v3708, %v3868
        %v3870 = vpop.f32.mrf.mxu0
        %3871 = vdwg.mxu0
        %3872 = vmatprep.subr.bf16.mxu0 0
        %3873 = vmatpush1.bf16.msra.mxu0 %v3155
        %3874 = vmatprep.subr.bf16.mxu0 0
        %3875 = vmatpush1.bf16.msra.mxu0 %v3154
        %3876 = vmatprep.subr.bf16.mxu0 0
        %3877 = vmatpush1.bf16.msra.mxu0 %v3153
        %3878 = vmatprep.subr.bf16.mxu0 0
        %3879 = vmatpush1.bf16.msra.mxu0 %v3152
        %3880 = vmatprep.subr.bf16.mxu0 0
        %3881 = vmatpush1.bf16.msra.mxu0 %v3151
        %3882 = vmatprep.subr.bf16.mxu0 0
        %3883 = vmatpush1.bf16.msra.mxu0 %v3150
        %3884 = vmatprep.subr.bf16.mxu0 0
        %3885 = vmatpush1.bf16.msra.mxu0 %v3149
        %3886 = vmatprep.subr.bf16.mxu0 0
        %3887 = vmatpush1.bf16.msra.mxu0 %v3148
        %3888 = vmatprep.subr.bf16.mxu0 0
        %3889 = vmatpush2.bf16.msra.mxu0 0
        %3890 = vmatprep.subr.bf16.mxu0 0
        %3891 = vmatpush2.bf16.msra.mxu0 0
        %3892 = vmatprep.subr.bf16.mxu0 0
        %3893 = vmatpush2.bf16.msra.mxu0 0
        %3894 = vmatprep.subr.bf16.mxu0 0
        %3895 = vmatpush2.bf16.msra.mxu0 0
        %3896 = vmatprep.subr.bf16.mxu0 0
        %3897 = vmatpush2.bf16.msra.mxu0 0
        %3898 = vmatprep.subr.bf16.mxu0 0
        %3899 = vmatpush2.bf16.msra.mxu0 0
        %3900 = vmatprep.subr.bf16.mxu0 0
        %3901 = vmatpush2.bf16.msra.mxu0 0
        %3902 = vmatprep.subr.bf16.mxu0 0
        %3903 = vmatpush2.bf16.msra.mxu0 0
        %3904 = vmatprep.mubr.bf16.mxu0 0
        %3905 = vmatmul.mubr.bf16.gmra.mxu0 %v2636
        %v3906 = vpop.f32.mrf.mxu0
        %v3907 = vadd.f32 %v3746, %v3906
        %v3908 = vpop.f32.mrf.mxu0
        %v3909 = vpop.f32.mrf.mxu0
        %v3910 = vadd.f32 %v3749, %v3909
        %v3911 = vpop.f32.mrf.mxu0
        %3912 = vmatprep.mubr.bf16.mxu0 0
        %3913 = vmatmul.mubr.bf16.gmra.mxu0 %v2637
        %v3914 = vpop.f32.mrf.mxu0
        %v3915 = vadd.f32 %v3754, %v3914
        %v3916 = vpop.f32.mrf.mxu0
        %v3917 = vpop.f32.mrf.mxu0
        %v3918 = vadd.f32 %v3757, %v3917
        %v3919 = vpop.f32.mrf.mxu0
        %3920 = vmatprep.mubr.bf16.mxu0 0
        %3921 = vmatmul.mubr.bf16.gmra.mxu0 %v2638
        %v3922 = vpop.f32.mrf.mxu0
        %v3923 = vadd.f32 %v3762, %v3922
        %v3924 = vpop.f32.mrf.mxu0
        %v3925 = vpop.f32.mrf.mxu0
        %v3926 = vadd.f32 %v3765, %v3925
        %v3927 = vpop.f32.mrf.mxu0
        %3928 = vmatprep.mubr.bf16.mxu0 0
        %3929 = vmatmul.mubr.bf16.gmra.mxu0 %v2639
        %v3930 = vpop.f32.mrf.mxu0
        %v3931 = vadd.f32 %v3770, %v3930
        %v3932 = vpop.f32.mrf.mxu0
        %v3933 = vpop.f32.mrf.mxu0
        %v3934 = vadd.f32 %v3773, %v3933
        %v3935 = vpop.f32.mrf.mxu0
        %3936 = vmatprep.mubr.bf16.mxu0 0
        %3937 = vmatmul.mubr.bf16.gmra.mxu0 %v2640
        %v3938 = vpop.f32.mrf.mxu0
        %v3939 = vadd.f32 %v3778, %v3938
        %v3940 = vpop.f32.mrf.mxu0
        %v3941 = vpop.f32.mrf.mxu0
        %v3942 = vadd.f32 %v3781, %v3941
        %v3943 = vpop.f32.mrf.mxu0
        %3944 = vmatprep.mubr.bf16.mxu0 0
        %3945 = vmatmul.mubr.bf16.gmra.mxu0 %v2641
        %v3946 = vpop.f32.mrf.mxu0
        %v3947 = vadd.f32 %v3786, %v3946
        %v3948 = vpop.f32.mrf.mxu0
        %v3949 = vpop.f32.mrf.mxu0
        %v3950 = vadd.f32 %v3789, %v3949
        %v3951 = vpop.f32.mrf.mxu0
        %3952 = vmatprep.mubr.bf16.mxu0 0
        %3953 = vmatmul.mubr.bf16.gmra.mxu0 %v2642
        %v3954 = vpop.f32.mrf.mxu0
        %v3955 = vadd.f32 %v3794, %v3954
        %v3956 = vpop.f32.mrf.mxu0
        %v3957 = vpop.f32.mrf.mxu0
        %v3958 = vadd.f32 %v3797, %v3957
        %v3959 = vpop.f32.mrf.mxu0
        %3960 = vmatprep.mubr.bf16.mxu0 0
        %3961 = vmatmul.mubr.bf16.gmra.mxu0 %v2643
        %v3962 = vpop.f32.mrf.mxu0
        %v3963 = vadd.f32 %v3802, %v3962
        %v3964 = vpop.f32.mrf.mxu0
        %v3965 = vpop.f32.mrf.mxu0
        %v3966 = vadd.f32 %v3805, %v3965
        %v3967 = vpop.f32.mrf.mxu0
        %3968 = vmatprep.mubr.bf16.mxu0 0
        %3969 = vmatmul.mubr.bf16.gmra.mxu0 %v2644
        %v3970 = vpop.f32.mrf.mxu0
        %v3971 = vadd.f32 %v3810, %v3970
        %v3972 = vpop.f32.mrf.mxu0
        %v3973 = vpop.f32.mrf.mxu0
        %v3974 = vadd.f32 %v3813, %v3973
        %v3975 = vpop.f32.mrf.mxu0
        %3976 = vmatprep.mubr.bf16.mxu0 0
        %3977 = vmatmul.mubr.bf16.gmra.mxu0 %v2645
        %v3978 = vpop.f32.mrf.mxu0
        %v3979 = vadd.f32 %v3818, %v3978
        %v3980 = vpop.f32.mrf.mxu0
        %v3981 = vpop.f32.mrf.mxu0
        %v3982 = vadd.f32 %v3821, %v3981
        %v3983 = vpop.f32.mrf.mxu0
        %3984 = vmatprep.mubr.bf16.mxu0 0
        %3985 = vmatmul.mubr.bf16.gmra.mxu0 %v2646
        %v3986 = vpop.f32.mrf.mxu0
        %v3987 = vadd.f32 %v3826, %v3986
        %v3988 = vpop.f32.mrf.mxu0
        %v3989 = vpop.f32.mrf.mxu0
        %v3990 = vadd.f32 %v3829, %v3989
        %v3991 = vpop.f32.mrf.mxu0
        %3992 = vmatprep.mubr.bf16.mxu0 0
        %3993 = vmatmul.mubr.bf16.gmra.mxu0 %v2647
        %v3994 = vpop.f32.mrf.mxu0
        %v3995 = vadd.f32 %v3834, %v3994
        %v3996 = vpop.f32.mrf.mxu0
        %v3997 = vpop.f32.mrf.mxu0
        %v3998 = vadd.f32 %v3837, %v3997
        %v3999 = vpop.f32.mrf.mxu0
        %4000 = vmatprep.mubr.bf16.mxu0 0
        %4001 = vmatmul.mubr.bf16.gmra.mxu0 %v2648
        %v4002 = vpop.f32.mrf.mxu0
        %v4003 = vadd.f32 %v3842, %v4002
        %v4004 = vpop.f32.mrf.mxu0
        %v4005 = vpop.f32.mrf.mxu0
        %v4006 = vadd.f32 %v3845, %v4005
        %v4007 = vpop.f32.mrf.mxu0
        %4008 = vmatprep.mubr.bf16.mxu0 0
        %4009 = vmatmul.mubr.bf16.gmra.mxu0 %v2649
        %v4010 = vpop.f32.mrf.mxu0
        %v4011 = vadd.f32 %v3850, %v4010
        %v4012 = vpop.f32.mrf.mxu0
        %v4013 = vpop.f32.mrf.mxu0
        %v4014 = vadd.f32 %v3853, %v4013
        %v4015 = vpop.f32.mrf.mxu0
        %4016 = vmatprep.mubr.bf16.mxu0 0
        %4017 = vmatmul.mubr.bf16.gmra.mxu0 %v2650
        %v4018 = vpop.f32.mrf.mxu0
        %v4019 = vadd.f32 %v3858, %v4018
        %v4020 = vpop.f32.mrf.mxu0
        %v4021 = vpop.f32.mrf.mxu0
        %v4022 = vadd.f32 %v3861, %v4021
        %v4023 = vpop.f32.mrf.mxu0
        %4024 = vmatprep.mubr.bf16.mxu0 0
        %4025 = vmatmul.mubr.bf16.gmra.mxu0 %v2651
        %v4026 = vpop.f32.mrf.mxu0
        %v4027 = vadd.f32 %v3866, %v4026
        %v4028 = vpop.f32.mrf.mxu0
        %v4029 = vpop.f32.mrf.mxu0
        %v4030 = vadd.f32 %v3869, %v4029
        %v4031 = vpop.f32.mrf.mxu0
        %4032 = vdwg.mxu0
        %v4033 = vld [vmem:[%s3] sm:$0x1]
        %v4035 = vlaneseq
        %v4036 = vshrl.u32 %v4035, 7
        %v4037 = vsub.s32 0, %v4036
        %v4038 = vrot.slane %v4033, %v4037
        %v4040 = vmul.f32 %v3907, %v4038
        %v4041 = vmul.f32 %v3910, %v4038
        %v4042 = vmul.f32 %v3915, %v4038
        %v4043 = vmul.f32 %v3918, %v4038
        %v4044 = vmul.f32 %v3923, %v4038
        %v4045 = vmul.f32 %v3926, %v4038
        %v4046 = vmul.f32 %v3931, %v4038
        %v4047 = vmul.f32 %v3934, %v4038
        %v4048 = vmul.f32 %v3939, %v4038
        %v4049 = vmul.f32 %v3942, %v4038
        %v4050 = vmul.f32 %v3947, %v4038
        %v4051 = vmul.f32 %v3950, %v4038
        %v4052 = vmul.f32 %v3955, %v4038
        %v4053 = vmul.f32 %v3958, %v4038
        %v4054 = vmul.f32 %v3963, %v4038
        %v4055 = vmul.f32 %v3966, %v4038
        %v4056 = vmul.f32 %v3971, %v4038
        %v4057 = vmul.f32 %v3974, %v4038
        %v4058 = vmul.f32 %v3979, %v4038
        %v4059 = vmul.f32 %v3982, %v4038
        %v4060 = vmul.f32 %v3987, %v4038
        %v4061 = vmul.f32 %v3990, %v4038
        %v4062 = vmul.f32 %v3995, %v4038
        %v4063 = vmul.f32 %v3998, %v4038
        %v4064 = vmul.f32 %v4003, %v4038
        %v4065 = vmul.f32 %v4006, %v4038
        %v4066 = vmul.f32 %v4011, %v4038
        %v4067 = vmul.f32 %v4014, %v4038
        %v4068 = vmul.f32 %v4019, %v4038
        %v4069 = vmul.f32 %v4022, %v4038
        %v4070 = vmul.f32 %v4027, %v4038
        %v4071 = vmul.f32 %v4030, %v4038
        %v4072 = vld [vmem:[%s4] sm:$0x1]
        %v4074 = vlaneseq
        %v4075 = vshrl.u32 %v4074, 7
        %v4076 = vsub.s32 0, %v4075
        %v4077 = vrot.slane %v4072, %v4076
        %v4079 = vadd.f32 %v4040, %v4077
        %v4080 = vadd.f32 %v4041, %v4077
        %v4081 = vadd.f32 %v4042, %v4077
        %v4082 = vadd.f32 %v4043, %v4077
        %v4083 = vadd.f32 %v4044, %v4077
        %v4084 = vadd.f32 %v4045, %v4077
        %v4085 = vadd.f32 %v4046, %v4077
        %v4086 = vadd.f32 %v4047, %v4077
        %v4087 = vadd.f32 %v4048, %v4077
        %v4088 = vadd.f32 %v4049, %v4077
        %v4089 = vadd.f32 %v4050, %v4077
        %v4090 = vadd.f32 %v4051, %v4077
        %v4091 = vadd.f32 %v4052, %v4077
        %v4092 = vadd.f32 %v4053, %v4077
        %v4093 = vadd.f32 %v4054, %v4077
        %v4094 = vadd.f32 %v4055, %v4077
        %v4095 = vadd.f32 %v4056, %v4077
        %v4096 = vadd.f32 %v4057, %v4077
        %v4097 = vadd.f32 %v4058, %v4077
        %v4098 = vadd.f32 %v4059, %v4077
        %v4099 = vadd.f32 %v4060, %v4077
        %v4100 = vadd.f32 %v4061, %v4077
        %v4101 = vadd.f32 %v4062, %v4077
        %v4102 = vadd.f32 %v4063, %v4077
        %v4103 = vadd.f32 %v4064, %v4077
        %v4104 = vadd.f32 %v4065, %v4077
        %v4105 = vadd.f32 %v4066, %v4077
        %v4106 = vadd.f32 %v4067, %v4077
        %v4107 = vadd.f32 %v4068, %v4077
        %v4108 = vadd.f32 %v4069, %v4077
        %v4109 = vadd.f32 %v4070, %v4077
        %v4110 = vadd.f32 %v4071, %v4077
        %v4111 = vmax.f32 %v4079, 0.0
        %v4112 = vmax.f32 %v4080, 0.0
        %v4113 = vmax.f32 %v4081, 0.0
        %v4114 = vmax.f32 %v4082, 0.0
        %v4115 = vmax.f32 %v4083, 0.0
        %v4116 = vmax.f32 %v4084, 0.0
        %v4117 = vmax.f32 %v4085, 0.0
        %v4118 = vmax.f32 %v4086, 0.0
        %v4119 = vmax.f32 %v4087, 0.0
        %v4120 = vmax.f32 %v4088, 0.0
        %v4121 = vmax.f32 %v4089, 0.0
        %v4122 = vmax.f32 %v4090, 0.0
        %v4123 = vmax.f32 %v4091, 0.0
        %v4124 = vmax.f32 %v4092, 0.0
        %v4125 = vmax.f32 %v4093, 0.0
        %v4126 = vmax.f32 %v4094, 0.0
        %v4127 = vmax.f32 %v4095, 0.0
        %v4128 = vmax.f32 %v4096, 0.0
        %v4129 = vmax.f32 %v4097, 0.0
        %v4130 = vmax.f32 %v4098, 0.0
        %v4131 = vmax.f32 %v4099, 0.0
        %v4132 = vmax.f32 %v4100, 0.0
        %v4133 = vmax.f32 %v4101, 0.0
        %v4134 = vmax.f32 %v4102, 0.0
        %v4135 = vmax.f32 %v4103, 0.0
        %v4136 = vmax.f32 %v4104, 0.0
        %v4137 = vmax.f32 %v4105, 0.0
        %v4138 = vmax.f32 %v4106, 0.0
        %v4139 = vmax.f32 %v4107, 0.0
        %v4140 = vmax.f32 %v4108, 0.0
        %v4141 = vmax.f32 %v4109, 0.0
        %v4142 = vmax.f32 %v4110, 0.0
        %v4143 = vrot.slane %v4111, 7
        %v4144 = vrot.slane %v4112, 7
        %v4145 = vrot.slane %v4113, 7
        %v4146 = vrot.slane %v4114, 7
        %v4147 = vrot.slane %v4115, 7
        %v4148 = vrot.slane %v4116, 7
        %v4149 = vrot.slane %v4117, 7
        %v4150 = vrot.slane %v4118, 7
        %v4151 = vrot.slane %v4119, 7
        %v4152 = vrot.slane %v4120, 7
        %v4153 = vrot.slane %v4121, 7
        %v4154 = vrot.slane %v4122, 7
        %v4155 = vrot.slane %v4123, 7
        %v4156 = vrot.slane %v4124, 7
        %v4157 = vrot.slane %v4125, 7
        %v4158 = vrot.slane %v4126, 7
        %v4159 = vrot.slane %v4127, 7
        %v4160 = vrot.slane %v4128, 7
        %v4161 = vrot.slane %v4129, 7
        %v4162 = vrot.slane %v4130, 7
        %v4163 = vrot.slane %v4131, 7
        %v4164 = vrot.slane %v4132, 7
        %v4165 = vrot.slane %v4133, 7
        %v4166 = vrot.slane %v4134, 7
        %v4167 = vrot.slane %v4135, 7
        %v4168 = vrot.slane %v4136, 7
        %v4169 = vrot.slane %v4137, 7
        %v4170 = vrot.slane %v4138, 7
        %v4171 = vrot.slane %v4139, 7
        %v4172 = vrot.slane %v4140, 7
        %v4173 = vrot.slane %v4141, 7
        %v4174 = vrot.slane %v4142, 7
        %v4175 = vsel %vm1642, %v4173, %v4174
        %v4176 = vsel %vm1642, %v4172, %v4173
        %v4177 = vsel %vm1642, %v4171, %v4172
        %v4178 = vsel %vm1642, %v4170, %v4171
        %v4179 = vsel %vm1642, %v4169, %v4170
        %v4180 = vsel %vm1642, %v4168, %v4169
        %v4181 = vsel %vm1642, %v4167, %v4168
        %v4182 = vsel %vm1642, %v4166, %v4167
        %v4183 = vsel %vm1642, %v4165, %v4166
        %v4184 = vsel %vm1642, %v4164, %v4165
        %v4185 = vsel %vm1642, %v4163, %v4164
        %v4186 = vsel %vm1642, %v4162, %v4163
        %v4187 = vsel %vm1642, %v4161, %v4162
        %v4188 = vsel %vm1642, %v4160, %v4161
        %v4189 = vsel %vm1642, %v4159, %v4160
        %v4190 = vsel %vm1642, %v4158, %v4159
        %v4191 = vsel %vm1642, %v4157, %v4158
        %v4192 = vsel %vm1642, %v4156, %v4157
        %v4193 = vsel %vm1642, %v4155, %v4156
        %v4194 = vsel %vm1642, %v4154, %v4155
        %v4195 = vsel %vm1642, %v4153, %v4154
        %v4196 = vsel %vm1642, %v4152, %v4153
        %v4197 = vsel %vm1642, %v4151, %v4152
        %v4198 = vsel %vm1642, %v4150, %v4151
        %v4199 = vsel %vm1642, %v4149, %v4150
        %v4200 = vsel %vm1642, %v4148, %v4149
        %v4201 = vsel %vm1642, %v4147, %v4148
        %v4202 = vsel %vm1642, %v4146, %v4147
        %v4203 = vsel %vm1642, %v4145, %v4146
        %v4204 = vsel %vm1642, %v4144, %v4145
        %v4205 = vsel %vm1642, %v4143, %v4144
        %v4206 = vsel %vm1642, %v4174, %v4143
        %v4207 = vsel %vm1707, %v4176, 0.0
        %v4208 = vsel %vm1708, %v4175, 0.0
        %v4209 = vsel %vm1709, %v4206, 0.0
        %v4210 = vsel %vm1710, %v4205, 0.0
        %v4211 = vsel %vm1711, %v4204, 0.0
        %v4212 = vsel %vm1712, %v4203, 0.0
        %v4213 = vsel %vm1713, %v4202, 0.0
        %v4214 = vsel %vm1714, %v4201, 0.0
        %v4215 = vsel %vm1715, %v4200, 0.0
        %v4216 = vsel %vm1716, %v4199, 0.0
        %v4217 = vsel %vm1717, %v4198, 0.0
        %v4218 = vsel %vm1718, %v4197, 0.0
        %v4219 = vsel %vm1719, %v4196, 0.0
        %v4220 = vsel %vm1720, %v4195, 0.0
        %v4221 = vsel %vm1721, %v4194, 0.0
        %v4222 = vsel %vm1722, %v4193, 0.0
        %v4223 = vsel %vm1723, %v4192, 0.0
        %v4224 = vsel %vm1724, %v4191, 0.0
        %v4225 = vsel %vm1725, %v4190, 0.0
        %v4226 = vsel %vm1726, %v4189, 0.0
        %v4227 = vsel %vm1727, %v4188, 0.0
        %v4228 = vsel %vm1728, %v4187, 0.0
        %v4229 = vsel %vm1729, %v4186, 0.0
        %v4230 = vsel %vm1730, %v4185, 0.0
        %v4231 = vsel %vm1731, %v4184, 0.0
        %v4232 = vsel %vm1732, %v4183, 0.0
        %v4233 = vsel %vm1733, %v4182, 0.0
        %v4234 = vsel %vm1734, %v4181, 0.0
        %v4235 = vsel %vm1735, %v4180, 0.0
        %v4236 = vsel %vm1736, %v4179, 0.0
        %v4237 = vsel %vm1737, %v4178, 0.0
        %v4238 = vsel %vm1738, %v4177, 0.0
        %v4239 = vpack.c.bf16 %v4208, %v4207
        %v4240 = vpack.c.bf16 %v4210, %v4209
        %v4241 = vpack.c.bf16 %v4212, %v4211
        %v4242 = vpack.c.bf16 %v4214, %v4213
        %v4243 = vpack.c.bf16 %v4216, %v4215
        %v4244 = vpack.c.bf16 %v4218, %v4217
        %v4245 = vpack.c.bf16 %v4220, %v4219
        %v4246 = vpack.c.bf16 %v4222, %v4221
        %v4247 = vpack.c.bf16 %v4224, %v4223
        %v4248 = vpack.c.bf16 %v4226, %v4225
        %v4249 = vpack.c.bf16 %v4228, %v4227
        %v4250 = vpack.c.bf16 %v4230, %v4229
        %v4251 = vpack.c.bf16 %v4232, %v4231
        %v4252 = vpack.c.bf16 %v4234, %v4233
        %v4253 = vpack.c.bf16 %v4236, %v4235
        %v4254 = vpack.c.bf16 %v4238, %v4237
        %v4255 = vsel %vm1819, %v4141, 0.0
        %v4256 = vsel %vm1820, %v4142, 0.0
        %v4257 = vsel %vm1821, %v4111, 0.0
        %v4258 = vsel %vm1822, %v4112, 0.0
        %v4259 = vsel %vm1823, %v4113, 0.0
        %v4260 = vsel %vm1824, %v4114, 0.0
        %v4261 = vsel %vm1825, %v4115, 0.0
        %v4262 = vsel %vm1826, %v4116, 0.0
        %v4263 = vsel %vm1827, %v4117, 0.0
        %v4264 = vsel %vm1828, %v4118, 0.0
        %v4265 = vsel %vm1829, %v4119, 0.0
        %v4266 = vsel %vm1830, %v4120, 0.0
        %v4267 = vsel %vm1831, %v4121, 0.0
        %v4268 = vsel %vm1832, %v4122, 0.0
        %v4269 = vsel %vm1833, %v4123, 0.0
        %v4270 = vsel %vm1834, %v4124, 0.0
        %v4271 = vsel %vm1835, %v4125, 0.0
        %v4272 = vsel %vm1836, %v4126, 0.0
        %v4273 = vsel %vm1837, %v4127, 0.0
        %v4274 = vsel %vm1838, %v4128, 0.0
        %v4275 = vsel %vm1839, %v4129, 0.0
        %v4276 = vsel %vm1840, %v4130, 0.0
        %v4277 = vsel %vm1841, %v4131, 0.0
        %v4278 = vsel %vm1842, %v4132, 0.0
        %v4279 = vsel %vm1843, %v4133, 0.0
        %v4280 = vsel %vm1844, %v4134, 0.0
        %v4281 = vsel %vm1845, %v4135, 0.0
        %v4282 = vsel %vm1846, %v4136, 0.0
        %v4283 = vsel %vm1847, %v4137, 0.0
        %v4284 = vsel %vm1848, %v4138, 0.0
        %v4285 = vsel %vm1849, %v4139, 0.0
        %v4286 = vsel %vm1850, %v4140, 0.0
        %v4287 = vpack.c.bf16 %v4256, %v4255
        %v4288 = vpack.c.bf16 %v4258, %v4257
        %v4289 = vpack.c.bf16 %v4260, %v4259
        %v4290 = vpack.c.bf16 %v4262, %v4261
        %v4291 = vpack.c.bf16 %v4264, %v4263
        %v4292 = vpack.c.bf16 %v4266, %v4265
        %v4293 = vpack.c.bf16 %v4268, %v4267
        %v4294 = vpack.c.bf16 %v4270, %v4269
        %v4295 = vpack.c.bf16 %v4272, %v4271
        %v4296 = vpack.c.bf16 %v4274, %v4273
        %v4297 = vpack.c.bf16 %v4276, %v4275
        %v4298 = vpack.c.bf16 %v4278, %v4277
        %v4299 = vpack.c.bf16 %v4280, %v4279
        %v4300 = vpack.c.bf16 %v4282, %v4281
        %v4301 = vpack.c.bf16 %v4284, %v4283
        %v4302 = vpack.c.bf16 %v4286, %v4285
        %v4303 = vrot.slane %v4111, 1
        %v4304 = vrot.slane %v4112, 1
        %v4305 = vrot.slane %v4113, 1
        %v4306 = vrot.slane %v4114, 1
        %v4307 = vrot.slane %v4115, 1
        %v4308 = vrot.slane %v4116, 1
        %v4309 = vrot.slane %v4117, 1
        %v4310 = vrot.slane %v4118, 1
        %v4311 = vrot.slane %v4119, 1
        %v4312 = vrot.slane %v4120, 1
        %v4313 = vrot.slane %v4121, 1
        %v4314 = vrot.slane %v4122, 1
        %v4315 = vrot.slane %v4123, 1
        %v4316 = vrot.slane %v4124, 1
        %v4317 = vrot.slane %v4125, 1
        %v4318 = vrot.slane %v4126, 1
        %v4319 = vrot.slane %v4127, 1
        %v4320 = vrot.slane %v4128, 1
        %v4321 = vrot.slane %v4129, 1
        %v4322 = vrot.slane %v4130, 1
        %v4323 = vrot.slane %v4131, 1
        %v4324 = vrot.slane %v4132, 1
        %v4325 = vrot.slane %v4133, 1
        %v4326 = vrot.slane %v4134, 1
        %v4327 = vrot.slane %v4135, 1
        %v4328 = vrot.slane %v4136, 1
        %v4329 = vrot.slane %v4137, 1
        %v4330 = vrot.slane %v4138, 1
        %v4331 = vrot.slane %v4139, 1
        %v4332 = vrot.slane %v4140, 1
        %v4333 = vrot.slane %v4141, 1
        %v4334 = vrot.slane %v4142, 1
        %v4335 = vsel %vm1931, %v4333, %v4334
        %v4336 = vsel %vm1931, %v4332, %v4333
        %v4337 = vsel %vm1931, %v4331, %v4332
        %v4338 = vsel %vm1931, %v4330, %v4331
        %v4339 = vsel %vm1931, %v4329, %v4330
        %v4340 = vsel %vm1931, %v4328, %v4329
        %v4341 = vsel %vm1931, %v4327, %v4328
        %v4342 = vsel %vm1931, %v4326, %v4327
        %v4343 = vsel %vm1931, %v4325, %v4326
        %v4344 = vsel %vm1931, %v4324, %v4325
        %v4345 = vsel %vm1931, %v4323, %v4324
        %v4346 = vsel %vm1931, %v4322, %v4323
        %v4347 = vsel %vm1931, %v4321, %v4322
        %v4348 = vsel %vm1931, %v4320, %v4321
        %v4349 = vsel %vm1931, %v4319, %v4320
        %v4350 = vsel %vm1931, %v4318, %v4319
        %v4351 = vsel %vm1931, %v4317, %v4318
        %v4352 = vsel %vm1931, %v4316, %v4317
        %v4353 = vsel %vm1931, %v4315, %v4316
        %v4354 = vsel %vm1931, %v4314, %v4315
        %v4355 = vsel %vm1931, %v4313, %v4314
        %v4356 = vsel %vm1931, %v4312, %v4313
        %v4357 = vsel %vm1931, %v4311, %v4312
        %v4358 = vsel %vm1931, %v4310, %v4311
        %v4359 = vsel %vm1931, %v4309, %v4310
        %v4360 = vsel %vm1931, %v4308, %v4309
        %v4361 = vsel %vm1931, %v4307, %v4308
        %v4362 = vsel %vm1931, %v4306, %v4307
        %v4363 = vsel %vm1931, %v4305, %v4306
        %v4364 = vsel %vm1931, %v4304, %v4305
        %v4365 = vsel %vm1931, %v4303, %v4304
        %v4366 = vsel %vm1931, %v4334, %v4303
        %v4367 = vsel %vm1996, %v4335, 0.0
        %v4368 = vsel %vm1997, %v4366, 0.0
        %v4369 = vsel %vm1998, %v4365, 0.0
        %v4370 = vsel %vm1999, %v4364, 0.0
        %v4371 = vsel %vm2000, %v4363, 0.0
        %v4372 = vsel %vm2001, %v4362, 0.0
        %v4373 = vsel %vm2002, %v4361, 0.0
        %v4374 = vsel %vm2003, %v4360, 0.0
        %v4375 = vsel %vm2004, %v4359, 0.0
        %v4376 = vsel %vm2005, %v4358, 0.0
        %v4377 = vsel %vm2006, %v4357, 0.0
        %v4378 = vsel %vm2007, %v4356, 0.0
        %v4379 = vsel %vm2008, %v4355, 0.0
        %v4380 = vsel %vm2009, %v4354, 0.0
        %v4381 = vsel %vm2010, %v4353, 0.0
        %v4382 = vsel %vm2011, %v4352, 0.0
        %v4383 = vsel %vm2012, %v4351, 0.0
        %v4384 = vsel %vm2013, %v4350, 0.0
        %v4385 = vsel %vm2014, %v4349, 0.0
        %v4386 = vsel %vm2015, %v4348, 0.0
        %v4387 = vsel %vm2016, %v4347, 0.0
        %v4388 = vsel %vm2017, %v4346, 0.0
        %v4389 = vsel %vm2018, %v4345, 0.0
        %v4390 = vsel %vm2019, %v4344, 0.0
        %v4391 = vsel %vm2020, %v4343, 0.0
        %v4392 = vsel %vm2021, %v4342, 0.0
        %v4393 = vsel %vm2022, %v4341, 0.0
        %v4394 = vsel %vm2023, %v4340, 0.0
        %v4395 = vsel %vm2024, %v4339, 0.0
        %v4396 = vsel %vm2025, %v4338, 0.0
        %v4397 = vsel %vm2026, %v4337, 0.0
        %v4398 = vsel %vm2027, %v4336, 0.0
        %v4399 = vpack.c.bf16 %v4368, %v4367
        %v4400 = vpack.c.bf16 %v4370, %v4369
        %v4401 = vpack.c.bf16 %v4372, %v4371
        %v4402 = vpack.c.bf16 %v4374, %v4373
        %v4403 = vpack.c.bf16 %v4376, %v4375
        %v4404 = vpack.c.bf16 %v4378, %v4377
        %v4405 = vpack.c.bf16 %v4380, %v4379
        %v4406 = vpack.c.bf16 %v4382, %v4381
        %v4407 = vpack.c.bf16 %v4384, %v4383
        %v4408 = vpack.c.bf16 %v4386, %v4385
        %v4409 = vpack.c.bf16 %v4388, %v4387
        %v4410 = vpack.c.bf16 %v4390, %v4389
        %v4411 = vpack.c.bf16 %v4392, %v4391
        %v4412 = vpack.c.bf16 %v4394, %v4393
        %v4413 = vpack.c.bf16 %v4396, %v4395
        %v4414 = vpack.c.bf16 %v4398, %v4397
        %v4415 = vsel %vm2108, %v4206, 0.0
        %v4416 = vsel %vm2109, %v4205, 0.0
        %v4417 = vsel %vm2110, %v4204, 0.0
        %v4418 = vsel %vm2111, %v4203, 0.0
        %v4419 = vsel %vm2112, %v4202, 0.0
        %v4420 = vsel %vm2113, %v4201, 0.0
        %v4421 = vsel %vm2114, %v4200, 0.0
        %v4422 = vsel %vm2115, %v4199, 0.0
        %v4423 = vsel %vm2116, %v4198, 0.0
        %v4424 = vsel %vm2117, %v4197, 0.0
        %v4425 = vsel %vm2118, %v4196, 0.0
        %v4426 = vsel %vm2119, %v4195, 0.0
        %v4427 = vsel %vm2120, %v4194, 0.0
        %v4428 = vsel %vm2121, %v4193, 0.0
        %v4429 = vsel %vm2122, %v4192, 0.0
        %v4430 = vsel %vm2123, %v4191, 0.0
        %v4431 = vsel %vm2124, %v4190, 0.0
        %v4432 = vsel %vm2125, %v4189, 0.0
        %v4433 = vsel %vm2126, %v4188, 0.0
        %v4434 = vsel %vm2127, %v4187, 0.0
        %v4435 = vsel %vm2128, %v4186, 0.0
        %v4436 = vsel %vm2129, %v4185, 0.0
        %v4437 = vsel %vm2130, %v4184, 0.0
        %v4438 = vsel %vm2131, %v4183, 0.0
        %v4439 = vsel %vm2132, %v4182, 0.0
        %v4440 = vsel %vm2133, %v4181, 0.0
        %v4441 = vsel %vm2134, %v4180, 0.0
        %v4442 = vsel %vm2135, %v4179, 0.0
        %v4443 = vsel %vm2136, %v4178, 0.0
        %v4444 = vsel %vm2137, %v4177, 0.0
        %v4445 = vsel %vm2138, %v4176, 0.0
        %v4446 = vsel %vm2139, %v4175, 0.0
        %v4447 = vpack.c.bf16 %v4416, %v4415
        %v4448 = vpack.c.bf16 %v4418, %v4417
        %v4449 = vpack.c.bf16 %v4420, %v4419
        %v4450 = vpack.c.bf16 %v4422, %v4421
        %v4451 = vpack.c.bf16 %v4424, %v4423
        %v4452 = vpack.c.bf16 %v4426, %v4425
        %v4453 = vpack.c.bf16 %v4428, %v4427
        %v4454 = vpack.c.bf16 %v4430, %v4429
        %v4455 = vpack.c.bf16 %v4432, %v4431
        %v4456 = vpack.c.bf16 %v4434, %v4433
        %v4457 = vpack.c.bf16 %v4436, %v4435
        %v4458 = vpack.c.bf16 %v4438, %v4437
        %v4459 = vpack.c.bf16 %v4440, %v4439
        %v4460 = vpack.c.bf16 %v4442, %v4441
        %v4461 = vpack.c.bf16 %v4444, %v4443
        %v4462 = vpack.c.bf16 %v4446, %v4445
        %v4463 = vpack.c.bf16 %v4112, %v4111
        %v4464 = vpack.c.bf16 %v4114, %v4113
        %v4465 = vpack.c.bf16 %v4116, %v4115
        %v4466 = vpack.c.bf16 %v4118, %v4117
        %v4467 = vpack.c.bf16 %v4120, %v4119
        %v4468 = vpack.c.bf16 %v4122, %v4121
        %v4469 = vpack.c.bf16 %v4124, %v4123
        %v4470 = vpack.c.bf16 %v4126, %v4125
        %v4471 = vpack.c.bf16 %v4128, %v4127
        %v4472 = vpack.c.bf16 %v4130, %v4129
        %v4473 = vpack.c.bf16 %v4132, %v4131
        %v4474 = vpack.c.bf16 %v4134, %v4133
        %v4475 = vpack.c.bf16 %v4136, %v4135
        %v4476 = vpack.c.bf16 %v4138, %v4137
        %v4477 = vpack.c.bf16 %v4140, %v4139
        %v4478 = vpack.c.bf16 %v4142, %v4141
        %v4479 = vsel %vm2236, %v4365, 0.0
        %v4480 = vsel %vm2237, %v4364, 0.0
        %v4481 = vsel %vm2238, %v4363, 0.0
        %v4482 = vsel %vm2239, %v4362, 0.0
        %v4483 = vsel %vm2240, %v4361, 0.0
        %v4484 = vsel %vm2241, %v4360, 0.0
        %v4485 = vsel %vm2242, %v4359, 0.0
        %v4486 = vsel %vm2243, %v4358, 0.0
        %v4487 = vsel %vm2244, %v4357, 0.0
        %v4488 = vsel %vm2245, %v4356, 0.0
        %v4489 = vsel %vm2246, %v4355, 0.0
        %v4490 = vsel %vm2247, %v4354, 0.0
        %v4491 = vsel %vm2248, %v4353, 0.0
        %v4492 = vsel %vm2249, %v4352, 0.0
        %v4493 = vsel %vm2250, %v4351, 0.0
        %v4494 = vsel %vm2251, %v4350, 0.0
        %v4495 = vsel %vm2252, %v4349, 0.0
        %v4496 = vsel %vm2253, %v4348, 0.0
        %v4497 = vsel %vm2254, %v4347, 0.0
        %v4498 = vsel %vm2255, %v4346, 0.0
        %v4499 = vsel %vm2256, %v4345, 0.0
        %v4500 = vsel %vm2257, %v4344, 0.0
        %v4501 = vsel %vm2258, %v4343, 0.0
        %v4502 = vsel %vm2259, %v4342, 0.0
        %v4503 = vsel %vm2260, %v4341, 0.0
        %v4504 = vsel %vm2261, %v4340, 0.0
        %v4505 = vsel %vm2262, %v4339, 0.0
        %v4506 = vsel %vm2263, %v4338, 0.0
        %v4507 = vsel %vm2264, %v4337, 0.0
        %v4508 = vsel %vm2265, %v4336, 0.0
        %v4509 = vsel %vm2266, %v4335, 0.0
        %v4510 = vsel %vm2267, %v4366, 0.0
        %v4511 = vpack.c.bf16 %v4480, %v4479
        %v4512 = vpack.c.bf16 %v4482, %v4481
        %v4513 = vpack.c.bf16 %v4484, %v4483
        %v4514 = vpack.c.bf16 %v4486, %v4485
        %v4515 = vpack.c.bf16 %v4488, %v4487
        %v4516 = vpack.c.bf16 %v4490, %v4489
        %v4517 = vpack.c.bf16 %v4492, %v4491
        %v4518 = vpack.c.bf16 %v4494, %v4493
        %v4519 = vpack.c.bf16 %v4496, %v4495
        %v4520 = vpack.c.bf16 %v4498, %v4497
        %v4521 = vpack.c.bf16 %v4500, %v4499
        %v4522 = vpack.c.bf16 %v4502, %v4501
        %v4523 = vpack.c.bf16 %v4504, %v4503
        %v4524 = vpack.c.bf16 %v4506, %v4505
        %v4525 = vpack.c.bf16 %v4508, %v4507
        %v4526 = vpack.c.bf16 %v4510, %v4509
        %v4527 = vsel %vm2348, %v4204, 0.0
        %v4528 = vsel %vm2349, %v4203, 0.0
        %v4529 = vsel %vm2350, %v4202, 0.0
        %v4530 = vsel %vm2351, %v4201, 0.0
        %v4531 = vsel %vm2352, %v4200, 0.0
        %v4532 = vsel %vm2353, %v4199, 0.0
        %v4533 = vsel %vm2354, %v4198, 0.0
        %v4534 = vsel %vm2355, %v4197, 0.0
        %v4535 = vsel %vm2356, %v4196, 0.0
        %v4536 = vsel %vm2357, %v4195, 0.0
        %v4537 = vsel %vm2358, %v4194, 0.0
        %v4538 = vsel %vm2359, %v4193, 0.0
        %v4539 = vsel %vm2360, %v4192, 0.0
        %v4540 = vsel %vm2361, %v4191, 0.0
        %v4541 = vsel %vm2362, %v4190, 0.0
        %v4542 = vsel %vm2363, %v4189, 0.0
        %v4543 = vsel %vm2364, %v4188, 0.0
        %v4544 = vsel %vm2365, %v4187, 0.0
        %v4545 = vsel %vm2366, %v4186, 0.0
        %v4546 = vsel %vm2367, %v4185, 0.0
        %v4547 = vsel %vm2368, %v4184, 0.0
        %v4548 = vsel %vm2369, %v4183, 0.0
        %v4549 = vsel %vm2370, %v4182, 0.0
        %v4550 = vsel %vm2371, %v4181, 0.0
        %v4551 = vsel %vm2372, %v4180, 0.0
        %v4552 = vsel %vm2373, %v4179, 0.0
        %v4553 = vsel %vm2374, %v4178, 0.0
        %v4554 = vsel %vm2375, %v4177, 0.0
        %v4555 = vsel %vm2376, %v4176, 0.0
        %v4556 = vsel %vm2377, %v4175, 0.0
        %v4557 = vsel %vm2378, %v4206, 0.0
        %v4558 = vsel %vm2379, %v4205, 0.0
        %v4559 = vpack.c.bf16 %v4528, %v4527
        %v4560 = vpack.c.bf16 %v4530, %v4529
        %v4561 = vpack.c.bf16 %v4532, %v4531
        %v4562 = vpack.c.bf16 %v4534, %v4533
        %v4563 = vpack.c.bf16 %v4536, %v4535
        %v4564 = vpack.c.bf16 %v4538, %v4537
        %v4565 = vpack.c.bf16 %v4540, %v4539
        %v4566 = vpack.c.bf16 %v4542, %v4541
        %v4567 = vpack.c.bf16 %v4544, %v4543
        %v4568 = vpack.c.bf16 %v4546, %v4545
        %v4569 = vpack.c.bf16 %v4548, %v4547
        %v4570 = vpack.c.bf16 %v4550, %v4549
        %v4571 = vpack.c.bf16 %v4552, %v4551
        %v4572 = vpack.c.bf16 %v4554, %v4553
        %v4573 = vpack.c.bf16 %v4556, %v4555
        %v4574 = vpack.c.bf16 %v4558, %v4557
        %v4575 = vsel %vm2460, %v4113, 0.0
        %v4576 = vsel %vm2461, %v4114, 0.0
        %v4577 = vsel %vm2462, %v4115, 0.0
        %v4578 = vsel %vm2463, %v4116, 0.0
        %v4579 = vsel %vm2464, %v4117, 0.0
        %v4580 = vsel %vm2465, %v4118, 0.0
        %v4581 = vsel %vm2466, %v4119, 0.0
        %v4582 = vsel %vm2467, %v4120, 0.0
        %v4583 = vsel %vm2468, %v4121, 0.0
        %v4584 = vsel %vm2469, %v4122, 0.0
        %v4585 = vsel %vm2470, %v4123, 0.0
        %v4586 = vsel %vm2471, %v4124, 0.0
        %v4587 = vsel %vm2472, %v4125, 0.0
        %v4588 = vsel %vm2473, %v4126, 0.0
        %v4589 = vsel %vm2474, %v4127, 0.0
        %v4590 = vsel %vm2475, %v4128, 0.0
        %v4591 = vsel %vm2476, %v4129, 0.0
        %v4592 = vsel %vm2477, %v4130, 0.0
        %v4593 = vsel %vm2478, %v4131, 0.0
        %v4594 = vsel %vm2479, %v4132, 0.0
        %v4595 = vsel %vm2480, %v4133, 0.0
        %v4596 = vsel %vm2481, %v4134, 0.0
        %v4597 = vsel %vm2482, %v4135, 0.0
        %v4598 = vsel %vm2483, %v4136, 0.0
        %v4599 = vsel %vm2484, %v4137, 0.0
        %v4600 = vsel %vm2485, %v4138, 0.0
        %v4601 = vsel %vm2486, %v4139, 0.0
        %v4602 = vsel %vm2487, %v4140, 0.0
        %v4603 = vsel %vm2488, %v4141, 0.0
        %v4604 = vsel %vm2489, %v4142, 0.0
        %v4605 = vsel %vm2490, %v4111, 0.0
        %v4606 = vsel %vm2491, %v4112, 0.0
        %v4607 = vpack.c.bf16 %v4576, %v4575
        %v4608 = vpack.c.bf16 %v4578, %v4577
        %v4609 = vpack.c.bf16 %v4580, %v4579
        %v4610 = vpack.c.bf16 %v4582, %v4581
        %v4611 = vpack.c.bf16 %v4584, %v4583
        %v4612 = vpack.c.bf16 %v4586, %v4585
        %v4613 = vpack.c.bf16 %v4588, %v4587
        %v4614 = vpack.c.bf16 %v4590, %v4589
        %v4615 = vpack.c.bf16 %v4592, %v4591
        %v4616 = vpack.c.bf16 %v4594, %v4593
        %v4617 = vpack.c.bf16 %v4596, %v4595
        %v4618 = vpack.c.bf16 %v4598, %v4597
        %v4619 = vpack.c.bf16 %v4600, %v4599
        %v4620 = vpack.c.bf16 %v4602, %v4601
        %v4621 = vpack.c.bf16 %v4604, %v4603
        %v4622 = vpack.c.bf16 %v4606, %v4605
        %v4623 = vsel %vm2572, %v4363, 0.0
        %v4624 = vsel %vm2573, %v4362, 0.0
        %v4625 = vsel %vm2574, %v4361, 0.0
        %v4626 = vsel %vm2575, %v4360, 0.0
        %v4627 = vsel %vm2576, %v4359, 0.0
        %v4628 = vsel %vm2577, %v4358, 0.0
        %v4629 = vsel %vm2578, %v4357, 0.0
        %v4630 = vsel %vm2579, %v4356, 0.0
        %v4631 = vsel %vm2580, %v4355, 0.0
        %v4632 = vsel %vm2581, %v4354, 0.0
        %v4633 = vsel %vm2582, %v4353, 0.0
        %v4634 = vsel %vm2583, %v4352, 0.0
        %v4635 = vsel %vm2584, %v4351, 0.0
        %v4636 = vsel %vm2585, %v4350, 0.0
        %v4637 = vsel %vm2586, %v4349, 0.0
        %v4638 = vsel %vm2587, %v4348, 0.0
        %v4639 = vsel %vm2588, %v4347, 0.0
        %v4640 = vsel %vm2589, %v4346, 0.0
        %v4641 = vsel %vm2590, %v4345, 0.0
        %v4642 = vsel %vm2591, %v4344, 0.0
        %v4643 = vsel %vm2592, %v4343, 0.0
        %v4644 = vsel %vm2593, %v4342, 0.0
        %v4645 = vsel %vm2594, %v4341, 0.0
        %v4646 = vsel %vm2595, %v4340, 0.0
        %v4647 = vsel %vm2596, %v4339, 0.0
        %v4648 = vsel %vm2597, %v4338, 0.0
        %v4649 = vsel %vm2598, %v4337, 0.0
        %v4650 = vsel %vm2599, %v4336, 0.0
        %v4651 = vsel %vm2600, %v4335, 0.0
        %v4652 = vsel %vm2601, %v4366, 0.0
        %v4653 = vsel %vm2602, %v4365, 0.0
        %v4654 = vsel %vm2603, %v4364, 0.0
        %v4655 = vpack.c.bf16 %v4624, %v4623
        %v4656 = vpack.c.bf16 %v4626, %v4625
        %v4657 = vpack.c.bf16 %v4628, %v4627
        %v4658 = vpack.c.bf16 %v4630, %v4629
        %v4659 = vpack.c.bf16 %v4632, %v4631
        %v4660 = vpack.c.bf16 %v4634, %v4633
        %v4661 = vpack.c.bf16 %v4636, %v4635
        %v4662 = vpack.c.bf16 %v4638, %v4637
        %v4663 = vpack.c.bf16 %v4640, %v4639
        %v4664 = vpack.c.bf16 %v4642, %v4641
        %v4665 = vpack.c.bf16 %v4644, %v4643
        %v4666 = vpack.c.bf16 %v4646, %v4645
        %v4667 = vpack.c.bf16 %v4648, %v4647
        %v4668 = vpack.c.bf16 %v4650, %v4649
        %v4669 = vpack.c.bf16 %v4652, %v4651
        %v4670 = vpack.c.bf16 %v4654, %v4653
        %v4671 = vld [vmem:[#allocation7] sm:$0xf]
        %v4672 = vld [vmem:[#allocation7 + $0x4] sm:$0xf]
        %v4673 = vld [vmem:[#allocation7 + $0x8] sm:$0xf]
        %v4674 = vld [vmem:[#allocation7 + $0xc] sm:$0xf]
        %v4675 = vld [vmem:[#allocation7 + $0x10] sm:$0xf]
        %v4676 = vld [vmem:[#allocation7 + $0x14] sm:$0xf]
        %v4677 = vld [vmem:[#allocation7 + $0x18] sm:$0xf]
        %v4678 = vld [vmem:[#allocation7 + $0x1c] sm:$0xf]
        %v4679 = vld [vmem:[#allocation7 + $0x20] sm:$0xf]
        %v4680 = vld [vmem:[#allocation7 + $0x24] sm:$0xf]
        %v4681 = vld [vmem:[#allocation7 + $0x28] sm:$0xf]
        %v4682 = vld [vmem:[#allocation7 + $0x2c] sm:$0xf]
        %v4683 = vld [vmem:[#allocation7 + $0x30] sm:$0xf]
        %v4684 = vld [vmem:[#allocation7 + $0x34] sm:$0xf]
        %v4685 = vld [vmem:[#allocation7 + $0x38] sm:$0xf]
        %v4686 = vld [vmem:[#allocation7 + $0x3c] sm:$0xf]
        %v4687 = vld [vmem:[#allocation7 + $0x40] sm:$0xf]
        %v4688 = vld [vmem:[#allocation7 + $0x44] sm:$0xf]
        %v4689 = vld [vmem:[#allocation7 + $0x48] sm:$0xf]
        %v4690 = vld [vmem:[#allocation7 + $0x4c] sm:$0xf]
        %v4691 = vld [vmem:[#allocation7 + $0x50] sm:$0xf]
        %v4692 = vld [vmem:[#allocation7 + $0x54] sm:$0xf]
        %v4693 = vld [vmem:[#allocation7 + $0x58] sm:$0xf]
        %v4694 = vld [vmem:[#allocation7 + $0x5c] sm:$0xf]
        %v4695 = vld [vmem:[#allocation7 + $0x60] sm:$0xf]
        %v4696 = vld [vmem:[#allocation7 + $0x64] sm:$0xf]
        %v4697 = vld [vmem:[#allocation7 + $0x68] sm:$0xf]
        %v4698 = vld [vmem:[#allocation7 + $0x6c] sm:$0xf]
        %v4699 = vld [vmem:[#allocation7 + $0x70] sm:$0xf]
        %v4700 = vld [vmem:[#allocation7 + $0x74] sm:$0xf]
        %v4701 = vld [vmem:[#allocation7 + $0x78] sm:$0xf]
        %v4702 = vld [vmem:[#allocation7 + $0x7c] sm:$0xf]
        %v4703 = vld [vmem:[#allocation7 + $0x80] sm:$0xf]
        %v4704 = vld [vmem:[#allocation7 + $0x84] sm:$0xf]
        %v4705 = vld [vmem:[#allocation7 + $0x88] sm:$0xf]
        %v4706 = vld [vmem:[#allocation7 + $0x8c] sm:$0xf]
        %v4707 = vld [vmem:[#allocation7 + $0x90] sm:$0xf]
        %v4708 = vld [vmem:[#allocation7 + $0x94] sm:$0xf]
        %v4709 = vld [vmem:[#allocation7 + $0x98] sm:$0xf]
        %v4710 = vld [vmem:[#allocation7 + $0x9c] sm:$0xf]
        %v4711 = vld [vmem:[#allocation7 + $0xa0] sm:$0xf]
        %v4712 = vld [vmem:[#allocation7 + $0xa4] sm:$0xf]
        %v4713 = vld [vmem:[#allocation7 + $0xa8] sm:$0xf]
        %v4714 = vld [vmem:[#allocation7 + $0xac] sm:$0xf]
        %v4715 = vld [vmem:[#allocation7 + $0xb0] sm:$0xf]
        %v4716 = vld [vmem:[#allocation7 + $0xb4] sm:$0xf]
        %v4717 = vld [vmem:[#allocation7 + $0xb8] sm:$0xf]
        %v4718 = vld [vmem:[#allocation7 + $0xbc] sm:$0xf]
        %v4719 = vld [vmem:[#allocation7 + $0xc0] sm:$0xf]
        %v4720 = vld [vmem:[#allocation7 + $0xc4] sm:$0xf]
        %v4721 = vld [vmem:[#allocation7 + $0xc8] sm:$0xf]
        %v4722 = vld [vmem:[#allocation7 + $0xcc] sm:$0xf]
        %v4723 = vld [vmem:[#allocation7 + $0xd0] sm:$0xf]
        %v4724 = vld [vmem:[#allocation7 + $0xd4] sm:$0xf]
        %v4725 = vld [vmem:[#allocation7 + $0xd8] sm:$0xf]
        %v4726 = vld [vmem:[#allocation7 + $0xdc] sm:$0xf]
        %v4727 = vld [vmem:[#allocation7 + $0xe0] sm:$0xf]
        %v4728 = vld [vmem:[#allocation7 + $0xe4] sm:$0xf]
        %v4729 = vld [vmem:[#allocation7 + $0xe8] sm:$0xf]
        %v4730 = vld [vmem:[#allocation7 + $0xec] sm:$0xf]
        %v4731 = vld [vmem:[#allocation7 + $0xf0] sm:$0xf]
        %v4732 = vld [vmem:[#allocation7 + $0xf4] sm:$0xf]
        %v4733 = vld [vmem:[#allocation7 + $0xf8] sm:$0xf]
        %v4734 = vld [vmem:[#allocation7 + $0xfc] sm:$0xf]
        %v4735 = vld [vmem:[#allocation7 + $0x100] sm:$0xf]
        %v4736 = vld [vmem:[#allocation7 + $0x104] sm:$0xf]
        %v4737 = vld [vmem:[#allocation7 + $0x108] sm:$0xf]
        %v4738 = vld [vmem:[#allocation7 + $0x10c] sm:$0xf]
        %v4739 = vld [vmem:[#allocation7 + $0x110] sm:$0xf]
        %v4740 = vld [vmem:[#allocation7 + $0x114] sm:$0xf]
        %v4741 = vld [vmem:[#allocation7 + $0x118] sm:$0xf]
        %v4742 = vld [vmem:[#allocation7 + $0x11c] sm:$0xf]
        %v4743 = vld [vmem:[#allocation7 + $0x120] sm:$0xf]
        %v4744 = vld [vmem:[#allocation7 + $0x124] sm:$0xf]
        %v4745 = vld [vmem:[#allocation7 + $0x128] sm:$0xf]
        %v4746 = vld [vmem:[#allocation7 + $0x12c] sm:$0xf]
        %v4747 = vld [vmem:[#allocation7 + $0x130] sm:$0xf]
        %v4748 = vld [vmem:[#allocation7 + $0x134] sm:$0xf]
        %v4749 = vld [vmem:[#allocation7 + $0x138] sm:$0xf]
        %v4750 = vld [vmem:[#allocation7 + $0x13c] sm:$0xf]
        %v4751 = vld [vmem:[#allocation7 + $0x140] sm:$0xf]
        %v4752 = vld [vmem:[#allocation7 + $0x144] sm:$0xf]
        %v4753 = vld [vmem:[#allocation7 + $0x148] sm:$0xf]
        %v4754 = vld [vmem:[#allocation7 + $0x14c] sm:$0xf]
        %v4755 = vld [vmem:[#allocation7 + $0x150] sm:$0xf]
        %v4756 = vld [vmem:[#allocation7 + $0x154] sm:$0xf]
        %v4757 = vld [vmem:[#allocation7 + $0x158] sm:$0xf]
        %v4758 = vld [vmem:[#allocation7 + $0x15c] sm:$0xf]
        %v4759 = vld [vmem:[#allocation7 + $0x160] sm:$0xf]
        %v4760 = vld [vmem:[#allocation7 + $0x164] sm:$0xf]
        %v4761 = vld [vmem:[#allocation7 + $0x168] sm:$0xf]
        %v4762 = vld [vmem:[#allocation7 + $0x16c] sm:$0xf]
        %v4763 = vld [vmem:[#allocation7 + $0x170] sm:$0xf]
        %v4764 = vld [vmem:[#allocation7 + $0x174] sm:$0xf]
        %v4765 = vld [vmem:[#allocation7 + $0x178] sm:$0xf]
        %v4766 = vld [vmem:[#allocation7 + $0x17c] sm:$0xf]
        %v4767 = vld [vmem:[#allocation7 + $0x180] sm:$0xf]
        %v4768 = vld [vmem:[#allocation7 + $0x184] sm:$0xf]
        %v4769 = vld [vmem:[#allocation7 + $0x188] sm:$0xf]
        %v4770 = vld [vmem:[#allocation7 + $0x18c] sm:$0xf]
        %v4771 = vld [vmem:[#allocation7 + $0x190] sm:$0xf]
        %v4772 = vld [vmem:[#allocation7 + $0x194] sm:$0xf]
        %v4773 = vld [vmem:[#allocation7 + $0x198] sm:$0xf]
        %v4774 = vld [vmem:[#allocation7 + $0x19c] sm:$0xf]
        %v4775 = vld [vmem:[#allocation7 + $0x1a0] sm:$0xf]
        %v4776 = vld [vmem:[#allocation7 + $0x1a4] sm:$0xf]
        %v4777 = vld [vmem:[#allocation7 + $0x1a8] sm:$0xf]
        %v4778 = vld [vmem:[#allocation7 + $0x1ac] sm:$0xf]
        %v4779 = vld [vmem:[#allocation7 + $0x1b0] sm:$0xf]
        %v4780 = vld [vmem:[#allocation7 + $0x1b4] sm:$0xf]
        %v4781 = vld [vmem:[#allocation7 + $0x1b8] sm:$0xf]
        %v4782 = vld [vmem:[#allocation7 + $0x1bc] sm:$0xf]
        %v4783 = vld [vmem:[#allocation7 + $0x1c0] sm:$0xf]
        %v4784 = vld [vmem:[#allocation7 + $0x1c4] sm:$0xf]
        %v4785 = vld [vmem:[#allocation7 + $0x1c8] sm:$0xf]
        %v4786 = vld [vmem:[#allocation7 + $0x1cc] sm:$0xf]
        %v4787 = vld [vmem:[#allocation7 + $0x1d0] sm:$0xf]
        %v4788 = vld [vmem:[#allocation7 + $0x1d4] sm:$0xf]
        %v4789 = vld [vmem:[#allocation7 + $0x1d8] sm:$0xf]
        %v4790 = vld [vmem:[#allocation7 + $0x1dc] sm:$0xf]
        %v4791 = vld [vmem:[#allocation7 + $0x1e0] sm:$0xf]
        %v4792 = vld [vmem:[#allocation7 + $0x1e4] sm:$0xf]
        %v4793 = vld [vmem:[#allocation7 + $0x1e8] sm:$0xf]
        %v4794 = vld [vmem:[#allocation7 + $0x1ec] sm:$0xf]
        %v4795 = vld [vmem:[#allocation7 + $0x1f0] sm:$0xf]
        %v4796 = vld [vmem:[#allocation7 + $0x1f4] sm:$0xf]
        %v4797 = vld [vmem:[#allocation7 + $0x1f8] sm:$0xf]
        %v4798 = vld [vmem:[#allocation7 + $0x1fc] sm:$0xf]
        %v4799 = vld [vmem:[#allocation7 + $0x200] sm:$0xf]
        %v4800 = vld [vmem:[#allocation7 + $0x204] sm:$0xf]
        %v4801 = vld [vmem:[#allocation7 + $0x208] sm:$0xf]
        %v4802 = vld [vmem:[#allocation7 + $0x20c] sm:$0xf]
        %v4803 = vld [vmem:[#allocation7 + $0x210] sm:$0xf]
        %v4804 = vld [vmem:[#allocation7 + $0x214] sm:$0xf]
        %v4805 = vld [vmem:[#allocation7 + $0x218] sm:$0xf]
        %v4806 = vld [vmem:[#allocation7 + $0x21c] sm:$0xf]
        %v4807 = vld [vmem:[#allocation7 + $0x220] sm:$0xf]
        %v4808 = vld [vmem:[#allocation7 + $0x224] sm:$0xf]
        %v4809 = vld [vmem:[#allocation7 + $0x228] sm:$0xf]
        %v4810 = vld [vmem:[#allocation7 + $0x22c] sm:$0xf]
        %v4811 = vld [vmem:[#allocation7 + $0x230] sm:$0xf]
        %v4812 = vld [vmem:[#allocation7 + $0x234] sm:$0xf]
        %v4813 = vld [vmem:[#allocation7 + $0x238] sm:$0xf]
        %v4814 = vld [vmem:[#allocation7 + $0x23c] sm:$0xf]
        %v4959 = vunpack.c.l.b16 %v4671
        %v4960 = vunpack.c.l.b16 %v4672
        %v4961 = vunpack.c.l.b16 %v4673
        %v4962 = vunpack.c.l.b16 %v4674
        %v4963 = vunpack.c.l.b16 %v4675
        %v4964 = vunpack.c.l.b16 %v4676
        %v4965 = vunpack.c.l.b16 %v4677
        %v4966 = vunpack.c.l.b16 %v4678
        %v4967 = vunpack.c.l.b16 %v4679
        %v4968 = vunpack.c.l.b16 %v4680
        %v4969 = vunpack.c.l.b16 %v4681
        %v4970 = vunpack.c.l.b16 %v4682
        %v4971 = vunpack.c.l.b16 %v4683
        %v4972 = vunpack.c.l.b16 %v4684
        %v4973 = vunpack.c.l.b16 %v4685
        %v4974 = vunpack.c.l.b16 %v4686
        %v4975 = vunpack.c.l.b16 %v4687
        %v4976 = vunpack.c.l.b16 %v4688
        %v4977 = vunpack.c.l.b16 %v4689
        %v4978 = vunpack.c.l.b16 %v4690
        %v4979 = vunpack.c.l.b16 %v4691
        %v4980 = vunpack.c.l.b16 %v4692
        %v4981 = vunpack.c.l.b16 %v4693
        %v4982 = vunpack.c.l.b16 %v4694
        %v4983 = vunpack.c.l.b16 %v4695
        %v4984 = vunpack.c.l.b16 %v4696
        %v4985 = vunpack.c.l.b16 %v4697
        %v4986 = vunpack.c.l.b16 %v4698
        %v4987 = vunpack.c.l.b16 %v4699
        %v4988 = vunpack.c.l.b16 %v4700
        %v4989 = vunpack.c.l.b16 %v4701
        %v4990 = vunpack.c.l.b16 %v4702
        %v4991 = vunpack.c.l.b16 %v4703
        %v4992 = vunpack.c.l.b16 %v4704
        %v4993 = vunpack.c.l.b16 %v4705
        %v4994 = vunpack.c.l.b16 %v4706
        %v4995 = vunpack.c.l.b16 %v4707
        %v4996 = vunpack.c.l.b16 %v4708
        %v4997 = vunpack.c.l.b16 %v4709
        %v4998 = vunpack.c.l.b16 %v4710
        %v4999 = vunpack.c.l.b16 %v4711
        %v5000 = vunpack.c.l.b16 %v4712
        %v5001 = vunpack.c.l.b16 %v4713
        %v5002 = vunpack.c.l.b16 %v4714
        %v5003 = vunpack.c.l.b16 %v4715
        %v5004 = vunpack.c.l.b16 %v4716
        %v5005 = vunpack.c.l.b16 %v4717
        %v5006 = vunpack.c.l.b16 %v4718
        %v5007 = vunpack.c.l.b16 %v4719
        %v5008 = vunpack.c.l.b16 %v4720
        %v5009 = vunpack.c.l.b16 %v4721
        %v5010 = vunpack.c.l.b16 %v4722
        %v5011 = vunpack.c.l.b16 %v4723
        %v5012 = vunpack.c.l.b16 %v4724
        %v5013 = vunpack.c.l.b16 %v4725
        %v5014 = vunpack.c.l.b16 %v4726
        %v5015 = vunpack.c.l.b16 %v4727
        %v5016 = vunpack.c.l.b16 %v4728
        %v5017 = vunpack.c.l.b16 %v4729
        %v5018 = vunpack.c.l.b16 %v4730
        %v5019 = vunpack.c.l.b16 %v4731
        %v5020 = vunpack.c.l.b16 %v4732
        %v5021 = vunpack.c.l.b16 %v4733
        %v5022 = vunpack.c.l.b16 %v4734
        %v5023 = vunpack.c.l.b16 %v4735
        %v5024 = vunpack.c.l.b16 %v4736
        %v5025 = vunpack.c.l.b16 %v4737
        %v5026 = vunpack.c.l.b16 %v4738
        %v5027 = vunpack.c.l.b16 %v4739
        %v5028 = vunpack.c.l.b16 %v4740
        %v5029 = vunpack.c.l.b16 %v4741
        %v5030 = vunpack.c.l.b16 %v4742
        %v5031 = vunpack.c.l.b16 %v4743
        %v5032 = vunpack.c.l.b16 %v4744
        %v5033 = vunpack.c.l.b16 %v4745
        %v5034 = vunpack.c.l.b16 %v4746
        %v5035 = vunpack.c.l.b16 %v4747
        %v5036 = vunpack.c.l.b16 %v4748
        %v5037 = vunpack.c.l.b16 %v4749
        %v5038 = vunpack.c.l.b16 %v4750
        %v5039 = vunpack.c.l.b16 %v4751
        %v5040 = vunpack.c.l.b16 %v4752
        %v5041 = vunpack.c.l.b16 %v4753
        %v5042 = vunpack.c.l.b16 %v4754
        %v5043 = vunpack.c.l.b16 %v4755
        %v5044 = vunpack.c.l.b16 %v4756
        %v5045 = vunpack.c.l.b16 %v4757
        %v5046 = vunpack.c.l.b16 %v4758
        %v5047 = vunpack.c.l.b16 %v4759
        %v5048 = vunpack.c.l.b16 %v4760
        %v5049 = vunpack.c.l.b16 %v4761
        %v5050 = vunpack.c.l.b16 %v4762
        %v5051 = vunpack.c.l.b16 %v4763
        %v5052 = vunpack.c.l.b16 %v4764
        %v5053 = vunpack.c.l.b16 %v4765
        %v5054 = vunpack.c.l.b16 %v4766
        %v5055 = vunpack.c.l.b16 %v4767
        %v5056 = vunpack.c.l.b16 %v4768
        %v5057 = vunpack.c.l.b16 %v4769
        %v5058 = vunpack.c.l.b16 %v4770
        %v5059 = vunpack.c.l.b16 %v4771
        %v5060 = vunpack.c.l.b16 %v4772
        %v5061 = vunpack.c.l.b16 %v4773
        %v5062 = vunpack.c.l.b16 %v4774
        %v5063 = vunpack.c.l.b16 %v4775
        %v5064 = vunpack.c.l.b16 %v4776
        %v5065 = vunpack.c.l.b16 %v4777
        %v5066 = vunpack.c.l.b16 %v4778
        %v5067 = vunpack.c.l.b16 %v4779
        %v5068 = vunpack.c.l.b16 %v4780
        %v5069 = vunpack.c.l.b16 %v4781
        %v5070 = vunpack.c.l.b16 %v4782
        %v5071 = vunpack.c.l.b16 %v4783
        %v5072 = vunpack.c.l.b16 %v4784
        %v5073 = vunpack.c.l.b16 %v4785
        %v5074 = vunpack.c.l.b16 %v4786
        %v5075 = vunpack.c.l.b16 %v4787
        %v5076 = vunpack.c.l.b16 %v4788
        %v5077 = vunpack.c.l.b16 %v4789
        %v5078 = vunpack.c.l.b16 %v4790
        %v5079 = vunpack.c.l.b16 %v4791
        %v5080 = vunpack.c.l.b16 %v4792
        %v5081 = vunpack.c.l.b16 %v4793
        %v5082 = vunpack.c.l.b16 %v4794
        %v5083 = vunpack.c.l.b16 %v4795
        %v5084 = vunpack.c.l.b16 %v4796
        %v5085 = vunpack.c.l.b16 %v4797
        %v5086 = vunpack.c.l.b16 %v4798
        %v5087 = vunpack.c.l.b16 %v4799
        %v5088 = vunpack.c.l.b16 %v4800
        %v5089 = vunpack.c.l.b16 %v4801
        %v5090 = vunpack.c.l.b16 %v4802
        %v5091 = vunpack.c.l.b16 %v4803
        %v5092 = vunpack.c.l.b16 %v4804
        %v5093 = vunpack.c.l.b16 %v4805
        %v5094 = vunpack.c.l.b16 %v4806
        %v5095 = vunpack.c.l.b16 %v4807
        %v5096 = vunpack.c.l.b16 %v4808
        %v5097 = vunpack.c.l.b16 %v4809
        %v5098 = vunpack.c.l.b16 %v4810
        %v5099 = vunpack.c.l.b16 %v4811
        %v5100 = vunpack.c.l.b16 %v4812
        %v5101 = vunpack.c.l.b16 %v4813
        %v5102 = vunpack.c.l.b16 %v4814
        %v5103 = vpack.c.b16 %v4960, %v4959
        %v5104 = vpack.c.b16 %v4962, %v4961
        %v5105 = vpack.c.b16 %v4964, %v4963
        %v5106 = vpack.c.b16 %v4966, %v4965
        %v5107 = vpack.c.b16 %v4968, %v4967
        %v5108 = vpack.c.b16 %v4970, %v4969
        %v5109 = vpack.c.b16 %v4972, %v4971
        %v5110 = vpack.c.b16 %v4974, %v4973
        %v5111 = vpack.c.b16 %v4976, %v4975
        %v5112 = vpack.c.b16 %v4978, %v4977
        %v5113 = vpack.c.b16 %v4980, %v4979
        %v5114 = vpack.c.b16 %v4982, %v4981
        %v5115 = vpack.c.b16 %v4984, %v4983
        %v5116 = vpack.c.b16 %v4986, %v4985
        %v5117 = vpack.c.b16 %v4988, %v4987
        %v5118 = vpack.c.b16 %v4990, %v4989
        %v5119 = vpack.c.b16 %v4992, %v4991
        %v5120 = vpack.c.b16 %v4994, %v4993
        %v5121 = vpack.c.b16 %v4996, %v4995
        %v5122 = vpack.c.b16 %v4998, %v4997
        %v5123 = vpack.c.b16 %v5000, %v4999
        %v5124 = vpack.c.b16 %v5002, %v5001
        %v5125 = vpack.c.b16 %v5004, %v5003
        %v5126 = vpack.c.b16 %v5006, %v5005
        %v5127 = vpack.c.b16 %v5008, %v5007
        %v5128 = vpack.c.b16 %v5010, %v5009
        %v5129 = vpack.c.b16 %v5012, %v5011
        %v5130 = vpack.c.b16 %v5014, %v5013
        %v5131 = vpack.c.b16 %v5016, %v5015
        %v5132 = vpack.c.b16 %v5018, %v5017
        %v5133 = vpack.c.b16 %v5020, %v5019
        %v5134 = vpack.c.b16 %v5022, %v5021
        %v5135 = vpack.c.b16 %v5024, %v5023
        %v5136 = vpack.c.b16 %v5026, %v5025
        %v5137 = vpack.c.b16 %v5028, %v5027
        %v5138 = vpack.c.b16 %v5030, %v5029
        %v5139 = vpack.c.b16 %v5032, %v5031
        %v5140 = vpack.c.b16 %v5034, %v5033
        %v5141 = vpack.c.b16 %v5036, %v5035
        %v5142 = vpack.c.b16 %v5038, %v5037
        %v5143 = vpack.c.b16 %v5040, %v5039
        %v5144 = vpack.c.b16 %v5042, %v5041
        %v5145 = vpack.c.b16 %v5044, %v5043
        %v5146 = vpack.c.b16 %v5046, %v5045
        %v5147 = vpack.c.b16 %v5048, %v5047
        %v5148 = vpack.c.b16 %v5050, %v5049
        %v5149 = vpack.c.b16 %v5052, %v5051
        %v5150 = vpack.c.b16 %v5054, %v5053
        %v5151 = vpack.c.b16 %v5056, %v5055
        %v5152 = vpack.c.b16 %v5058, %v5057
        %v5153 = vpack.c.b16 %v5060, %v5059
        %v5154 = vpack.c.b16 %v5062, %v5061
        %v5155 = vpack.c.b16 %v5064, %v5063
        %v5156 = vpack.c.b16 %v5066, %v5065
        %v5157 = vpack.c.b16 %v5068, %v5067
        %v5158 = vpack.c.b16 %v5070, %v5069
        %v5159 = vpack.c.b16 %v5072, %v5071
        %v5160 = vpack.c.b16 %v5074, %v5073
        %v5161 = vpack.c.b16 %v5076, %v5075
        %v5162 = vpack.c.b16 %v5078, %v5077
        %v5163 = vpack.c.b16 %v5080, %v5079
        %v5164 = vpack.c.b16 %v5082, %v5081
        %v5165 = vpack.c.b16 %v5084, %v5083
        %v5166 = vpack.c.b16 %v5086, %v5085
        %v5167 = vpack.c.b16 %v5088, %v5087
        %v5168 = vpack.c.b16 %v5090, %v5089
        %v5169 = vpack.c.b16 %v5092, %v5091
        %v5170 = vpack.c.b16 %v5094, %v5093
        %v5171 = vpack.c.b16 %v5096, %v5095
        %v5172 = vpack.c.b16 %v5098, %v5097
        %v5173 = vpack.c.b16 %v5100, %v5099
        %v5174 = vpack.c.b16 %v5102, %v5101
        %5247 = vmatprep.subr.bf16.mxu0 0
        %5248 = vmatpush1.bf16.msra.mxu0 %v5110
        %5249 = vmatprep.subr.bf16.mxu0 0
        %5250 = vmatpush1.bf16.msra.mxu0 %v5109
        %5251 = vmatprep.subr.bf16.mxu0 0
        %5252 = vmatpush1.bf16.msra.mxu0 %v5108
        %5253 = vmatprep.subr.bf16.mxu0 0
        %5254 = vmatpush1.bf16.msra.mxu0 %v5107
        %5255 = vmatprep.subr.bf16.mxu0 0
        %5256 = vmatpush1.bf16.msra.mxu0 %v5106
        %5257 = vmatprep.subr.bf16.mxu0 0
        %5258 = vmatpush1.bf16.msra.mxu0 %v5105
        %5259 = vmatprep.subr.bf16.mxu0 0
        %5260 = vmatpush1.bf16.msra.mxu0 %v5104
        %5261 = vmatprep.subr.bf16.mxu0 0
        %5262 = vmatpush1.bf16.msra.mxu0 %v5103
        %5263 = vmatprep.subr.bf16.mxu0 0
        %5264 = vmatpush2.bf16.msra.mxu0 %v5118
        %5265 = vmatprep.subr.bf16.mxu0 0
        %5266 = vmatpush2.bf16.msra.mxu0 %v5117
        %5267 = vmatprep.subr.bf16.mxu0 0
        %5268 = vmatpush2.bf16.msra.mxu0 %v5116
        %5269 = vmatprep.subr.bf16.mxu0 0
        %5270 = vmatpush2.bf16.msra.mxu0 %v5115
        %5271 = vmatprep.subr.bf16.mxu0 0
        %5272 = vmatpush2.bf16.msra.mxu0 %v5114
        %5273 = vmatprep.subr.bf16.mxu0 0
        %5274 = vmatpush2.bf16.msra.mxu0 %v5113
        %5275 = vmatprep.subr.bf16.mxu0 0
        %5276 = vmatpush2.bf16.msra.mxu0 %v5112
        %5277 = vmatprep.subr.bf16.mxu0 0
        %5278 = vmatpush2.bf16.msra.mxu0 %v5111
        %5279 = vmatprep.mubr.bf16.mxu0 %v4287
        %5280 = vmatmul.mubr.bf16.gmra.mxu0 %v4239
        %v5281 = vpop.f32.mrf.mxu0
        %v5282 = vadd.f32 0.0, %v5281
        %v5283 = vpop.f32.mrf.mxu0
        %v5284 = vpop.f32.mrf.mxu0
        %v5285 = vadd.f32 0.0, %v5284
        %v5286 = vpop.f32.mrf.mxu0
        %5287 = vmatprep.mubr.bf16.mxu0 %v4288
        %5288 = vmatmul.mubr.bf16.gmra.mxu0 %v4240
        %v5289 = vpop.f32.mrf.mxu0
        %v5290 = vadd.f32 0.0, %v5289
        %v5291 = vpop.f32.mrf.mxu0
        %v5292 = vpop.f32.mrf.mxu0
        %v5293 = vadd.f32 0.0, %v5292
        %v5294 = vpop.f32.mrf.mxu0
        %5295 = vmatprep.mubr.bf16.mxu0 %v4289
        %5296 = vmatmul.mubr.bf16.gmra.mxu0 %v4241
        %v5297 = vpop.f32.mrf.mxu0
        %v5298 = vadd.f32 0.0, %v5297
        %v5299 = vpop.f32.mrf.mxu0
        %v5300 = vpop.f32.mrf.mxu0
        %v5301 = vadd.f32 0.0, %v5300
        %v5302 = vpop.f32.mrf.mxu0
        %5303 = vmatprep.mubr.bf16.mxu0 %v4290
        %5304 = vmatmul.mubr.bf16.gmra.mxu0 %v4242
        %v5305 = vpop.f32.mrf.mxu0
        %v5306 = vadd.f32 0.0, %v5305
        %v5307 = vpop.f32.mrf.mxu0
        %v5308 = vpop.f32.mrf.mxu0
        %v5309 = vadd.f32 0.0, %v5308
        %v5310 = vpop.f32.mrf.mxu0
        %5311 = vmatprep.mubr.bf16.mxu0 %v4291
        %5312 = vmatmul.mubr.bf16.gmra.mxu0 %v4243
        %v5313 = vpop.f32.mrf.mxu0
        %v5314 = vadd.f32 0.0, %v5313
        %v5315 = vpop.f32.mrf.mxu0
        %v5316 = vpop.f32.mrf.mxu0
        %v5317 = vadd.f32 0.0, %v5316
        %v5318 = vpop.f32.mrf.mxu0
        %5319 = vmatprep.mubr.bf16.mxu0 %v4292
        %5320 = vmatmul.mubr.bf16.gmra.mxu0 %v4244
        %v5321 = vpop.f32.mrf.mxu0
        %v5322 = vadd.f32 0.0, %v5321
        %v5323 = vpop.f32.mrf.mxu0
        %v5324 = vpop.f32.mrf.mxu0
        %v5325 = vadd.f32 0.0, %v5324
        %v5326 = vpop.f32.mrf.mxu0
        %5327 = vmatprep.mubr.bf16.mxu0 %v4293
        %5328 = vmatmul.mubr.bf16.gmra.mxu0 %v4245
        %v5329 = vpop.f32.mrf.mxu0
        %v5330 = vadd.f32 0.0, %v5329
        %v5331 = vpop.f32.mrf.mxu0
        %v5332 = vpop.f32.mrf.mxu0
        %v5333 = vadd.f32 0.0, %v5332
        %v5334 = vpop.f32.mrf.mxu0
        %5335 = vmatprep.mubr.bf16.mxu0 %v4294
        %5336 = vmatmul.mubr.bf16.gmra.mxu0 %v4246
        %v5337 = vpop.f32.mrf.mxu0
        %v5338 = vadd.f32 0.0, %v5337
        %v5339 = vpop.f32.mrf.mxu0
        %v5340 = vpop.f32.mrf.mxu0
        %v5341 = vadd.f32 0.0, %v5340
        %v5342 = vpop.f32.mrf.mxu0
        %5343 = vmatprep.mubr.bf16.mxu0 %v4295
        %5344 = vmatmul.mubr.bf16.gmra.mxu0 %v4247
        %v5345 = vpop.f32.mrf.mxu0
        %v5346 = vadd.f32 0.0, %v5345
        %v5347 = vpop.f32.mrf.mxu0
        %v5348 = vpop.f32.mrf.mxu0
        %v5349 = vadd.f32 0.0, %v5348
        %v5350 = vpop.f32.mrf.mxu0
        %5351 = vmatprep.mubr.bf16.mxu0 %v4296
        %5352 = vmatmul.mubr.bf16.gmra.mxu0 %v4248
        %v5353 = vpop.f32.mrf.mxu0
        %v5354 = vadd.f32 0.0, %v5353
        %v5355 = vpop.f32.mrf.mxu0
        %v5356 = vpop.f32.mrf.mxu0
        %v5357 = vadd.f32 0.0, %v5356
        %v5358 = vpop.f32.mrf.mxu0
        %5359 = vmatprep.mubr.bf16.mxu0 %v4297
        %5360 = vmatmul.mubr.bf16.gmra.mxu0 %v4249
        %v5361 = vpop.f32.mrf.mxu0
        %v5362 = vadd.f32 0.0, %v5361
        %v5363 = vpop.f32.mrf.mxu0
        %v5364 = vpop.f32.mrf.mxu0
        %v5365 = vadd.f32 0.0, %v5364
        %v5366 = vpop.f32.mrf.mxu0
        %5367 = vmatprep.mubr.bf16.mxu0 %v4298
        %5368 = vmatmul.mubr.bf16.gmra.mxu0 %v4250
        %v5369 = vpop.f32.mrf.mxu0
        %v5370 = vadd.f32 0.0, %v5369
        %v5371 = vpop.f32.mrf.mxu0
        %v5372 = vpop.f32.mrf.mxu0
        %v5373 = vadd.f32 0.0, %v5372
        %v5374 = vpop.f32.mrf.mxu0
        %5375 = vmatprep.mubr.bf16.mxu0 %v4299
        %5376 = vmatmul.mubr.bf16.gmra.mxu0 %v4251
        %v5377 = vpop.f32.mrf.mxu0
        %v5378 = vadd.f32 0.0, %v5377
        %v5379 = vpop.f32.mrf.mxu0
        %v5380 = vpop.f32.mrf.mxu0
        %v5381 = vadd.f32 0.0, %v5380
        %v5382 = vpop.f32.mrf.mxu0
        %5383 = vmatprep.mubr.bf16.mxu0 %v4300
        %5384 = vmatmul.mubr.bf16.gmra.mxu0 %v4252
        %v5385 = vpop.f32.mrf.mxu0
        %v5386 = vadd.f32 0.0, %v5385
        %v5387 = vpop.f32.mrf.mxu0
        %v5388 = vpop.f32.mrf.mxu0
        %v5389 = vadd.f32 0.0, %v5388
        %v5390 = vpop.f32.mrf.mxu0
        %5391 = vmatprep.mubr.bf16.mxu0 %v4301
        %5392 = vmatmul.mubr.bf16.gmra.mxu0 %v4253
        %v5393 = vpop.f32.mrf.mxu0
        %v5394 = vadd.f32 0.0, %v5393
        %v5395 = vpop.f32.mrf.mxu0
        %v5396 = vpop.f32.mrf.mxu0
        %v5397 = vadd.f32 0.0, %v5396
        %v5398 = vpop.f32.mrf.mxu0
        %5399 = vmatprep.mubr.bf16.mxu0 %v4302
        %5400 = vmatmul.mubr.bf16.gmra.mxu0 %v4254
        %v5401 = vpop.f32.mrf.mxu0
        %v5402 = vadd.f32 0.0, %v5401
        %v5403 = vpop.f32.mrf.mxu0
        %v5404 = vpop.f32.mrf.mxu0
        %v5405 = vadd.f32 0.0, %v5404
        %v5406 = vpop.f32.mrf.mxu0
        %5407 = vdwg.mxu0
        %5408 = vmatprep.subr.bf16.mxu0 0
        %5409 = vmatpush1.bf16.msra.mxu0 %v5126
        %5410 = vmatprep.subr.bf16.mxu0 0
        %5411 = vmatpush1.bf16.msra.mxu0 %v5125
        %5412 = vmatprep.subr.bf16.mxu0 0
        %5413 = vmatpush1.bf16.msra.mxu0 %v5124
        %5414 = vmatprep.subr.bf16.mxu0 0
        %5415 = vmatpush1.bf16.msra.mxu0 %v5123
        %5416 = vmatprep.subr.bf16.mxu0 0
        %5417 = vmatpush1.bf16.msra.mxu0 %v5122
        %5418 = vmatprep.subr.bf16.mxu0 0
        %5419 = vmatpush1.bf16.msra.mxu0 %v5121
        %5420 = vmatprep.subr.bf16.mxu0 0
        %5421 = vmatpush1.bf16.msra.mxu0 %v5120
        %5422 = vmatprep.subr.bf16.mxu0 0
        %5423 = vmatpush1.bf16.msra.mxu0 %v5119
        %5424 = vmatprep.subr.bf16.mxu0 0
        %5425 = vmatpush2.bf16.msra.mxu0 %v5134
        %5426 = vmatprep.subr.bf16.mxu0 0
        %5427 = vmatpush2.bf16.msra.mxu0 %v5133
        %5428 = vmatprep.subr.bf16.mxu0 0
        %5429 = vmatpush2.bf16.msra.mxu0 %v5132
        %5430 = vmatprep.subr.bf16.mxu0 0
        %5431 = vmatpush2.bf16.msra.mxu0 %v5131
        %5432 = vmatprep.subr.bf16.mxu0 0
        %5433 = vmatpush2.bf16.msra.mxu0 %v5130
        %5434 = vmatprep.subr.bf16.mxu0 0
        %5435 = vmatpush2.bf16.msra.mxu0 %v5129
        %5436 = vmatprep.subr.bf16.mxu0 0
        %5437 = vmatpush2.bf16.msra.mxu0 %v5128
        %5438 = vmatprep.subr.bf16.mxu0 0
        %5439 = vmatpush2.bf16.msra.mxu0 %v5127
        %5440 = vmatprep.mubr.bf16.mxu0 %v4447
        %5441 = vmatmul.mubr.bf16.gmra.mxu0 %v4399
        %v5442 = vpop.f32.mrf.mxu0
        %v5443 = vadd.f32 %v5282, %v5442
        %v5444 = vpop.f32.mrf.mxu0
        %v5445 = vpop.f32.mrf.mxu0
        %v5446 = vadd.f32 %v5285, %v5445
        %v5447 = vpop.f32.mrf.mxu0
        %5448 = vmatprep.mubr.bf16.mxu0 %v4448
        %5449 = vmatmul.mubr.bf16.gmra.mxu0 %v4400
        %v5450 = vpop.f32.mrf.mxu0
        %v5451 = vadd.f32 %v5290, %v5450
        %v5452 = vpop.f32.mrf.mxu0
        %v5453 = vpop.f32.mrf.mxu0
        %v5454 = vadd.f32 %v5293, %v5453
        %v5455 = vpop.f32.mrf.mxu0
        %5456 = vmatprep.mubr.bf16.mxu0 %v4449
        %5457 = vmatmul.mubr.bf16.gmra.mxu0 %v4401
        %v5458 = vpop.f32.mrf.mxu0
        %v5459 = vadd.f32 %v5298, %v5458
        %v5460 = vpop.f32.mrf.mxu0
        %v5461 = vpop.f32.mrf.mxu0
        %v5462 = vadd.f32 %v5301, %v5461
        %v5463 = vpop.f32.mrf.mxu0
        %5464 = vmatprep.mubr.bf16.mxu0 %v4450
        %5465 = vmatmul.mubr.bf16.gmra.mxu0 %v4402
        %v5466 = vpop.f32.mrf.mxu0
        %v5467 = vadd.f32 %v5306, %v5466
        %v5468 = vpop.f32.mrf.mxu0
        %v5469 = vpop.f32.mrf.mxu0
        %v5470 = vadd.f32 %v5309, %v5469
        %v5471 = vpop.f32.mrf.mxu0
        %5472 = vmatprep.mubr.bf16.mxu0 %v4451
        %5473 = vmatmul.mubr.bf16.gmra.mxu0 %v4403
        %v5474 = vpop.f32.mrf.mxu0
        %v5475 = vadd.f32 %v5314, %v5474
        %v5476 = vpop.f32.mrf.mxu0
        %v5477 = vpop.f32.mrf.mxu0
        %v5478 = vadd.f32 %v5317, %v5477
        %v5479 = vpop.f32.mrf.mxu0
        %5480 = vmatprep.mubr.bf16.mxu0 %v4452
        %5481 = vmatmul.mubr.bf16.gmra.mxu0 %v4404
        %v5482 = vpop.f32.mrf.mxu0
        %v5483 = vadd.f32 %v5322, %v5482
        %v5484 = vpop.f32.mrf.mxu0
        %v5485 = vpop.f32.mrf.mxu0
        %v5486 = vadd.f32 %v5325, %v5485
        %v5487 = vpop.f32.mrf.mxu0
        %5488 = vmatprep.mubr.bf16.mxu0 %v4453
        %5489 = vmatmul.mubr.bf16.gmra.mxu0 %v4405
        %v5490 = vpop.f32.mrf.mxu0
        %v5491 = vadd.f32 %v5330, %v5490
        %v5492 = vpop.f32.mrf.mxu0
        %v5493 = vpop.f32.mrf.mxu0
        %v5494 = vadd.f32 %v5333, %v5493
        %v5495 = vpop.f32.mrf.mxu0
        %5496 = vmatprep.mubr.bf16.mxu0 %v4454
        %5497 = vmatmul.mubr.bf16.gmra.mxu0 %v4406
        %v5498 = vpop.f32.mrf.mxu0
        %v5499 = vadd.f32 %v5338, %v5498
        %v5500 = vpop.f32.mrf.mxu0
        %v5501 = vpop.f32.mrf.mxu0
        %v5502 = vadd.f32 %v5341, %v5501
        %v5503 = vpop.f32.mrf.mxu0
        %5504 = vmatprep.mubr.bf16.mxu0 %v4455
        %5505 = vmatmul.mubr.bf16.gmra.mxu0 %v4407
        %v5506 = vpop.f32.mrf.mxu0
        %v5507 = vadd.f32 %v5346, %v5506
        %v5508 = vpop.f32.mrf.mxu0
        %v5509 = vpop.f32.mrf.mxu0
        %v5510 = vadd.f32 %v5349, %v5509
        %v5511 = vpop.f32.mrf.mxu0
        %5512 = vmatprep.mubr.bf16.mxu0 %v4456
        %5513 = vmatmul.mubr.bf16.gmra.mxu0 %v4408
        %v5514 = vpop.f32.mrf.mxu0
        %v5515 = vadd.f32 %v5354, %v5514
        %v5516 = vpop.f32.mrf.mxu0
        %v5517 = vpop.f32.mrf.mxu0
        %v5518 = vadd.f32 %v5357, %v5517
        %v5519 = vpop.f32.mrf.mxu0
        %5520 = vmatprep.mubr.bf16.mxu0 %v4457
        %5521 = vmatmul.mubr.bf16.gmra.mxu0 %v4409
        %v5522 = vpop.f32.mrf.mxu0
        %v5523 = vadd.f32 %v5362, %v5522
        %v5524 = vpop.f32.mrf.mxu0
        %v5525 = vpop.f32.mrf.mxu0
        %v5526 = vadd.f32 %v5365, %v5525
        %v5527 = vpop.f32.mrf.mxu0
        %5528 = vmatprep.mubr.bf16.mxu0 %v4458
        %5529 = vmatmul.mubr.bf16.gmra.mxu0 %v4410
        %v5530 = vpop.f32.mrf.mxu0
        %v5531 = vadd.f32 %v5370, %v5530
        %v5532 = vpop.f32.mrf.mxu0
        %v5533 = vpop.f32.mrf.mxu0
        %v5534 = vadd.f32 %v5373, %v5533
        %v5535 = vpop.f32.mrf.mxu0
        %5536 = vmatprep.mubr.bf16.mxu0 %v4459
        %5537 = vmatmul.mubr.bf16.gmra.mxu0 %v4411
        %v5538 = vpop.f32.mrf.mxu0
        %v5539 = vadd.f32 %v5378, %v5538
        %v5540 = vpop.f32.mrf.mxu0
        %v5541 = vpop.f32.mrf.mxu0
        %v5542 = vadd.f32 %v5381, %v5541
        %v5543 = vpop.f32.mrf.mxu0
        %5544 = vmatprep.mubr.bf16.mxu0 %v4460
        %5545 = vmatmul.mubr.bf16.gmra.mxu0 %v4412
        %v5546 = vpop.f32.mrf.mxu0
        %v5547 = vadd.f32 %v5386, %v5546
        %v5548 = vpop.f32.mrf.mxu0
        %v5549 = vpop.f32.mrf.mxu0
        %v5550 = vadd.f32 %v5389, %v5549
        %v5551 = vpop.f32.mrf.mxu0
        %5552 = vmatprep.mubr.bf16.mxu0 %v4461
        %5553 = vmatmul.mubr.bf16.gmra.mxu0 %v4413
        %v5554 = vpop.f32.mrf.mxu0
        %v5555 = vadd.f32 %v5394, %v5554
        %v5556 = vpop.f32.mrf.mxu0
        %v5557 = vpop.f32.mrf.mxu0
        %v5558 = vadd.f32 %v5397, %v5557
        %v5559 = vpop.f32.mrf.mxu0
        %5560 = vmatprep.mubr.bf16.mxu0 %v4462
        %5561 = vmatmul.mubr.bf16.gmra.mxu0 %v4414
        %v5562 = vpop.f32.mrf.mxu0
        %v5563 = vadd.f32 %v5402, %v5562
        %v5564 = vpop.f32.mrf.mxu0
        %v5565 = vpop.f32.mrf.mxu0
        %v5566 = vadd.f32 %v5405, %v5565
        %v5567 = vpop.f32.mrf.mxu0
        %5568 = vdwg.mxu0
        %5569 = vmatprep.subr.bf16.mxu0 0
        %5570 = vmatpush1.bf16.msra.mxu0 %v5142
        %5571 = vmatprep.subr.bf16.mxu0 0
        %5572 = vmatpush1.bf16.msra.mxu0 %v5141
        %5573 = vmatprep.subr.bf16.mxu0 0
        %5574 = vmatpush1.bf16.msra.mxu0 %v5140
        %5575 = vmatprep.subr.bf16.mxu0 0
        %5576 = vmatpush1.bf16.msra.mxu0 %v5139
        %5577 = vmatprep.subr.bf16.mxu0 0
        %5578 = vmatpush1.bf16.msra.mxu0 %v5138
        %5579 = vmatprep.subr.bf16.mxu0 0
        %5580 = vmatpush1.bf16.msra.mxu0 %v5137
        %5581 = vmatprep.subr.bf16.mxu0 0
        %5582 = vmatpush1.bf16.msra.mxu0 %v5136
        %5583 = vmatprep.subr.bf16.mxu0 0
        %5584 = vmatpush1.bf16.msra.mxu0 %v5135
        %5585 = vmatprep.subr.bf16.mxu0 0
        %5586 = vmatpush2.bf16.msra.mxu0 %v5150
        %5587 = vmatprep.subr.bf16.mxu0 0
        %5588 = vmatpush2.bf16.msra.mxu0 %v5149
        %5589 = vmatprep.subr.bf16.mxu0 0
        %5590 = vmatpush2.bf16.msra.mxu0 %v5148
        %5591 = vmatprep.subr.bf16.mxu0 0
        %5592 = vmatpush2.bf16.msra.mxu0 %v5147
        %5593 = vmatprep.subr.bf16.mxu0 0
        %5594 = vmatpush2.bf16.msra.mxu0 %v5146
        %5595 = vmatprep.subr.bf16.mxu0 0
        %5596 = vmatpush2.bf16.msra.mxu0 %v5145
        %5597 = vmatprep.subr.bf16.mxu0 0
        %5598 = vmatpush2.bf16.msra.mxu0 %v5144
        %5599 = vmatprep.subr.bf16.mxu0 0
        %5600 = vmatpush2.bf16.msra.mxu0 %v5143
        %5601 = vmatprep.mubr.bf16.mxu0 %v4511
        %5602 = vmatmul.mubr.bf16.gmra.mxu0 %v4463
        %v5603 = vpop.f32.mrf.mxu0
        %v5604 = vadd.f32 %v5443, %v5603
        %v5605 = vpop.f32.mrf.mxu0
        %v5606 = vpop.f32.mrf.mxu0
        %v5607 = vadd.f32 %v5446, %v5606
        %v5608 = vpop.f32.mrf.mxu0
        %5609 = vmatprep.mubr.bf16.mxu0 %v4512
        %5610 = vmatmul.mubr.bf16.gmra.mxu0 %v4464
        %v5611 = vpop.f32.mrf.mxu0
        %v5612 = vadd.f32 %v5451, %v5611
        %v5613 = vpop.f32.mrf.mxu0
        %v5614 = vpop.f32.mrf.mxu0
        %v5615 = vadd.f32 %v5454, %v5614
        %v5616 = vpop.f32.mrf.mxu0
        %5617 = vmatprep.mubr.bf16.mxu0 %v4513
        %5618 = vmatmul.mubr.bf16.gmra.mxu0 %v4465
        %v5619 = vpop.f32.mrf.mxu0
        %v5620 = vadd.f32 %v5459, %v5619
        %v5621 = vpop.f32.mrf.mxu0
        %v5622 = vpop.f32.mrf.mxu0
        %v5623 = vadd.f32 %v5462, %v5622
        %v5624 = vpop.f32.mrf.mxu0
        %5625 = vmatprep.mubr.bf16.mxu0 %v4514
        %5626 = vmatmul.mubr.bf16.gmra.mxu0 %v4466
        %v5627 = vpop.f32.mrf.mxu0
        %v5628 = vadd.f32 %v5467, %v5627
        %v5629 = vpop.f32.mrf.mxu0
        %v5630 = vpop.f32.mrf.mxu0
        %v5631 = vadd.f32 %v5470, %v5630
        %v5632 = vpop.f32.mrf.mxu0
        %5633 = vmatprep.mubr.bf16.mxu0 %v4515
        %5634 = vmatmul.mubr.bf16.gmra.mxu0 %v4467
        %v5635 = vpop.f32.mrf.mxu0
        %v5636 = vadd.f32 %v5475, %v5635
        %v5637 = vpop.f32.mrf.mxu0
        %v5638 = vpop.f32.mrf.mxu0
        %v5639 = vadd.f32 %v5478, %v5638
        %v5640 = vpop.f32.mrf.mxu0
        %5641 = vmatprep.mubr.bf16.mxu0 %v4516
        %5642 = vmatmul.mubr.bf16.gmra.mxu0 %v4468
        %v5643 = vpop.f32.mrf.mxu0
        %v5644 = vadd.f32 %v5483, %v5643
        %v5645 = vpop.f32.mrf.mxu0
        %v5646 = vpop.f32.mrf.mxu0
        %v5647 = vadd.f32 %v5486, %v5646
        %v5648 = vpop.f32.mrf.mxu0
        %5649 = vmatprep.mubr.bf16.mxu0 %v4517
        %5650 = vmatmul.mubr.bf16.gmra.mxu0 %v4469
        %v5651 = vpop.f32.mrf.mxu0
        %v5652 = vadd.f32 %v5491, %v5651
        %v5653 = vpop.f32.mrf.mxu0
        %v5654 = vpop.f32.mrf.mxu0
        %v5655 = vadd.f32 %v5494, %v5654
        %v5656 = vpop.f32.mrf.mxu0
        %5657 = vmatprep.mubr.bf16.mxu0 %v4518
        %5658 = vmatmul.mubr.bf16.gmra.mxu0 %v4470
        %v5659 = vpop.f32.mrf.mxu0
        %v5660 = vadd.f32 %v5499, %v5659
        %v5661 = vpop.f32.mrf.mxu0
        %v5662 = vpop.f32.mrf.mxu0
        %v5663 = vadd.f32 %v5502, %v5662
        %v5664 = vpop.f32.mrf.mxu0
        %5665 = vmatprep.mubr.bf16.mxu0 %v4519
        %5666 = vmatmul.mubr.bf16.gmra.mxu0 %v4471
        %v5667 = vpop.f32.mrf.mxu0
        %v5668 = vadd.f32 %v5507, %v5667
        %v5669 = vpop.f32.mrf.mxu0
        %v5670 = vpop.f32.mrf.mxu0
        %v5671 = vadd.f32 %v5510, %v5670
        %v5672 = vpop.f32.mrf.mxu0
        %5673 = vmatprep.mubr.bf16.mxu0 %v4520
        %5674 = vmatmul.mubr.bf16.gmra.mxu0 %v4472
        %v5675 = vpop.f32.mrf.mxu0
        %v5676 = vadd.f32 %v5515, %v5675
        %v5677 = vpop.f32.mrf.mxu0
        %v5678 = vpop.f32.mrf.mxu0
        %v5679 = vadd.f32 %v5518, %v5678
        %v5680 = vpop.f32.mrf.mxu0
        %5681 = vmatprep.mubr.bf16.mxu0 %v4521
        %5682 = vmatmul.mubr.bf16.gmra.mxu0 %v4473
        %v5683 = vpop.f32.mrf.mxu0
        %v5684 = vadd.f32 %v5523, %v5683
        %v5685 = vpop.f32.mrf.mxu0
        %v5686 = vpop.f32.mrf.mxu0
        %v5687 = vadd.f32 %v5526, %v5686
        %v5688 = vpop.f32.mrf.mxu0
        %5689 = vmatprep.mubr.bf16.mxu0 %v4522
        %5690 = vmatmul.mubr.bf16.gmra.mxu0 %v4474
        %v5691 = vpop.f32.mrf.mxu0
        %v5692 = vadd.f32 %v5531, %v5691
        %v5693 = vpop.f32.mrf.mxu0
        %v5694 = vpop.f32.mrf.mxu0
        %v5695 = vadd.f32 %v5534, %v5694
        %v5696 = vpop.f32.mrf.mxu0
        %5697 = vmatprep.mubr.bf16.mxu0 %v4523
        %5698 = vmatmul.mubr.bf16.gmra.mxu0 %v4475
        %v5699 = vpop.f32.mrf.mxu0
        %v5700 = vadd.f32 %v5539, %v5699
        %v5701 = vpop.f32.mrf.mxu0
        %v5702 = vpop.f32.mrf.mxu0
        %v5703 = vadd.f32 %v5542, %v5702
        %v5704 = vpop.f32.mrf.mxu0
        %5705 = vmatprep.mubr.bf16.mxu0 %v4524
        %5706 = vmatmul.mubr.bf16.gmra.mxu0 %v4476
        %v5707 = vpop.f32.mrf.mxu0
        %v5708 = vadd.f32 %v5547, %v5707
        %v5709 = vpop.f32.mrf.mxu0
        %v5710 = vpop.f32.mrf.mxu0
        %v5711 = vadd.f32 %v5550, %v5710
        %v5712 = vpop.f32.mrf.mxu0
        %5713 = vmatprep.mubr.bf16.mxu0 %v4525
        %5714 = vmatmul.mubr.bf16.gmra.mxu0 %v4477
        %v5715 = vpop.f32.mrf.mxu0
        %v5716 = vadd.f32 %v5555, %v5715
        %v5717 = vpop.f32.mrf.mxu0
        %v5718 = vpop.f32.mrf.mxu0
        %v5719 = vadd.f32 %v5558, %v5718
        %v5720 = vpop.f32.mrf.mxu0
        %5721 = vmatprep.mubr.bf16.mxu0 %v4526
        %5722 = vmatmul.mubr.bf16.gmra.mxu0 %v4478
        %v5723 = vpop.f32.mrf.mxu0
        %v5724 = vadd.f32 %v5563, %v5723
        %v5725 = vpop.f32.mrf.mxu0
        %v5726 = vpop.f32.mrf.mxu0
        %v5727 = vadd.f32 %v5566, %v5726
        %v5728 = vpop.f32.mrf.mxu0
        %5729 = vdwg.mxu0
        %5730 = vmatprep.subr.bf16.mxu0 0
        %5731 = vmatpush1.bf16.msra.mxu0 %v5158
        %5732 = vmatprep.subr.bf16.mxu0 0
        %5733 = vmatpush1.bf16.msra.mxu0 %v5157
        %5734 = vmatprep.subr.bf16.mxu0 0
        %5735 = vmatpush1.bf16.msra.mxu0 %v5156
        %5736 = vmatprep.subr.bf16.mxu0 0
        %5737 = vmatpush1.bf16.msra.mxu0 %v5155
        %5738 = vmatprep.subr.bf16.mxu0 0
        %5739 = vmatpush1.bf16.msra.mxu0 %v5154
        %5740 = vmatprep.subr.bf16.mxu0 0
        %5741 = vmatpush1.bf16.msra.mxu0 %v5153
        %5742 = vmatprep.subr.bf16.mxu0 0
        %5743 = vmatpush1.bf16.msra.mxu0 %v5152
        %5744 = vmatprep.subr.bf16.mxu0 0
        %5745 = vmatpush1.bf16.msra.mxu0 %v5151
        %5746 = vmatprep.subr.bf16.mxu0 0
        %5747 = vmatpush2.bf16.msra.mxu0 %v5166
        %5748 = vmatprep.subr.bf16.mxu0 0
        %5749 = vmatpush2.bf16.msra.mxu0 %v5165
        %5750 = vmatprep.subr.bf16.mxu0 0
        %5751 = vmatpush2.bf16.msra.mxu0 %v5164
        %5752 = vmatprep.subr.bf16.mxu0 0
        %5753 = vmatpush2.bf16.msra.mxu0 %v5163
        %5754 = vmatprep.subr.bf16.mxu0 0
        %5755 = vmatpush2.bf16.msra.mxu0 %v5162
        %5756 = vmatprep.subr.bf16.mxu0 0
        %5757 = vmatpush2.bf16.msra.mxu0 %v5161
        %5758 = vmatprep.subr.bf16.mxu0 0
        %5759 = vmatpush2.bf16.msra.mxu0 %v5160
        %5760 = vmatprep.subr.bf16.mxu0 0
        %5761 = vmatpush2.bf16.msra.mxu0 %v5159
        %5762 = vmatprep.mubr.bf16.mxu0 %v4607
        %5763 = vmatmul.mubr.bf16.gmra.mxu0 %v4559
        %v5764 = vpop.f32.mrf.mxu0
        %v5765 = vadd.f32 %v5604, %v5764
        %v5766 = vpop.f32.mrf.mxu0
        %v5767 = vpop.f32.mrf.mxu0
        %v5768 = vadd.f32 %v5607, %v5767
        %v5769 = vpop.f32.mrf.mxu0
        %5770 = vmatprep.mubr.bf16.mxu0 %v4608
        %5771 = vmatmul.mubr.bf16.gmra.mxu0 %v4560
        %v5772 = vpop.f32.mrf.mxu0
        %v5773 = vadd.f32 %v5612, %v5772
        %v5774 = vpop.f32.mrf.mxu0
        %v5775 = vpop.f32.mrf.mxu0
        %v5776 = vadd.f32 %v5615, %v5775
        %v5777 = vpop.f32.mrf.mxu0
        %5778 = vmatprep.mubr.bf16.mxu0 %v4609
        %5779 = vmatmul.mubr.bf16.gmra.mxu0 %v4561
        %v5780 = vpop.f32.mrf.mxu0
        %v5781 = vadd.f32 %v5620, %v5780
        %v5782 = vpop.f32.mrf.mxu0
        %v5783 = vpop.f32.mrf.mxu0
        %v5784 = vadd.f32 %v5623, %v5783
        %v5785 = vpop.f32.mrf.mxu0
        %5786 = vmatprep.mubr.bf16.mxu0 %v4610
        %5787 = vmatmul.mubr.bf16.gmra.mxu0 %v4562
        %v5788 = vpop.f32.mrf.mxu0
        %v5789 = vadd.f32 %v5628, %v5788
        %v5790 = vpop.f32.mrf.mxu0
        %v5791 = vpop.f32.mrf.mxu0
        %v5792 = vadd.f32 %v5631, %v5791
        %v5793 = vpop.f32.mrf.mxu0
        %5794 = vmatprep.mubr.bf16.mxu0 %v4611
        %5795 = vmatmul.mubr.bf16.gmra.mxu0 %v4563
        %v5796 = vpop.f32.mrf.mxu0
        %v5797 = vadd.f32 %v5636, %v5796
        %v5798 = vpop.f32.mrf.mxu0
        %v5799 = vpop.f32.mrf.mxu0
        %v5800 = vadd.f32 %v5639, %v5799
        %v5801 = vpop.f32.mrf.mxu0
        %5802 = vmatprep.mubr.bf16.mxu0 %v4612
        %5803 = vmatmul.mubr.bf16.gmra.mxu0 %v4564
        %v5804 = vpop.f32.mrf.mxu0
        %v5805 = vadd.f32 %v5644, %v5804
        %v5806 = vpop.f32.mrf.mxu0
        %v5807 = vpop.f32.mrf.mxu0
        %v5808 = vadd.f32 %v5647, %v5807
        %v5809 = vpop.f32.mrf.mxu0
        %5810 = vmatprep.mubr.bf16.mxu0 %v4613
        %5811 = vmatmul.mubr.bf16.gmra.mxu0 %v4565
        %v5812 = vpop.f32.mrf.mxu0
        %v5813 = vadd.f32 %v5652, %v5812
        %v5814 = vpop.f32.mrf.mxu0
        %v5815 = vpop.f32.mrf.mxu0
        %v5816 = vadd.f32 %v5655, %v5815
        %v5817 = vpop.f32.mrf.mxu0
        %5818 = vmatprep.mubr.bf16.mxu0 %v4614
        %5819 = vmatmul.mubr.bf16.gmra.mxu0 %v4566
        %v5820 = vpop.f32.mrf.mxu0
        %v5821 = vadd.f32 %v5660, %v5820
        %v5822 = vpop.f32.mrf.mxu0
        %v5823 = vpop.f32.mrf.mxu0
        %v5824 = vadd.f32 %v5663, %v5823
        %v5825 = vpop.f32.mrf.mxu0
        %5826 = vmatprep.mubr.bf16.mxu0 %v4615
        %5827 = vmatmul.mubr.bf16.gmra.mxu0 %v4567
        %v5828 = vpop.f32.mrf.mxu0
        %v5829 = vadd.f32 %v5668, %v5828
        %v5830 = vpop.f32.mrf.mxu0
        %v5831 = vpop.f32.mrf.mxu0
        %v5832 = vadd.f32 %v5671, %v5831
        %v5833 = vpop.f32.mrf.mxu0
        %5834 = vmatprep.mubr.bf16.mxu0 %v4616
        %5835 = vmatmul.mubr.bf16.gmra.mxu0 %v4568
        %v5836 = vpop.f32.mrf.mxu0
        %v5837 = vadd.f32 %v5676, %v5836
        %v5838 = vpop.f32.mrf.mxu0
        %v5839 = vpop.f32.mrf.mxu0
        %v5840 = vadd.f32 %v5679, %v5839
        %v5841 = vpop.f32.mrf.mxu0
        %5842 = vmatprep.mubr.bf16.mxu0 %v4617
        %5843 = vmatmul.mubr.bf16.gmra.mxu0 %v4569
        %v5844 = vpop.f32.mrf.mxu0
        %v5845 = vadd.f32 %v5684, %v5844
        %v5846 = vpop.f32.mrf.mxu0
        %v5847 = vpop.f32.mrf.mxu0
        %v5848 = vadd.f32 %v5687, %v5847
        %v5849 = vpop.f32.mrf.mxu0
        %5850 = vmatprep.mubr.bf16.mxu0 %v4618
        %5851 = vmatmul.mubr.bf16.gmra.mxu0 %v4570
        %v5852 = vpop.f32.mrf.mxu0
        %v5853 = vadd.f32 %v5692, %v5852
        %v5854 = vpop.f32.mrf.mxu0
        %v5855 = vpop.f32.mrf.mxu0
        %v5856 = vadd.f32 %v5695, %v5855
        %v5857 = vpop.f32.mrf.mxu0
        %5858 = vmatprep.mubr.bf16.mxu0 %v4619
        %5859 = vmatmul.mubr.bf16.gmra.mxu0 %v4571
        %v5860 = vpop.f32.mrf.mxu0
        %v5861 = vadd.f32 %v5700, %v5860
        %v5862 = vpop.f32.mrf.mxu0
        %v5863 = vpop.f32.mrf.mxu0
        %v5864 = vadd.f32 %v5703, %v5863
        %v5865 = vpop.f32.mrf.mxu0
        %5866 = vmatprep.mubr.bf16.mxu0 %v4620
        %5867 = vmatmul.mubr.bf16.gmra.mxu0 %v4572
        %v5868 = vpop.f32.mrf.mxu0
        %v5869 = vadd.f32 %v5708, %v5868
        %v5870 = vpop.f32.mrf.mxu0
        %v5871 = vpop.f32.mrf.mxu0
        %v5872 = vadd.f32 %v5711, %v5871
        %v5873 = vpop.f32.mrf.mxu0
        %5874 = vmatprep.mubr.bf16.mxu0 %v4621
        %5875 = vmatmul.mubr.bf16.gmra.mxu0 %v4573
        %v5876 = vpop.f32.mrf.mxu0
        %v5877 = vadd.f32 %v5716, %v5876
        %v5878 = vpop.f32.mrf.mxu0
        %v5879 = vpop.f32.mrf.mxu0
        %v5880 = vadd.f32 %v5719, %v5879
        %v5881 = vpop.f32.mrf.mxu0
        %5882 = vmatprep.mubr.bf16.mxu0 %v4622
        %5883 = vmatmul.mubr.bf16.gmra.mxu0 %v4574
        %v5884 = vpop.f32.mrf.mxu0
        %v5885 = vadd.f32 %v5724, %v5884
        %v5886 = vpop.f32.mrf.mxu0
        %v5887 = vpop.f32.mrf.mxu0
        %v5888 = vadd.f32 %v5727, %v5887
        %v5889 = vpop.f32.mrf.mxu0
        %5890 = vdwg.mxu0
        %5891 = vmatprep.subr.bf16.mxu0 0
        %5892 = vmatpush1.bf16.msra.mxu0 %v5174
        %5893 = vmatprep.subr.bf16.mxu0 0
        %5894 = vmatpush1.bf16.msra.mxu0 %v5173
        %5895 = vmatprep.subr.bf16.mxu0 0
        %5896 = vmatpush1.bf16.msra.mxu0 %v5172
        %5897 = vmatprep.subr.bf16.mxu0 0
        %5898 = vmatpush1.bf16.msra.mxu0 %v5171
        %5899 = vmatprep.subr.bf16.mxu0 0
        %5900 = vmatpush1.bf16.msra.mxu0 %v5170
        %5901 = vmatprep.subr.bf16.mxu0 0
        %5902 = vmatpush1.bf16.msra.mxu0 %v5169
        %5903 = vmatprep.subr.bf16.mxu0 0
        %5904 = vmatpush1.bf16.msra.mxu0 %v5168
        %5905 = vmatprep.subr.bf16.mxu0 0
        %5906 = vmatpush1.bf16.msra.mxu0 %v5167
        %5907 = vmatprep.subr.bf16.mxu0 0
        %5908 = vmatpush2.bf16.msra.mxu0 0
        %5909 = vmatprep.subr.bf16.mxu0 0
        %5910 = vmatpush2.bf16.msra.mxu0 0
        %5911 = vmatprep.subr.bf16.mxu0 0
        %5912 = vmatpush2.bf16.msra.mxu0 0
        %5913 = vmatprep.subr.bf16.mxu0 0
        %5914 = vmatpush2.bf16.msra.mxu0 0
        %5915 = vmatprep.subr.bf16.mxu0 0
        %5916 = vmatpush2.bf16.msra.mxu0 0
        %5917 = vmatprep.subr.bf16.mxu0 0
        %5918 = vmatpush2.bf16.msra.mxu0 0
        %5919 = vmatprep.subr.bf16.mxu0 0
        %5920 = vmatpush2.bf16.msra.mxu0 0
        %5921 = vmatprep.subr.bf16.mxu0 0
        %5922 = vmatpush2.bf16.msra.mxu0 0
        %5923 = vmatprep.mubr.bf16.mxu0 0
        %5924 = vmatmul.mubr.bf16.gmra.mxu0 %v4655
        %v5925 = vpop.f32.mrf.mxu0
        %v5926 = vadd.f32 %v5765, %v5925
        %v5927 = vpop.f32.mrf.mxu0
        %v5928 = vpop.f32.mrf.mxu0
        %v5929 = vadd.f32 %v5768, %v5928
        %v5930 = vpop.f32.mrf.mxu0
        %5931 = vmatprep.mubr.bf16.mxu0 0
        %5932 = vmatmul.mubr.bf16.gmra.mxu0 %v4656
        %v5933 = vpop.f32.mrf.mxu0
        %v5934 = vadd.f32 %v5773, %v5933
        %v5935 = vpop.f32.mrf.mxu0
        %v5936 = vpop.f32.mrf.mxu0
        %v5937 = vadd.f32 %v5776, %v5936
        %v5938 = vpop.f32.mrf.mxu0
        %5939 = vmatprep.mubr.bf16.mxu0 0
        %5940 = vmatmul.mubr.bf16.gmra.mxu0 %v4657
        %v5941 = vpop.f32.mrf.mxu0
        %v5942 = vadd.f32 %v5781, %v5941
        %v5943 = vpop.f32.mrf.mxu0
        %v5944 = vpop.f32.mrf.mxu0
        %v5945 = vadd.f32 %v5784, %v5944
        %v5946 = vpop.f32.mrf.mxu0
        %5947 = vmatprep.mubr.bf16.mxu0 0
        %5948 = vmatmul.mubr.bf16.gmra.mxu0 %v4658
        %v5949 = vpop.f32.mrf.mxu0
        %v5950 = vadd.f32 %v5789, %v5949
        %v5951 = vpop.f32.mrf.mxu0
        %v5952 = vpop.f32.mrf.mxu0
        %v5953 = vadd.f32 %v5792, %v5952
        %v5954 = vpop.f32.mrf.mxu0
        %5955 = vmatprep.mubr.bf16.mxu0 0
        %5956 = vmatmul.mubr.bf16.gmra.mxu0 %v4659
        %v5957 = vpop.f32.mrf.mxu0
        %v5958 = vadd.f32 %v5797, %v5957
        %v5959 = vpop.f32.mrf.mxu0
        %v5960 = vpop.f32.mrf.mxu0
        %v5961 = vadd.f32 %v5800, %v5960
        %v5962 = vpop.f32.mrf.mxu0
        %5963 = vmatprep.mubr.bf16.mxu0 0
        %5964 = vmatmul.mubr.bf16.gmra.mxu0 %v4660
        %v5965 = vpop.f32.mrf.mxu0
        %v5966 = vadd.f32 %v5805, %v5965
        %v5967 = vpop.f32.mrf.mxu0
        %v5968 = vpop.f32.mrf.mxu0
        %v5969 = vadd.f32 %v5808, %v5968
        %v5970 = vpop.f32.mrf.mxu0
        %5971 = vmatprep.mubr.bf16.mxu0 0
        %5972 = vmatmul.mubr.bf16.gmra.mxu0 %v4661
        %v5973 = vpop.f32.mrf.mxu0
        %v5974 = vadd.f32 %v5813, %v5973
        %v5975 = vpop.f32.mrf.mxu0
        %v5976 = vpop.f32.mrf.mxu0
        %v5977 = vadd.f32 %v5816, %v5976
        %v5978 = vpop.f32.mrf.mxu0
        %5979 = vmatprep.mubr.bf16.mxu0 0
        %5980 = vmatmul.mubr.bf16.gmra.mxu0 %v4662
        %v5981 = vpop.f32.mrf.mxu0
        %v5982 = vadd.f32 %v5821, %v5981
        %v5983 = vpop.f32.mrf.mxu0
        %v5984 = vpop.f32.mrf.mxu0
        %v5985 = vadd.f32 %v5824, %v5984
        %v5986 = vpop.f32.mrf.mxu0
        %5987 = vmatprep.mubr.bf16.mxu0 0
        %5988 = vmatmul.mubr.bf16.gmra.mxu0 %v4663
        %v5989 = vpop.f32.mrf.mxu0
        %v5990 = vadd.f32 %v5829, %v5989
        %v5991 = vpop.f32.mrf.mxu0
        %v5992 = vpop.f32.mrf.mxu0
        %v5993 = vadd.f32 %v5832, %v5992
        %v5994 = vpop.f32.mrf.mxu0
        %5995 = vmatprep.mubr.bf16.mxu0 0
        %5996 = vmatmul.mubr.bf16.gmra.mxu0 %v4664
        %v5997 = vpop.f32.mrf.mxu0
        %v5998 = vadd.f32 %v5837, %v5997
        %v5999 = vpop.f32.mrf.mxu0
        %v6000 = vpop.f32.mrf.mxu0
        %v6001 = vadd.f32 %v5840, %v6000
        %v6002 = vpop.f32.mrf.mxu0
        %6003 = vmatprep.mubr.bf16.mxu0 0
        %6004 = vmatmul.mubr.bf16.gmra.mxu0 %v4665
        %v6005 = vpop.f32.mrf.mxu0
        %v6006 = vadd.f32 %v5845, %v6005
        %v6007 = vpop.f32.mrf.mxu0
        %v6008 = vpop.f32.mrf.mxu0
        %v6009 = vadd.f32 %v5848, %v6008
        %v6010 = vpop.f32.mrf.mxu0
        %6011 = vmatprep.mubr.bf16.mxu0 0
        %6012 = vmatmul.mubr.bf16.gmra.mxu0 %v4666
        %v6013 = vpop.f32.mrf.mxu0
        %v6014 = vadd.f32 %v5853, %v6013
        %v6015 = vpop.f32.mrf.mxu0
        %v6016 = vpop.f32.mrf.mxu0
        %v6017 = vadd.f32 %v5856, %v6016
        %v6018 = vpop.f32.mrf.mxu0
        %6019 = vmatprep.mubr.bf16.mxu0 0
        %6020 = vmatmul.mubr.bf16.gmra.mxu0 %v4667
        %v6021 = vpop.f32.mrf.mxu0
        %v6022 = vadd.f32 %v5861, %v6021
        %v6023 = vpop.f32.mrf.mxu0
        %v6024 = vpop.f32.mrf.mxu0
        %v6025 = vadd.f32 %v5864, %v6024
        %v6026 = vpop.f32.mrf.mxu0
        %6027 = vmatprep.mubr.bf16.mxu0 0
        %6028 = vmatmul.mubr.bf16.gmra.mxu0 %v4668
        %v6029 = vpop.f32.mrf.mxu0
        %v6030 = vadd.f32 %v5869, %v6029
        %v6031 = vpop.f32.mrf.mxu0
        %v6032 = vpop.f32.mrf.mxu0
        %v6033 = vadd.f32 %v5872, %v6032
        %v6034 = vpop.f32.mrf.mxu0
        %6035 = vmatprep.mubr.bf16.mxu0 0
        %6036 = vmatmul.mubr.bf16.gmra.mxu0 %v4669
        %v6037 = vpop.f32.mrf.mxu0
        %v6038 = vadd.f32 %v5877, %v6037
        %v6039 = vpop.f32.mrf.mxu0
        %v6040 = vpop.f32.mrf.mxu0
        %v6041 = vadd.f32 %v5880, %v6040
        %v6042 = vpop.f32.mrf.mxu0
        %6043 = vmatprep.mubr.bf16.mxu0 0
        %6044 = vmatmul.mubr.bf16.gmra.mxu0 %v4670
        %v6045 = vpop.f32.mrf.mxu0
        %v6046 = vadd.f32 %v5885, %v6045
        %v6047 = vpop.f32.mrf.mxu0
        %v6048 = vpop.f32.mrf.mxu0
        %v6049 = vadd.f32 %v5888, %v6048
        %v6050 = vpop.f32.mrf.mxu0
        %6051 = vdwg.mxu0
        %v6052 = vld [vmem:[%s5] sm:$0x1]
        %v6054 = vlaneseq
        %v6055 = vshrl.u32 %v6054, 7
        %v6056 = vsub.s32 0, %v6055
        %v6057 = vrot.slane %v6052, %v6056
        %v6059 = vmul.f32 %v5926, %v6057
        %v6060 = vmul.f32 %v5929, %v6057
        %v6061 = vmul.f32 %v5934, %v6057
        %v6062 = vmul.f32 %v5937, %v6057
        %v6063 = vmul.f32 %v5942, %v6057
        %v6064 = vmul.f32 %v5945, %v6057
        %v6065 = vmul.f32 %v5950, %v6057
        %v6066 = vmul.f32 %v5953, %v6057
        %v6067 = vmul.f32 %v5958, %v6057
        %v6068 = vmul.f32 %v5961, %v6057
        %v6069 = vmul.f32 %v5966, %v6057
        %v6070 = vmul.f32 %v5969, %v6057
        %v6071 = vmul.f32 %v5974, %v6057
        %v6072 = vmul.f32 %v5977, %v6057
        %v6073 = vmul.f32 %v5982, %v6057
        %v6074 = vmul.f32 %v5985, %v6057
        %v6075 = vmul.f32 %v5990, %v6057
        %v6076 = vmul.f32 %v5993, %v6057
        %v6077 = vmul.f32 %v5998, %v6057
        %v6078 = vmul.f32 %v6001, %v6057
        %v6079 = vmul.f32 %v6006, %v6057
        %v6080 = vmul.f32 %v6009, %v6057
        %v6081 = vmul.f32 %v6014, %v6057
        %v6082 = vmul.f32 %v6017, %v6057
        %v6083 = vmul.f32 %v6022, %v6057
        %v6084 = vmul.f32 %v6025, %v6057
        %v6085 = vmul.f32 %v6030, %v6057
        %v6086 = vmul.f32 %v6033, %v6057
        %v6087 = vmul.f32 %v6038, %v6057
        %v6088 = vmul.f32 %v6041, %v6057
        %v6089 = vmul.f32 %v6046, %v6057
        %v6090 = vmul.f32 %v6049, %v6057
        %v6091 = vld [vmem:[%s6] sm:$0x1]
        %v6093 = vlaneseq
        %v6094 = vshrl.u32 %v6093, 7
        %v6095 = vsub.s32 0, %v6094
        %v6096 = vrot.slane %v6091, %v6095
        %v6098 = vadd.f32 %v6059, %v6096
        %v6099 = vadd.f32 %v6060, %v6096
        %v6100 = vadd.f32 %v6061, %v6096
        %v6101 = vadd.f32 %v6062, %v6096
        %v6102 = vadd.f32 %v6063, %v6096
        %v6103 = vadd.f32 %v6064, %v6096
        %v6104 = vadd.f32 %v6065, %v6096
        %v6105 = vadd.f32 %v6066, %v6096
        %v6106 = vadd.f32 %v6067, %v6096
        %v6107 = vadd.f32 %v6068, %v6096
        %v6108 = vadd.f32 %v6069, %v6096
        %v6109 = vadd.f32 %v6070, %v6096
        %v6110 = vadd.f32 %v6071, %v6096
        %v6111 = vadd.f32 %v6072, %v6096
        %v6112 = vadd.f32 %v6073, %v6096
        %v6113 = vadd.f32 %v6074, %v6096
        %v6114 = vadd.f32 %v6075, %v6096
        %v6115 = vadd.f32 %v6076, %v6096
        %v6116 = vadd.f32 %v6077, %v6096
        %v6117 = vadd.f32 %v6078, %v6096
        %v6118 = vadd.f32 %v6079, %v6096
        %v6119 = vadd.f32 %v6080, %v6096
        %v6120 = vadd.f32 %v6081, %v6096
        %v6121 = vadd.f32 %v6082, %v6096
        %v6122 = vadd.f32 %v6083, %v6096
        %v6123 = vadd.f32 %v6084, %v6096
        %v6124 = vadd.f32 %v6085, %v6096
        %v6125 = vadd.f32 %v6086, %v6096
        %v6126 = vadd.f32 %v6087, %v6096
        %v6127 = vadd.f32 %v6088, %v6096
        %v6128 = vadd.f32 %v6089, %v6096
        %v6129 = vadd.f32 %v6090, %v6096
        %v6130 = vadd.f32 %v6098, %v329
        %v6131 = vadd.f32 %v6099, %v330
        %v6132 = vadd.f32 %v6100, %v331
        %v6133 = vadd.f32 %v6101, %v332
        %v6134 = vadd.f32 %v6102, %v333
        %v6135 = vadd.f32 %v6103, %v334
        %v6136 = vadd.f32 %v6104, %v335
        %v6137 = vadd.f32 %v6105, %v336
        %v6138 = vadd.f32 %v6106, %v337
        %v6139 = vadd.f32 %v6107, %v338
        %v6140 = vadd.f32 %v6108, %v339
        %v6141 = vadd.f32 %v6109, %v340
        %v6142 = vadd.f32 %v6110, %v341
        %v6143 = vadd.f32 %v6111, %v342
        %v6144 = vadd.f32 %v6112, %v343
        %v6145 = vadd.f32 %v6113, %v344
        %v6146 = vadd.f32 %v6114, %v345
        %v6147 = vadd.f32 %v6115, %v346
        %v6148 = vadd.f32 %v6116, %v347
        %v6149 = vadd.f32 %v6117, %v348
        %v6150 = vadd.f32 %v6118, %v349
        %v6151 = vadd.f32 %v6119, %v350
        %v6152 = vadd.f32 %v6120, %v351
        %v6153 = vadd.f32 %v6121, %v352
        %v6154 = vadd.f32 %v6122, %v353
        %v6155 = vadd.f32 %v6123, %v354
        %v6156 = vadd.f32 %v6124, %v355
        %v6157 = vadd.f32 %v6125, %v356
        %v6158 = vadd.f32 %v6126, %v357
        %v6159 = vadd.f32 %v6127, %v358
        %v6160 = vadd.f32 %v6128, %v359
        %v6161 = vadd.f32 %v6129, %v360
        %v6162 = vmax.f32 %v6130, 0.0
        %v6163 = vmax.f32 %v6131, 0.0
        %v6164 = vmax.f32 %v6132, 0.0
        %v6165 = vmax.f32 %v6133, 0.0
        %v6166 = vmax.f32 %v6134, 0.0
        %v6167 = vmax.f32 %v6135, 0.0
        %v6168 = vmax.f32 %v6136, 0.0
        %v6169 = vmax.f32 %v6137, 0.0
        %v6170 = vmax.f32 %v6138, 0.0
        %v6171 = vmax.f32 %v6139, 0.0
        %v6172 = vmax.f32 %v6140, 0.0
        %v6173 = vmax.f32 %v6141, 0.0
        %v6174 = vmax.f32 %v6142, 0.0
        %v6175 = vmax.f32 %v6143, 0.0
        %v6176 = vmax.f32 %v6144, 0.0
        %v6177 = vmax.f32 %v6145, 0.0
        %v6178 = vmax.f32 %v6146, 0.0
        %v6179 = vmax.f32 %v6147, 0.0
        %v6180 = vmax.f32 %v6148, 0.0
        %v6181 = vmax.f32 %v6149, 0.0
        %v6182 = vmax.f32 %v6150, 0.0
        %v6183 = vmax.f32 %v6151, 0.0
        %v6184 = vmax.f32 %v6152, 0.0
        %v6185 = vmax.f32 %v6153, 0.0
        %v6186 = vmax.f32 %v6154, 0.0
        %v6187 = vmax.f32 %v6155, 0.0
        %v6188 = vmax.f32 %v6156, 0.0
        %v6189 = vmax.f32 %v6157, 0.0
        %v6190 = vmax.f32 %v6158, 0.0
        %v6191 = vmax.f32 %v6159, 0.0
        %v6192 = vmax.f32 %v6160, 0.0
        %v6193 = vmax.f32 %v6161, 0.0
        %6194 = vst [vmem:[%s325] sm:$0xff] %v6162
        %6195 = vst [vmem:[%s325 + $0x8] sm:$0xff] %v6163
        %6196 = vst [vmem:[%s325 + $0x10] sm:$0xff] %v6164
        %6197 = vst [vmem:[%s325 + $0x18] sm:$0xff] %v6165
        %6198 = vst [vmem:[%s325 + $0x20] sm:$0xff] %v6166
        %6199 = vst [vmem:[%s325 + $0x28] sm:$0xff] %v6167
        %6200 = vst [vmem:[%s325 + $0x30] sm:$0xff] %v6168
        %6201 = vst [vmem:[%s325 + $0x38] sm:$0xff] %v6169
        %6202 = vst [vmem:[%s325 + $0x40] sm:$0xff] %v6170
        %6203 = vst [vmem:[%s325 + $0x48] sm:$0xff] %v6171
        %6204 = vst [vmem:[%s325 + $0x50] sm:$0xff] %v6172
        %6205 = vst [vmem:[%s325 + $0x58] sm:$0xff] %v6173
        %6206 = vst [vmem:[%s325 + $0x60] sm:$0xff] %v6174
        %6207 = vst [vmem:[%s325 + $0x68] sm:$0xff] %v6175
        %6208 = vst [vmem:[%s325 + $0x70] sm:$0xff] %v6176
        %6209 = vst [vmem:[%s325 + $0x78] sm:$0xff] %v6177
        %6210 = vst [vmem:[%s325 + $0x80] sm:$0xff] %v6178
        %6211 = vst [vmem:[%s325 + $0x88] sm:$0xff] %v6179
        %6212 = vst [vmem:[%s325 + $0x90] sm:$0xff] %v6180
        %6213 = vst [vmem:[%s325 + $0x98] sm:$0xff] %v6181
        %6214 = vst [vmem:[%s325 + $0xa0] sm:$0xff] %v6182
        %6215 = vst [vmem:[%s325 + $0xa8] sm:$0xff] %v6183
        %6216 = vst [vmem:[%s325 + $0xb0] sm:$0xff] %v6184
        %6217 = vst [vmem:[%s325 + $0xb8] sm:$0xff] %v6185
        %6218 = vst [vmem:[%s325 + $0xc0] sm:$0xff] %v6186
        %6219 = vst [vmem:[%s325 + $0xc8] sm:$0xff] %v6187
        %6220 = vst [vmem:[%s325 + $0xd0] sm:$0xff] %v6188
        %6221 = vst [vmem:[%s325 + $0xd8] sm:$0xff] %v6189
        %6222 = vst [vmem:[%s325 + $0xe0] sm:$0xff] %v6190
        %6223 = vst [vmem:[%s325 + $0xe8] sm:$0xff] %v6191
        %6224 = vst [vmem:[%s325 + $0xf0] sm:$0xff] %v6192
        %6225 = vst [vmem:[%s325 + $0xf8] sm:$0xff] %v6193
        %s6226 = sand.u32 %s185, 1
        %s6227 = scalar_lea.sflag [#allocation4], %s6226
        %s6228 = sand.u32 %s185, 1
        %s6229 = smul.addr %s6228, 256
        %s6230 = scalar_lea.vmem [#allocation8], %s6229
        // Predicated region
        $region61: #{tpu_custom_call.1} parent=47 // pred_check
          %p6231 = pneg %p195
        $region62: #{tpu_custom_call.1} parent=47 // pred_check_branch
          %6233 = sbr.rel (%p6231) target = $region64
        $region63: #{tpu_custom_call.1} parent=47 // pred_region
          %s6234 = smul.u32 32, %s25
          %s6236 = ssub.s32 4096, 4096
          %6237 = vsyncadd %s6227, %s6236
          %s6238 = smul.addr %s6234, 128
          %s6239 = scalar_lea.hbm %s7, %s6238
          %s6240 = sshll.u32 %s6230, 4
          %s6241 = int_to_ptr.vmem [resolvable:$true] %s6240
          %6246 = dma.vmem_to_hbm [thread:$0]  %s6241, 4096, %s6239, %s6227, 128, 128, 8
        $region64: #{tpu_custom_call.1} parent=47 // pred_fallthru
          _
      $region48: #{tpu_custom_call.1} parent=5 // pred_fallthru
        _
      %p6247 = scmp.le.s32.totalorder 2, %s20
      // Predicated region
      $region65: #{tpu_custom_call.1} parent=5 // pred_check
        %p6248 = pneg %p6247
      $region66: #{tpu_custom_call.1} parent=5 // pred_check_branch
        %6250 = sbr.rel (%p6248) target = $region68
      $region67: #{tpu_custom_call.1} parent=5 // pred_region
        %s6251 = ssub.s32 %s20, 2
        // Predicated region
        $region69: #{tpu_custom_call.1} parent=67 // pred_check
          %p6252 = pneg %p201
        $region70: #{tpu_custom_call.1} parent=67 // pred_check_branch
          %6254 = sbr.rel (%p6252) target = $region72
        $region71: #{tpu_custom_call.1} parent=67 // pred_region
          %s6255 = sand.u32 %s186, 1
          %s6256 = scalar_lea.sflag [#allocation4], %s6255
          %s6257 = sand.u32 %s186, 1
          %s6258 = smul.addr %s6257, 256
          %s6259 = scalar_lea.vmem [#allocation8], %s6258
          %6260 = dma.done %s6256, 4096
        $region72: #{tpu_custom_call.1} parent=67 // pred_fallthru
          _
      $region68: #{tpu_custom_call.1} parent=5 // pred_fallthru
        _
    $region6: #{tpu_custom_call.1} parent=1 // loop_footer
      %s24 = sadd.s32 1, %s20
    $region7: #{tpu_custom_call.1} parent=1 // loop_footer_branch
      %19 = sbr.rel target = $region3
    $region8: #{tpu_custom_call.1} parent=1 // loop_exit
      _
    %6261 = vsyncpa [#allocation3], 1
    %s6262 = scalar_lea.sflag [#allocation3], 1
    %6263 = vsyncpa %s6262, 1
    %6264 = vsyncpa [#allocation6], 1
    %6265 = vsyncpa [#allocation4], 1
    %s6266 = scalar_lea.sflag [#allocation4], 1
    %6267 = vsyncpa %s6266, 1

</llo_original>
